<compile_context>
chip_gen: v5e
topology: v5e:2x2
jax: 0.10.0
libtpu: 0.0.40
codegen_flags: <defaults>
</compile_context>

<pallas_src>
import functools

import jax
import jax.numpy as jnp
from jax.experimental import pallas as pl
from jax.experimental.pallas import tpu as pltpu

_EPS = 1e-5


def _vmem_spec():
    # Whole array resident in VMEM (everything here is tiny); no grid, no pipelining.
    return pl.BlockSpec(memory_space=pltpu.MemorySpace.VMEM)


# --------------------------------------------------------------------------- #
# Kernel 1: fused 4 x (ConvTranspose2d(2,2,0) + BatchNorm2d + ReLU)
#   activations are kept as pixel-row matrices (rows = pixels, cols = channels);
#   each deconv appends its 4 (kh,kw) output blocks along the row axis, so the
#   2x2 spatial scatter is deferred to XLA glue after the kernel.
# --------------------------------------------------------------------------- #
def _decoder_core_kernel(x_ref,
                         w1_ref, p1_ref, w2_ref, p2_ref,
                         w3_ref, p3_ref, w4_ref, p4_ref,
                         o_ref, a1_ref, a2_ref, a3_ref, *, eps):
    def layer(x, w_ref, p_ref, out_ref):
        bias = p_ref[0:1, :]
        gamma = p_ref[1:2, :]
        beta = p_ref[2:3, :]
        # 4 per-(kh,kw) matmuls stacked along rows -> (4*M, Cout), fully in VMEM.
        y = jnp.concatenate(
            [jnp.dot(x, w_ref[k], preferred_element_type=jnp.float32)
             for k in range(4)],
            axis=0) + bias
        # BatchNorm (training mode): biased batch stats over all pixels per channel.
        mean = jnp.mean(y, axis=0, keepdims=True)
        var = jnp.mean(jnp.square(y - mean), axis=0, keepdims=True)
        scale = gamma * jax.lax.rsqrt(var + eps)
        shift = beta - mean * scale
        out_ref[...] = jnp.maximum(y * scale + shift, 0.0)

    layer(x_ref[...], w1_ref, p1_ref, a1_ref)
    layer(a1_ref[...], w2_ref, p2_ref, a2_ref)
    layer(a2_ref[...], w3_ref, p3_ref, a3_ref)
    layer(a3_ref[...], w4_ref, p4_ref, o_ref)


def _decoder_core(x0, layer_params):
    m0 = x0.shape[0]                      # N * 2 * 2 input pixels
    cout_last = layer_params[-1][0].shape[2]
    out_rows = m0 * (4 ** len(layer_params))

    flat_inputs = [x0]
    in_specs = [_vmem_spec()]
    scratch = []
    m = m0
    for i, (wk, pk) in enumerate(layer_params):
        flat_inputs += [wk, pk]
        in_specs += [_vmem_spec(), _vmem_spec()]
        m *= 4
        if i < len(layer_params) - 1:
            scratch.append(pltpu.VMEM((m, wk.shape[2]), jnp.float32))

    return pl.pallas_call(
        functools.partial(_decoder_core_kernel, eps=_EPS),
        out_shape=jax.ShapeDtypeStruct((out_rows, cout_last), jnp.float32),
        in_specs=in_specs,
        out_specs=_vmem_spec(),
        scratch_shapes=scratch,
    )(*flat_inputs)


# --------------------------------------------------------------------------- #
# Kernel 2: Conv2d(32, 1, 3, 1, 1) + Tanh on the packed layout
#   x_ref: (N, 34, 1024)  rows = h (padded by 1 on each side), lanes = (w, c)
#   t_ref: (3, 1024, 32)  per-dh tap matrix with the dw taps / w-padding folded in
# --------------------------------------------------------------------------- #
def _conv3x3_tanh_kernel(x_ref, t_ref, b_ref, o_ref):
    n_img, h_out, w_out = o_ref.shape
    for i in range(n_img):
        acc = jnp.zeros((h_out, w_out), jnp.float32)
        for dh in range(3):
            win = x_ref[i, dh:dh + h_out, :]          # rows h+dh-1 (zero padded)
            acc = acc + jnp.dot(win, t_ref[dh], preferred_element_type=jnp.float32)
        o_ref[i, :, :] = jnp.tanh(acc + b_ref[...])


def _conv3x3_tanh(x_img_padded, t_mat, bias):
    n, hp, _ = x_img_padded.shape
    h = hp - 2
    w = t_mat.shape[2]
    return pl.pallas_call(
        _conv3x3_tanh_kernel,
        out_shape=jax.ShapeDtypeStruct((n, h, w), jnp.float32),
        in_specs=[_vmem_spec(), _vmem_spec(), _vmem_spec()],
        out_specs=_vmem_spec(),
    )(x_img_padded, t_mat, bias)


# --------------------------------------------------------------------------- #
# XLA glue: the deferred spatial scatter (pure row permutation, 4 small copies).
# Kernel-1 output rows are ordered (kh4,kw4,kh3,kw3,kh2,kw2,kh1,kw1, n, h0, w0);
# target packed layout is (n, h, (w, c)) with h = 16*h0+8*kh1+4*kh2+2*kh3+kh4 etc.
# --------------------------------------------------------------------------- #
def _spatial_scatter(y, n):
    c = y.shape[1]
    y = y.reshape(64, 2, 2, n, 2, 2, c)                      # (K432, kh1, kw1, n, h0, w0, c)
    y = jnp.transpose(y, (0, 3, 4, 1, 5, 2, 6)).reshape(16, 2, 2, n, 4, 4, c)
    y = jnp.transpose(y, (0, 3, 4, 1, 5, 2, 6)).reshape(4, 2, 2, n, 8, 8, c)
    y = jnp.transpose(y, (0, 3, 4, 1, 5, 2, 6)).reshape(2, 2, n, 16, 16, c)
    y = jnp.transpose(y, (2, 3, 0, 4, 1, 5)).reshape(n, 32, 32 * c)
    return y                                                 # (n, h, (w, c)) packed


@jax.jit
def resnet_decoder(x_nchw, params):
    layer_params, t_mat, conv_bias = params
    n = x_nchw.shape[0]
    assert x_nchw.shape[1:] == (512, 2, 2), x_nchw.shape

    # NCHW -> pixel-row matrix, rows ordered (n, h0, w0)
    x0 = jnp.transpose(x_nchw, (0, 2, 3, 1)).astype(jnp.float32).reshape(n * 4, 512)

    core = _decoder_core(x0, layer_params)          # (1024*n, 32), scrambled row order
    x_img = _spatial_scatter(core, n)               # (n, 32, 1024) packed (h, (w, c))
    x_img = jnp.pad(x_img, ((0, 0), (1, 1), (0, 0)))  # zero-pad in h for the 3x3 conv

    out = _conv3x3_tanh(x_img, t_mat, conv_bias)    # (n, 32, 32)
    return out[:, None, :, :]                       # NCHW (n, 1, 32, 32)


# --------------------------------------------------------------------------- #
# Parameter prefolding (done once, outside the jitted forward).
# --------------------------------------------------------------------------- #
def prepare_params(deconv_params, conv_params):
    layer_params = []
    for (w, b, gamma, beta) in deconv_params:
        cin, cout = w.shape[0], w.shape[1]
        # ConvTranspose2d weight (Cin, Cout, 2, 2) -> (4, Cin, Cout), k = kh*2 + kw
        wk = jnp.transpose(w, (2, 3, 0, 1)).reshape(4, cin, cout).astype(jnp.float32)
        pk = jnp.stack([b, gamma, beta], axis=0).astype(jnp.float32)   # (3, Cout)
        layer_params.append((wk, pk))

    wc, bc = conv_params                     # (1, 32, 3, 3), (1,)
    c = wc.shape[1]
    w_len = 32
    wi = jnp.arange(w_len)
    t_list = []
    for dh in range(3):
        acc = jnp.zeros((w_len, c, w_len), jnp.float32)
        for dw in range(3):
            # shift matrix: contributes iff w_in == w_out + dw - 1 (w-padding implicit)
            s = (wi[:, None] == (wi[None, :] + dw - 1)).astype(jnp.float32)
            acc = acc + s[:, None, :] * wc[0, :, dh, dw][None, :, None]
        t_list.append(acc.reshape(w_len * c, w_len))
    t_mat = jnp.stack(t_list, axis=0)                          # (3, 1024, 32)
    bias = jnp.asarray(bc, jnp.float32).reshape(1, 1)
    return tuple(layer_params), t_mat, bias


# --------------------------------------------------------------------------- #
# Pure-JAX reference (same math, straightforward ops) used as a self-check.
# --------------------------------------------------------------------------- #
def _reference_forward(x_nchw, deconv_params, conv_params):
    x = jnp.transpose(x_nchw, (0, 2, 3, 1)).astype(jnp.float32)   # NHWC
    for (w, b, gamma, beta) in deconv_params:
        n, h, wd, _ = x.shape
        cout = w.shape[1]
        y = jnp.einsum("nhwi,iokl->nhkwlo", x, w)   # (n, h, kh, w, kw, cout)
        y = y.reshape(n, 2 * h, 2 * wd, cout) + b
        mean = y.mean(axis=(0, 1, 2))
        var = jnp.mean(jnp.square(y - mean), axis=(0, 1, 2))
        y = (y - mean) * jax.lax.rsqrt(var + _EPS) * gamma + beta
        x = jnp.maximum(y, 0.0)
    wc, bc = conv_params
    n, hh, ww, _ = x.shape
    xp = jnp.pad(x, ((0, 0), (1, 1), (1, 1), (0, 0)))
    out = jnp.zeros((n, hh, ww), jnp.float32) + bc[0]
    for dh in range(3):
        for dw in range(3):
            out = out + jnp.einsum("nhwc,c->nhw",
                                   xp[:, dh:dh + hh, dw:dw + ww, :], wc[0, :, dh, dw])
    return jnp.tanh(out)[:, None, :, :]


# --------------------------------------------------------------------------- #
def init_params(key):
    specs = [(512, 256), (256, 128), (128, 64), (64, 32)]
    deconv_params = []
    for cin, cout in specs:
        key, k1, k2, k3, k4 = jax.random.split(key, 5)
        scale = 1.0 / jnp.sqrt(cin * 4.0)
        w = jax.random.uniform(k1, (cin, cout, 2, 2), jnp.float32, -scale, scale)
        b = jax.random.uniform(k2, (cout,), jnp.float32, -scale, scale)
        gamma = 1.0 + 0.1 * jax.random.normal(k3, (cout,), jnp.float32)
        beta = 0.1 * jax.random.normal(k4, (cout,), jnp.float32)
        deconv_params.append((w, b, gamma, beta))
    key, k1, k2 = jax.random.split(key, 3)
    scale = 1.0 / jnp.sqrt(32 * 9.0)
    wc = jax.random.uniform(k1, (1, 32, 3, 3), jnp.float32, -scale, scale)
    bc = jax.random.uniform(k2, (1,), jnp.float32, -scale, scale)
    return deconv_params, (wc, bc)


if __name__ == "__main__":
    key = jax.random.PRNGKey(0)
    kp, kx = jax.random.split(key)
    deconv_raw, conv_raw = init_params(kp)
    params = prepare_params(deconv_raw, conv_raw)      # prefolded, outside hot path

    # Input fixed by the module: 512 channels; 2x2 spatial -> 32x32 output. Batch 2.
    x = jax.random.normal(kx, (2, 512, 2, 2), jnp.float32)

    out = resnet_decoder(x, params)
    jax.block_until_ready(out)

    assert out.shape == (2, 1, 32, 32), out.shape
    assert bool(jnp.all(jnp.isfinite(out)))

    # Loose-tolerance structural self-check against a plain-JAX reference
    # (tolerance covers MXU default-precision differences; structural bugs would be O(1)).
    ref = _reference_forward(x, deconv_raw, conv_raw)
    max_err = float(jnp.max(jnp.abs(out - ref)))
    assert max_err < 1e-1, max_err

    print("KERNEL_OK")
</pallas_src>

<mosaic_0001>
module attributes {stable_mosaic.version = 11 : i64} {
  func.func @_decoder_core_kernel(%arg0: memref<8x512xf32, #tpu.memory_space<vmem>>, %arg1: memref<4x512x256xf32, #tpu.memory_space<vmem>>, %arg2: memref<3x256xf32, #tpu.memory_space<vmem>>, %arg3: memref<4x256x128xf32, #tpu.memory_space<vmem>>, %arg4: memref<3x128xf32, #tpu.memory_space<vmem>>, %arg5: memref<4x128x64xf32, #tpu.memory_space<vmem>>, %arg6: memref<3x64xf32, #tpu.memory_space<vmem>>, %arg7: memref<4x64x32xf32, #tpu.memory_space<vmem>>, %arg8: memref<3x32xf32, #tpu.memory_space<vmem>>, %arg9: memref<2048x32xf32, #tpu.memory_space<vmem>>, %arg10: memref<32x256xf32, #tpu.memory_space<vmem>>, %arg11: memref<128x128xf32, #tpu.memory_space<vmem>>, %arg12: memref<512x64xf32, #tpu.memory_space<vmem>>) attributes {dimension_semantics = [], scalar_prefetch = 0 : i64, scratch_operands = 3 : i64, tpu.core_type = #tpu.core_type<tc>} {
    %c0 = arith.constant 0 : index
    %c0_0 = arith.constant 0 : index
    %0 = vector.load %arg0[%c0, %c0_0] : memref<8x512xf32, #tpu.memory_space<vmem>>, vector<8x512xf32>
    %c0_1 = arith.constant 0 : index
    %c0_2 = arith.constant 0 : index
    %1 = vector.load %arg2[%c0_1, %c0_2] : memref<3x256xf32, #tpu.memory_space<vmem>>, vector<1x256xf32>
    %c1 = arith.constant 1 : index
    %c0_3 = arith.constant 0 : index
    %2 = vector.load %arg2[%c1, %c0_3] : memref<3x256xf32, #tpu.memory_space<vmem>>, vector<1x256xf32>
    %c2 = arith.constant 2 : index
    %c0_4 = arith.constant 0 : index
    %3 = vector.load %arg2[%c2, %c0_4] : memref<3x256xf32, #tpu.memory_space<vmem>>, vector<1x256xf32>
    %c0_5 = arith.constant 0 : index
    %c0_6 = arith.constant 0 : index
    %c0_7 = arith.constant 0 : index
    %4 = vector.load %arg1[%c0_5, %c0_6, %c0_7] : memref<4x512x256xf32, #tpu.memory_space<vmem>>, vector<1x512x256xf32>
    %5 = vector.shape_cast %4 : vector<1x512x256xf32> to vector<512x256xf32>
    %cst = arith.constant dense<0.000000e+00> : vector<8x256xf32>
    %6 = tpu.matmul %0, %5, %cst {dimension_numbers = #tpu.dot_dimension_numbers<[1], [0], [0], [1], [0, 0, 1, 1], [], []>} : vector<8x512xf32>, vector<512x256xf32>, vector<8x256xf32> -> vector<8x256xf32>
    %c1_8 = arith.constant 1 : index
    %c0_9 = arith.constant 0 : index
    %c0_10 = arith.constant 0 : index
    %7 = vector.load %arg1[%c1_8, %c0_9, %c0_10] : memref<4x512x256xf32, #tpu.memory_space<vmem>>, vector<1x512x256xf32>
    %8 = vector.shape_cast %7 : vector<1x512x256xf32> to vector<512x256xf32>
    %cst_11 = arith.constant dense<0.000000e+00> : vector<8x256xf32>
    %9 = tpu.matmul %0, %8, %cst_11 {dimension_numbers = #tpu.dot_dimension_numbers<[1], [0], [0], [1], [0, 0, 1, 1], [], []>} : vector<8x512xf32>, vector<512x256xf32>, vector<8x256xf32> -> vector<8x256xf32>
    %c2_12 = arith.constant 2 : index
    %c0_13 = arith.constant 0 : index
    %c0_14 = arith.constant 0 : index
    %10 = vector.load %arg1[%c2_12, %c0_13, %c0_14] : memref<4x512x256xf32, #tpu.memory_space<vmem>>, vector<1x512x256xf32>
    %11 = vector.shape_cast %10 : vector<1x512x256xf32> to vector<512x256xf32>
    %cst_15 = arith.constant dense<0.000000e+00> : vector<8x256xf32>
    %12 = tpu.matmul %0, %11, %cst_15 {dimension_numbers = #tpu.dot_dimension_numbers<[1], [0], [0], [1], [0, 0, 1, 1], [], []>} : vector<8x512xf32>, vector<512x256xf32>, vector<8x256xf32> -> vector<8x256xf32>
    %c3 = arith.constant 3 : index
    %c0_16 = arith.constant 0 : index
    %c0_17 = arith.constant 0 : index
    %13 = vector.load %arg1[%c3, %c0_16, %c0_17] : memref<4x512x256xf32, #tpu.memory_space<vmem>>, vector<1x512x256xf32>
    %14 = vector.shape_cast %13 : vector<1x512x256xf32> to vector<512x256xf32>
    %cst_18 = arith.constant dense<0.000000e+00> : vector<8x256xf32>
    %15 = tpu.matmul %0, %14, %cst_18 {dimension_numbers = #tpu.dot_dimension_numbers<[1], [0], [0], [1], [0, 0, 1, 1], [], []>} : vector<8x512xf32>, vector<512x256xf32>, vector<8x256xf32> -> vector<8x256xf32>
    %16 = tpu.concatenate %6, %9, %12, %15 in 0 : vector<8x256xf32>, vector<8x256xf32>, vector<8x256xf32>, vector<8x256xf32> -> vector<32x256xf32>
    %17 = vector.broadcast %1 : vector<1x256xf32> to vector<32x256xf32>
    %18 = arith.addf %16, %17 : vector<32x256xf32>
    %cst_19 = arith.constant dense<0.000000e+00> : vector<256xf32>
    %19 = vector.multi_reduction <add>, %18, %cst_19 [0] : vector<32x256xf32> to vector<256xf32>
    %20 = vector.shape_cast %19 : vector<256xf32> to vector<1x256xf32>
    %cst_20 = arith.constant 3.200000e+01 : f32
    %21 = vector.broadcast %cst_20 : f32 to vector<1x256xf32>
    %22 = arith.divf %20, %21 : vector<1x256xf32>
    %23 = vector.broadcast %22 : vector<1x256xf32> to vector<32x256xf32>
    %24 = arith.subf %18, %23 : vector<32x256xf32>
    %25 = arith.mulf %24, %24 : vector<32x256xf32>
    %cst_21 = arith.constant dense<0.000000e+00> : vector<256xf32>
    %26 = vector.multi_reduction <add>, %25, %cst_21 [0] : vector<32x256xf32> to vector<256xf32>
    %27 = vector.shape_cast %26 : vector<256xf32> to vector<1x256xf32>
    %cst_22 = arith.constant 3.200000e+01 : f32
    %28 = vector.broadcast %cst_22 : f32 to vector<1x256xf32>
    %29 = arith.divf %27, %28 : vector<1x256xf32>
    %cst_23 = arith.constant 9.99999974E-6 : f32
    %30 = vector.broadcast %cst_23 : f32 to vector<1x256xf32>
    %31 = arith.addf %29, %30 : vector<1x256xf32>
    %32 = math.rsqrt %31 : vector<1x256xf32>
    %33 = arith.mulf %2, %32 : vector<1x256xf32>
    %34 = arith.mulf %22, %33 : vector<1x256xf32>
    %35 = arith.subf %3, %34 : vector<1x256xf32>
    %36 = vector.broadcast %33 : vector<1x256xf32> to vector<32x256xf32>
    %37 = arith.mulf %18, %36 : vector<32x256xf32>
    %38 = vector.broadcast %35 : vector<1x256xf32> to vector<32x256xf32>
    %39 = arith.addf %37, %38 : vector<32x256xf32>
    %cst_24 = arith.constant 0.000000e+00 : f32
    %40 = vector.broadcast %cst_24 : f32 to vector<32x256xf32>
    %41 = arith.maximumf %39, %40 : vector<32x256xf32>
    %c0_25 = arith.constant 0 : index
    %c0_26 = arith.constant 0 : index
    %42 = vector.load %arg10[%c0_25, %c0_26] : memref<32x256xf32, #tpu.memory_space<vmem>>, vector<32x256xf32>
    tpu.vector_store %arg10[%c0_25, %c0_26], %41 {strides = array<i32>} : memref<32x256xf32, #tpu.memory_space<vmem>>, vector<32x256xf32>,
    %c0_27 = arith.constant 0 : index
    %c0_28 = arith.constant 0 : index
    %43 = vector.load %arg10[%c0_27, %c0_28] : memref<32x256xf32, #tpu.memory_space<vmem>>, vector<32x256xf32>
    %c0_29 = arith.constant 0 : index
    %c0_30 = arith.constant 0 : index
    %44 = vector.load %arg4[%c0_29, %c0_30] : memref<3x128xf32, #tpu.memory_space<vmem>>, vector<1x128xf32>
    %c1_31 = arith.constant 1 : index
    %c0_32 = arith.constant 0 : index
    %45 = vector.load %arg4[%c1_31, %c0_32] : memref<3x128xf32, #tpu.memory_space<vmem>>, vector<1x128xf32>
    %c2_33 = arith.constant 2 : index
    %c0_34 = arith.constant 0 : index
    %46 = vector.load %arg4[%c2_33, %c0_34] : memref<3x128xf32, #tpu.memory_space<vmem>>, vector<1x128xf32>
    %c0_35 = arith.constant 0 : index
    %c0_36 = arith.constant 0 : index
    %c0_37 = arith.constant 0 : index
    %47 = vector.load %arg3[%c0_35, %c0_36, %c0_37] : memref<4x256x128xf32, #tpu.memory_space<vmem>>, vector<1x256x128xf32>
    %48 = vector.shape_cast %47 : vector<1x256x128xf32> to vector<256x128xf32>
    %cst_38 = arith.constant dense<0.000000e+00> : vector<32x128xf32>
    %49 = tpu.matmul %43, %48, %cst_38 {dimension_numbers = #tpu.dot_dimension_numbers<[1], [0], [0], [1], [0, 0, 1, 1], [], []>} : vector<32x256xf32>, vector<256x128xf32>, vector<32x128xf32> -> vector<32x128xf32>
    %c1_39 = arith.constant 1 : index
    %c0_40 = arith.constant 0 : index
    %c0_41 = arith.constant 0 : index
    %50 = vector.load %arg3[%c1_39, %c0_40, %c0_41] : memref<4x256x128xf32, #tpu.memory_space<vmem>>, vector<1x256x128xf32>
    %51 = vector.shape_cast %50 : vector<1x256x128xf32> to vector<256x128xf32>
    %cst_42 = arith.constant dense<0.000000e+00> : vector<32x128xf32>
    %52 = tpu.matmul %43, %51, %cst_42 {dimension_numbers = #tpu.dot_dimension_numbers<[1], [0], [0], [1], [0, 0, 1, 1], [], []>} : vector<32x256xf32>, vector<256x128xf32>, vector<32x128xf32> -> vector<32x128xf32>
    %c2_43 = arith.constant 2 : index
    %c0_44 = arith.constant 0 : index
    %c0_45 = arith.constant 0 : index
    %53 = vector.load %arg3[%c2_43, %c0_44, %c0_45] : memref<4x256x128xf32, #tpu.memory_space<vmem>>, vector<1x256x128xf32>
    %54 = vector.shape_cast %53 : vector<1x256x128xf32> to vector<256x128xf32>
    %cst_46 = arith.constant dense<0.000000e+00> : vector<32x128xf32>
    %55 = tpu.matmul %43, %54, %cst_46 {dimension_numbers = #tpu.dot_dimension_numbers<[1], [0], [0], [1], [0, 0, 1, 1], [], []>} : vector<32x256xf32>, vector<256x128xf32>, vector<32x128xf32> -> vector<32x128xf32>
    %c3_47 = arith.constant 3 : index
    %c0_48 = arith.constant 0 : index
    %c0_49 = arith.constant 0 : index
    %56 = vector.load %arg3[%c3_47, %c0_48, %c0_49] : memref<4x256x128xf32, #tpu.memory_space<vmem>>, vector<1x256x128xf32>
    %57 = vector.shape_cast %56 : vector<1x256x128xf32> to vector<256x128xf32>
    %cst_50 = arith.constant dense<0.000000e+00> : vector<32x128xf32>
    %58 = tpu.matmul %43, %57, %cst_50 {dimension_numbers = #tpu.dot_dimension_numbers<[1], [0], [0], [1], [0, 0, 1, 1], [], []>} : vector<32x256xf32>, vector<256x128xf32>, vector<32x128xf32> -> vector<32x128xf32>
    %59 = tpu.concatenate %49, %52, %55, %58 in 0 : vector<32x128xf32>, vector<32x128xf32>, vector<32x128xf32>, vector<32x128xf32> -> vector<128x128xf32>
    %60 = vector.broadcast %44 : vector<1x128xf32> to vector<128x128xf32>
    %61 = arith.addf %59, %60 : vector<128x128xf32>
    %cst_51 = arith.constant dense<0.000000e+00> : vector<128xf32>
    %62 = vector.multi_reduction <add>, %61, %cst_51 [0] : vector<128x128xf32> to vector<128xf32>
    %63 = vector.shape_cast %62 : vector<128xf32> to vector<1x128xf32>
    %cst_52 = arith.constant 1.280000e+02 : f32
    %64 = vector.broadcast %cst_52 : f32 to vector<1x128xf32>
    %65 = arith.divf %63, %64 : vector<1x128xf32>
    %66 = vector.broadcast %65 : vector<1x128xf32> to vector<128x128xf32>
    %67 = arith.subf %61, %66 : vector<128x128xf32>
    %68 = arith.mulf %67, %67 : vector<128x128xf32>
    %cst_53 = arith.constant dense<0.000000e+00> : vector<128xf32>
    %69 = vector.multi_reduction <add>, %68, %cst_53 [0] : vector<128x128xf32> to vector<128xf32>
    %70 = vector.shape_cast %69 : vector<128xf32> to vector<1x128xf32>
    %cst_54 = arith.constant 1.280000e+02 : f32
    %71 = vector.broadcast %cst_54 : f32 to vector<1x128xf32>
    %72 = arith.divf %70, %71 : vector<1x128xf32>
    %cst_55 = arith.constant 9.99999974E-6 : f32
    %73 = vector.broadcast %cst_55 : f32 to vector<1x128xf32>
    %74 = arith.addf %72, %73 : vector<1x128xf32>
    %75 = math.rsqrt %74 : vector<1x128xf32>
    %76 = arith.mulf %45, %75 : vector<1x128xf32>
    %77 = arith.mulf %65, %76 : vector<1x128xf32>
    %78 = arith.subf %46, %77 : vector<1x128xf32>
    %79 = vector.broadcast %76 : vector<1x128xf32> to vector<128x128xf32>
    %80 = arith.mulf %61, %79 : vector<128x128xf32>
    %81 = vector.broadcast %78 : vector<1x128xf32> to vector<128x128xf32>
    %82 = arith.addf %80, %81 : vector<128x128xf32>
    %cst_56 = arith.constant 0.000000e+00 : f32
    %83 = vector.broadcast %cst_56 : f32 to vector<128x128xf32>
    %84 = arith.maximumf %82, %83 : vector<128x128xf32>
    %c0_57 = arith.constant 0 : index
    %c0_58 = arith.constant 0 : index
    %85 = vector.load %arg11[%c0_57, %c0_58] : memref<128x128xf32, #tpu.memory_space<vmem>>, vector<128x128xf32>
    tpu.vector_store %arg11[%c0_57, %c0_58], %84 {strides = array<i32>} : memref<128x128xf32, #tpu.memory_space<vmem>>, vector<128x128xf32>,
    %c0_59 = arith.constant 0 : index
    %c0_60 = arith.constant 0 : index
    %86 = vector.load %arg11[%c0_59, %c0_60] : memref<128x128xf32, #tpu.memory_space<vmem>>, vector<128x128xf32>
    %c0_61 = arith.constant 0 : index
    %c0_62 = arith.constant 0 : index
    %87 = vector.load %arg6[%c0_61, %c0_62] : memref<3x64xf32, #tpu.memory_space<vmem>>, vector<1x64xf32>
    %c1_63 = arith.constant 1 : index
    %c0_64 = arith.constant 0 : index
    %88 = vector.load %arg6[%c1_63, %c0_64] : memref<3x64xf32, #tpu.memory_space<vmem>>, vector<1x64xf32>
    %c2_65 = arith.constant 2 : index
    %c0_66 = arith.constant 0 : index
    %89 = vector.load %arg6[%c2_65, %c0_66] : memref<3x64xf32, #tpu.memory_space<vmem>>, vector<1x64xf32>
    %c0_67 = arith.constant 0 : index
    %c0_68 = arith.constant 0 : index
    %c0_69 = arith.constant 0 : index
    %90 = vector.load %arg5[%c0_67, %c0_68, %c0_69] : memref<4x128x64xf32, #tpu.memory_space<vmem>>, vector<1x128x64xf32>
    %91 = vector.shape_cast %90 : vector<1x128x64xf32> to vector<128x64xf32>
    %cst_70 = arith.constant dense<0.000000e+00> : vector<128x64xf32>
    %92 = tpu.matmul %86, %91, %cst_70 {dimension_numbers = #tpu.dot_dimension_numbers<[1], [0], [0], [1], [0, 0, 1, 1], [], []>} : vector<128x128xf32>, vector<128x64xf32>, vector<128x64xf32> -> vector<128x64xf32>
    %c1_71 = arith.constant 1 : index
    %c0_72 = arith.constant 0 : index
    %c0_73 = arith.constant 0 : index
    %93 = vector.load %arg5[%c1_71, %c0_72, %c0_73] : memref<4x128x64xf32, #tpu.memory_space<vmem>>, vector<1x128x64xf32>
    %94 = vector.shape_cast %93 : vector<1x128x64xf32> to vector<128x64xf32>
    %cst_74 = arith.constant dense<0.000000e+00> : vector<128x64xf32>
    %95 = tpu.matmul %86, %94, %cst_74 {dimension_numbers = #tpu.dot_dimension_numbers<[1], [0], [0], [1], [0, 0, 1, 1], [], []>} : vector<128x128xf32>, vector<128x64xf32>, vector<128x64xf32> -> vector<128x64xf32>
    %c2_75 = arith.constant 2 : index
    %c0_76 = arith.constant 0 : index
    %c0_77 = arith.constant 0 : index
    %96 = vector.load %arg5[%c2_75, %c0_76, %c0_77] : memref<4x128x64xf32, #tpu.memory_space<vmem>>, vector<1x128x64xf32>
    %97 = vector.shape_cast %96 : vector<1x128x64xf32> to vector<128x64xf32>
    %cst_78 = arith.constant dense<0.000000e+00> : vector<128x64xf32>
    %98 = tpu.matmul %86, %97, %cst_78 {dimension_numbers = #tpu.dot_dimension_numbers<[1], [0], [0], [1], [0, 0, 1, 1], [], []>} : vector<128x128xf32>, vector<128x64xf32>, vector<128x64xf32> -> vector<128x64xf32>
    %c3_79 = arith.constant 3 : index
    %c0_80 = arith.constant 0 : index
    %c0_81 = arith.constant 0 : index
    %99 = vector.load %arg5[%c3_79, %c0_80, %c0_81] : memref<4x128x64xf32, #tpu.memory_space<vmem>>, vector<1x128x64xf32>
    %100 = vector.shape_cast %99 : vector<1x128x64xf32> to vector<128x64xf32>
    %cst_82 = arith.constant dense<0.000000e+00> : vector<128x64xf32>
    %101 = tpu.matmul %86, %100, %cst_82 {dimension_numbers = #tpu.dot_dimension_numbers<[1], [0], [0], [1], [0, 0, 1, 1], [], []>} : vector<128x128xf32>, vector<128x64xf32>, vector<128x64xf32> -> vector<128x64xf32>
    %102 = tpu.concatenate %92, %95, %98, %101 in 0 : vector<128x64xf32>, vector<128x64xf32>, vector<128x64xf32>, vector<128x64xf32> -> vector<512x64xf32>
    %103 = vector.broadcast %87 : vector<1x64xf32> to vector<512x64xf32>
    %104 = arith.addf %102, %103 : vector<512x64xf32>
    %cst_83 = arith.constant dense<0.000000e+00> : vector<64xf32>
    %105 = vector.multi_reduction <add>, %104, %cst_83 [0] : vector<512x64xf32> to vector<64xf32>
    %106 = vector.shape_cast %105 : vector<64xf32> to vector<1x64xf32>
    %cst_84 = arith.constant 5.120000e+02 : f32
    %107 = vector.broadcast %cst_84 : f32 to vector<1x64xf32>
    %108 = arith.divf %106, %107 : vector<1x64xf32>
    %109 = vector.broadcast %108 : vector<1x64xf32> to vector<512x64xf32>
    %110 = arith.subf %104, %109 : vector<512x64xf32>
    %111 = arith.mulf %110, %110 : vector<512x64xf32>
    %cst_85 = arith.constant dense<0.000000e+00> : vector<64xf32>
    %112 = vector.multi_reduction <add>, %111, %cst_85 [0] : vector<512x64xf32> to vector<64xf32>
    %113 = vector.shape_cast %112 : vector<64xf32> to vector<1x64xf32>
    %cst_86 = arith.constant 5.120000e+02 : f32
    %114 = vector.broadcast %cst_86 : f32 to vector<1x64xf32>
    %115 = arith.divf %113, %114 : vector<1x64xf32>
    %cst_87 = arith.constant 9.99999974E-6 : f32
    %116 = vector.broadcast %cst_87 : f32 to vector<1x64xf32>
    %117 = arith.addf %115, %116 : vector<1x64xf32>
    %118 = math.rsqrt %117 : vector<1x64xf32>
    %119 = arith.mulf %88, %118 : vector<1x64xf32>
    %120 = arith.mulf %108, %119 : vector<1x64xf32>
    %121 = arith.subf %89, %120 : vector<1x64xf32>
    %122 = vector.broadcast %119 : vector<1x64xf32> to vector<512x64xf32>
    %123 = arith.mulf %104, %122 : vector<512x64xf32>
    %124 = vector.broadcast %121 : vector<1x64xf32> to vector<512x64xf32>
    %125 = arith.addf %123, %124 : vector<512x64xf32>
    %cst_88 = arith.constant 0.000000e+00 : f32
    %126 = vector.broadcast %cst_88 : f32 to vector<512x64xf32>
    %127 = arith.maximumf %125, %126 : vector<512x64xf32>
    %c0_89 = arith.constant 0 : index
    %c0_90 = arith.constant 0 : index
    %128 = vector.load %arg12[%c0_89, %c0_90] : memref<512x64xf32, #tpu.memory_space<vmem>>, vector<512x64xf32>
    tpu.vector_store %arg12[%c0_89, %c0_90], %127 {strides = array<i32>} : memref<512x64xf32, #tpu.memory_space<vmem>>, vector<512x64xf32>,
    %c0_91 = arith.constant 0 : index
    %c0_92 = arith.constant 0 : index
    %129 = vector.load %arg12[%c0_91, %c0_92] : memref<512x64xf32, #tpu.memory_space<vmem>>, vector<512x64xf32>
    %c0_93 = arith.constant 0 : index
    %c0_94 = arith.constant 0 : index
    %130 = vector.load %arg8[%c0_93, %c0_94] : memref<3x32xf32, #tpu.memory_space<vmem>>, vector<1x32xf32>
    %c1_95 = arith.constant 1 : index
    %c0_96 = arith.constant 0 : index
    %131 = vector.load %arg8[%c1_95, %c0_96] : memref<3x32xf32, #tpu.memory_space<vmem>>, vector<1x32xf32>
    %c2_97 = arith.constant 2 : index
    %c0_98 = arith.constant 0 : index
    %132 = vector.load %arg8[%c2_97, %c0_98] : memref<3x32xf32, #tpu.memory_space<vmem>>, vector<1x32xf32>
    %c0_99 = arith.constant 0 : index
    %c0_100 = arith.constant 0 : index
    %c0_101 = arith.constant 0 : index
    %133 = vector.load %arg7[%c0_99, %c0_100, %c0_101] : memref<4x64x32xf32, #tpu.memory_space<vmem>>, vector<1x64x32xf32>
    %134 = vector.shape_cast %133 : vector<1x64x32xf32> to vector<64x32xf32>
    %cst_102 = arith.constant dense<0.000000e+00> : vector<512x32xf32>
    %135 = tpu.matmul %129, %134, %cst_102 {dimension_numbers = #tpu.dot_dimension_numbers<[1], [0], [0], [1], [0, 0, 1, 1], [], []>} : vector<512x64xf32>, vector<64x32xf32>, vector<512x32xf32> -> vector<512x32xf32>
    %c1_103 = arith.constant 1 : index
    %c0_104 = arith.constant 0 : index
    %c0_105 = arith.constant 0 : index
    %136 = vector.load %arg7[%c1_103, %c0_104, %c0_105] : memref<4x64x32xf32, #tpu.memory_space<vmem>>, vector<1x64x32xf32>
    %137 = vector.shape_cast %136 : vector<1x64x32xf32> to vector<64x32xf32>
    %cst_106 = arith.constant dense<0.000000e+00> : vector<512x32xf32>
    %138 = tpu.matmul %129, %137, %cst_106 {dimension_numbers = #tpu.dot_dimension_numbers<[1], [0], [0], [1], [0, 0, 1, 1], [], []>} : vector<512x64xf32>, vector<64x32xf32>, vector<512x32xf32> -> vector<512x32xf32>
    %c2_107 = arith.constant 2 : index
    %c0_108 = arith.constant 0 : index
    %c0_109 = arith.constant 0 : index
    %139 = vector.load %arg7[%c2_107, %c0_108, %c0_109] : memref<4x64x32xf32, #tpu.memory_space<vmem>>, vector<1x64x32xf32>
    %140 = vector.shape_cast %139 : vector<1x64x32xf32> to vector<64x32xf32>
    %cst_110 = arith.constant dense<0.000000e+00> : vector<512x32xf32>
    %141 = tpu.matmul %129, %140, %cst_110 {dimension_numbers = #tpu.dot_dimension_numbers<[1], [0], [0], [1], [0, 0, 1, 1], [], []>} : vector<512x64xf32>, vector<64x32xf32>, vector<512x32xf32> -> vector<512x32xf32>
    %c3_111 = arith.constant 3 : index
    %c0_112 = arith.constant 0 : index
    %c0_113 = arith.constant 0 : index
    %142 = vector.load %arg7[%c3_111, %c0_112, %c0_113] : memref<4x64x32xf32, #tpu.memory_space<vmem>>, vector<1x64x32xf32>
    %143 = vector.shape_cast %142 : vector<1x64x32xf32> to vector<64x32xf32>
    %cst_114 = arith.constant dense<0.000000e+00> : vector<512x32xf32>
    %144 = tpu.matmul %129, %143, %cst_114 {dimension_numbers = #tpu.dot_dimension_numbers<[1], [0], [0], [1], [0, 0, 1, 1], [], []>} : vector<512x64xf32>, vector<64x32xf32>, vector<512x32xf32> -> vector<512x32xf32>
    %145 = tpu.concatenate %135, %138, %141, %144 in 0 : vector<512x32xf32>, vector<512x32xf32>, vector<512x32xf32>, vector<512x32xf32> -> vector<2048x32xf32>
    %146 = vector.broadcast %130 : vector<1x32xf32> to vector<2048x32xf32>
    %147 = arith.addf %145, %146 : vector<2048x32xf32>
    %cst_115 = arith.constant dense<0.000000e+00> : vector<32xf32>
    %148 = vector.multi_reduction <add>, %147, %cst_115 [0] : vector<2048x32xf32> to vector<32xf32>
    %149 = vector.shape_cast %148 : vector<32xf32> to vector<1x32xf32>
    %cst_116 = arith.constant 2.048000e+03 : f32
    %150 = vector.broadcast %cst_116 : f32 to vector<1x32xf32>
    %151 = arith.divf %149, %150 : vector<1x32xf32>
    %152 = vector.broadcast %151 : vector<1x32xf32> to vector<2048x32xf32>
    %153 = arith.subf %147, %152 : vector<2048x32xf32>
    %154 = arith.mulf %153, %153 : vector<2048x32xf32>
    %cst_117 = arith.constant dense<0.000000e+00> : vector<32xf32>
    %155 = vector.multi_reduction <add>, %154, %cst_117 [0] : vector<2048x32xf32> to vector<32xf32>
    %156 = vector.shape_cast %155 : vector<32xf32> to vector<1x32xf32>
    %cst_118 = arith.constant 2.048000e+03 : f32
    %157 = vector.broadcast %cst_118 : f32 to vector<1x32xf32>
    %158 = arith.divf %156, %157 : vector<1x32xf32>
    %cst_119 = arith.constant 9.99999974E-6 : f32
    %159 = vector.broadcast %cst_119 : f32 to vector<1x32xf32>
    %160 = arith.addf %158, %159 : vector<1x32xf32>
    %161 = math.rsqrt %160 : vector<1x32xf32>
    %162 = arith.mulf %131, %161 : vector<1x32xf32>
    %163 = arith.mulf %151, %162 : vector<1x32xf32>
    %164 = arith.subf %132, %163 : vector<1x32xf32>
    %165 = vector.broadcast %162 : vector<1x32xf32> to vector<2048x32xf32>
    %166 = arith.mulf %147, %165 : vector<2048x32xf32>
    %167 = vector.broadcast %164 : vector<1x32xf32> to vector<2048x32xf32>
    %168 = arith.addf %166, %167 : vector<2048x32xf32>
    %cst_120 = arith.constant 0.000000e+00 : f32
    %169 = vector.broadcast %cst_120 : f32 to vector<2048x32xf32>
    %170 = arith.maximumf %168, %169 : vector<2048x32xf32>
    %c0_121 = arith.constant 0 : index
    %c0_122 = arith.constant 0 : index
    %171 = vector.load %arg9[%c0_121, %c0_122] : memref<2048x32xf32, #tpu.memory_space<vmem>>, vector<2048x32xf32>
    tpu.vector_store %arg9[%c0_121, %c0_122], %170 {strides = array<i32>} : memref<2048x32xf32, #tpu.memory_space<vmem>>, vector<2048x32xf32>,
    return
  }
}

module attributes {stable_mosaic.version = 11 : i64} {
  func.func @_conv3x3_tanh_kernel(%arg0: memref<2x34x1024xf32, #tpu.memory_space<vmem>>, %arg1: memref<3x1024x32xf32, #tpu.memory_space<vmem>>, %arg2: memref<1x1xf32, #tpu.memory_space<vmem>>, %arg3: memref<2x32x32xf32, #tpu.memory_space<vmem>>) attributes {dimension_semantics = [], scalar_prefetch = 0 : i64, scratch_operands = 0 : i64, tpu.core_type = #tpu.core_type<tc>} {
    %cst = arith.constant 0.000000e+00 : f32
    %0 = vector.broadcast %cst : f32 to vector<32x32xf32>
    %c0 = arith.constant 0 : index
    %c0_0 = arith.constant 0 : index
    %c0_1 = arith.constant 0 : index
    %1 = vector.load %arg0[%c0, %c0_0, %c0_1] : memref<2x34x1024xf32, #tpu.memory_space<vmem>>, vector<1x32x1024xf32>
    %2 = vector.shape_cast %1 : vector<1x32x1024xf32> to vector<32x1024xf32>
    %c0_2 = arith.constant 0 : index
    %c0_3 = arith.constant 0 : index
    %c0_4 = arith.constant 0 : index
    %3 = vector.load %arg1[%c0_2, %c0_3, %c0_4] : memref<3x1024x32xf32, #tpu.memory_space<vmem>>, vector<1x1024x32xf32>
    %4 = vector.shape_cast %3 : vector<1x1024x32xf32> to vector<1024x32xf32>
    %cst_5 = arith.constant dense<0.000000e+00> : vector<32x32xf32>
    %5 = tpu.matmul %2, %4, %cst_5 {dimension_numbers = #tpu.dot_dimension_numbers<[1], [0], [0], [1], [0, 0, 1, 1], [], []>} : vector<32x1024xf32>, vector<1024x32xf32>, vector<32x32xf32> -> vector<32x32xf32>
    %6 = arith.addf %0, %5 : vector<32x32xf32>
    %c0_6 = arith.constant 0 : index
    %c1 = arith.constant 1 : index
    %c0_7 = arith.constant 0 : index
    %7 = vector.load %arg0[%c0_6, %c1, %c0_7] : memref<2x34x1024xf32, #tpu.memory_space<vmem>>, vector<1x32x1024xf32>
    %8 = vector.shape_cast %7 : vector<1x32x1024xf32> to vector<32x1024xf32>
    %c1_8 = arith.constant 1 : index
    %c0_9 = arith.constant 0 : index
    %c0_10 = arith.constant 0 : index
    %9 = vector.load %arg1[%c1_8, %c0_9, %c0_10] : memref<3x1024x32xf32, #tpu.memory_space<vmem>>, vector<1x1024x32xf32>
    %10 = vector.shape_cast %9 : vector<1x1024x32xf32> to vector<1024x32xf32>
    %cst_11 = arith.constant dense<0.000000e+00> : vector<32x32xf32>
    %11 = tpu.matmul %8, %10, %cst_11 {dimension_numbers = #tpu.dot_dimension_numbers<[1], [0], [0], [1], [0, 0, 1, 1], [], []>} : vector<32x1024xf32>, vector<1024x32xf32>, vector<32x32xf32> -> vector<32x32xf32>
    %12 = arith.addf %6, %11 : vector<32x32xf32>
    %c0_12 = arith.constant 0 : index
    %c2 = arith.constant 2 : index
    %c0_13 = arith.constant 0 : index
    %13 = vector.load %arg0[%c0_12, %c2, %c0_13] : memref<2x34x1024xf32, #tpu.memory_space<vmem>>, vector<1x32x1024xf32>
    %14 = vector.shape_cast %13 : vector<1x32x1024xf32> to vector<32x1024xf32>
    %c2_14 = arith.constant 2 : index
    %c0_15 = arith.constant 0 : index
    %c0_16 = arith.constant 0 : index
    %15 = vector.load %arg1[%c2_14, %c0_15, %c0_16] : memref<3x1024x32xf32, #tpu.memory_space<vmem>>, vector<1x1024x32xf32>
    %16 = vector.shape_cast %15 : vector<1x1024x32xf32> to vector<1024x32xf32>
    %cst_17 = arith.constant dense<0.000000e+00> : vector<32x32xf32>
    %17 = tpu.matmul %14, %16, %cst_17 {dimension_numbers = #tpu.dot_dimension_numbers<[1], [0], [0], [1], [0, 0, 1, 1], [], []>} : vector<32x1024xf32>, vector<1024x32xf32>, vector<32x32xf32> -> vector<32x32xf32>
    %18 = arith.addf %12, %17 : vector<32x32xf32>
    %c0_18 = arith.constant 0 : index
    %c0_19 = arith.constant 0 : index
    %19 = vector.load %arg2[%c0_18, %c0_19] : memref<1x1xf32, #tpu.memory_space<vmem>>, vector<1x1xf32>
    %20 = vector.broadcast %19 : vector<1x1xf32> to vector<32x32xf32>
    %21 = arith.addf %18, %20 : vector<32x32xf32>
    %22 = math.tanh %21 : vector<32x32xf32>
    %c0_20 = arith.constant 0 : index
    %c0_21 = arith.constant 0 : index
    %c0_22 = arith.constant 0 : index
    %23 = vector.load %arg3[%c0_20, %c0_21, %c0_22] : memref<2x32x32xf32, #tpu.memory_space<vmem>>, vector<1x32x32xf32>
    %24 = vector.shape_cast %23 : vector<1x32x32xf32> to vector<32x32xf32>
    %25 = vector.shape_cast %22 : vector<32x32xf32> to vector<1x32x32xf32>
    tpu.vector_store %arg3[%c0_20, %c0_21, %c0_22], %25 {strides = array<i32>} : memref<2x32x32xf32, #tpu.memory_space<vmem>>, vector<1x32x32xf32>,
    %cst_23 = arith.constant 0.000000e+00 : f32
    %26 = vector.broadcast %cst_23 : f32 to vector<32x32xf32>
    %c1_24 = arith.constant 1 : index
    %c0_25 = arith.constant 0 : index
    %c0_26 = arith.constant 0 : index
    %27 = vector.load %arg0[%c1_24, %c0_25, %c0_26] : memref<2x34x1024xf32, #tpu.memory_space<vmem>>, vector<1x32x1024xf32>
    %28 = vector.shape_cast %27 : vector<1x32x1024xf32> to vector<32x1024xf32>
    %c0_27 = arith.constant 0 : index
    %c0_28 = arith.constant 0 : index
    %c0_29 = arith.constant 0 : index
    %29 = vector.load %arg1[%c0_27, %c0_28, %c0_29] : memref<3x1024x32xf32, #tpu.memory_space<vmem>>, vector<1x1024x32xf32>
    %30 = vector.shape_cast %29 : vector<1x1024x32xf32> to vector<1024x32xf32>
    %cst_30 = arith.constant dense<0.000000e+00> : vector<32x32xf32>
    %31 = tpu.matmul %28, %30, %cst_30 {dimension_numbers = #tpu.dot_dimension_numbers<[1], [0], [0], [1], [0, 0, 1, 1], [], []>} : vector<32x1024xf32>, vector<1024x32xf32>, vector<32x32xf32> -> vector<32x32xf32>
    %32 = arith.addf %26, %31 : vector<32x32xf32>
    %c1_31 = arith.constant 1 : index
    %c1_32 = arith.constant 1 : index
    %c0_33 = arith.constant 0 : index
    %33 = vector.load %arg0[%c1_31, %c1_32, %c0_33] : memref<2x34x1024xf32, #tpu.memory_space<vmem>>, vector<1x32x1024xf32>
    %34 = vector.shape_cast %33 : vector<1x32x1024xf32> to vector<32x1024xf32>
    %c1_34 = arith.constant 1 : index
    %c0_35 = arith.constant 0 : index
    %c0_36 = arith.constant 0 : index
    %35 = vector.load %arg1[%c1_34, %c0_35, %c0_36] : memref<3x1024x32xf32, #tpu.memory_space<vmem>>, vector<1x1024x32xf32>
    %36 = vector.shape_cast %35 : vector<1x1024x32xf32> to vector<1024x32xf32>
    %cst_37 = arith.constant dense<0.000000e+00> : vector<32x32xf32>
    %37 = tpu.matmul %34, %36, %cst_37 {dimension_numbers = #tpu.dot_dimension_numbers<[1], [0], [0], [1], [0, 0, 1, 1], [], []>} : vector<32x1024xf32>, vector<1024x32xf32>, vector<32x32xf32> -> vector<32x32xf32>
    %38 = arith.addf %32, %37 : vector<32x32xf32>
    %c1_38 = arith.constant 1 : index
    %c2_39 = arith.constant 2 : index
    %c0_40 = arith.constant 0 : index
    %39 = vector.load %arg0[%c1_38, %c2_39, %c0_40] : memref<2x34x1024xf32, #tpu.memory_space<vmem>>, vector<1x32x1024xf32>
    %40 = vector.shape_cast %39 : vector<1x32x1024xf32> to vector<32x1024xf32>
    %c2_41 = arith.constant 2 : index
    %c0_42 = arith.constant 0 : index
    %c0_43 = arith.constant 0 : index
    %41 = vector.load %arg1[%c2_41, %c0_42, %c0_43] : memref<3x1024x32xf32, #tpu.memory_space<vmem>>, vector<1x1024x32xf32>
    %42 = vector.shape_cast %41 : vector<1x1024x32xf32> to vector<1024x32xf32>
    %cst_44 = arith.constant dense<0.000000e+00> : vector<32x32xf32>
    %43 = tpu.matmul %40, %42, %cst_44 {dimension_numbers = #tpu.dot_dimension_numbers<[1], [0], [0], [1], [0, 0, 1, 1], [], []>} : vector<32x1024xf32>, vector<1024x32xf32>, vector<32x32xf32> -> vector<32x32xf32>
    %44 = arith.addf %38, %43 : vector<32x32xf32>
    %c0_45 = arith.constant 0 : index
    %c0_46 = arith.constant 0 : index
    %45 = vector.load %arg2[%c0_45, %c0_46] : memref<1x1xf32, #tpu.memory_space<vmem>>, vector<1x1xf32>
    %46 = vector.broadcast %45 : vector<1x1xf32> to vector<32x32xf32>
    %47 = arith.addf %44, %46 : vector<32x32xf32>
    %48 = math.tanh %47 : vector<32x32xf32>
    %c1_47 = arith.constant 1 : index
    %c0_48 = arith.constant 0 : index
    %c0_49 = arith.constant 0 : index
    %49 = vector.load %arg3[%c1_47, %c0_48, %c0_49] : memref<2x32x32xf32, #tpu.memory_space<vmem>>, vector<1x32x32xf32>
    %50 = vector.shape_cast %49 : vector<1x32x32xf32> to vector<32x32xf32>
    %51 = vector.shape_cast %48 : vector<32x32xf32> to vector<1x32x32xf32>
    tpu.vector_store %arg3[%c1_47, %c0_48, %c0_49], %51 {strides = array<i32>} : memref<2x32x32xf32, #tpu.memory_space<vmem>>, vector<1x32x32xf32>,
    return
  }
}

</mosaic_0001>

<llo_original>
// kernel: resnet_decoder.2
$region0: #{resnet_decoder.2}
  #allocation0 [shape = 'u32[]', space=smem, size = 0x4, offset = 0x4, fixed_abs, tag = 'smem constant byte address 0x4 - core index']
  #allocation1 [shape = 'u32[72,128]{1,0:T(1,128)}', space=vmem, size = 0x9000, scoped, tag = 'internal scratch']
  #allocation2 [shape = 'f32[32,256]{1,0:T(8,128)}', space=vmem, size = 0x8000, scoped, tag = 'scratch operand']
  #allocation3 [shape = 'f32[128,128]{1,0:T(8,128)}', space=vmem, size = 0x10000, scoped, tag = 'scratch operand']
  #allocation4 [shape = 'f32[512,64]{1,0:T(8,128)}', space=vmem, size = 0x40000, scoped, tag = 'scratch operand']
  %s0 = inlined_call_operand.vmem [shape: f32[8,512], index: 0, kind: input, shape index: {}]
  %s1 = inlined_call_operand.hbm [shape: f32[4,512,256], index: 1, kind: input, shape index: {}]
  %s2 = inlined_call_operand.hbm [shape: f32[3,256], index: 2, kind: input, shape index: {}]
  %s3 = inlined_call_operand.hbm [shape: f32[4,256,128], index: 3, kind: input, shape index: {}]
  %s4 = inlined_call_operand.hbm [shape: f32[3,128], index: 4, kind: input, shape index: {}]
  %s5 = inlined_call_operand.vmem [shape: f32[4,128,64], index: 5, kind: input, shape index: {}]
  %s6 = inlined_call_operand.hbm [shape: f32[3,64], index: 6, kind: input, shape index: {}]
  %s7 = inlined_call_operand.vmem [shape: f32[4,64,32], index: 7, kind: input, shape index: {}]
  %s8 = inlined_call_operand.hbm [shape: f32[3,32], index: 8, kind: input, shape index: {}]
  %s9 = inlined_call_operand.vmem [shape: f32[2048,32], index: 9, kind: output, shape index: {}]
  %s10 = sld [smem:[#allocation0]]
  $region70: #{resnet_decoder.2} parent=0
    _
  %s12 = ssub.s32 1, %s10
  %s13 = scalar_select 0, %s12, %s10
  $region1: #{resnet_decoder.2} parent=0
    #allocation5 [shape = 'u8[2097152]{0}', space=vmem, size = 0x200000, scoped, tag = 'input window, operand 1, single buffered']
    #allocation6 [shape = 's32[1]{0}', space=sflag, size = 0x4, scoped, tag = 'scoped memory for resnet_decoder.2']
    #allocation7 [shape = 'u8[4096]{0}', space=vmem, size = 0x1000, scoped, tag = 'input window, operand 2, single buffered']
    #allocation8 [shape = 's32[1]{0}', space=sflag, size = 0x4, scoped, tag = 'scoped memory for resnet_decoder.2']
    #allocation9 [shape = 'u8[524288]{0}', space=vmem, size = 0x80000, scoped, tag = 'input window, operand 3, single buffered']
    #allocation10 [shape = 'u8[2048]{0}', space=vmem, size = 0x800, scoped, tag = 'input window, operand 4, single buffered']
    #allocation11 [shape = 's32[1]{0}', space=sflag, size = 0x4, scoped, tag = 'scoped memory for resnet_decoder.2']
    #allocation12 [shape = 'u8[2048]{0}', space=vmem, size = 0x800, scoped, tag = 'input window, operand 6, single buffered']
    #allocation13 [shape = 'u8[2048]{0}', space=vmem, size = 0x800, scoped, tag = 'input window, operand 8, single buffered']
    #allocation14 [shape = 's32[1]{0}', space=sflag, size = 0x4, scoped, tag = 'scoped memory for resnet_decoder.2']
    %14 = vsyncpa [#allocation6], 0
    %15 = vsyncpa [#allocation8], 0
    %16 = vsyncpa [#allocation11], 0
    %17 = vsyncpa [#allocation14], 0
    // Predicated region
    $region2: #{resnet_decoder.2} parent=1 // pred_check
      _
    $region3: #{resnet_decoder.2} parent=1 // pred_check_branch
      %19 = sbr.rel (0) target = $region5
    $region4: #{resnet_decoder.2} parent=1 // pred_region
      _
    $region5: #{resnet_decoder.2} parent=1 // pred_fallthru
      _
    // Predicated region
    $region6: #{resnet_decoder.2} parent=1 // pred_check
      _
    $region7: #{resnet_decoder.2} parent=1 // pred_check_branch
      %21 = sbr.rel (0) target = $region9
    $region8: #{resnet_decoder.2} parent=1 // pred_region
      %23 = vsyncadd [#allocation6], 0
      %s24 = sshll.u32 %s1, 4
      %s25 = int_to_ptr.hbm [resolvable:$true] %s24
      %s26 = sshll.u32 [#allocation5], 4
      %s27 = int_to_ptr.vmem [resolvable:$true] %s26
      %32 = dma.hbm_to_vmem [thread:$0]  %s25, 65536, %s27, [#allocation6], 256, 256, 16
    $region9: #{resnet_decoder.2} parent=1 // pred_fallthru
      _
    // Predicated region
    $region10: #{resnet_decoder.2} parent=1 // pred_check
      _
    $region11: #{resnet_decoder.2} parent=1 // pred_check_branch
      %34 = sbr.rel (0) target = $region13
    $region12: #{resnet_decoder.2} parent=1 // pred_region
      %36 = vsyncadd [#allocation8], 0
      %s38 = sshll.u32 %s2, 4
      %s39 = int_to_ptr.hbm [resolvable:$true] %s38
      %s40 = sshll.u32 [#allocation7], 4
      %s41 = int_to_ptr.vmem [resolvable:$true] %s40
      %43 = dma.hbm_to_vmem [thread:$0]  %s39, 128, %s41, [#allocation8]
    $region13: #{resnet_decoder.2} parent=1 // pred_fallthru
      _
    // Predicated region
    $region14: #{resnet_decoder.2} parent=1 // pred_check
      _
    $region15: #{resnet_decoder.2} parent=1 // pred_check_branch
      %45 = sbr.rel (0) target = $region17
    $region16: #{resnet_decoder.2} parent=1 // pred_region
      %47 = vsyncadd [#allocation8], 0
      %s48 = sshll.u32 %s3, 4
      %s49 = int_to_ptr.hbm [resolvable:$true] %s48
      %s50 = sshll.u32 [#allocation9], 4
      %s51 = int_to_ptr.vmem [resolvable:$true] %s50
      %56 = dma.hbm_to_vmem [thread:$0]  %s49, 16384, %s51, [#allocation8], 128, 128, 8
    $region17: #{resnet_decoder.2} parent=1 // pred_fallthru
      _
    // Predicated region
    $region18: #{resnet_decoder.2} parent=1 // pred_check
      _
    $region19: #{resnet_decoder.2} parent=1 // pred_check_branch
      %58 = sbr.rel (0) target = $region21
    $region20: #{resnet_decoder.2} parent=1 // pred_region
      %60 = vsyncadd [#allocation11], 0
      %s62 = sshll.u32 %s4, 4
      %s63 = int_to_ptr.hbm [resolvable:$true] %s62
      %s64 = sshll.u32 [#allocation10], 4
      %s65 = int_to_ptr.vmem [resolvable:$true] %s64
      %67 = dma.hbm_to_vmem [thread:$0]  %s63, 64, %s65, [#allocation11]
    $region21: #{resnet_decoder.2} parent=1 // pred_fallthru
      _
    // Predicated region
    $region22: #{resnet_decoder.2} parent=1 // pred_check
      _
    $region23: #{resnet_decoder.2} parent=1 // pred_check_branch
      %69 = sbr.rel (0) target = $region25
    $region24: #{resnet_decoder.2} parent=1 // pred_region
      _
    $region25: #{resnet_decoder.2} parent=1 // pred_fallthru
      _
    // Predicated region
    $region26: #{resnet_decoder.2} parent=1 // pred_check
      _
    $region27: #{resnet_decoder.2} parent=1 // pred_check_branch
      %71 = sbr.rel (0) target = $region29
    $region28: #{resnet_decoder.2} parent=1 // pred_region
      %73 = vsyncadd [#allocation11], 0
      %s75 = sshll.u32 %s6, 4
      %s76 = int_to_ptr.hbm [resolvable:$true] %s75
      %s77 = sshll.u32 [#allocation12], 4
      %s78 = int_to_ptr.vmem [resolvable:$true] %s77
      %80 = dma.hbm_to_vmem [thread:$0]  %s76, 64, %s78, [#allocation11]
    $region29: #{resnet_decoder.2} parent=1 // pred_fallthru
      _
    // Predicated region
    $region30: #{resnet_decoder.2} parent=1 // pred_check
      _
    $region31: #{resnet_decoder.2} parent=1 // pred_check_branch
      %82 = sbr.rel (0) target = $region33
    $region32: #{resnet_decoder.2} parent=1 // pred_region
      _
    $region33: #{resnet_decoder.2} parent=1 // pred_fallthru
      _
    // Predicated region
    $region34: #{resnet_decoder.2} parent=1 // pred_check
      _
    $region35: #{resnet_decoder.2} parent=1 // pred_check_branch
      %84 = sbr.rel (0) target = $region37
    $region36: #{resnet_decoder.2} parent=1 // pred_region
      %86 = vsyncadd [#allocation14], 0
      %s88 = sshll.u32 %s8, 4
      %s89 = int_to_ptr.hbm [resolvable:$true] %s88
      %s90 = sshll.u32 [#allocation13], 4
      %s91 = int_to_ptr.vmem [resolvable:$true] %s90
      %93 = dma.hbm_to_vmem [thread:$0]  %s89, 64, %s91, [#allocation14]
    $region37: #{resnet_decoder.2} parent=1 // pred_fallthru
      _
    // Predicated region
    $region38: #{resnet_decoder.2} parent=1 // pred_check
      _
    $region39: #{resnet_decoder.2} parent=1 // pred_check_branch
      %95 = sbr.rel (0) target = $region41
    $region40: #{resnet_decoder.2} parent=1 // pred_region
      %97 = dma.done [#allocation6], 65536
    $region41: #{resnet_decoder.2} parent=1 // pred_fallthru
      _
    // Predicated region
    $region42: #{resnet_decoder.2} parent=1 // pred_check
      _
    $region43: #{resnet_decoder.2} parent=1 // pred_check_branch
      %99 = sbr.rel (0) target = $region45
    $region44: #{resnet_decoder.2} parent=1 // pred_region
      %101 = dma.done [#allocation8], 128
    $region45: #{resnet_decoder.2} parent=1 // pred_fallthru
      _
    // Predicated region
    $region46: #{resnet_decoder.2} parent=1 // pred_check
      _
    $region47: #{resnet_decoder.2} parent=1 // pred_check_branch
      %103 = sbr.rel (0) target = $region49
    $region48: #{resnet_decoder.2} parent=1 // pred_region
      %105 = dma.done [#allocation8], 16384
    $region49: #{resnet_decoder.2} parent=1 // pred_fallthru
      _
    // Predicated region
    $region50: #{resnet_decoder.2} parent=1 // pred_check
      _
    $region51: #{resnet_decoder.2} parent=1 // pred_check_branch
      %107 = sbr.rel (0) target = $region53
    $region52: #{resnet_decoder.2} parent=1 // pred_region
      %109 = dma.done [#allocation11], 64
    $region53: #{resnet_decoder.2} parent=1 // pred_fallthru
      _
    // Predicated region
    $region54: #{resnet_decoder.2} parent=1 // pred_check
      _
    $region55: #{resnet_decoder.2} parent=1 // pred_check_branch
      %111 = sbr.rel (0) target = $region57
    $region56: #{resnet_decoder.2} parent=1 // pred_region
      %113 = dma.done [#allocation11], 64
    $region57: #{resnet_decoder.2} parent=1 // pred_fallthru
      _
    // Predicated region
    $region58: #{resnet_decoder.2} parent=1 // pred_check
      _
    $region59: #{resnet_decoder.2} parent=1 // pred_check_branch
      %115 = sbr.rel (0) target = $region61
    $region60: #{resnet_decoder.2} parent=1 // pred_region
      %117 = dma.done [#allocation14], 64
    $region61: #{resnet_decoder.2} parent=1 // pred_fallthru
      _
    %v118 = vld [vmem:[%s0] sm:$0xff]
    %v119 = vld [vmem:[%s0 + $0x8] sm:$0xff]
    %v120 = vld [vmem:[%s0 + $0x10] sm:$0xff]
    %v121 = vld [vmem:[%s0 + $0x18] sm:$0xff]
    %v122 = vld [vmem:[#allocation7] ss:$4 sm:$0x3]
    %s123 = scalar_lea.vmem [#allocation7], 1
    %v124 = vld [vmem:[%s123] ss:$4 sm:$0x3]
    %s125 = scalar_lea.vmem [#allocation7], 2
    %v126 = vld [vmem:[%s125] ss:$4 sm:$0x3]
    %v127 = vld [vmem:[#allocation5] sm:$0xff]
    %v128 = vld [vmem:[#allocation5 + $0x8] sm:$0xff]
    %v129 = vld [vmem:[#allocation5 + $0x10] sm:$0xff]
    %v130 = vld [vmem:[#allocation5 + $0x18] sm:$0xff]
    %v131 = vld [vmem:[#allocation5 + $0x20] sm:$0xff]
    %v132 = vld [vmem:[#allocation5 + $0x28] sm:$0xff]
    %v133 = vld [vmem:[#allocation5 + $0x30] sm:$0xff]
    %v134 = vld [vmem:[#allocation5 + $0x38] sm:$0xff]
    %v135 = vld [vmem:[#allocation5 + $0x40] sm:$0xff]
    %v136 = vld [vmem:[#allocation5 + $0x48] sm:$0xff]
    %v137 = vld [vmem:[#allocation5 + $0x50] sm:$0xff]
    %v138 = vld [vmem:[#allocation5 + $0x58] sm:$0xff]
    %v139 = vld [vmem:[#allocation5 + $0x60] sm:$0xff]
    %v140 = vld [vmem:[#allocation5 + $0x68] sm:$0xff]
    %v141 = vld [vmem:[#allocation5 + $0x70] sm:$0xff]
    %v142 = vld [vmem:[#allocation5 + $0x78] sm:$0xff]
    %v143 = vld [vmem:[#allocation5 + $0x80] sm:$0xff]
    %v144 = vld [vmem:[#allocation5 + $0x88] sm:$0xff]
    %v145 = vld [vmem:[#allocation5 + $0x90] sm:$0xff]
    %v146 = vld [vmem:[#allocation5 + $0x98] sm:$0xff]
    %v147 = vld [vmem:[#allocation5 + $0xa0] sm:$0xff]
    %v148 = vld [vmem:[#allocation5 + $0xa8] sm:$0xff]
    %v149 = vld [vmem:[#allocation5 + $0xb0] sm:$0xff]
    %v150 = vld [vmem:[#allocation5 + $0xb8] sm:$0xff]
    %v151 = vld [vmem:[#allocation5 + $0xc0] sm:$0xff]
    %v152 = vld [vmem:[#allocation5 + $0xc8] sm:$0xff]
    %v153 = vld [vmem:[#allocation5 + $0xd0] sm:$0xff]
    %v154 = vld [vmem:[#allocation5 + $0xd8] sm:$0xff]
    %v155 = vld [vmem:[#allocation5 + $0xe0] sm:$0xff]
    %v156 = vld [vmem:[#allocation5 + $0xe8] sm:$0xff]
    %v157 = vld [vmem:[#allocation5 + $0xf0] sm:$0xff]
    %v158 = vld [vmem:[#allocation5 + $0xf8] sm:$0xff]
    %v159 = vld [vmem:[#allocation5 + $0x100] sm:$0xff]
    %v160 = vld [vmem:[#allocation5 + $0x108] sm:$0xff]
    %v161 = vld [vmem:[#allocation5 + $0x110] sm:$0xff]
    %v162 = vld [vmem:[#allocation5 + $0x118] sm:$0xff]
    %v163 = vld [vmem:[#allocation5 + $0x120] sm:$0xff]
    %v164 = vld [vmem:[#allocation5 + $0x128] sm:$0xff]
    %v165 = vld [vmem:[#allocation5 + $0x130] sm:$0xff]
    %v166 = vld [vmem:[#allocation5 + $0x138] sm:$0xff]
    %v167 = vld [vmem:[#allocation5 + $0x140] sm:$0xff]
    %v168 = vld [vmem:[#allocation5 + $0x148] sm:$0xff]
    %v169 = vld [vmem:[#allocation5 + $0x150] sm:$0xff]
    %v170 = vld [vmem:[#allocation5 + $0x158] sm:$0xff]
    %v171 = vld [vmem:[#allocation5 + $0x160] sm:$0xff]
    %v172 = vld [vmem:[#allocation5 + $0x168] sm:$0xff]
    %v173 = vld [vmem:[#allocation5 + $0x170] sm:$0xff]
    %v174 = vld [vmem:[#allocation5 + $0x178] sm:$0xff]
    %v175 = vld [vmem:[#allocation5 + $0x180] sm:$0xff]
    %v176 = vld [vmem:[#allocation5 + $0x188] sm:$0xff]
    %v177 = vld [vmem:[#allocation5 + $0x190] sm:$0xff]
    %v178 = vld [vmem:[#allocation5 + $0x198] sm:$0xff]
    %v179 = vld [vmem:[#allocation5 + $0x1a0] sm:$0xff]
    %v180 = vld [vmem:[#allocation5 + $0x1a8] sm:$0xff]
    %v181 = vld [vmem:[#allocation5 + $0x1b0] sm:$0xff]
    %v182 = vld [vmem:[#allocation5 + $0x1b8] sm:$0xff]
    %v183 = vld [vmem:[#allocation5 + $0x1c0] sm:$0xff]
    %v184 = vld [vmem:[#allocation5 + $0x1c8] sm:$0xff]
    %v185 = vld [vmem:[#allocation5 + $0x1d0] sm:$0xff]
    %v186 = vld [vmem:[#allocation5 + $0x1d8] sm:$0xff]
    %v187 = vld [vmem:[#allocation5 + $0x1e0] sm:$0xff]
    %v188 = vld [vmem:[#allocation5 + $0x1e8] sm:$0xff]
    %v189 = vld [vmem:[#allocation5 + $0x1f0] sm:$0xff]
    %v190 = vld [vmem:[#allocation5 + $0x1f8] sm:$0xff]
    %v191 = vld [vmem:[#allocation5 + $0x200] sm:$0xff]
    %v192 = vld [vmem:[#allocation5 + $0x208] sm:$0xff]
    %v193 = vld [vmem:[#allocation5 + $0x210] sm:$0xff]
    %v194 = vld [vmem:[#allocation5 + $0x218] sm:$0xff]
    %v195 = vld [vmem:[#allocation5 + $0x220] sm:$0xff]
    %v196 = vld [vmem:[#allocation5 + $0x228] sm:$0xff]
    %v197 = vld [vmem:[#allocation5 + $0x230] sm:$0xff]
    %v198 = vld [vmem:[#allocation5 + $0x238] sm:$0xff]
    %v199 = vld [vmem:[#allocation5 + $0x240] sm:$0xff]
    %v200 = vld [vmem:[#allocation5 + $0x248] sm:$0xff]
    %v201 = vld [vmem:[#allocation5 + $0x250] sm:$0xff]
    %v202 = vld [vmem:[#allocation5 + $0x258] sm:$0xff]
    %v203 = vld [vmem:[#allocation5 + $0x260] sm:$0xff]
    %v204 = vld [vmem:[#allocation5 + $0x268] sm:$0xff]
    %v205 = vld [vmem:[#allocation5 + $0x270] sm:$0xff]
    %v206 = vld [vmem:[#allocation5 + $0x278] sm:$0xff]
    %v207 = vld [vmem:[#allocation5 + $0x280] sm:$0xff]
    %v208 = vld [vmem:[#allocation5 + $0x288] sm:$0xff]
    %v209 = vld [vmem:[#allocation5 + $0x290] sm:$0xff]
    %v210 = vld [vmem:[#allocation5 + $0x298] sm:$0xff]
    %v211 = vld [vmem:[#allocation5 + $0x2a0] sm:$0xff]
    %v212 = vld [vmem:[#allocation5 + $0x2a8] sm:$0xff]
    %v213 = vld [vmem:[#allocation5 + $0x2b0] sm:$0xff]
    %v214 = vld [vmem:[#allocation5 + $0x2b8] sm:$0xff]
    %v215 = vld [vmem:[#allocation5 + $0x2c0] sm:$0xff]
    %v216 = vld [vmem:[#allocation5 + $0x2c8] sm:$0xff]
    %v217 = vld [vmem:[#allocation5 + $0x2d0] sm:$0xff]
    %v218 = vld [vmem:[#allocation5 + $0x2d8] sm:$0xff]
    %v219 = vld [vmem:[#allocation5 + $0x2e0] sm:$0xff]
    %v220 = vld [vmem:[#allocation5 + $0x2e8] sm:$0xff]
    %v221 = vld [vmem:[#allocation5 + $0x2f0] sm:$0xff]
    %v222 = vld [vmem:[#allocation5 + $0x2f8] sm:$0xff]
    %v223 = vld [vmem:[#allocation5 + $0x300] sm:$0xff]
    %v224 = vld [vmem:[#allocation5 + $0x308] sm:$0xff]
    %v225 = vld [vmem:[#allocation5 + $0x310] sm:$0xff]
    %v226 = vld [vmem:[#allocation5 + $0x318] sm:$0xff]
    %v227 = vld [vmem:[#allocation5 + $0x320] sm:$0xff]
    %v228 = vld [vmem:[#allocation5 + $0x328] sm:$0xff]
    %v229 = vld [vmem:[#allocation5 + $0x330] sm:$0xff]
    %v230 = vld [vmem:[#allocation5 + $0x338] sm:$0xff]
    %v231 = vld [vmem:[#allocation5 + $0x340] sm:$0xff]
    %v232 = vld [vmem:[#allocation5 + $0x348] sm:$0xff]
    %v233 = vld [vmem:[#allocation5 + $0x350] sm:$0xff]
    %v234 = vld [vmem:[#allocation5 + $0x358] sm:$0xff]
    %v235 = vld [vmem:[#allocation5 + $0x360] sm:$0xff]
    %v236 = vld [vmem:[#allocation5 + $0x368] sm:$0xff]
    %v237 = vld [vmem:[#allocation5 + $0x370] sm:$0xff]
    %v238 = vld [vmem:[#allocation5 + $0x378] sm:$0xff]
    %v239 = vld [vmem:[#allocation5 + $0x380] sm:$0xff]
    %v240 = vld [vmem:[#allocation5 + $0x388] sm:$0xff]
    %v241 = vld [vmem:[#allocation5 + $0x390] sm:$0xff]
    %v242 = vld [vmem:[#allocation5 + $0x398] sm:$0xff]
    %v243 = vld [vmem:[#allocation5 + $0x3a0] sm:$0xff]
    %v244 = vld [vmem:[#allocation5 + $0x3a8] sm:$0xff]
    %v245 = vld [vmem:[#allocation5 + $0x3b0] sm:$0xff]
    %v246 = vld [vmem:[#allocation5 + $0x3b8] sm:$0xff]
    %v247 = vld [vmem:[#allocation5 + $0x3c0] sm:$0xff]
    %v248 = vld [vmem:[#allocation5 + $0x3c8] sm:$0xff]
    %v249 = vld [vmem:[#allocation5 + $0x3d0] sm:$0xff]
    %v250 = vld [vmem:[#allocation5 + $0x3d8] sm:$0xff]
    %v251 = vld [vmem:[#allocation5 + $0x3e0] sm:$0xff]
    %v252 = vld [vmem:[#allocation5 + $0x3e8] sm:$0xff]
    %v253 = vld [vmem:[#allocation5 + $0x3f0] sm:$0xff]
    %v254 = vld [vmem:[#allocation5 + $0x3f8] sm:$0xff]
    %255 = vmatpush.msra.mxu0 %v157
    %256 = vmatpush.msra.mxu0 %v155
    %257 = vmatpush.msra.mxu0 %v153
    %258 = vmatpush.msra.mxu0 %v151
    %259 = vmatpush.msra.mxu0 %v149
    %260 = vmatpush.msra.mxu0 %v147
    %261 = vmatpush.msra.mxu0 %v145
    %262 = vmatpush.msra.mxu0 %v143
    %263 = vmatpush.msra.mxu0 %v141
    %264 = vmatpush.msra.mxu0 %v139
    %265 = vmatpush.msra.mxu0 %v137
    %266 = vmatpush.msra.mxu0 %v135
    %267 = vmatpush.msra.mxu0 %v133
    %268 = vmatpush.msra.mxu0 %v131
    %269 = vmatpush.msra.mxu0 %v129
    %270 = vmatpush.msra.mxu0 %v127
    %271 = vmatmul.f32.gmra.mxu0 %v118
    %v272 = vpop.f32.mrf.mxu0
    %v273 = vadd.f32 0.0, %v272
    %274 = vdwg.mxu0
    %275 = vmatpush.msra.mxu0 %v189
    %276 = vmatpush.msra.mxu0 %v187
    %277 = vmatpush.msra.mxu0 %v185
    %278 = vmatpush.msra.mxu0 %v183
    %279 = vmatpush.msra.mxu0 %v181
    %280 = vmatpush.msra.mxu0 %v179
    %281 = vmatpush.msra.mxu0 %v177
    %282 = vmatpush.msra.mxu0 %v175
    %283 = vmatpush.msra.mxu0 %v173
    %284 = vmatpush.msra.mxu0 %v171
    %285 = vmatpush.msra.mxu0 %v169
    %286 = vmatpush.msra.mxu0 %v167
    %287 = vmatpush.msra.mxu0 %v165
    %288 = vmatpush.msra.mxu0 %v163
    %289 = vmatpush.msra.mxu0 %v161
    %290 = vmatpush.msra.mxu0 %v159
    %291 = vmatmul.f32.gmra.mxu0 %v119
    %v292 = vpop.f32.mrf.mxu0
    %v293 = vadd.f32 %v273, %v292
    %294 = vdwg.mxu0
    %295 = vmatpush.msra.mxu0 %v221
    %296 = vmatpush.msra.mxu0 %v219
    %297 = vmatpush.msra.mxu0 %v217
    %298 = vmatpush.msra.mxu0 %v215
    %299 = vmatpush.msra.mxu0 %v213
    %300 = vmatpush.msra.mxu0 %v211
    %301 = vmatpush.msra.mxu0 %v209
    %302 = vmatpush.msra.mxu0 %v207
    %303 = vmatpush.msra.mxu0 %v205
    %304 = vmatpush.msra.mxu0 %v203
    %305 = vmatpush.msra.mxu0 %v201
    %306 = vmatpush.msra.mxu0 %v199
    %307 = vmatpush.msra.mxu0 %v197
    %308 = vmatpush.msra.mxu0 %v195
    %309 = vmatpush.msra.mxu0 %v193
    %310 = vmatpush.msra.mxu0 %v191
    %311 = vmatmul.f32.gmra.mxu0 %v120
    %v312 = vpop.f32.mrf.mxu0
    %v313 = vadd.f32 %v293, %v312
    %314 = vdwg.mxu0
    %315 = vmatpush.msra.mxu0 %v253
    %316 = vmatpush.msra.mxu0 %v251
    %317 = vmatpush.msra.mxu0 %v249
    %318 = vmatpush.msra.mxu0 %v247
    %319 = vmatpush.msra.mxu0 %v245
    %320 = vmatpush.msra.mxu0 %v243
    %321 = vmatpush.msra.mxu0 %v241
    %322 = vmatpush.msra.mxu0 %v239
    %323 = vmatpush.msra.mxu0 %v237
    %324 = vmatpush.msra.mxu0 %v235
    %325 = vmatpush.msra.mxu0 %v233
    %326 = vmatpush.msra.mxu0 %v231
    %327 = vmatpush.msra.mxu0 %v229
    %328 = vmatpush.msra.mxu0 %v227
    %329 = vmatpush.msra.mxu0 %v225
    %330 = vmatpush.msra.mxu0 %v223
    %331 = vmatmul.f32.gmra.mxu0 %v121
    %v332 = vpop.f32.mrf.mxu0
    %v333 = vadd.f32 %v313, %v332
    %334 = vdwg.mxu0
    %335 = vmatpush.msra.mxu0 %v158
    %336 = vmatpush.msra.mxu0 %v156
    %337 = vmatpush.msra.mxu0 %v154
    %338 = vmatpush.msra.mxu0 %v152
    %339 = vmatpush.msra.mxu0 %v150
    %340 = vmatpush.msra.mxu0 %v148
    %341 = vmatpush.msra.mxu0 %v146
    %342 = vmatpush.msra.mxu0 %v144
    %343 = vmatpush.msra.mxu0 %v142
    %344 = vmatpush.msra.mxu0 %v140
    %345 = vmatpush.msra.mxu0 %v138
    %346 = vmatpush.msra.mxu0 %v136
    %347 = vmatpush.msra.mxu0 %v134
    %348 = vmatpush.msra.mxu0 %v132
    %349 = vmatpush.msra.mxu0 %v130
    %350 = vmatpush.msra.mxu0 %v128
    %351 = vmatmul.f32.gmra.mxu0 %v118
    %v352 = vpop.f32.mrf.mxu0
    %v353 = vadd.f32 0.0, %v352
    %354 = vdwg.mxu0
    %355 = vmatpush.msra.mxu0 %v190
    %356 = vmatpush.msra.mxu0 %v188
    %357 = vmatpush.msra.mxu0 %v186
    %358 = vmatpush.msra.mxu0 %v184
    %359 = vmatpush.msra.mxu0 %v182
    %360 = vmatpush.msra.mxu0 %v180
    %361 = vmatpush.msra.mxu0 %v178
    %362 = vmatpush.msra.mxu0 %v176
    %363 = vmatpush.msra.mxu0 %v174
    %364 = vmatpush.msra.mxu0 %v172
    %365 = vmatpush.msra.mxu0 %v170
    %366 = vmatpush.msra.mxu0 %v168
    %367 = vmatpush.msra.mxu0 %v166
    %368 = vmatpush.msra.mxu0 %v164
    %369 = vmatpush.msra.mxu0 %v162
    %370 = vmatpush.msra.mxu0 %v160
    %371 = vmatmul.f32.gmra.mxu0 %v119
    %v372 = vpop.f32.mrf.mxu0
    %v373 = vadd.f32 %v353, %v372
    %374 = vdwg.mxu0
    %375 = vmatpush.msra.mxu0 %v222
    %376 = vmatpush.msra.mxu0 %v220
    %377 = vmatpush.msra.mxu0 %v218
    %378 = vmatpush.msra.mxu0 %v216
    %379 = vmatpush.msra.mxu0 %v214
    %380 = vmatpush.msra.mxu0 %v212
    %381 = vmatpush.msra.mxu0 %v210
    %382 = vmatpush.msra.mxu0 %v208
    %383 = vmatpush.msra.mxu0 %v206
    %384 = vmatpush.msra.mxu0 %v204
    %385 = vmatpush.msra.mxu0 %v202
    %386 = vmatpush.msra.mxu0 %v200
    %387 = vmatpush.msra.mxu0 %v198
    %388 = vmatpush.msra.mxu0 %v196
    %389 = vmatpush.msra.mxu0 %v194
    %390 = vmatpush.msra.mxu0 %v192
    %391 = vmatmul.f32.gmra.mxu0 %v120
    %v392 = vpop.f32.mrf.mxu0
    %v393 = vadd.f32 %v373, %v392
    %394 = vdwg.mxu0
    %395 = vmatpush.msra.mxu0 %v254
    %396 = vmatpush.msra.mxu0 %v252
    %397 = vmatpush.msra.mxu0 %v250
    %398 = vmatpush.msra.mxu0 %v248
    %399 = vmatpush.msra.mxu0 %v246
    %400 = vmatpush.msra.mxu0 %v244
    %401 = vmatpush.msra.mxu0 %v242
    %402 = vmatpush.msra.mxu0 %v240
    %403 = vmatpush.msra.mxu0 %v238
    %404 = vmatpush.msra.mxu0 %v236
    %405 = vmatpush.msra.mxu0 %v234
    %406 = vmatpush.msra.mxu0 %v232
    %407 = vmatpush.msra.mxu0 %v230
    %408 = vmatpush.msra.mxu0 %v228
    %409 = vmatpush.msra.mxu0 %v226
    %410 = vmatpush.msra.mxu0 %v224
    %411 = vmatmul.f32.gmra.mxu0 %v121
    %v412 = vpop.f32.mrf.mxu0
    %v413 = vadd.f32 %v393, %v412
    %414 = vdwg.mxu0
    %s415 = scalar_lea.vmem [#allocation5], 1024
    %v416 = vld [vmem:[%s415] sm:$0xff]
    %v417 = vld [vmem:[%s415 + $0x8] sm:$0xff]
    %v418 = vld [vmem:[%s415 + $0x10] sm:$0xff]
    %v419 = vld [vmem:[%s415 + $0x18] sm:$0xff]
    %v420 = vld [vmem:[%s415 + $0x20] sm:$0xff]
    %v421 = vld [vmem:[%s415 + $0x28] sm:$0xff]
    %v422 = vld [vmem:[%s415 + $0x30] sm:$0xff]
    %v423 = vld [vmem:[%s415 + $0x38] sm:$0xff]
    %v424 = vld [vmem:[%s415 + $0x40] sm:$0xff]
    %v425 = vld [vmem:[%s415 + $0x48] sm:$0xff]
    %v426 = vld [vmem:[%s415 + $0x50] sm:$0xff]
    %v427 = vld [vmem:[%s415 + $0x58] sm:$0xff]
    %v428 = vld [vmem:[%s415 + $0x60] sm:$0xff]
    %v429 = vld [vmem:[%s415 + $0x68] sm:$0xff]
    %v430 = vld [vmem:[%s415 + $0x70] sm:$0xff]
    %v431 = vld [vmem:[%s415 + $0x78] sm:$0xff]
    %v432 = vld [vmem:[%s415 + $0x80] sm:$0xff]
    %v433 = vld [vmem:[%s415 + $0x88] sm:$0xff]
    %v434 = vld [vmem:[%s415 + $0x90] sm:$0xff]
    %v435 = vld [vmem:[%s415 + $0x98] sm:$0xff]
    %v436 = vld [vmem:[%s415 + $0xa0] sm:$0xff]
    %v437 = vld [vmem:[%s415 + $0xa8] sm:$0xff]
    %v438 = vld [vmem:[%s415 + $0xb0] sm:$0xff]
    %v439 = vld [vmem:[%s415 + $0xb8] sm:$0xff]
    %v440 = vld [vmem:[%s415 + $0xc0] sm:$0xff]
    %v441 = vld [vmem:[%s415 + $0xc8] sm:$0xff]
    %v442 = vld [vmem:[%s415 + $0xd0] sm:$0xff]
    %v443 = vld [vmem:[%s415 + $0xd8] sm:$0xff]
    %v444 = vld [vmem:[%s415 + $0xe0] sm:$0xff]
    %v445 = vld [vmem:[%s415 + $0xe8] sm:$0xff]
    %v446 = vld [vmem:[%s415 + $0xf0] sm:$0xff]
    %v447 = vld [vmem:[%s415 + $0xf8] sm:$0xff]
    %v448 = vld [vmem:[%s415 + $0x100] sm:$0xff]
    %v449 = vld [vmem:[%s415 + $0x108] sm:$0xff]
    %v450 = vld [vmem:[%s415 + $0x110] sm:$0xff]
    %v451 = vld [vmem:[%s415 + $0x118] sm:$0xff]
    %v452 = vld [vmem:[%s415 + $0x120] sm:$0xff]
    %v453 = vld [vmem:[%s415 + $0x128] sm:$0xff]
    %v454 = vld [vmem:[%s415 + $0x130] sm:$0xff]
    %v455 = vld [vmem:[%s415 + $0x138] sm:$0xff]
    %v456 = vld [vmem:[%s415 + $0x140] sm:$0xff]
    %v457 = vld [vmem:[%s415 + $0x148] sm:$0xff]
    %v458 = vld [vmem:[%s415 + $0x150] sm:$0xff]
    %v459 = vld [vmem:[%s415 + $0x158] sm:$0xff]
    %v460 = vld [vmem:[%s415 + $0x160] sm:$0xff]
    %v461 = vld [vmem:[%s415 + $0x168] sm:$0xff]
    %v462 = vld [vmem:[%s415 + $0x170] sm:$0xff]
    %v463 = vld [vmem:[%s415 + $0x178] sm:$0xff]
    %v464 = vld [vmem:[%s415 + $0x180] sm:$0xff]
    %v465 = vld [vmem:[%s415 + $0x188] sm:$0xff]
    %v466 = vld [vmem:[%s415 + $0x190] sm:$0xff]
    %v467 = vld [vmem:[%s415 + $0x198] sm:$0xff]
    %v468 = vld [vmem:[%s415 + $0x1a0] sm:$0xff]
    %v469 = vld [vmem:[%s415 + $0x1a8] sm:$0xff]
    %v470 = vld [vmem:[%s415 + $0x1b0] sm:$0xff]
    %v471 = vld [vmem:[%s415 + $0x1b8] sm:$0xff]
    %v472 = vld [vmem:[%s415 + $0x1c0] sm:$0xff]
    %v473 = vld [vmem:[%s415 + $0x1c8] sm:$0xff]
    %v474 = vld [vmem:[%s415 + $0x1d0] sm:$0xff]
    %v475 = vld [vmem:[%s415 + $0x1d8] sm:$0xff]
    %v476 = vld [vmem:[%s415 + $0x1e0] sm:$0xff]
    %v477 = vld [vmem:[%s415 + $0x1e8] sm:$0xff]
    %v478 = vld [vmem:[%s415 + $0x1f0] sm:$0xff]
    %v479 = vld [vmem:[%s415 + $0x1f8] sm:$0xff]
    %v480 = vld [vmem:[%s415 + $0x200] sm:$0xff]
    %v481 = vld [vmem:[%s415 + $0x208] sm:$0xff]
    %v482 = vld [vmem:[%s415 + $0x210] sm:$0xff]
    %v483 = vld [vmem:[%s415 + $0x218] sm:$0xff]
    %v484 = vld [vmem:[%s415 + $0x220] sm:$0xff]
    %v485 = vld [vmem:[%s415 + $0x228] sm:$0xff]
    %v486 = vld [vmem:[%s415 + $0x230] sm:$0xff]
    %v487 = vld [vmem:[%s415 + $0x238] sm:$0xff]
    %v488 = vld [vmem:[%s415 + $0x240] sm:$0xff]
    %v489 = vld [vmem:[%s415 + $0x248] sm:$0xff]
    %v490 = vld [vmem:[%s415 + $0x250] sm:$0xff]
    %v491 = vld [vmem:[%s415 + $0x258] sm:$0xff]
    %v492 = vld [vmem:[%s415 + $0x260] sm:$0xff]
    %v493 = vld [vmem:[%s415 + $0x268] sm:$0xff]
    %v494 = vld [vmem:[%s415 + $0x270] sm:$0xff]
    %v495 = vld [vmem:[%s415 + $0x278] sm:$0xff]
    %v496 = vld [vmem:[%s415 + $0x280] sm:$0xff]
    %v497 = vld [vmem:[%s415 + $0x288] sm:$0xff]
    %v498 = vld [vmem:[%s415 + $0x290] sm:$0xff]
    %v499 = vld [vmem:[%s415 + $0x298] sm:$0xff]
    %v500 = vld [vmem:[%s415 + $0x2a0] sm:$0xff]
    %v501 = vld [vmem:[%s415 + $0x2a8] sm:$0xff]
    %v502 = vld [vmem:[%s415 + $0x2b0] sm:$0xff]
    %v503 = vld [vmem:[%s415 + $0x2b8] sm:$0xff]
    %v504 = vld [vmem:[%s415 + $0x2c0] sm:$0xff]
    %v505 = vld [vmem:[%s415 + $0x2c8] sm:$0xff]
    %v506 = vld [vmem:[%s415 + $0x2d0] sm:$0xff]
    %v507 = vld [vmem:[%s415 + $0x2d8] sm:$0xff]
    %v508 = vld [vmem:[%s415 + $0x2e0] sm:$0xff]
    %v509 = vld [vmem:[%s415 + $0x2e8] sm:$0xff]
    %v510 = vld [vmem:[%s415 + $0x2f0] sm:$0xff]
    %v511 = vld [vmem:[%s415 + $0x2f8] sm:$0xff]
    %v512 = vld [vmem:[%s415 + $0x300] sm:$0xff]
    %v513 = vld [vmem:[%s415 + $0x308] sm:$0xff]
    %v514 = vld [vmem:[%s415 + $0x310] sm:$0xff]
    %v515 = vld [vmem:[%s415 + $0x318] sm:$0xff]
    %v516 = vld [vmem:[%s415 + $0x320] sm:$0xff]
    %v517 = vld [vmem:[%s415 + $0x328] sm:$0xff]
    %v518 = vld [vmem:[%s415 + $0x330] sm:$0xff]
    %v519 = vld [vmem:[%s415 + $0x338] sm:$0xff]
    %v520 = vld [vmem:[%s415 + $0x340] sm:$0xff]
    %v521 = vld [vmem:[%s415 + $0x348] sm:$0xff]
    %v522 = vld [vmem:[%s415 + $0x350] sm:$0xff]
    %v523 = vld [vmem:[%s415 + $0x358] sm:$0xff]
    %v524 = vld [vmem:[%s415 + $0x360] sm:$0xff]
    %v525 = vld [vmem:[%s415 + $0x368] sm:$0xff]
    %v526 = vld [vmem:[%s415 + $0x370] sm:$0xff]
    %v527 = vld [vmem:[%s415 + $0x378] sm:$0xff]
    %v528 = vld [vmem:[%s415 + $0x380] sm:$0xff]
    %v529 = vld [vmem:[%s415 + $0x388] sm:$0xff]
    %v530 = vld [vmem:[%s415 + $0x390] sm:$0xff]
    %v531 = vld [vmem:[%s415 + $0x398] sm:$0xff]
    %v532 = vld [vmem:[%s415 + $0x3a0] sm:$0xff]
    %v533 = vld [vmem:[%s415 + $0x3a8] sm:$0xff]
    %v534 = vld [vmem:[%s415 + $0x3b0] sm:$0xff]
    %v535 = vld [vmem:[%s415 + $0x3b8] sm:$0xff]
    %v536 = vld [vmem:[%s415 + $0x3c0] sm:$0xff]
    %v537 = vld [vmem:[%s415 + $0x3c8] sm:$0xff]
    %v538 = vld [vmem:[%s415 + $0x3d0] sm:$0xff]
    %v539 = vld [vmem:[%s415 + $0x3d8] sm:$0xff]
    %v540 = vld [vmem:[%s415 + $0x3e0] sm:$0xff]
    %v541 = vld [vmem:[%s415 + $0x3e8] sm:$0xff]
    %v542 = vld [vmem:[%s415 + $0x3f0] sm:$0xff]
    %v543 = vld [vmem:[%s415 + $0x3f8] sm:$0xff]
    %544 = vmatpush.msra.mxu0 %v446
    %545 = vmatpush.msra.mxu0 %v444
    %546 = vmatpush.msra.mxu0 %v442
    %547 = vmatpush.msra.mxu0 %v440
    %548 = vmatpush.msra.mxu0 %v438
    %549 = vmatpush.msra.mxu0 %v436
    %550 = vmatpush.msra.mxu0 %v434
    %551 = vmatpush.msra.mxu0 %v432
    %552 = vmatpush.msra.mxu0 %v430
    %553 = vmatpush.msra.mxu0 %v428
    %554 = vmatpush.msra.mxu0 %v426
    %555 = vmatpush.msra.mxu0 %v424
    %556 = vmatpush.msra.mxu0 %v422
    %557 = vmatpush.msra.mxu0 %v420
    %558 = vmatpush.msra.mxu0 %v418
    %559 = vmatpush.msra.mxu0 %v416
    %560 = vmatmul.f32.gmra.mxu0 %v118
    %v561 = vpop.f32.mrf.mxu0
    %v562 = vadd.f32 0.0, %v561
    %563 = vdwg.mxu0
    %564 = vmatpush.msra.mxu0 %v478
    %565 = vmatpush.msra.mxu0 %v476
    %566 = vmatpush.msra.mxu0 %v474
    %567 = vmatpush.msra.mxu0 %v472
    %568 = vmatpush.msra.mxu0 %v470
    %569 = vmatpush.msra.mxu0 %v468
    %570 = vmatpush.msra.mxu0 %v466
    %571 = vmatpush.msra.mxu0 %v464
    %572 = vmatpush.msra.mxu0 %v462
    %573 = vmatpush.msra.mxu0 %v460
    %574 = vmatpush.msra.mxu0 %v458
    %575 = vmatpush.msra.mxu0 %v456
    %576 = vmatpush.msra.mxu0 %v454
    %577 = vmatpush.msra.mxu0 %v452
    %578 = vmatpush.msra.mxu0 %v450
    %579 = vmatpush.msra.mxu0 %v448
    %580 = vmatmul.f32.gmra.mxu0 %v119
    %v581 = vpop.f32.mrf.mxu0
    %v582 = vadd.f32 %v562, %v581
    %583 = vdwg.mxu0
    %584 = vmatpush.msra.mxu0 %v510
    %585 = vmatpush.msra.mxu0 %v508
    %586 = vmatpush.msra.mxu0 %v506
    %587 = vmatpush.msra.mxu0 %v504
    %588 = vmatpush.msra.mxu0 %v502
    %589 = vmatpush.msra.mxu0 %v500
    %590 = vmatpush.msra.mxu0 %v498
    %591 = vmatpush.msra.mxu0 %v496
    %592 = vmatpush.msra.mxu0 %v494
    %593 = vmatpush.msra.mxu0 %v492
    %594 = vmatpush.msra.mxu0 %v490
    %595 = vmatpush.msra.mxu0 %v488
    %596 = vmatpush.msra.mxu0 %v486
    %597 = vmatpush.msra.mxu0 %v484
    %598 = vmatpush.msra.mxu0 %v482
    %599 = vmatpush.msra.mxu0 %v480
    %600 = vmatmul.f32.gmra.mxu0 %v120
    %v601 = vpop.f32.mrf.mxu0
    %v602 = vadd.f32 %v582, %v601
    %603 = vdwg.mxu0
    %604 = vmatpush.msra.mxu0 %v542
    %605 = vmatpush.msra.mxu0 %v540
    %606 = vmatpush.msra.mxu0 %v538
    %607 = vmatpush.msra.mxu0 %v536
    %608 = vmatpush.msra.mxu0 %v534
    %609 = vmatpush.msra.mxu0 %v532
    %610 = vmatpush.msra.mxu0 %v530
    %611 = vmatpush.msra.mxu0 %v528
    %612 = vmatpush.msra.mxu0 %v526
    %613 = vmatpush.msra.mxu0 %v524
    %614 = vmatpush.msra.mxu0 %v522
    %615 = vmatpush.msra.mxu0 %v520
    %616 = vmatpush.msra.mxu0 %v518
    %617 = vmatpush.msra.mxu0 %v516
    %618 = vmatpush.msra.mxu0 %v514
    %619 = vmatpush.msra.mxu0 %v512
    %620 = vmatmul.f32.gmra.mxu0 %v121
    %v621 = vpop.f32.mrf.mxu0
    %v622 = vadd.f32 %v602, %v621
    %623 = vdwg.mxu0
    %624 = vmatpush.msra.mxu0 %v447
    %625 = vmatpush.msra.mxu0 %v445
    %626 = vmatpush.msra.mxu0 %v443
    %627 = vmatpush.msra.mxu0 %v441
    %628 = vmatpush.msra.mxu0 %v439
    %629 = vmatpush.msra.mxu0 %v437
    %630 = vmatpush.msra.mxu0 %v435
    %631 = vmatpush.msra.mxu0 %v433
    %632 = vmatpush.msra.mxu0 %v431
    %633 = vmatpush.msra.mxu0 %v429
    %634 = vmatpush.msra.mxu0 %v427
    %635 = vmatpush.msra.mxu0 %v425
    %636 = vmatpush.msra.mxu0 %v423
    %637 = vmatpush.msra.mxu0 %v421
    %638 = vmatpush.msra.mxu0 %v419
    %639 = vmatpush.msra.mxu0 %v417
    %640 = vmatmul.f32.gmra.mxu0 %v118
    %v641 = vpop.f32.mrf.mxu0
    %v642 = vadd.f32 0.0, %v641
    %643 = vdwg.mxu0
    %644 = vmatpush.msra.mxu0 %v479
    %645 = vmatpush.msra.mxu0 %v477
    %646 = vmatpush.msra.mxu0 %v475
    %647 = vmatpush.msra.mxu0 %v473
    %648 = vmatpush.msra.mxu0 %v471
    %649 = vmatpush.msra.mxu0 %v469
    %650 = vmatpush.msra.mxu0 %v467
    %651 = vmatpush.msra.mxu0 %v465
    %652 = vmatpush.msra.mxu0 %v463
    %653 = vmatpush.msra.mxu0 %v461
    %654 = vmatpush.msra.mxu0 %v459
    %655 = vmatpush.msra.mxu0 %v457
    %656 = vmatpush.msra.mxu0 %v455
    %657 = vmatpush.msra.mxu0 %v453
    %658 = vmatpush.msra.mxu0 %v451
    %659 = vmatpush.msra.mxu0 %v449
    %660 = vmatmul.f32.gmra.mxu0 %v119
    %v661 = vpop.f32.mrf.mxu0
    %v662 = vadd.f32 %v642, %v661
    %663 = vdwg.mxu0
    %664 = vmatpush.msra.mxu0 %v511
    %665 = vmatpush.msra.mxu0 %v509
    %666 = vmatpush.msra.mxu0 %v507
    %667 = vmatpush.msra.mxu0 %v505
    %668 = vmatpush.msra.mxu0 %v503
    %669 = vmatpush.msra.mxu0 %v501
    %670 = vmatpush.msra.mxu0 %v499
    %671 = vmatpush.msra.mxu0 %v497
    %672 = vmatpush.msra.mxu0 %v495
    %673 = vmatpush.msra.mxu0 %v493
    %674 = vmatpush.msra.mxu0 %v491
    %675 = vmatpush.msra.mxu0 %v489
    %676 = vmatpush.msra.mxu0 %v487
    %677 = vmatpush.msra.mxu0 %v485
    %678 = vmatpush.msra.mxu0 %v483
    %679 = vmatpush.msra.mxu0 %v481
    %680 = vmatmul.f32.gmra.mxu0 %v120
    %v681 = vpop.f32.mrf.mxu0
    %v682 = vadd.f32 %v662, %v681
    %683 = vdwg.mxu0
    %684 = vmatpush.msra.mxu0 %v543
    %685 = vmatpush.msra.mxu0 %v541
    %686 = vmatpush.msra.mxu0 %v539
    %687 = vmatpush.msra.mxu0 %v537
    %688 = vmatpush.msra.mxu0 %v535
    %689 = vmatpush.msra.mxu0 %v533
    %690 = vmatpush.msra.mxu0 %v531
    %691 = vmatpush.msra.mxu0 %v529
    %692 = vmatpush.msra.mxu0 %v527
    %693 = vmatpush.msra.mxu0 %v525
    %694 = vmatpush.msra.mxu0 %v523
    %695 = vmatpush.msra.mxu0 %v521
    %696 = vmatpush.msra.mxu0 %v519
    %697 = vmatpush.msra.mxu0 %v517
    %698 = vmatpush.msra.mxu0 %v515
    %699 = vmatpush.msra.mxu0 %v513
    %700 = vmatmul.f32.gmra.mxu0 %v121
    %v701 = vpop.f32.mrf.mxu0
    %v702 = vadd.f32 %v682, %v701
    %703 = vdwg.mxu0
    %s704 = scalar_lea.vmem [#allocation5], 2048
    %v705 = vld [vmem:[%s704] sm:$0xff]
    %v706 = vld [vmem:[%s704 + $0x8] sm:$0xff]
    %v707 = vld [vmem:[%s704 + $0x10] sm:$0xff]
    %v708 = vld [vmem:[%s704 + $0x18] sm:$0xff]
    %v709 = vld [vmem:[%s704 + $0x20] sm:$0xff]
    %v710 = vld [vmem:[%s704 + $0x28] sm:$0xff]
    %v711 = vld [vmem:[%s704 + $0x30] sm:$0xff]
    %v712 = vld [vmem:[%s704 + $0x38] sm:$0xff]
    %v713 = vld [vmem:[%s704 + $0x40] sm:$0xff]
    %v714 = vld [vmem:[%s704 + $0x48] sm:$0xff]
    %v715 = vld [vmem:[%s704 + $0x50] sm:$0xff]
    %v716 = vld [vmem:[%s704 + $0x58] sm:$0xff]
    %v717 = vld [vmem:[%s704 + $0x60] sm:$0xff]
    %v718 = vld [vmem:[%s704 + $0x68] sm:$0xff]
    %v719 = vld [vmem:[%s704 + $0x70] sm:$0xff]
    %v720 = vld [vmem:[%s704 + $0x78] sm:$0xff]
    %v721 = vld [vmem:[%s704 + $0x80] sm:$0xff]
    %v722 = vld [vmem:[%s704 + $0x88] sm:$0xff]
    %v723 = vld [vmem:[%s704 + $0x90] sm:$0xff]
    %v724 = vld [vmem:[%s704 + $0x98] sm:$0xff]
    %v725 = vld [vmem:[%s704 + $0xa0] sm:$0xff]
    %v726 = vld [vmem:[%s704 + $0xa8] sm:$0xff]
    %v727 = vld [vmem:[%s704 + $0xb0] sm:$0xff]
    %v728 = vld [vmem:[%s704 + $0xb8] sm:$0xff]
    %v729 = vld [vmem:[%s704 + $0xc0] sm:$0xff]
    %v730 = vld [vmem:[%s704 + $0xc8] sm:$0xff]
    %v731 = vld [vmem:[%s704 + $0xd0] sm:$0xff]
    %v732 = vld [vmem:[%s704 + $0xd8] sm:$0xff]
    %v733 = vld [vmem:[%s704 + $0xe0] sm:$0xff]
    %v734 = vld [vmem:[%s704 + $0xe8] sm:$0xff]
    %v735 = vld [vmem:[%s704 + $0xf0] sm:$0xff]
    %v736 = vld [vmem:[%s704 + $0xf8] sm:$0xff]
    %v737 = vld [vmem:[%s704 + $0x100] sm:$0xff]
    %v738 = vld [vmem:[%s704 + $0x108] sm:$0xff]
    %v739 = vld [vmem:[%s704 + $0x110] sm:$0xff]
    %v740 = vld [vmem:[%s704 + $0x118] sm:$0xff]
    %v741 = vld [vmem:[%s704 + $0x120] sm:$0xff]
    %v742 = vld [vmem:[%s704 + $0x128] sm:$0xff]
    %v743 = vld [vmem:[%s704 + $0x130] sm:$0xff]
    %v744 = vld [vmem:[%s704 + $0x138] sm:$0xff]
    %v745 = vld [vmem:[%s704 + $0x140] sm:$0xff]
    %v746 = vld [vmem:[%s704 + $0x148] sm:$0xff]
    %v747 = vld [vmem:[%s704 + $0x150] sm:$0xff]
    %v748 = vld [vmem:[%s704 + $0x158] sm:$0xff]
    %v749 = vld [vmem:[%s704 + $0x160] sm:$0xff]
    %v750 = vld [vmem:[%s704 + $0x168] sm:$0xff]
    %v751 = vld [vmem:[%s704 + $0x170] sm:$0xff]
    %v752 = vld [vmem:[%s704 + $0x178] sm:$0xff]
    %v753 = vld [vmem:[%s704 + $0x180] sm:$0xff]
    %v754 = vld [vmem:[%s704 + $0x188] sm:$0xff]
    %v755 = vld [vmem:[%s704 + $0x190] sm:$0xff]
    %v756 = vld [vmem:[%s704 + $0x198] sm:$0xff]
    %v757 = vld [vmem:[%s704 + $0x1a0] sm:$0xff]
    %v758 = vld [vmem:[%s704 + $0x1a8] sm:$0xff]
    %v759 = vld [vmem:[%s704 + $0x1b0] sm:$0xff]
    %v760 = vld [vmem:[%s704 + $0x1b8] sm:$0xff]
    %v761 = vld [vmem:[%s704 + $0x1c0] sm:$0xff]
    %v762 = vld [vmem:[%s704 + $0x1c8] sm:$0xff]
    %v763 = vld [vmem:[%s704 + $0x1d0] sm:$0xff]
    %v764 = vld [vmem:[%s704 + $0x1d8] sm:$0xff]
    %v765 = vld [vmem:[%s704 + $0x1e0] sm:$0xff]
    %v766 = vld [vmem:[%s704 + $0x1e8] sm:$0xff]
    %v767 = vld [vmem:[%s704 + $0x1f0] sm:$0xff]
    %v768 = vld [vmem:[%s704 + $0x1f8] sm:$0xff]
    %v769 = vld [vmem:[%s704 + $0x200] sm:$0xff]
    %v770 = vld [vmem:[%s704 + $0x208] sm:$0xff]
    %v771 = vld [vmem:[%s704 + $0x210] sm:$0xff]
    %v772 = vld [vmem:[%s704 + $0x218] sm:$0xff]
    %v773 = vld [vmem:[%s704 + $0x220] sm:$0xff]
    %v774 = vld [vmem:[%s704 + $0x228] sm:$0xff]
    %v775 = vld [vmem:[%s704 + $0x230] sm:$0xff]
    %v776 = vld [vmem:[%s704 + $0x238] sm:$0xff]
    %v777 = vld [vmem:[%s704 + $0x240] sm:$0xff]
    %v778 = vld [vmem:[%s704 + $0x248] sm:$0xff]
    %v779 = vld [vmem:[%s704 + $0x250] sm:$0xff]
    %v780 = vld [vmem:[%s704 + $0x258] sm:$0xff]
    %v781 = vld [vmem:[%s704 + $0x260] sm:$0xff]
    %v782 = vld [vmem:[%s704 + $0x268] sm:$0xff]
    %v783 = vld [vmem:[%s704 + $0x270] sm:$0xff]
    %v784 = vld [vmem:[%s704 + $0x278] sm:$0xff]
    %v785 = vld [vmem:[%s704 + $0x280] sm:$0xff]
    %v786 = vld [vmem:[%s704 + $0x288] sm:$0xff]
    %v787 = vld [vmem:[%s704 + $0x290] sm:$0xff]
    %v788 = vld [vmem:[%s704 + $0x298] sm:$0xff]
    %v789 = vld [vmem:[%s704 + $0x2a0] sm:$0xff]
    %v790 = vld [vmem:[%s704 + $0x2a8] sm:$0xff]
    %v791 = vld [vmem:[%s704 + $0x2b0] sm:$0xff]
    %v792 = vld [vmem:[%s704 + $0x2b8] sm:$0xff]
    %v793 = vld [vmem:[%s704 + $0x2c0] sm:$0xff]
    %v794 = vld [vmem:[%s704 + $0x2c8] sm:$0xff]
    %v795 = vld [vmem:[%s704 + $0x2d0] sm:$0xff]
    %v796 = vld [vmem:[%s704 + $0x2d8] sm:$0xff]
    %v797 = vld [vmem:[%s704 + $0x2e0] sm:$0xff]
    %v798 = vld [vmem:[%s704 + $0x2e8] sm:$0xff]
    %v799 = vld [vmem:[%s704 + $0x2f0] sm:$0xff]
    %v800 = vld [vmem:[%s704 + $0x2f8] sm:$0xff]
    %v801 = vld [vmem:[%s704 + $0x300] sm:$0xff]
    %v802 = vld [vmem:[%s704 + $0x308] sm:$0xff]
    %v803 = vld [vmem:[%s704 + $0x310] sm:$0xff]
    %v804 = vld [vmem:[%s704 + $0x318] sm:$0xff]
    %v805 = vld [vmem:[%s704 + $0x320] sm:$0xff]
    %v806 = vld [vmem:[%s704 + $0x328] sm:$0xff]
    %v807 = vld [vmem:[%s704 + $0x330] sm:$0xff]
    %v808 = vld [vmem:[%s704 + $0x338] sm:$0xff]
    %v809 = vld [vmem:[%s704 + $0x340] sm:$0xff]
    %v810 = vld [vmem:[%s704 + $0x348] sm:$0xff]
    %v811 = vld [vmem:[%s704 + $0x350] sm:$0xff]
    %v812 = vld [vmem:[%s704 + $0x358] sm:$0xff]
    %v813 = vld [vmem:[%s704 + $0x360] sm:$0xff]
    %v814 = vld [vmem:[%s704 + $0x368] sm:$0xff]
    %v815 = vld [vmem:[%s704 + $0x370] sm:$0xff]
    %v816 = vld [vmem:[%s704 + $0x378] sm:$0xff]
    %v817 = vld [vmem:[%s704 + $0x380] sm:$0xff]
    %v818 = vld [vmem:[%s704 + $0x388] sm:$0xff]
    %v819 = vld [vmem:[%s704 + $0x390] sm:$0xff]
    %v820 = vld [vmem:[%s704 + $0x398] sm:$0xff]
    %v821 = vld [vmem:[%s704 + $0x3a0] sm:$0xff]
    %v822 = vld [vmem:[%s704 + $0x3a8] sm:$0xff]
    %v823 = vld [vmem:[%s704 + $0x3b0] sm:$0xff]
    %v824 = vld [vmem:[%s704 + $0x3b8] sm:$0xff]
    %v825 = vld [vmem:[%s704 + $0x3c0] sm:$0xff]
    %v826 = vld [vmem:[%s704 + $0x3c8] sm:$0xff]
    %v827 = vld [vmem:[%s704 + $0x3d0] sm:$0xff]
    %v828 = vld [vmem:[%s704 + $0x3d8] sm:$0xff]
    %v829 = vld [vmem:[%s704 + $0x3e0] sm:$0xff]
    %v830 = vld [vmem:[%s704 + $0x3e8] sm:$0xff]
    %v831 = vld [vmem:[%s704 + $0x3f0] sm:$0xff]
    %v832 = vld [vmem:[%s704 + $0x3f8] sm:$0xff]
    %833 = vmatpush.msra.mxu0 %v735
    %834 = vmatpush.msra.mxu0 %v733
    %835 = vmatpush.msra.mxu0 %v731
    %836 = vmatpush.msra.mxu0 %v729
    %837 = vmatpush.msra.mxu0 %v727
    %838 = vmatpush.msra.mxu0 %v725
    %839 = vmatpush.msra.mxu0 %v723
    %840 = vmatpush.msra.mxu0 %v721
    %841 = vmatpush.msra.mxu0 %v719
    %842 = vmatpush.msra.mxu0 %v717
    %843 = vmatpush.msra.mxu0 %v715
    %844 = vmatpush.msra.mxu0 %v713
    %845 = vmatpush.msra.mxu0 %v711
    %846 = vmatpush.msra.mxu0 %v709
    %847 = vmatpush.msra.mxu0 %v707
    %848 = vmatpush.msra.mxu0 %v705
    %849 = vmatmul.f32.gmra.mxu0 %v118
    %v850 = vpop.f32.mrf.mxu0
    %v851 = vadd.f32 0.0, %v850
    %852 = vdwg.mxu0
    %853 = vmatpush.msra.mxu0 %v767
    %854 = vmatpush.msra.mxu0 %v765
    %855 = vmatpush.msra.mxu0 %v763
    %856 = vmatpush.msra.mxu0 %v761
    %857 = vmatpush.msra.mxu0 %v759
    %858 = vmatpush.msra.mxu0 %v757
    %859 = vmatpush.msra.mxu0 %v755
    %860 = vmatpush.msra.mxu0 %v753
    %861 = vmatpush.msra.mxu0 %v751
    %862 = vmatpush.msra.mxu0 %v749
    %863 = vmatpush.msra.mxu0 %v747
    %864 = vmatpush.msra.mxu0 %v745
    %865 = vmatpush.msra.mxu0 %v743
    %866 = vmatpush.msra.mxu0 %v741
    %867 = vmatpush.msra.mxu0 %v739
    %868 = vmatpush.msra.mxu0 %v737
    %869 = vmatmul.f32.gmra.mxu0 %v119
    %v870 = vpop.f32.mrf.mxu0
    %v871 = vadd.f32 %v851, %v870
    %872 = vdwg.mxu0
    %873 = vmatpush.msra.mxu0 %v799
    %874 = vmatpush.msra.mxu0 %v797
    %875 = vmatpush.msra.mxu0 %v795
    %876 = vmatpush.msra.mxu0 %v793
    %877 = vmatpush.msra.mxu0 %v791
    %878 = vmatpush.msra.mxu0 %v789
    %879 = vmatpush.msra.mxu0 %v787
    %880 = vmatpush.msra.mxu0 %v785
    %881 = vmatpush.msra.mxu0 %v783
    %882 = vmatpush.msra.mxu0 %v781
    %883 = vmatpush.msra.mxu0 %v779
    %884 = vmatpush.msra.mxu0 %v777
    %885 = vmatpush.msra.mxu0 %v775
    %886 = vmatpush.msra.mxu0 %v773
    %887 = vmatpush.msra.mxu0 %v771
    %888 = vmatpush.msra.mxu0 %v769
    %889 = vmatmul.f32.gmra.mxu0 %v120
    %v890 = vpop.f32.mrf.mxu0
    %v891 = vadd.f32 %v871, %v890
    %892 = vdwg.mxu0
    %893 = vmatpush.msra.mxu0 %v831
    %894 = vmatpush.msra.mxu0 %v829
    %895 = vmatpush.msra.mxu0 %v827
    %896 = vmatpush.msra.mxu0 %v825
    %897 = vmatpush.msra.mxu0 %v823
    %898 = vmatpush.msra.mxu0 %v821
    %899 = vmatpush.msra.mxu0 %v819
    %900 = vmatpush.msra.mxu0 %v817
    %901 = vmatpush.msra.mxu0 %v815
    %902 = vmatpush.msra.mxu0 %v813
    %903 = vmatpush.msra.mxu0 %v811
    %904 = vmatpush.msra.mxu0 %v809
    %905 = vmatpush.msra.mxu0 %v807
    %906 = vmatpush.msra.mxu0 %v805
    %907 = vmatpush.msra.mxu0 %v803
    %908 = vmatpush.msra.mxu0 %v801
    %909 = vmatmul.f32.gmra.mxu0 %v121
    %v910 = vpop.f32.mrf.mxu0
    %v911 = vadd.f32 %v891, %v910
    %912 = vdwg.mxu0
    %913 = vmatpush.msra.mxu0 %v736
    %914 = vmatpush.msra.mxu0 %v734
    %915 = vmatpush.msra.mxu0 %v732
    %916 = vmatpush.msra.mxu0 %v730
    %917 = vmatpush.msra.mxu0 %v728
    %918 = vmatpush.msra.mxu0 %v726
    %919 = vmatpush.msra.mxu0 %v724
    %920 = vmatpush.msra.mxu0 %v722
    %921 = vmatpush.msra.mxu0 %v720
    %922 = vmatpush.msra.mxu0 %v718
    %923 = vmatpush.msra.mxu0 %v716
    %924 = vmatpush.msra.mxu0 %v714
    %925 = vmatpush.msra.mxu0 %v712
    %926 = vmatpush.msra.mxu0 %v710
    %927 = vmatpush.msra.mxu0 %v708
    %928 = vmatpush.msra.mxu0 %v706
    %929 = vmatmul.f32.gmra.mxu0 %v118
    %v930 = vpop.f32.mrf.mxu0
    %v931 = vadd.f32 0.0, %v930
    %932 = vdwg.mxu0
    %933 = vmatpush.msra.mxu0 %v768
    %934 = vmatpush.msra.mxu0 %v766
    %935 = vmatpush.msra.mxu0 %v764
    %936 = vmatpush.msra.mxu0 %v762
    %937 = vmatpush.msra.mxu0 %v760
    %938 = vmatpush.msra.mxu0 %v758
    %939 = vmatpush.msra.mxu0 %v756
    %940 = vmatpush.msra.mxu0 %v754
    %941 = vmatpush.msra.mxu0 %v752
    %942 = vmatpush.msra.mxu0 %v750
    %943 = vmatpush.msra.mxu0 %v748
    %944 = vmatpush.msra.mxu0 %v746
    %945 = vmatpush.msra.mxu0 %v744
    %946 = vmatpush.msra.mxu0 %v742
    %947 = vmatpush.msra.mxu0 %v740
    %948 = vmatpush.msra.mxu0 %v738
    %949 = vmatmul.f32.gmra.mxu0 %v119
    %v950 = vpop.f32.mrf.mxu0
    %v951 = vadd.f32 %v931, %v950
    %952 = vdwg.mxu0
    %953 = vmatpush.msra.mxu0 %v800
    %954 = vmatpush.msra.mxu0 %v798
    %955 = vmatpush.msra.mxu0 %v796
    %956 = vmatpush.msra.mxu0 %v794
    %957 = vmatpush.msra.mxu0 %v792
    %958 = vmatpush.msra.mxu0 %v790
    %959 = vmatpush.msra.mxu0 %v788
    %960 = vmatpush.msra.mxu0 %v786
    %961 = vmatpush.msra.mxu0 %v784
    %962 = vmatpush.msra.mxu0 %v782
    %963 = vmatpush.msra.mxu0 %v780
    %964 = vmatpush.msra.mxu0 %v778
    %965 = vmatpush.msra.mxu0 %v776
    %966 = vmatpush.msra.mxu0 %v774
    %967 = vmatpush.msra.mxu0 %v772
    %968 = vmatpush.msra.mxu0 %v770
    %969 = vmatmul.f32.gmra.mxu0 %v120
    %v970 = vpop.f32.mrf.mxu0
    %v971 = vadd.f32 %v951, %v970
    %972 = vdwg.mxu0
    %973 = vmatpush.msra.mxu0 %v832
    %974 = vmatpush.msra.mxu0 %v830
    %975 = vmatpush.msra.mxu0 %v828
    %976 = vmatpush.msra.mxu0 %v826
    %977 = vmatpush.msra.mxu0 %v824
    %978 = vmatpush.msra.mxu0 %v822
    %979 = vmatpush.msra.mxu0 %v820
    %980 = vmatpush.msra.mxu0 %v818
    %981 = vmatpush.msra.mxu0 %v816
    %982 = vmatpush.msra.mxu0 %v814
    %983 = vmatpush.msra.mxu0 %v812
    %984 = vmatpush.msra.mxu0 %v810
    %985 = vmatpush.msra.mxu0 %v808
    %986 = vmatpush.msra.mxu0 %v806
    %987 = vmatpush.msra.mxu0 %v804
    %988 = vmatpush.msra.mxu0 %v802
    %989 = vmatmul.f32.gmra.mxu0 %v121
    %v990 = vpop.f32.mrf.mxu0
    %v991 = vadd.f32 %v971, %v990
    %992 = vdwg.mxu0
    %s993 = scalar_lea.vmem [#allocation5], 3072
    %v994 = vld [vmem:[%s993] sm:$0xff]
    %v995 = vld [vmem:[%s993 + $0x8] sm:$0xff]
    %v996 = vld [vmem:[%s993 + $0x10] sm:$0xff]
    %v997 = vld [vmem:[%s993 + $0x18] sm:$0xff]
    %v998 = vld [vmem:[%s993 + $0x20] sm:$0xff]
    %v999 = vld [vmem:[%s993 + $0x28] sm:$0xff]
    %v1000 = vld [vmem:[%s993 + $0x30] sm:$0xff]
    %v1001 = vld [vmem:[%s993 + $0x38] sm:$0xff]
    %v1002 = vld [vmem:[%s993 + $0x40] sm:$0xff]
    %v1003 = vld [vmem:[%s993 + $0x48] sm:$0xff]
    %v1004 = vld [vmem:[%s993 + $0x50] sm:$0xff]
    %v1005 = vld [vmem:[%s993 + $0x58] sm:$0xff]
    %v1006 = vld [vmem:[%s993 + $0x60] sm:$0xff]
    %v1007 = vld [vmem:[%s993 + $0x68] sm:$0xff]
    %v1008 = vld [vmem:[%s993 + $0x70] sm:$0xff]
    %v1009 = vld [vmem:[%s993 + $0x78] sm:$0xff]
    %v1010 = vld [vmem:[%s993 + $0x80] sm:$0xff]
    %v1011 = vld [vmem:[%s993 + $0x88] sm:$0xff]
    %v1012 = vld [vmem:[%s993 + $0x90] sm:$0xff]
    %v1013 = vld [vmem:[%s993 + $0x98] sm:$0xff]
    %v1014 = vld [vmem:[%s993 + $0xa0] sm:$0xff]
    %v1015 = vld [vmem:[%s993 + $0xa8] sm:$0xff]
    %v1016 = vld [vmem:[%s993 + $0xb0] sm:$0xff]
    %v1017 = vld [vmem:[%s993 + $0xb8] sm:$0xff]
    %v1018 = vld [vmem:[%s993 + $0xc0] sm:$0xff]
    %v1019 = vld [vmem:[%s993 + $0xc8] sm:$0xff]
    %v1020 = vld [vmem:[%s993 + $0xd0] sm:$0xff]
    %v1021 = vld [vmem:[%s993 + $0xd8] sm:$0xff]
    %v1022 = vld [vmem:[%s993 + $0xe0] sm:$0xff]
    %v1023 = vld [vmem:[%s993 + $0xe8] sm:$0xff]
    %v1024 = vld [vmem:[%s993 + $0xf0] sm:$0xff]
    %v1025 = vld [vmem:[%s993 + $0xf8] sm:$0xff]
    %v1026 = vld [vmem:[%s993 + $0x100] sm:$0xff]
    %v1027 = vld [vmem:[%s993 + $0x108] sm:$0xff]
    %v1028 = vld [vmem:[%s993 + $0x110] sm:$0xff]
    %v1029 = vld [vmem:[%s993 + $0x118] sm:$0xff]
    %v1030 = vld [vmem:[%s993 + $0x120] sm:$0xff]
    %v1031 = vld [vmem:[%s993 + $0x128] sm:$0xff]
    %v1032 = vld [vmem:[%s993 + $0x130] sm:$0xff]
    %v1033 = vld [vmem:[%s993 + $0x138] sm:$0xff]
    %v1034 = vld [vmem:[%s993 + $0x140] sm:$0xff]
    %v1035 = vld [vmem:[%s993 + $0x148] sm:$0xff]
    %v1036 = vld [vmem:[%s993 + $0x150] sm:$0xff]
    %v1037 = vld [vmem:[%s993 + $0x158] sm:$0xff]
    %v1038 = vld [vmem:[%s993 + $0x160] sm:$0xff]
    %v1039 = vld [vmem:[%s993 + $0x168] sm:$0xff]
    %v1040 = vld [vmem:[%s993 + $0x170] sm:$0xff]
    %v1041 = vld [vmem:[%s993 + $0x178] sm:$0xff]
    %v1042 = vld [vmem:[%s993 + $0x180] sm:$0xff]
    %v1043 = vld [vmem:[%s993 + $0x188] sm:$0xff]
    %v1044 = vld [vmem:[%s993 + $0x190] sm:$0xff]
    %v1045 = vld [vmem:[%s993 + $0x198] sm:$0xff]
    %v1046 = vld [vmem:[%s993 + $0x1a0] sm:$0xff]
    %v1047 = vld [vmem:[%s993 + $0x1a8] sm:$0xff]
    %v1048 = vld [vmem:[%s993 + $0x1b0] sm:$0xff]
    %v1049 = vld [vmem:[%s993 + $0x1b8] sm:$0xff]
    %v1050 = vld [vmem:[%s993 + $0x1c0] sm:$0xff]
    %v1051 = vld [vmem:[%s993 + $0x1c8] sm:$0xff]
    %v1052 = vld [vmem:[%s993 + $0x1d0] sm:$0xff]
    %v1053 = vld [vmem:[%s993 + $0x1d8] sm:$0xff]
    %v1054 = vld [vmem:[%s993 + $0x1e0] sm:$0xff]
    %v1055 = vld [vmem:[%s993 + $0x1e8] sm:$0xff]
    %v1056 = vld [vmem:[%s993 + $0x1f0] sm:$0xff]
    %v1057 = vld [vmem:[%s993 + $0x1f8] sm:$0xff]
    %v1058 = vld [vmem:[%s993 + $0x200] sm:$0xff]
    %v1059 = vld [vmem:[%s993 + $0x208] sm:$0xff]
    %v1060 = vld [vmem:[%s993 + $0x210] sm:$0xff]
    %v1061 = vld [vmem:[%s993 + $0x218] sm:$0xff]
    %v1062 = vld [vmem:[%s993 + $0x220] sm:$0xff]
    %v1063 = vld [vmem:[%s993 + $0x228] sm:$0xff]
    %v1064 = vld [vmem:[%s993 + $0x230] sm:$0xff]
    %v1065 = vld [vmem:[%s993 + $0x238] sm:$0xff]
    %v1066 = vld [vmem:[%s993 + $0x240] sm:$0xff]
    %v1067 = vld [vmem:[%s993 + $0x248] sm:$0xff]
    %v1068 = vld [vmem:[%s993 + $0x250] sm:$0xff]
    %v1069 = vld [vmem:[%s993 + $0x258] sm:$0xff]
    %v1070 = vld [vmem:[%s993 + $0x260] sm:$0xff]
    %v1071 = vld [vmem:[%s993 + $0x268] sm:$0xff]
    %v1072 = vld [vmem:[%s993 + $0x270] sm:$0xff]
    %v1073 = vld [vmem:[%s993 + $0x278] sm:$0xff]
    %v1074 = vld [vmem:[%s993 + $0x280] sm:$0xff]
    %v1075 = vld [vmem:[%s993 + $0x288] sm:$0xff]
    %v1076 = vld [vmem:[%s993 + $0x290] sm:$0xff]
    %v1077 = vld [vmem:[%s993 + $0x298] sm:$0xff]
    %v1078 = vld [vmem:[%s993 + $0x2a0] sm:$0xff]
    %v1079 = vld [vmem:[%s993 + $0x2a8] sm:$0xff]
    %v1080 = vld [vmem:[%s993 + $0x2b0] sm:$0xff]
    %v1081 = vld [vmem:[%s993 + $0x2b8] sm:$0xff]
    %v1082 = vld [vmem:[%s993 + $0x2c0] sm:$0xff]
    %v1083 = vld [vmem:[%s993 + $0x2c8] sm:$0xff]
    %v1084 = vld [vmem:[%s993 + $0x2d0] sm:$0xff]
    %v1085 = vld [vmem:[%s993 + $0x2d8] sm:$0xff]
    %v1086 = vld [vmem:[%s993 + $0x2e0] sm:$0xff]
    %v1087 = vld [vmem:[%s993 + $0x2e8] sm:$0xff]
    %v1088 = vld [vmem:[%s993 + $0x2f0] sm:$0xff]
    %v1089 = vld [vmem:[%s993 + $0x2f8] sm:$0xff]
    %v1090 = vld [vmem:[%s993 + $0x300] sm:$0xff]
    %v1091 = vld [vmem:[%s993 + $0x308] sm:$0xff]
    %v1092 = vld [vmem:[%s993 + $0x310] sm:$0xff]
    %v1093 = vld [vmem:[%s993 + $0x318] sm:$0xff]
    %v1094 = vld [vmem:[%s993 + $0x320] sm:$0xff]
    %v1095 = vld [vmem:[%s993 + $0x328] sm:$0xff]
    %v1096 = vld [vmem:[%s993 + $0x330] sm:$0xff]
    %v1097 = vld [vmem:[%s993 + $0x338] sm:$0xff]
    %v1098 = vld [vmem:[%s993 + $0x340] sm:$0xff]
    %v1099 = vld [vmem:[%s993 + $0x348] sm:$0xff]
    %v1100 = vld [vmem:[%s993 + $0x350] sm:$0xff]
    %v1101 = vld [vmem:[%s993 + $0x358] sm:$0xff]
    %v1102 = vld [vmem:[%s993 + $0x360] sm:$0xff]
    %v1103 = vld [vmem:[%s993 + $0x368] sm:$0xff]
    %v1104 = vld [vmem:[%s993 + $0x370] sm:$0xff]
    %v1105 = vld [vmem:[%s993 + $0x378] sm:$0xff]
    %v1106 = vld [vmem:[%s993 + $0x380] sm:$0xff]
    %v1107 = vld [vmem:[%s993 + $0x388] sm:$0xff]
    %v1108 = vld [vmem:[%s993 + $0x390] sm:$0xff]
    %v1109 = vld [vmem:[%s993 + $0x398] sm:$0xff]
    %v1110 = vld [vmem:[%s993 + $0x3a0] sm:$0xff]
    %v1111 = vld [vmem:[%s993 + $0x3a8] sm:$0xff]
    %v1112 = vld [vmem:[%s993 + $0x3b0] sm:$0xff]
    %v1113 = vld [vmem:[%s993 + $0x3b8] sm:$0xff]
    %v1114 = vld [vmem:[%s993 + $0x3c0] sm:$0xff]
    %v1115 = vld [vmem:[%s993 + $0x3c8] sm:$0xff]
    %v1116 = vld [vmem:[%s993 + $0x3d0] sm:$0xff]
    %v1117 = vld [vmem:[%s993 + $0x3d8] sm:$0xff]
    %v1118 = vld [vmem:[%s993 + $0x3e0] sm:$0xff]
    %v1119 = vld [vmem:[%s993 + $0x3e8] sm:$0xff]
    %v1120 = vld [vmem:[%s993 + $0x3f0] sm:$0xff]
    %v1121 = vld [vmem:[%s993 + $0x3f8] sm:$0xff]
    %1122 = vmatpush.msra.mxu0 %v1024
    %1123 = vmatpush.msra.mxu0 %v1022
    %1124 = vmatpush.msra.mxu0 %v1020
    %1125 = vmatpush.msra.mxu0 %v1018
    %1126 = vmatpush.msra.mxu0 %v1016
    %1127 = vmatpush.msra.mxu0 %v1014
    %1128 = vmatpush.msra.mxu0 %v1012
    %1129 = vmatpush.msra.mxu0 %v1010
    %1130 = vmatpush.msra.mxu0 %v1008
    %1131 = vmatpush.msra.mxu0 %v1006
    %1132 = vmatpush.msra.mxu0 %v1004
    %1133 = vmatpush.msra.mxu0 %v1002
    %1134 = vmatpush.msra.mxu0 %v1000
    %1135 = vmatpush.msra.mxu0 %v998
    %1136 = vmatpush.msra.mxu0 %v996
    %1137 = vmatpush.msra.mxu0 %v994
    %1138 = vmatmul.f32.gmra.mxu0 %v118
    %v1139 = vpop.f32.mrf.mxu0
    %v1140 = vadd.f32 0.0, %v1139
    %1141 = vdwg.mxu0
    %1142 = vmatpush.msra.mxu0 %v1056
    %1143 = vmatpush.msra.mxu0 %v1054
    %1144 = vmatpush.msra.mxu0 %v1052
    %1145 = vmatpush.msra.mxu0 %v1050
    %1146 = vmatpush.msra.mxu0 %v1048
    %1147 = vmatpush.msra.mxu0 %v1046
    %1148 = vmatpush.msra.mxu0 %v1044
    %1149 = vmatpush.msra.mxu0 %v1042
    %1150 = vmatpush.msra.mxu0 %v1040
    %1151 = vmatpush.msra.mxu0 %v1038
    %1152 = vmatpush.msra.mxu0 %v1036
    %1153 = vmatpush.msra.mxu0 %v1034
    %1154 = vmatpush.msra.mxu0 %v1032
    %1155 = vmatpush.msra.mxu0 %v1030
    %1156 = vmatpush.msra.mxu0 %v1028
    %1157 = vmatpush.msra.mxu0 %v1026
    %1158 = vmatmul.f32.gmra.mxu0 %v119
    %v1159 = vpop.f32.mrf.mxu0
    %v1160 = vadd.f32 %v1140, %v1159
    %1161 = vdwg.mxu0
    %1162 = vmatpush.msra.mxu0 %v1088
    %1163 = vmatpush.msra.mxu0 %v1086
    %1164 = vmatpush.msra.mxu0 %v1084
    %1165 = vmatpush.msra.mxu0 %v1082
    %1166 = vmatpush.msra.mxu0 %v1080
    %1167 = vmatpush.msra.mxu0 %v1078
    %1168 = vmatpush.msra.mxu0 %v1076
    %1169 = vmatpush.msra.mxu0 %v1074
    %1170 = vmatpush.msra.mxu0 %v1072
    %1171 = vmatpush.msra.mxu0 %v1070
    %1172 = vmatpush.msra.mxu0 %v1068
    %1173 = vmatpush.msra.mxu0 %v1066
    %1174 = vmatpush.msra.mxu0 %v1064
    %1175 = vmatpush.msra.mxu0 %v1062
    %1176 = vmatpush.msra.mxu0 %v1060
    %1177 = vmatpush.msra.mxu0 %v1058
    %1178 = vmatmul.f32.gmra.mxu0 %v120
    %v1179 = vpop.f32.mrf.mxu0
    %v1180 = vadd.f32 %v1160, %v1179
    %1181 = vdwg.mxu0
    %1182 = vmatpush.msra.mxu0 %v1120
    %1183 = vmatpush.msra.mxu0 %v1118
    %1184 = vmatpush.msra.mxu0 %v1116
    %1185 = vmatpush.msra.mxu0 %v1114
    %1186 = vmatpush.msra.mxu0 %v1112
    %1187 = vmatpush.msra.mxu0 %v1110
    %1188 = vmatpush.msra.mxu0 %v1108
    %1189 = vmatpush.msra.mxu0 %v1106
    %1190 = vmatpush.msra.mxu0 %v1104
    %1191 = vmatpush.msra.mxu0 %v1102
    %1192 = vmatpush.msra.mxu0 %v1100
    %1193 = vmatpush.msra.mxu0 %v1098
    %1194 = vmatpush.msra.mxu0 %v1096
    %1195 = vmatpush.msra.mxu0 %v1094
    %1196 = vmatpush.msra.mxu0 %v1092
    %1197 = vmatpush.msra.mxu0 %v1090
    %1198 = vmatmul.f32.gmra.mxu0 %v121
    %v1199 = vpop.f32.mrf.mxu0
    %v1200 = vadd.f32 %v1180, %v1199
    %1201 = vdwg.mxu0
    %1202 = vmatpush.msra.mxu0 %v1025
    %1203 = vmatpush.msra.mxu0 %v1023
    %1204 = vmatpush.msra.mxu0 %v1021
    %1205 = vmatpush.msra.mxu0 %v1019
    %1206 = vmatpush.msra.mxu0 %v1017
    %1207 = vmatpush.msra.mxu0 %v1015
    %1208 = vmatpush.msra.mxu0 %v1013
    %1209 = vmatpush.msra.mxu0 %v1011
    %1210 = vmatpush.msra.mxu0 %v1009
    %1211 = vmatpush.msra.mxu0 %v1007
    %1212 = vmatpush.msra.mxu0 %v1005
    %1213 = vmatpush.msra.mxu0 %v1003
    %1214 = vmatpush.msra.mxu0 %v1001
    %1215 = vmatpush.msra.mxu0 %v999
    %1216 = vmatpush.msra.mxu0 %v997
    %1217 = vmatpush.msra.mxu0 %v995
    %1218 = vmatmul.f32.gmra.mxu0 %v118
    %v1219 = vpop.f32.mrf.mxu0
    %v1220 = vadd.f32 0.0, %v1219
    %1221 = vdwg.mxu0
    %1222 = vmatpush.msra.mxu0 %v1057
    %1223 = vmatpush.msra.mxu0 %v1055
    %1224 = vmatpush.msra.mxu0 %v1053
    %1225 = vmatpush.msra.mxu0 %v1051
    %1226 = vmatpush.msra.mxu0 %v1049
    %1227 = vmatpush.msra.mxu0 %v1047
    %1228 = vmatpush.msra.mxu0 %v1045
    %1229 = vmatpush.msra.mxu0 %v1043
    %1230 = vmatpush.msra.mxu0 %v1041
    %1231 = vmatpush.msra.mxu0 %v1039
    %1232 = vmatpush.msra.mxu0 %v1037
    %1233 = vmatpush.msra.mxu0 %v1035
    %1234 = vmatpush.msra.mxu0 %v1033
    %1235 = vmatpush.msra.mxu0 %v1031
    %1236 = vmatpush.msra.mxu0 %v1029
    %1237 = vmatpush.msra.mxu0 %v1027
    %1238 = vmatmul.f32.gmra.mxu0 %v119
    %v1239 = vpop.f32.mrf.mxu0
    %v1240 = vadd.f32 %v1220, %v1239
    %1241 = vdwg.mxu0
    %1242 = vmatpush.msra.mxu0 %v1089
    %1243 = vmatpush.msra.mxu0 %v1087
    %1244 = vmatpush.msra.mxu0 %v1085
    %1245 = vmatpush.msra.mxu0 %v1083
    %1246 = vmatpush.msra.mxu0 %v1081
    %1247 = vmatpush.msra.mxu0 %v1079
    %1248 = vmatpush.msra.mxu0 %v1077
    %1249 = vmatpush.msra.mxu0 %v1075
    %1250 = vmatpush.msra.mxu0 %v1073
    %1251 = vmatpush.msra.mxu0 %v1071
    %1252 = vmatpush.msra.mxu0 %v1069
    %1253 = vmatpush.msra.mxu0 %v1067
    %1254 = vmatpush.msra.mxu0 %v1065
    %1255 = vmatpush.msra.mxu0 %v1063
    %1256 = vmatpush.msra.mxu0 %v1061
    %1257 = vmatpush.msra.mxu0 %v1059
    %1258 = vmatmul.f32.gmra.mxu0 %v120
    %v1259 = vpop.f32.mrf.mxu0
    %v1260 = vadd.f32 %v1240, %v1259
    %1261 = vdwg.mxu0
    %1262 = vmatpush.msra.mxu0 %v1121
    %1263 = vmatpush.msra.mxu0 %v1119
    %1264 = vmatpush.msra.mxu0 %v1117
    %1265 = vmatpush.msra.mxu0 %v1115
    %1266 = vmatpush.msra.mxu0 %v1113
    %1267 = vmatpush.msra.mxu0 %v1111
    %1268 = vmatpush.msra.mxu0 %v1109
    %1269 = vmatpush.msra.mxu0 %v1107
    %1270 = vmatpush.msra.mxu0 %v1105
    %1271 = vmatpush.msra.mxu0 %v1103
    %1272 = vmatpush.msra.mxu0 %v1101
    %1273 = vmatpush.msra.mxu0 %v1099
    %1274 = vmatpush.msra.mxu0 %v1097
    %1275 = vmatpush.msra.mxu0 %v1095
    %1276 = vmatpush.msra.mxu0 %v1093
    %1277 = vmatpush.msra.mxu0 %v1091
    %1278 = vmatmul.f32.gmra.mxu0 %v121
    %v1279 = vpop.f32.mrf.mxu0
    %v1280 = vadd.f32 %v1260, %v1279
    %1281 = vdwg.mxu0
    %v1283 = vperm.slane %v122, 0
    %v1284 = vperm.slane %v122, 1
    %v1287 = vadd.f32 %v333, %v1283
    %v1288 = vadd.f32 %v413, %v1284
    %v1289 = vadd.f32 %v622, %v1283
    %v1290 = vadd.f32 %v702, %v1284
    %v1291 = vadd.f32 %v911, %v1283
    %v1292 = vadd.f32 %v991, %v1284
    %v1293 = vadd.f32 %v1200, %v1283
    %v1294 = vadd.f32 %v1280, %v1284
    %v1295 = vadd.f32 %v1287, %v1289
    %v1296 = vadd.f32 %v1295, %v1291
    %v1297 = vadd.f32 %v1296, %v1293
    %v1298 = vrot.slane %v1297, 4
    %v1299 = vadd.f32 %v1297, %v1298
    %v1300 = vrot.slane %v1299, 2
    %v1301 = vadd.f32 %v1299, %v1300
    %v1302 = vrot.slane %v1301, 1
    %v1303 = vadd.f32 %v1301, %v1302
    %v1304 = vadd.f32 %v1288, %v1290
    %v1305 = vadd.f32 %v1304, %v1292
    %v1306 = vadd.f32 %v1305, %v1294
    %v1307 = vrot.slane %v1306, 4
    %v1308 = vadd.f32 %v1306, %v1307
    %v1309 = vrot.slane %v1308, 2
    %v1310 = vadd.f32 %v1308, %v1309
    %v1311 = vrot.slane %v1310, 1
    %v1312 = vadd.f32 %v1310, %v1311
    %v1313 = vrcp.pop 32.0
    %v1314 = vmul.f32 32.0, %v1313
    %v1315 = vsub.f32 1.0, %v1314
    %v1316 = vmul.f32 %v1313, %v1315
    %v1317 = vadd.f32 %v1313, %v1316
    %vm1318 = vweird.f32 %v1313
    %v1319 = vsel %vm1318, %v1313, %v1317
    %v1320 = vmul.f32 %v1303, %v1319
    %v1321 = vmul.f32 %v1312, %v1319
    %v1322 = vsub.f32 %v1287, %v1320
    %v1323 = vsub.f32 %v1288, %v1321
    %v1324 = vsub.f32 %v1289, %v1320
    %v1325 = vsub.f32 %v1290, %v1321
    %v1326 = vsub.f32 %v1291, %v1320
    %v1327 = vsub.f32 %v1292, %v1321
    %v1328 = vsub.f32 %v1293, %v1320
    %v1329 = vsub.f32 %v1294, %v1321
    %v1330 = vmul.f32 %v1322, %v1322
    %v1331 = vmul.f32 %v1323, %v1323
    %v1332 = vmul.f32 %v1324, %v1324
    %v1333 = vmul.f32 %v1325, %v1325
    %v1334 = vmul.f32 %v1326, %v1326
    %v1335 = vmul.f32 %v1327, %v1327
    %v1336 = vmul.f32 %v1328, %v1328
    %v1337 = vmul.f32 %v1329, %v1329
    %v1338 = vadd.f32 %v1330, %v1332
    %v1339 = vadd.f32 %v1338, %v1334
    %v1340 = vadd.f32 %v1339, %v1336
    %v1341 = vrot.slane %v1340, 4
    %v1342 = vadd.f32 %v1340, %v1341
    %v1343 = vrot.slane %v1342, 2
    %v1344 = vadd.f32 %v1342, %v1343
    %v1345 = vrot.slane %v1344, 1
    %v1346 = vadd.f32 %v1344, %v1345
    %v1347 = vadd.f32 %v1331, %v1333
    %v1348 = vadd.f32 %v1347, %v1335
    %v1349 = vadd.f32 %v1348, %v1337
    %v1350 = vrot.slane %v1349, 4
    %v1351 = vadd.f32 %v1349, %v1350
    %v1352 = vrot.slane %v1351, 2
    %v1353 = vadd.f32 %v1351, %v1352
    %v1354 = vrot.slane %v1353, 1
    %v1355 = vadd.f32 %v1353, %v1354
    %v1356 = vmul.f32 %v1346, %v1319
    %v1357 = vmul.f32 %v1355, %v1319
    %v1358 = vadd.f32 %v1356, 1e-05
    %v1359 = vadd.f32 %v1357, 1e-05
    %v1360 = vrsqrt.pop %v1358
    %v1361 = vmul.f32 %v1360, %v1358
    %v1362 = vmul.f32 %v1361, %v1360
    %v1363 = vmul.f32 0.5, %v1362
    %v1364 = vsub.f32 1.5, %v1363
    %v1365 = vmul.f32 %v1360, %v1364
    %vm1366 = vweird.f32 %v1358
    %vm1367 = vweird.f32 %v1360
    %vm1368 = vmor %vm1366, %vm1367
    %v1369 = vsel %vm1368, %v1360, %v1365
    %v1370 = vrsqrt.pop %v1359
    %v1371 = vmul.f32 %v1370, %v1359
    %v1372 = vmul.f32 %v1371, %v1370
    %v1373 = vmul.f32 0.5, %v1372
    %v1374 = vsub.f32 1.5, %v1373
    %v1375 = vmul.f32 %v1370, %v1374
    %vm1376 = vweird.f32 %v1359
    %vm1377 = vweird.f32 %v1370
    %vm1378 = vmor %vm1376, %vm1377
    %v1379 = vsel %vm1378, %v1370, %v1375
    %v1382 = vrot.slane %v1379, 7
    %vm1383 = vcmask 1040384
    %v1384 = vsel %vm1383, %v1369, %v1382
    %v1386 = vmul.f32 %v124, %v1384
    %v1388 = vperm.slane %v1386, 0
    %v1389 = vperm.slane %v1386, 1
    %v1392 = vmul.f32 %v1320, %v1388
    %v1393 = vmul.f32 %v1321, %v1389
    %v1396 = vrot.slane %v1393, 7
    %v1397 = vsel %vm1383, %v1392, %v1396
    %v1399 = vsub.f32 %v126, %v1397
    %v1400 = vmul.f32 %v1287, %v1388
    %v1401 = vmul.f32 %v1288, %v1389
    %v1402 = vmul.f32 %v1289, %v1388
    %v1403 = vmul.f32 %v1290, %v1389
    %v1404 = vmul.f32 %v1291, %v1388
    %v1405 = vmul.f32 %v1292, %v1389
    %v1406 = vmul.f32 %v1293, %v1388
    %v1407 = vmul.f32 %v1294, %v1389
    %v1409 = vperm.slane %v1399, 0
    %v1410 = vperm.slane %v1399, 1
    %v1413 = vadd.f32 %v1400, %v1409
    %v1414 = vadd.f32 %v1401, %v1410
    %v1415 = vadd.f32 %v1402, %v1409
    %v1416 = vadd.f32 %v1403, %v1410
    %v1417 = vadd.f32 %v1404, %v1409
    %v1418 = vadd.f32 %v1405, %v1410
    %v1419 = vadd.f32 %v1406, %v1409
    %v1420 = vadd.f32 %v1407, %v1410
    %v1421 = vmax.f32 %v1413, 0.0
    %v1422 = vmax.f32 %v1414, 0.0
    %v1423 = vmax.f32 %v1415, 0.0
    %v1424 = vmax.f32 %v1416, 0.0
    %v1425 = vmax.f32 %v1417, 0.0
    %v1426 = vmax.f32 %v1418, 0.0
    %v1427 = vmax.f32 %v1419, 0.0
    %v1428 = vmax.f32 %v1420, 0.0
    %1429 = vst [vmem:[#allocation2] sm:$0xff] %v1421
    %1430 = vst [vmem:[#allocation2 + $0x8] sm:$0xff] %v1422
    %1431 = vst [vmem:[#allocation2 + $0x10] sm:$0xff] %v1423
    %1432 = vst [vmem:[#allocation2 + $0x18] sm:$0xff] %v1424
    %1433 = vst [vmem:[#allocation2 + $0x20] sm:$0xff] %v1425
    %1434 = vst [vmem:[#allocation2 + $0x28] sm:$0xff] %v1426
    %1435 = vst [vmem:[#allocation2 + $0x30] sm:$0xff] %v1427
    %1436 = vst [vmem:[#allocation2 + $0x38] sm:$0xff] %v1428
    %v1437 = vld [vmem:[#allocation2] sm:$0xff]
    %v1438 = vld [vmem:[#allocation2 + $0x8] sm:$0xff]
    %v1439 = vld [vmem:[#allocation2 + $0x10] sm:$0xff]
    %v1440 = vld [vmem:[#allocation2 + $0x18] sm:$0xff]
    %v1441 = vld [vmem:[#allocation2 + $0x20] sm:$0xff]
    %v1442 = vld [vmem:[#allocation2 + $0x28] sm:$0xff]
    %v1443 = vld [vmem:[#allocation2 + $0x30] sm:$0xff]
    %v1444 = vld [vmem:[#allocation2 + $0x38] sm:$0xff]
    %v1445 = vld [vmem:[#allocation10] sm:$0x1]
    %v1446 = vld [vmem:[#allocation10 + $0x1] sm:$0x1]
    %v1447 = vld [vmem:[#allocation10 + $0x2] sm:$0x1]
    %v1448 = vld [vmem:[#allocation9] sm:$0xff]
    %v1449 = vld [vmem:[#allocation9 + $0x8] sm:$0xff]
    %v1450 = vld [vmem:[#allocation9 + $0x10] sm:$0xff]
    %v1451 = vld [vmem:[#allocation9 + $0x18] sm:$0xff]
    %v1452 = vld [vmem:[#allocation9 + $0x20] sm:$0xff]
    %v1453 = vld [vmem:[#allocation9 + $0x28] sm:$0xff]
    %v1454 = vld [vmem:[#allocation9 + $0x30] sm:$0xff]
    %v1455 = vld [vmem:[#allocation9 + $0x38] sm:$0xff]
    %v1456 = vld [vmem:[#allocation9 + $0x40] sm:$0xff]
    %v1457 = vld [vmem:[#allocation9 + $0x48] sm:$0xff]
    %v1458 = vld [vmem:[#allocation9 + $0x50] sm:$0xff]
    %v1459 = vld [vmem:[#allocation9 + $0x58] sm:$0xff]
    %v1460 = vld [vmem:[#allocation9 + $0x60] sm:$0xff]
    %v1461 = vld [vmem:[#allocation9 + $0x68] sm:$0xff]
    %v1462 = vld [vmem:[#allocation9 + $0x70] sm:$0xff]
    %v1463 = vld [vmem:[#allocation9 + $0x78] sm:$0xff]
    %v1464 = vld [vmem:[#allocation9 + $0x80] sm:$0xff]
    %v1465 = vld [vmem:[#allocation9 + $0x88] sm:$0xff]
    %v1466 = vld [vmem:[#allocation9 + $0x90] sm:$0xff]
    %v1467 = vld [vmem:[#allocation9 + $0x98] sm:$0xff]
    %v1468 = vld [vmem:[#allocation9 + $0xa0] sm:$0xff]
    %v1469 = vld [vmem:[#allocation9 + $0xa8] sm:$0xff]
    %v1470 = vld [vmem:[#allocation9 + $0xb0] sm:$0xff]
    %v1471 = vld [vmem:[#allocation9 + $0xb8] sm:$0xff]
    %v1472 = vld [vmem:[#allocation9 + $0xc0] sm:$0xff]
    %v1473 = vld [vmem:[#allocation9 + $0xc8] sm:$0xff]
    %v1474 = vld [vmem:[#allocation9 + $0xd0] sm:$0xff]
    %v1475 = vld [vmem:[#allocation9 + $0xd8] sm:$0xff]
    %v1476 = vld [vmem:[#allocation9 + $0xe0] sm:$0xff]
    %v1477 = vld [vmem:[#allocation9 + $0xe8] sm:$0xff]
    %v1478 = vld [vmem:[#allocation9 + $0xf0] sm:$0xff]
    %v1479 = vld [vmem:[#allocation9 + $0xf8] sm:$0xff]
    %1480 = vmatpush.msra.mxu0 %v1463
    %1481 = vmatpush.msra.mxu0 %v1462
    %1482 = vmatpush.msra.mxu0 %v1461
    %1483 = vmatpush.msra.mxu0 %v1460
    %1484 = vmatpush.msra.mxu0 %v1459
    %1485 = vmatpush.msra.mxu0 %v1458
    %1486 = vmatpush.msra.mxu0 %v1457
    %1487 = vmatpush.msra.mxu0 %v1456
    %1488 = vmatpush.msra.mxu0 %v1455
    %1489 = vmatpush.msra.mxu0 %v1454
    %1490 = vmatpush.msra.mxu0 %v1453
    %1491 = vmatpush.msra.mxu0 %v1452
    %1492 = vmatpush.msra.mxu0 %v1451
    %1493 = vmatpush.msra.mxu0 %v1450
    %1494 = vmatpush.msra.mxu0 %v1449
    %1495 = vmatpush.msra.mxu0 %v1448
    %1496 = vmatmul.f32.gmra.mxu0 %v1437
    %v1497 = vpop.f32.mrf.mxu0
    %v1498 = vadd.f32 0.0, %v1497
    %1499 = vmatmul.f32.gmra.mxu0 %v1439
    %v1500 = vpop.f32.mrf.mxu0
    %v1501 = vadd.f32 0.0, %v1500
    %1502 = vmatmul.f32.gmra.mxu0 %v1441
    %v1503 = vpop.f32.mrf.mxu0
    %v1504 = vadd.f32 0.0, %v1503
    %1505 = vmatmul.f32.gmra.mxu0 %v1443
    %v1506 = vpop.f32.mrf.mxu0
    %v1507 = vadd.f32 0.0, %v1506
    %1508 = vdwg.mxu0
    %1509 = vmatpush.msra.mxu0 %v1479
    %1510 = vmatpush.msra.mxu0 %v1478
    %1511 = vmatpush.msra.mxu0 %v1477
    %1512 = vmatpush.msra.mxu0 %v1476
    %1513 = vmatpush.msra.mxu0 %v1475
    %1514 = vmatpush.msra.mxu0 %v1474
    %1515 = vmatpush.msra.mxu0 %v1473
    %1516 = vmatpush.msra.mxu0 %v1472
    %1517 = vmatpush.msra.mxu0 %v1471
    %1518 = vmatpush.msra.mxu0 %v1470
    %1519 = vmatpush.msra.mxu0 %v1469
    %1520 = vmatpush.msra.mxu0 %v1468
    %1521 = vmatpush.msra.mxu0 %v1467
    %1522 = vmatpush.msra.mxu0 %v1466
    %1523 = vmatpush.msra.mxu0 %v1465
    %1524 = vmatpush.msra.mxu0 %v1464
    %1525 = vmatmul.f32.gmra.mxu0 %v1438
    %v1526 = vpop.f32.mrf.mxu0
    %v1527 = vadd.f32 %v1498, %v1526
    %1528 = vmatmul.f32.gmra.mxu0 %v1440
    %v1529 = vpop.f32.mrf.mxu0
    %v1530 = vadd.f32 %v1501, %v1529
    %1531 = vmatmul.f32.gmra.mxu0 %v1442
    %v1532 = vpop.f32.mrf.mxu0
    %v1533 = vadd.f32 %v1504, %v1532
    %1534 = vmatmul.f32.gmra.mxu0 %v1444
    %v1535 = vpop.f32.mrf.mxu0
    %v1536 = vadd.f32 %v1507, %v1535
    %1537 = vdwg.mxu0
    %s1538 = scalar_lea.vmem [#allocation9], 256
    %v1539 = vld [vmem:[%s1538] sm:$0xff]
    %v1540 = vld [vmem:[%s1538 + $0x8] sm:$0xff]
    %v1541 = vld [vmem:[%s1538 + $0x10] sm:$0xff]
    %v1542 = vld [vmem:[%s1538 + $0x18] sm:$0xff]
    %v1543 = vld [vmem:[%s1538 + $0x20] sm:$0xff]
    %v1544 = vld [vmem:[%s1538 + $0x28] sm:$0xff]
    %v1545 = vld [vmem:[%s1538 + $0x30] sm:$0xff]
    %v1546 = vld [vmem:[%s1538 + $0x38] sm:$0xff]
    %v1547 = vld [vmem:[%s1538 + $0x40] sm:$0xff]
    %v1548 = vld [vmem:[%s1538 + $0x48] sm:$0xff]
    %v1549 = vld [vmem:[%s1538 + $0x50] sm:$0xff]
    %v1550 = vld [vmem:[%s1538 + $0x58] sm:$0xff]
    %v1551 = vld [vmem:[%s1538 + $0x60] sm:$0xff]
    %v1552 = vld [vmem:[%s1538 + $0x68] sm:$0xff]
    %v1553 = vld [vmem:[%s1538 + $0x70] sm:$0xff]
    %v1554 = vld [vmem:[%s1538 + $0x78] sm:$0xff]
    %v1555 = vld [vmem:[%s1538 + $0x80] sm:$0xff]
    %v1556 = vld [vmem:[%s1538 + $0x88] sm:$0xff]
    %v1557 = vld [vmem:[%s1538 + $0x90] sm:$0xff]
    %v1558 = vld [vmem:[%s1538 + $0x98] sm:$0xff]
    %v1559 = vld [vmem:[%s1538 + $0xa0] sm:$0xff]
    %v1560 = vld [vmem:[%s1538 + $0xa8] sm:$0xff]
    %v1561 = vld [vmem:[%s1538 + $0xb0] sm:$0xff]
    %v1562 = vld [vmem:[%s1538 + $0xb8] sm:$0xff]
    %v1563 = vld [vmem:[%s1538 + $0xc0] sm:$0xff]
    %v1564 = vld [vmem:[%s1538 + $0xc8] sm:$0xff]
    %v1565 = vld [vmem:[%s1538 + $0xd0] sm:$0xff]
    %v1566 = vld [vmem:[%s1538 + $0xd8] sm:$0xff]
    %v1567 = vld [vmem:[%s1538 + $0xe0] sm:$0xff]
    %v1568 = vld [vmem:[%s1538 + $0xe8] sm:$0xff]
    %v1569 = vld [vmem:[%s1538 + $0xf0] sm:$0xff]
    %v1570 = vld [vmem:[%s1538 + $0xf8] sm:$0xff]
    %1571 = vmatpush.msra.mxu0 %v1554
    %1572 = vmatpush.msra.mxu0 %v1553
    %1573 = vmatpush.msra.mxu0 %v1552
    %1574 = vmatpush.msra.mxu0 %v1551
    %1575 = vmatpush.msra.mxu0 %v1550
    %1576 = vmatpush.msra.mxu0 %v1549
    %1577 = vmatpush.msra.mxu0 %v1548
    %1578 = vmatpush.msra.mxu0 %v1547
    %1579 = vmatpush.msra.mxu0 %v1546
    %1580 = vmatpush.msra.mxu0 %v1545
    %1581 = vmatpush.msra.mxu0 %v1544
    %1582 = vmatpush.msra.mxu0 %v1543
    %1583 = vmatpush.msra.mxu0 %v1542
    %1584 = vmatpush.msra.mxu0 %v1541
    %1585 = vmatpush.msra.mxu0 %v1540
    %1586 = vmatpush.msra.mxu0 %v1539
    %1587 = vmatmul.f32.gmra.mxu0 %v1437
    %v1588 = vpop.f32.mrf.mxu0
    %v1589 = vadd.f32 0.0, %v1588
    %1590 = vmatmul.f32.gmra.mxu0 %v1439
    %v1591 = vpop.f32.mrf.mxu0
    %v1592 = vadd.f32 0.0, %v1591
    %1593 = vmatmul.f32.gmra.mxu0 %v1441
    %v1594 = vpop.f32.mrf.mxu0
    %v1595 = vadd.f32 0.0, %v1594
    %1596 = vmatmul.f32.gmra.mxu0 %v1443
    %v1597 = vpop.f32.mrf.mxu0
    %v1598 = vadd.f32 0.0, %v1597
    %1599 = vdwg.mxu0
    %1600 = vmatpush.msra.mxu0 %v1570
    %1601 = vmatpush.msra.mxu0 %v1569
    %1602 = vmatpush.msra.mxu0 %v1568
    %1603 = vmatpush.msra.mxu0 %v1567
    %1604 = vmatpush.msra.mxu0 %v1566
    %1605 = vmatpush.msra.mxu0 %v1565
    %1606 = vmatpush.msra.mxu0 %v1564
    %1607 = vmatpush.msra.mxu0 %v1563
    %1608 = vmatpush.msra.mxu0 %v1562
    %1609 = vmatpush.msra.mxu0 %v1561
    %1610 = vmatpush.msra.mxu0 %v1560
    %1611 = vmatpush.msra.mxu0 %v1559
    %1612 = vmatpush.msra.mxu0 %v1558
    %1613 = vmatpush.msra.mxu0 %v1557
    %1614 = vmatpush.msra.mxu0 %v1556
    %1615 = vmatpush.msra.mxu0 %v1555
    %1616 = vmatmul.f32.gmra.mxu0 %v1438
    %v1617 = vpop.f32.mrf.mxu0
    %v1618 = vadd.f32 %v1589, %v1617
    %1619 = vmatmul.f32.gmra.mxu0 %v1440
    %v1620 = vpop.f32.mrf.mxu0
    %v1621 = vadd.f32 %v1592, %v1620
    %1622 = vmatmul.f32.gmra.mxu0 %v1442
    %v1623 = vpop.f32.mrf.mxu0
    %v1624 = vadd.f32 %v1595, %v1623
    %1625 = vmatmul.f32.gmra.mxu0 %v1444
    %v1626 = vpop.f32.mrf.mxu0
    %v1627 = vadd.f32 %v1598, %v1626
    %1628 = vdwg.mxu0
    %s1629 = scalar_lea.vmem [#allocation9], 512
    %v1630 = vld [vmem:[%s1629] sm:$0xff]
    %v1631 = vld [vmem:[%s1629 + $0x8] sm:$0xff]
    %v1632 = vld [vmem:[%s1629 + $0x10] sm:$0xff]
    %v1633 = vld [vmem:[%s1629 + $0x18] sm:$0xff]
    %v1634 = vld [vmem:[%s1629 + $0x20] sm:$0xff]
    %v1635 = vld [vmem:[%s1629 + $0x28] sm:$0xff]
    %v1636 = vld [vmem:[%s1629 + $0x30] sm:$0xff]
    %v1637 = vld [vmem:[%s1629 + $0x38] sm:$0xff]
    %v1638 = vld [vmem:[%s1629 + $0x40] sm:$0xff]
    %v1639 = vld [vmem:[%s1629 + $0x48] sm:$0xff]
    %v1640 = vld [vmem:[%s1629 + $0x50] sm:$0xff]
    %v1641 = vld [vmem:[%s1629 + $0x58] sm:$0xff]
    %v1642 = vld [vmem:[%s1629 + $0x60] sm:$0xff]
    %v1643 = vld [vmem:[%s1629 + $0x68] sm:$0xff]
    %v1644 = vld [vmem:[%s1629 + $0x70] sm:$0xff]
    %v1645 = vld [vmem:[%s1629 + $0x78] sm:$0xff]
    %v1646 = vld [vmem:[%s1629 + $0x80] sm:$0xff]
    %v1647 = vld [vmem:[%s1629 + $0x88] sm:$0xff]
    %v1648 = vld [vmem:[%s1629 + $0x90] sm:$0xff]
    %v1649 = vld [vmem:[%s1629 + $0x98] sm:$0xff]
    %v1650 = vld [vmem:[%s1629 + $0xa0] sm:$0xff]
    %v1651 = vld [vmem:[%s1629 + $0xa8] sm:$0xff]
    %v1652 = vld [vmem:[%s1629 + $0xb0] sm:$0xff]
    %v1653 = vld [vmem:[%s1629 + $0xb8] sm:$0xff]
    %v1654 = vld [vmem:[%s1629 + $0xc0] sm:$0xff]
    %v1655 = vld [vmem:[%s1629 + $0xc8] sm:$0xff]
    %v1656 = vld [vmem:[%s1629 + $0xd0] sm:$0xff]
    %v1657 = vld [vmem:[%s1629 + $0xd8] sm:$0xff]
    %v1658 = vld [vmem:[%s1629 + $0xe0] sm:$0xff]
    %v1659 = vld [vmem:[%s1629 + $0xe8] sm:$0xff]
    %v1660 = vld [vmem:[%s1629 + $0xf0] sm:$0xff]
    %v1661 = vld [vmem:[%s1629 + $0xf8] sm:$0xff]
    %1662 = vmatpush.msra.mxu0 %v1645
    %1663 = vmatpush.msra.mxu0 %v1644
    %1664 = vmatpush.msra.mxu0 %v1643
    %1665 = vmatpush.msra.mxu0 %v1642
    %1666 = vmatpush.msra.mxu0 %v1641
    %1667 = vmatpush.msra.mxu0 %v1640
    %1668 = vmatpush.msra.mxu0 %v1639
    %1669 = vmatpush.msra.mxu0 %v1638
    %1670 = vmatpush.msra.mxu0 %v1637
    %1671 = vmatpush.msra.mxu0 %v1636
    %1672 = vmatpush.msra.mxu0 %v1635
    %1673 = vmatpush.msra.mxu0 %v1634
    %1674 = vmatpush.msra.mxu0 %v1633
    %1675 = vmatpush.msra.mxu0 %v1632
    %1676 = vmatpush.msra.mxu0 %v1631
    %1677 = vmatpush.msra.mxu0 %v1630
    %1678 = vmatmul.f32.gmra.mxu0 %v1437
    %v1679 = vpop.f32.mrf.mxu0
    %v1680 = vadd.f32 0.0, %v1679
    %1681 = vmatmul.f32.gmra.mxu0 %v1439
    %v1682 = vpop.f32.mrf.mxu0
    %v1683 = vadd.f32 0.0, %v1682
    %1684 = vmatmul.f32.gmra.mxu0 %v1441
    %v1685 = vpop.f32.mrf.mxu0
    %v1686 = vadd.f32 0.0, %v1685
    %1687 = vmatmul.f32.gmra.mxu0 %v1443
    %v1688 = vpop.f32.mrf.mxu0
    %v1689 = vadd.f32 0.0, %v1688
    %1690 = vdwg.mxu0
    %1691 = vmatpush.msra.mxu0 %v1661
    %1692 = vmatpush.msra.mxu0 %v1660
    %1693 = vmatpush.msra.mxu0 %v1659
    %1694 = vmatpush.msra.mxu0 %v1658
    %1695 = vmatpush.msra.mxu0 %v1657
    %1696 = vmatpush.msra.mxu0 %v1656
    %1697 = vmatpush.msra.mxu0 %v1655
    %1698 = vmatpush.msra.mxu0 %v1654
    %1699 = vmatpush.msra.mxu0 %v1653
    %1700 = vmatpush.msra.mxu0 %v1652
    %1701 = vmatpush.msra.mxu0 %v1651
    %1702 = vmatpush.msra.mxu0 %v1650
    %1703 = vmatpush.msra.mxu0 %v1649
    %1704 = vmatpush.msra.mxu0 %v1648
    %1705 = vmatpush.msra.mxu0 %v1647
    %1706 = vmatpush.msra.mxu0 %v1646
    %1707 = vmatmul.f32.gmra.mxu0 %v1438
    %v1708 = vpop.f32.mrf.mxu0
    %v1709 = vadd.f32 %v1680, %v1708
    %1710 = vmatmul.f32.gmra.mxu0 %v1440
    %v1711 = vpop.f32.mrf.mxu0
    %v1712 = vadd.f32 %v1683, %v1711
    %1713 = vmatmul.f32.gmra.mxu0 %v1442
    %v1714 = vpop.f32.mrf.mxu0
    %v1715 = vadd.f32 %v1686, %v1714
    %1716 = vmatmul.f32.gmra.mxu0 %v1444
    %v1717 = vpop.f32.mrf.mxu0
    %v1718 = vadd.f32 %v1689, %v1717
    %1719 = vdwg.mxu0
    %s1720 = scalar_lea.vmem [#allocation9], 768
    %v1721 = vld [vmem:[%s1720] sm:$0xff]
    %v1722 = vld [vmem:[%s1720 + $0x8] sm:$0xff]
    %v1723 = vld [vmem:[%s1720 + $0x10] sm:$0xff]
    %v1724 = vld [vmem:[%s1720 + $0x18] sm:$0xff]
    %v1725 = vld [vmem:[%s1720 + $0x20] sm:$0xff]
    %v1726 = vld [vmem:[%s1720 + $0x28] sm:$0xff]
    %v1727 = vld [vmem:[%s1720 + $0x30] sm:$0xff]
    %v1728 = vld [vmem:[%s1720 + $0x38] sm:$0xff]
    %v1729 = vld [vmem:[%s1720 + $0x40] sm:$0xff]
    %v1730 = vld [vmem:[%s1720 + $0x48] sm:$0xff]
    %v1731 = vld [vmem:[%s1720 + $0x50] sm:$0xff]
    %v1732 = vld [vmem:[%s1720 + $0x58] sm:$0xff]
    %v1733 = vld [vmem:[%s1720 + $0x60] sm:$0xff]
    %v1734 = vld [vmem:[%s1720 + $0x68] sm:$0xff]
    %v1735 = vld [vmem:[%s1720 + $0x70] sm:$0xff]
    %v1736 = vld [vmem:[%s1720 + $0x78] sm:$0xff]
    %v1737 = vld [vmem:[%s1720 + $0x80] sm:$0xff]
    %v1738 = vld [vmem:[%s1720 + $0x88] sm:$0xff]
    %v1739 = vld [vmem:[%s1720 + $0x90] sm:$0xff]
    %v1740 = vld [vmem:[%s1720 + $0x98] sm:$0xff]
    %v1741 = vld [vmem:[%s1720 + $0xa0] sm:$0xff]
    %v1742 = vld [vmem:[%s1720 + $0xa8] sm:$0xff]
    %v1743 = vld [vmem:[%s1720 + $0xb0] sm:$0xff]
    %v1744 = vld [vmem:[%s1720 + $0xb8] sm:$0xff]
    %v1745 = vld [vmem:[%s1720 + $0xc0] sm:$0xff]
    %v1746 = vld [vmem:[%s1720 + $0xc8] sm:$0xff]
    %v1747 = vld [vmem:[%s1720 + $0xd0] sm:$0xff]
    %v1748 = vld [vmem:[%s1720 + $0xd8] sm:$0xff]
    %v1749 = vld [vmem:[%s1720 + $0xe0] sm:$0xff]
    %v1750 = vld [vmem:[%s1720 + $0xe8] sm:$0xff]
    %v1751 = vld [vmem:[%s1720 + $0xf0] sm:$0xff]
    %v1752 = vld [vmem:[%s1720 + $0xf8] sm:$0xff]
    %1753 = vmatpush.msra.mxu0 %v1736
    %1754 = vmatpush.msra.mxu0 %v1735
    %1755 = vmatpush.msra.mxu0 %v1734
    %1756 = vmatpush.msra.mxu0 %v1733
    %1757 = vmatpush.msra.mxu0 %v1732
    %1758 = vmatpush.msra.mxu0 %v1731
    %1759 = vmatpush.msra.mxu0 %v1730
    %1760 = vmatpush.msra.mxu0 %v1729
    %1761 = vmatpush.msra.mxu0 %v1728
    %1762 = vmatpush.msra.mxu0 %v1727
    %1763 = vmatpush.msra.mxu0 %v1726
    %1764 = vmatpush.msra.mxu0 %v1725
    %1765 = vmatpush.msra.mxu0 %v1724
    %1766 = vmatpush.msra.mxu0 %v1723
    %1767 = vmatpush.msra.mxu0 %v1722
    %1768 = vmatpush.msra.mxu0 %v1721
    %1769 = vmatmul.f32.gmra.mxu0 %v1437
    %v1770 = vpop.f32.mrf.mxu0
    %v1771 = vadd.f32 0.0, %v1770
    %1772 = vmatmul.f32.gmra.mxu0 %v1439
    %v1773 = vpop.f32.mrf.mxu0
    %v1774 = vadd.f32 0.0, %v1773
    %1775 = vmatmul.f32.gmra.mxu0 %v1441
    %v1776 = vpop.f32.mrf.mxu0
    %v1777 = vadd.f32 0.0, %v1776
    %1778 = vmatmul.f32.gmra.mxu0 %v1443
    %v1779 = vpop.f32.mrf.mxu0
    %v1780 = vadd.f32 0.0, %v1779
    %1781 = vdwg.mxu0
    %1782 = vmatpush.msra.mxu0 %v1752
    %1783 = vmatpush.msra.mxu0 %v1751
    %1784 = vmatpush.msra.mxu0 %v1750
    %1785 = vmatpush.msra.mxu0 %v1749
    %1786 = vmatpush.msra.mxu0 %v1748
    %1787 = vmatpush.msra.mxu0 %v1747
    %1788 = vmatpush.msra.mxu0 %v1746
    %1789 = vmatpush.msra.mxu0 %v1745
    %1790 = vmatpush.msra.mxu0 %v1744
    %1791 = vmatpush.msra.mxu0 %v1743
    %1792 = vmatpush.msra.mxu0 %v1742
    %1793 = vmatpush.msra.mxu0 %v1741
    %1794 = vmatpush.msra.mxu0 %v1740
    %1795 = vmatpush.msra.mxu0 %v1739
    %1796 = vmatpush.msra.mxu0 %v1738
    %1797 = vmatpush.msra.mxu0 %v1737
    %1798 = vmatmul.f32.gmra.mxu0 %v1438
    %v1799 = vpop.f32.mrf.mxu0
    %v1800 = vadd.f32 %v1771, %v1799
    %1801 = vmatmul.f32.gmra.mxu0 %v1440
    %v1802 = vpop.f32.mrf.mxu0
    %v1803 = vadd.f32 %v1774, %v1802
    %1804 = vmatmul.f32.gmra.mxu0 %v1442
    %v1805 = vpop.f32.mrf.mxu0
    %v1806 = vadd.f32 %v1777, %v1805
    %1807 = vmatmul.f32.gmra.mxu0 %v1444
    %v1808 = vpop.f32.mrf.mxu0
    %v1809 = vadd.f32 %v1780, %v1808
    %1810 = vdwg.mxu0
    %v1811 = vperm.slane %v1445, 0
    %v1812 = vadd.f32 %v1527, %v1811
    %v1813 = vadd.f32 %v1530, %v1811
    %v1814 = vadd.f32 %v1533, %v1811
    %v1815 = vadd.f32 %v1536, %v1811
    %v1816 = vadd.f32 %v1618, %v1811
    %v1817 = vadd.f32 %v1621, %v1811
    %v1818 = vadd.f32 %v1624, %v1811
    %v1819 = vadd.f32 %v1627, %v1811
    %v1820 = vadd.f32 %v1709, %v1811
    %v1821 = vadd.f32 %v1712, %v1811
    %v1822 = vadd.f32 %v1715, %v1811
    %v1823 = vadd.f32 %v1718, %v1811
    %v1824 = vadd.f32 %v1800, %v1811
    %v1825 = vadd.f32 %v1803, %v1811
    %v1826 = vadd.f32 %v1806, %v1811
    %v1827 = vadd.f32 %v1809, %v1811
    %v1828 = vadd.f32 %v1812, %v1813
    %v1829 = vadd.f32 %v1828, %v1814
    %v1830 = vadd.f32 %v1829, %v1815
    %v1831 = vadd.f32 %v1830, %v1816
    %v1832 = vadd.f32 %v1831, %v1817
    %v1833 = vadd.f32 %v1832, %v1818
    %v1834 = vadd.f32 %v1833, %v1819
    %v1835 = vadd.f32 %v1834, %v1820
    %v1836 = vadd.f32 %v1835, %v1821
    %v1837 = vadd.f32 %v1836, %v1822
    %v1838 = vadd.f32 %v1837, %v1823
    %v1839 = vadd.f32 %v1838, %v1824
    %v1840 = vadd.f32 %v1839, %v1825
    %v1841 = vadd.f32 %v1840, %v1826
    %v1842 = vadd.f32 %v1841, %v1827
    %v1843 = vrot.slane %v1842, 4
    %v1844 = vadd.f32 %v1842, %v1843
    %v1845 = vrot.slane %v1844, 2
    %v1846 = vadd.f32 %v1844, %v1845
    %v1847 = vrot.slane %v1846, 1
    %v1848 = vadd.f32 %v1846, %v1847
    %v1849 = vrcp.pop 128.0
    %v1850 = vmul.f32 128.0, %v1849
    %v1851 = vsub.f32 1.0, %v1850
    %v1852 = vmul.f32 %v1849, %v1851
    %v1853 = vadd.f32 %v1849, %v1852
    %vm1854 = vweird.f32 %v1849
    %v1855 = vsel %vm1854, %v1849, %v1853
    %v1856 = vmul.f32 %v1848, %v1855
    %v1857 = vsub.f32 %v1812, %v1856
    %v1858 = vsub.f32 %v1813, %v1856
    %v1859 = vsub.f32 %v1814, %v1856
    %v1860 = vsub.f32 %v1815, %v1856
    %v1861 = vsub.f32 %v1816, %v1856
    %v1862 = vsub.f32 %v1817, %v1856
    %v1863 = vsub.f32 %v1818, %v1856
    %v1864 = vsub.f32 %v1819, %v1856
    %v1865 = vsub.f32 %v1820, %v1856
    %v1866 = vsub.f32 %v1821, %v1856
    %v1867 = vsub.f32 %v1822, %v1856
    %v1868 = vsub.f32 %v1823, %v1856
    %v1869 = vsub.f32 %v1824, %v1856
    %v1870 = vsub.f32 %v1825, %v1856
    %v1871 = vsub.f32 %v1826, %v1856
    %v1872 = vsub.f32 %v1827, %v1856
    %v1873 = vmul.f32 %v1857, %v1857
    %v1874 = vmul.f32 %v1858, %v1858
    %v1875 = vmul.f32 %v1859, %v1859
    %v1876 = vmul.f32 %v1860, %v1860
    %v1877 = vmul.f32 %v1861, %v1861
    %v1878 = vmul.f32 %v1862, %v1862
    %v1879 = vmul.f32 %v1863, %v1863
    %v1880 = vmul.f32 %v1864, %v1864
    %v1881 = vmul.f32 %v1865, %v1865
    %v1882 = vmul.f32 %v1866, %v1866
    %v1883 = vmul.f32 %v1867, %v1867
    %v1884 = vmul.f32 %v1868, %v1868
    %v1885 = vmul.f32 %v1869, %v1869
    %v1886 = vmul.f32 %v1870, %v1870
    %v1887 = vmul.f32 %v1871, %v1871
    %v1888 = vmul.f32 %v1872, %v1872
    %v1889 = vadd.f32 %v1873, %v1874
    %v1890 = vadd.f32 %v1889, %v1875
    %v1891 = vadd.f32 %v1890, %v1876
    %v1892 = vadd.f32 %v1891, %v1877
    %v1893 = vadd.f32 %v1892, %v1878
    %v1894 = vadd.f32 %v1893, %v1879
    %v1895 = vadd.f32 %v1894, %v1880
    %v1896 = vadd.f32 %v1895, %v1881
    %v1897 = vadd.f32 %v1896, %v1882
    %v1898 = vadd.f32 %v1897, %v1883
    %v1899 = vadd.f32 %v1898, %v1884
    %v1900 = vadd.f32 %v1899, %v1885
    %v1901 = vadd.f32 %v1900, %v1886
    %v1902 = vadd.f32 %v1901, %v1887
    %v1903 = vadd.f32 %v1902, %v1888
    %v1904 = vrot.slane %v1903, 4
    %v1905 = vadd.f32 %v1903, %v1904
    %v1906 = vrot.slane %v1905, 2
    %v1907 = vadd.f32 %v1905, %v1906
    %v1908 = vrot.slane %v1907, 1
    %v1909 = vadd.f32 %v1907, %v1908
    %v1910 = vmul.f32 %v1909, %v1855
    %v1911 = vadd.f32 %v1910, 1e-05
    %v1912 = vrsqrt.pop %v1911
    %v1913 = vmul.f32 %v1912, %v1911
    %v1914 = vmul.f32 %v1913, %v1912
    %v1915 = vmul.f32 0.5, %v1914
    %v1916 = vsub.f32 1.5, %v1915
    %v1917 = vmul.f32 %v1912, %v1916
    %vm1918 = vweird.f32 %v1911
    %vm1919 = vweird.f32 %v1912
    %vm1920 = vmor %vm1918, %vm1919
    %v1921 = vsel %vm1920, %v1912, %v1917
    %v1922 = vmul.f32 %v1446, %v1921
    %v1923 = vmul.f32 %v1856, %v1922
    %v1924 = vsub.f32 %v1447, %v1923
    %v1925 = vperm.slane %v1922, 0
    %v1926 = vmul.f32 %v1812, %v1925
    %v1927 = vmul.f32 %v1813, %v1925
    %v1928 = vmul.f32 %v1814, %v1925
    %v1929 = vmul.f32 %v1815, %v1925
    %v1930 = vmul.f32 %v1816, %v1925
    %v1931 = vmul.f32 %v1817, %v1925
    %v1932 = vmul.f32 %v1818, %v1925
    %v1933 = vmul.f32 %v1819, %v1925
    %v1934 = vmul.f32 %v1820, %v1925
    %v1935 = vmul.f32 %v1821, %v1925
    %v1936 = vmul.f32 %v1822, %v1925
    %v1937 = vmul.f32 %v1823, %v1925
    %v1938 = vmul.f32 %v1824, %v1925
    %v1939 = vmul.f32 %v1825, %v1925
    %v1940 = vmul.f32 %v1826, %v1925
    %v1941 = vmul.f32 %v1827, %v1925
    %v1942 = vperm.slane %v1924, 0
    %v1943 = vadd.f32 %v1926, %v1942
    %v1944 = vadd.f32 %v1927, %v1942
    %v1945 = vadd.f32 %v1928, %v1942
    %v1946 = vadd.f32 %v1929, %v1942
    %v1947 = vadd.f32 %v1930, %v1942
    %v1948 = vadd.f32 %v1931, %v1942
    %v1949 = vadd.f32 %v1932, %v1942
    %v1950 = vadd.f32 %v1933, %v1942
    %v1951 = vadd.f32 %v1934, %v1942
    %v1952 = vadd.f32 %v1935, %v1942
    %v1953 = vadd.f32 %v1936, %v1942
    %v1954 = vadd.f32 %v1937, %v1942
    %v1955 = vadd.f32 %v1938, %v1942
    %v1956 = vadd.f32 %v1939, %v1942
    %v1957 = vadd.f32 %v1940, %v1942
    %v1958 = vadd.f32 %v1941, %v1942
    %v1959 = vmax.f32 %v1943, 0.0
    %v1960 = vmax.f32 %v1944, 0.0
    %v1961 = vmax.f32 %v1945, 0.0
    %v1962 = vmax.f32 %v1946, 0.0
    %v1963 = vmax.f32 %v1947, 0.0
    %v1964 = vmax.f32 %v1948, 0.0
    %v1965 = vmax.f32 %v1949, 0.0
    %v1966 = vmax.f32 %v1950, 0.0
    %v1967 = vmax.f32 %v1951, 0.0
    %v1968 = vmax.f32 %v1952, 0.0
    %v1969 = vmax.f32 %v1953, 0.0
    %v1970 = vmax.f32 %v1954, 0.0
    %v1971 = vmax.f32 %v1955, 0.0
    %v1972 = vmax.f32 %v1956, 0.0
    %v1973 = vmax.f32 %v1957, 0.0
    %v1974 = vmax.f32 %v1958, 0.0
    %1975 = vst [vmem:[#allocation3] sm:$0xff] %v1959
    %1976 = vst [vmem:[#allocation3 + $0x8] sm:$0xff] %v1960
    %1977 = vst [vmem:[#allocation3 + $0x10] sm:$0xff] %v1961
    %1978 = vst [vmem:[#allocation3 + $0x18] sm:$0xff] %v1962
    %1979 = vst [vmem:[#allocation3 + $0x20] sm:$0xff] %v1963
    %1980 = vst [vmem:[#allocation3 + $0x28] sm:$0xff] %v1964
    %1981 = vst [vmem:[#allocation3 + $0x30] sm:$0xff] %v1965
    %1982 = vst [vmem:[#allocation3 + $0x38] sm:$0xff] %v1966
    %1983 = vst [vmem:[#allocation3 + $0x40] sm:$0xff] %v1967
    %1984 = vst [vmem:[#allocation3 + $0x48] sm:$0xff] %v1968
    %1985 = vst [vmem:[#allocation3 + $0x50] sm:$0xff] %v1969
    %1986 = vst [vmem:[#allocation3 + $0x58] sm:$0xff] %v1970
    %1987 = vst [vmem:[#allocation3 + $0x60] sm:$0xff] %v1971
    %1988 = vst [vmem:[#allocation3 + $0x68] sm:$0xff] %v1972
    %1989 = vst [vmem:[#allocation3 + $0x70] sm:$0xff] %v1973
    %1990 = vst [vmem:[#allocation3 + $0x78] sm:$0xff] %v1974
    %v1991 = vld [vmem:[#allocation3] sm:$0xff]
    %v1992 = vld [vmem:[#allocation3 + $0x8] sm:$0xff]
    %v1993 = vld [vmem:[#allocation3 + $0x10] sm:$0xff]
    %v1994 = vld [vmem:[#allocation3 + $0x18] sm:$0xff]
    %v1995 = vld [vmem:[#allocation3 + $0x20] sm:$0xff]
    %v1996 = vld [vmem:[#allocation3 + $0x28] sm:$0xff]
    %v1997 = vld [vmem:[#allocation3 + $0x30] sm:$0xff]
    %v1998 = vld [vmem:[#allocation3 + $0x38] sm:$0xff]
    %v1999 = vld [vmem:[#allocation3 + $0x40] sm:$0xff]
    %v2000 = vld [vmem:[#allocation3 + $0x48] sm:$0xff]
    %v2001 = vld [vmem:[#allocation3 + $0x50] sm:$0xff]
    %v2002 = vld [vmem:[#allocation3 + $0x58] sm:$0xff]
    %v2003 = vld [vmem:[#allocation3 + $0x60] sm:$0xff]
    %v2004 = vld [vmem:[#allocation3 + $0x68] sm:$0xff]
    %v2005 = vld [vmem:[#allocation3 + $0x70] sm:$0xff]
    %v2006 = vld [vmem:[#allocation3 + $0x78] sm:$0xff]
    %v2007 = vld [vmem:[#allocation12] sm:$0x1]
    %v2008 = vld [vmem:[#allocation12 + $0x1] sm:$0x1]
    %v2009 = vld [vmem:[#allocation12 + $0x2] sm:$0x1]
    %v2010 = vld [vmem:[%s5] sm:$0xff]
    %v2011 = vld [vmem:[%s5 + $0x8] sm:$0xff]
    %v2012 = vld [vmem:[%s5 + $0x10] sm:$0xff]
    %v2013 = vld [vmem:[%s5 + $0x18] sm:$0xff]
    %v2014 = vld [vmem:[%s5 + $0x20] sm:$0xff]
    %v2015 = vld [vmem:[%s5 + $0x28] sm:$0xff]
    %v2016 = vld [vmem:[%s5 + $0x30] sm:$0xff]
    %v2017 = vld [vmem:[%s5 + $0x38] sm:$0xff]
    %v2018 = vld [vmem:[%s5 + $0x40] sm:$0xff]
    %v2019 = vld [vmem:[%s5 + $0x48] sm:$0xff]
    %v2020 = vld [vmem:[%s5 + $0x50] sm:$0xff]
    %v2021 = vld [vmem:[%s5 + $0x58] sm:$0xff]
    %v2022 = vld [vmem:[%s5 + $0x60] sm:$0xff]
    %v2023 = vld [vmem:[%s5 + $0x68] sm:$0xff]
    %v2024 = vld [vmem:[%s5 + $0x70] sm:$0xff]
    %v2025 = vld [vmem:[%s5 + $0x78] sm:$0xff]
    %2026 = vmatpush.msra.mxu0 %v2025
    %2027 = vmatpush.msra.mxu0 %v2024
    %2028 = vmatpush.msra.mxu0 %v2023
    %2029 = vmatpush.msra.mxu0 %v2022
    %2030 = vmatpush.msra.mxu0 %v2021
    %2031 = vmatpush.msra.mxu0 %v2020
    %2032 = vmatpush.msra.mxu0 %v2019
    %2033 = vmatpush.msra.mxu0 %v2018
    %2034 = vmatpush.msra.mxu0 %v2017
    %2035 = vmatpush.msra.mxu0 %v2016
    %2036 = vmatpush.msra.mxu0 %v2015
    %2037 = vmatpush.msra.mxu0 %v2014
    %2038 = vmatpush.msra.mxu0 %v2013
    %2039 = vmatpush.msra.mxu0 %v2012
    %2040 = vmatpush.msra.mxu0 %v2011
    %2041 = vmatpush.msra.mxu0 %v2010
    %2042 = vmatmul.f32.gmra.mxu0 %v1991
    %v2043 = vpop.f32.mrf.mxu0
    %v2044 = vadd.f32 0.0, %v2043
    %2045 = vmatmul.f32.gmra.mxu0 %v1992
    %v2046 = vpop.f32.mrf.mxu0
    %v2047 = vadd.f32 0.0, %v2046
    %2048 = vmatmul.f32.gmra.mxu0 %v1993
    %v2049 = vpop.f32.mrf.mxu0
    %v2050 = vadd.f32 0.0, %v2049
    %2051 = vmatmul.f32.gmra.mxu0 %v1994
    %v2052 = vpop.f32.mrf.mxu0
    %v2053 = vadd.f32 0.0, %v2052
    %2054 = vmatmul.f32.gmra.mxu0 %v1995
    %v2055 = vpop.f32.mrf.mxu0
    %v2056 = vadd.f32 0.0, %v2055
    %2057 = vmatmul.f32.gmra.mxu0 %v1996
    %v2058 = vpop.f32.mrf.mxu0
    %v2059 = vadd.f32 0.0, %v2058
    %2060 = vmatmul.f32.gmra.mxu0 %v1997
    %v2061 = vpop.f32.mrf.mxu0
    %v2062 = vadd.f32 0.0, %v2061
    %2063 = vmatmul.f32.gmra.mxu0 %v1998
    %v2064 = vpop.f32.mrf.mxu0
    %v2065 = vadd.f32 0.0, %v2064
    %2066 = vmatmul.f32.gmra.mxu0 %v1999
    %v2067 = vpop.f32.mrf.mxu0
    %v2068 = vadd.f32 0.0, %v2067
    %2069 = vmatmul.f32.gmra.mxu0 %v2000
    %v2070 = vpop.f32.mrf.mxu0
    %v2071 = vadd.f32 0.0, %v2070
    %2072 = vmatmul.f32.gmra.mxu0 %v2001
    %v2073 = vpop.f32.mrf.mxu0
    %v2074 = vadd.f32 0.0, %v2073
    %2075 = vmatmul.f32.gmra.mxu0 %v2002
    %v2076 = vpop.f32.mrf.mxu0
    %v2077 = vadd.f32 0.0, %v2076
    %2078 = vmatmul.f32.gmra.mxu0 %v2003
    %v2079 = vpop.f32.mrf.mxu0
    %v2080 = vadd.f32 0.0, %v2079
    %2081 = vmatmul.f32.gmra.mxu0 %v2004
    %v2082 = vpop.f32.mrf.mxu0
    %v2083 = vadd.f32 0.0, %v2082
    %2084 = vmatmul.f32.gmra.mxu0 %v2005
    %v2085 = vpop.f32.mrf.mxu0
    %v2086 = vadd.f32 0.0, %v2085
    %2087 = vmatmul.f32.gmra.mxu0 %v2006
    %v2088 = vpop.f32.mrf.mxu0
    %v2089 = vadd.f32 0.0, %v2088
    %2090 = vdwg.mxu0
    %s2091 = scalar_lea.vmem %s5, 128
    %v2092 = vld [vmem:[%s2091] sm:$0xff]
    %v2093 = vld [vmem:[%s2091 + $0x8] sm:$0xff]
    %v2094 = vld [vmem:[%s2091 + $0x10] sm:$0xff]
    %v2095 = vld [vmem:[%s2091 + $0x18] sm:$0xff]
    %v2096 = vld [vmem:[%s2091 + $0x20] sm:$0xff]
    %v2097 = vld [vmem:[%s2091 + $0x28] sm:$0xff]
    %v2098 = vld [vmem:[%s2091 + $0x30] sm:$0xff]
    %v2099 = vld [vmem:[%s2091 + $0x38] sm:$0xff]
    %v2100 = vld [vmem:[%s2091 + $0x40] sm:$0xff]
    %v2101 = vld [vmem:[%s2091 + $0x48] sm:$0xff]
    %v2102 = vld [vmem:[%s2091 + $0x50] sm:$0xff]
    %v2103 = vld [vmem:[%s2091 + $0x58] sm:$0xff]
    %v2104 = vld [vmem:[%s2091 + $0x60] sm:$0xff]
    %v2105 = vld [vmem:[%s2091 + $0x68] sm:$0xff]
    %v2106 = vld [vmem:[%s2091 + $0x70] sm:$0xff]
    %v2107 = vld [vmem:[%s2091 + $0x78] sm:$0xff]
    %2108 = vmatpush.msra.mxu0 %v2107
    %2109 = vmatpush.msra.mxu0 %v2106
    %2110 = vmatpush.msra.mxu0 %v2105
    %2111 = vmatpush.msra.mxu0 %v2104
    %2112 = vmatpush.msra.mxu0 %v2103
    %2113 = vmatpush.msra.mxu0 %v2102
    %2114 = vmatpush.msra.mxu0 %v2101
    %2115 = vmatpush.msra.mxu0 %v2100
    %2116 = vmatpush.msra.mxu0 %v2099
    %2117 = vmatpush.msra.mxu0 %v2098
    %2118 = vmatpush.msra.mxu0 %v2097
    %2119 = vmatpush.msra.mxu0 %v2096
    %2120 = vmatpush.msra.mxu0 %v2095
    %2121 = vmatpush.msra.mxu0 %v2094
    %2122 = vmatpush.msra.mxu0 %v2093
    %2123 = vmatpush.msra.mxu0 %v2092
    %2124 = vmatmul.f32.gmra.mxu0 %v1991
    %v2125 = vpop.f32.mrf.mxu0
    %v2126 = vadd.f32 0.0, %v2125
    %2127 = vmatmul.f32.gmra.mxu0 %v1992
    %v2128 = vpop.f32.mrf.mxu0
    %v2129 = vadd.f32 0.0, %v2128
    %2130 = vmatmul.f32.gmra.mxu0 %v1993
    %v2131 = vpop.f32.mrf.mxu0
    %v2132 = vadd.f32 0.0, %v2131
    %2133 = vmatmul.f32.gmra.mxu0 %v1994
    %v2134 = vpop.f32.mrf.mxu0
    %v2135 = vadd.f32 0.0, %v2134
    %2136 = vmatmul.f32.gmra.mxu0 %v1995
    %v2137 = vpop.f32.mrf.mxu0
    %v2138 = vadd.f32 0.0, %v2137
    %2139 = vmatmul.f32.gmra.mxu0 %v1996
    %v2140 = vpop.f32.mrf.mxu0
    %v2141 = vadd.f32 0.0, %v2140
    %2142 = vmatmul.f32.gmra.mxu0 %v1997
    %v2143 = vpop.f32.mrf.mxu0
    %v2144 = vadd.f32 0.0, %v2143
    %2145 = vmatmul.f32.gmra.mxu0 %v1998
    %v2146 = vpop.f32.mrf.mxu0
    %v2147 = vadd.f32 0.0, %v2146
    %2148 = vmatmul.f32.gmra.mxu0 %v1999
    %v2149 = vpop.f32.mrf.mxu0
    %v2150 = vadd.f32 0.0, %v2149
    %2151 = vmatmul.f32.gmra.mxu0 %v2000
    %v2152 = vpop.f32.mrf.mxu0
    %v2153 = vadd.f32 0.0, %v2152
    %2154 = vmatmul.f32.gmra.mxu0 %v2001
    %v2155 = vpop.f32.mrf.mxu0
    %v2156 = vadd.f32 0.0, %v2155
    %2157 = vmatmul.f32.gmra.mxu0 %v2002
    %v2158 = vpop.f32.mrf.mxu0
    %v2159 = vadd.f32 0.0, %v2158
    %2160 = vmatmul.f32.gmra.mxu0 %v2003
    %v2161 = vpop.f32.mrf.mxu0
    %v2162 = vadd.f32 0.0, %v2161
    %2163 = vmatmul.f32.gmra.mxu0 %v2004
    %v2164 = vpop.f32.mrf.mxu0
    %v2165 = vadd.f32 0.0, %v2164
    %2166 = vmatmul.f32.gmra.mxu0 %v2005
    %v2167 = vpop.f32.mrf.mxu0
    %v2168 = vadd.f32 0.0, %v2167
    %2169 = vmatmul.f32.gmra.mxu0 %v2006
    %v2170 = vpop.f32.mrf.mxu0
    %v2171 = vadd.f32 0.0, %v2170
    %2172 = vdwg.mxu0
    %s2173 = scalar_lea.vmem %s5, 256
    %v2174 = vld [vmem:[%s2173] sm:$0xff]
    %v2175 = vld [vmem:[%s2173 + $0x8] sm:$0xff]
    %v2176 = vld [vmem:[%s2173 + $0x10] sm:$0xff]
    %v2177 = vld [vmem:[%s2173 + $0x18] sm:$0xff]
    %v2178 = vld [vmem:[%s2173 + $0x20] sm:$0xff]
    %v2179 = vld [vmem:[%s2173 + $0x28] sm:$0xff]
    %v2180 = vld [vmem:[%s2173 + $0x30] sm:$0xff]
    %v2181 = vld [vmem:[%s2173 + $0x38] sm:$0xff]
    %v2182 = vld [vmem:[%s2173 + $0x40] sm:$0xff]
    %v2183 = vld [vmem:[%s2173 + $0x48] sm:$0xff]
    %v2184 = vld [vmem:[%s2173 + $0x50] sm:$0xff]
    %v2185 = vld [vmem:[%s2173 + $0x58] sm:$0xff]
    %v2186 = vld [vmem:[%s2173 + $0x60] sm:$0xff]
    %v2187 = vld [vmem:[%s2173 + $0x68] sm:$0xff]
    %v2188 = vld [vmem:[%s2173 + $0x70] sm:$0xff]
    %v2189 = vld [vmem:[%s2173 + $0x78] sm:$0xff]
    %2190 = vmatpush.msra.mxu0 %v2189
    %2191 = vmatpush.msra.mxu0 %v2188
    %2192 = vmatpush.msra.mxu0 %v2187
    %2193 = vmatpush.msra.mxu0 %v2186
    %2194 = vmatpush.msra.mxu0 %v2185
    %2195 = vmatpush.msra.mxu0 %v2184
    %2196 = vmatpush.msra.mxu0 %v2183
    %2197 = vmatpush.msra.mxu0 %v2182
    %2198 = vmatpush.msra.mxu0 %v2181
    %2199 = vmatpush.msra.mxu0 %v2180
    %2200 = vmatpush.msra.mxu0 %v2179
    %2201 = vmatpush.msra.mxu0 %v2178
    %2202 = vmatpush.msra.mxu0 %v2177
    %2203 = vmatpush.msra.mxu0 %v2176
    %2204 = vmatpush.msra.mxu0 %v2175
    %2205 = vmatpush.msra.mxu0 %v2174
    %2206 = vmatmul.f32.gmra.mxu0 %v1991
    %v2207 = vpop.f32.mrf.mxu0
    %v2208 = vadd.f32 0.0, %v2207
    %2209 = vmatmul.f32.gmra.mxu0 %v1992
    %v2210 = vpop.f32.mrf.mxu0
    %v2211 = vadd.f32 0.0, %v2210
    %2212 = vmatmul.f32.gmra.mxu0 %v1993
    %v2213 = vpop.f32.mrf.mxu0
    %v2214 = vadd.f32 0.0, %v2213
    %2215 = vmatmul.f32.gmra.mxu0 %v1994
    %v2216 = vpop.f32.mrf.mxu0
    %v2217 = vadd.f32 0.0, %v2216
    %2218 = vmatmul.f32.gmra.mxu0 %v1995
    %v2219 = vpop.f32.mrf.mxu0
    %v2220 = vadd.f32 0.0, %v2219
    %2221 = vmatmul.f32.gmra.mxu0 %v1996
    %v2222 = vpop.f32.mrf.mxu0
    %v2223 = vadd.f32 0.0, %v2222
    %2224 = vmatmul.f32.gmra.mxu0 %v1997
    %v2225 = vpop.f32.mrf.mxu0
    %v2226 = vadd.f32 0.0, %v2225
    %2227 = vmatmul.f32.gmra.mxu0 %v1998
    %v2228 = vpop.f32.mrf.mxu0
    %v2229 = vadd.f32 0.0, %v2228
    %2230 = vmatmul.f32.gmra.mxu0 %v1999
    %v2231 = vpop.f32.mrf.mxu0
    %v2232 = vadd.f32 0.0, %v2231
    %2233 = vmatmul.f32.gmra.mxu0 %v2000
    %v2234 = vpop.f32.mrf.mxu0
    %v2235 = vadd.f32 0.0, %v2234
    %2236 = vmatmul.f32.gmra.mxu0 %v2001
    %v2237 = vpop.f32.mrf.mxu0
    %v2238 = vadd.f32 0.0, %v2237
    %2239 = vmatmul.f32.gmra.mxu0 %v2002
    %v2240 = vpop.f32.mrf.mxu0
    %v2241 = vadd.f32 0.0, %v2240
    %2242 = vmatmul.f32.gmra.mxu0 %v2003
    %v2243 = vpop.f32.mrf.mxu0
    %v2244 = vadd.f32 0.0, %v2243
    %2245 = vmatmul.f32.gmra.mxu0 %v2004
    %v2246 = vpop.f32.mrf.mxu0
    %v2247 = vadd.f32 0.0, %v2246
    %2248 = vmatmul.f32.gmra.mxu0 %v2005
    %v2249 = vpop.f32.mrf.mxu0
    %v2250 = vadd.f32 0.0, %v2249
    %2251 = vmatmul.f32.gmra.mxu0 %v2006
    %v2252 = vpop.f32.mrf.mxu0
    %v2253 = vadd.f32 0.0, %v2252
    %2254 = vdwg.mxu0
    %s2255 = scalar_lea.vmem %s5, 384
    %v2256 = vld [vmem:[%s2255] sm:$0xff]
    %v2257 = vld [vmem:[%s2255 + $0x8] sm:$0xff]
    %v2258 = vld [vmem:[%s2255 + $0x10] sm:$0xff]
    %v2259 = vld [vmem:[%s2255 + $0x18] sm:$0xff]
    %v2260 = vld [vmem:[%s2255 + $0x20] sm:$0xff]
    %v2261 = vld [vmem:[%s2255 + $0x28] sm:$0xff]
    %v2262 = vld [vmem:[%s2255 + $0x30] sm:$0xff]
    %v2263 = vld [vmem:[%s2255 + $0x38] sm:$0xff]
    %v2264 = vld [vmem:[%s2255 + $0x40] sm:$0xff]
    %v2265 = vld [vmem:[%s2255 + $0x48] sm:$0xff]
    %v2266 = vld [vmem:[%s2255 + $0x50] sm:$0xff]
    %v2267 = vld [vmem:[%s2255 + $0x58] sm:$0xff]
    %v2268 = vld [vmem:[%s2255 + $0x60] sm:$0xff]
    %v2269 = vld [vmem:[%s2255 + $0x68] sm:$0xff]
    %v2270 = vld [vmem:[%s2255 + $0x70] sm:$0xff]
    %v2271 = vld [vmem:[%s2255 + $0x78] sm:$0xff]
    %2272 = vmatpush.msra.mxu0 %v2271
    %2273 = vmatpush.msra.mxu0 %v2270
    %2274 = vmatpush.msra.mxu0 %v2269
    %2275 = vmatpush.msra.mxu0 %v2268
    %2276 = vmatpush.msra.mxu0 %v2267
    %2277 = vmatpush.msra.mxu0 %v2266
    %2278 = vmatpush.msra.mxu0 %v2265
    %2279 = vmatpush.msra.mxu0 %v2264
    %2280 = vmatpush.msra.mxu0 %v2263
    %2281 = vmatpush.msra.mxu0 %v2262
    %2282 = vmatpush.msra.mxu0 %v2261
    %2283 = vmatpush.msra.mxu0 %v2260
    %2284 = vmatpush.msra.mxu0 %v2259
    %2285 = vmatpush.msra.mxu0 %v2258
    %2286 = vmatpush.msra.mxu0 %v2257
    %2287 = vmatpush.msra.mxu0 %v2256
    %2288 = vmatmul.f32.gmra.mxu0 %v1991
    %v2289 = vpop.f32.mrf.mxu0
    %v2290 = vadd.f32 0.0, %v2289
    %2291 = vmatmul.f32.gmra.mxu0 %v1992
    %v2292 = vpop.f32.mrf.mxu0
    %v2293 = vadd.f32 0.0, %v2292
    %2294 = vmatmul.f32.gmra.mxu0 %v1993
    %v2295 = vpop.f32.mrf.mxu0
    %v2296 = vadd.f32 0.0, %v2295
    %2297 = vmatmul.f32.gmra.mxu0 %v1994
    %v2298 = vpop.f32.mrf.mxu0
    %v2299 = vadd.f32 0.0, %v2298
    %2300 = vmatmul.f32.gmra.mxu0 %v1995
    %v2301 = vpop.f32.mrf.mxu0
    %v2302 = vadd.f32 0.0, %v2301
    %2303 = vmatmul.f32.gmra.mxu0 %v1996
    %v2304 = vpop.f32.mrf.mxu0
    %v2305 = vadd.f32 0.0, %v2304
    %2306 = vmatmul.f32.gmra.mxu0 %v1997
    %v2307 = vpop.f32.mrf.mxu0
    %v2308 = vadd.f32 0.0, %v2307
    %2309 = vmatmul.f32.gmra.mxu0 %v1998
    %v2310 = vpop.f32.mrf.mxu0
    %v2311 = vadd.f32 0.0, %v2310
    %2312 = vmatmul.f32.gmra.mxu0 %v1999
    %v2313 = vpop.f32.mrf.mxu0
    %v2314 = vadd.f32 0.0, %v2313
    %2315 = vmatmul.f32.gmra.mxu0 %v2000
    %v2316 = vpop.f32.mrf.mxu0
    %v2317 = vadd.f32 0.0, %v2316
    %2318 = vmatmul.f32.gmra.mxu0 %v2001
    %v2319 = vpop.f32.mrf.mxu0
    %v2320 = vadd.f32 0.0, %v2319
    %2321 = vmatmul.f32.gmra.mxu0 %v2002
    %v2322 = vpop.f32.mrf.mxu0
    %v2323 = vadd.f32 0.0, %v2322
    %2324 = vmatmul.f32.gmra.mxu0 %v2003
    %v2325 = vpop.f32.mrf.mxu0
    %v2326 = vadd.f32 0.0, %v2325
    %2327 = vmatmul.f32.gmra.mxu0 %v2004
    %v2328 = vpop.f32.mrf.mxu0
    %v2329 = vadd.f32 0.0, %v2328
    %2330 = vmatmul.f32.gmra.mxu0 %v2005
    %v2331 = vpop.f32.mrf.mxu0
    %v2332 = vadd.f32 0.0, %v2331
    %2333 = vmatmul.f32.gmra.mxu0 %v2006
    %v2334 = vpop.f32.mrf.mxu0
    %v2335 = vadd.f32 0.0, %v2334
    %2336 = vdwg.mxu0
    %v2337 = vperm.slane %v2007, 0
    %v2338 = vadd.f32 %v2044, %v2337
    %v2339 = vadd.f32 %v2047, %v2337
    %v2340 = vadd.f32 %v2050, %v2337
    %v2341 = vadd.f32 %v2053, %v2337
    %v2342 = vadd.f32 %v2056, %v2337
    %v2343 = vadd.f32 %v2059, %v2337
    %v2344 = vadd.f32 %v2062, %v2337
    %v2345 = vadd.f32 %v2065, %v2337
    %v2346 = vadd.f32 %v2068, %v2337
    %v2347 = vadd.f32 %v2071, %v2337
    %v2348 = vadd.f32 %v2074, %v2337
    %v2349 = vadd.f32 %v2077, %v2337
    %v2350 = vadd.f32 %v2080, %v2337
    %v2351 = vadd.f32 %v2083, %v2337
    %v2352 = vadd.f32 %v2086, %v2337
    %v2353 = vadd.f32 %v2089, %v2337
    %v2354 = vadd.f32 %v2126, %v2337
    %v2355 = vadd.f32 %v2129, %v2337
    %v2356 = vadd.f32 %v2132, %v2337
    %v2357 = vadd.f32 %v2135, %v2337
    %v2358 = vadd.f32 %v2138, %v2337
    %v2359 = vadd.f32 %v2141, %v2337
    %v2360 = vadd.f32 %v2144, %v2337
    %v2361 = vadd.f32 %v2147, %v2337
    %v2362 = vadd.f32 %v2150, %v2337
    %v2363 = vadd.f32 %v2153, %v2337
    %v2364 = vadd.f32 %v2156, %v2337
    %v2365 = vadd.f32 %v2159, %v2337
    %v2366 = vadd.f32 %v2162, %v2337
    %v2367 = vadd.f32 %v2165, %v2337
    %v2368 = vadd.f32 %v2168, %v2337
    %v2369 = vadd.f32 %v2171, %v2337
    %v2370 = vadd.f32 %v2208, %v2337
    %v2371 = vadd.f32 %v2211, %v2337
    %v2372 = vadd.f32 %v2214, %v2337
    %v2373 = vadd.f32 %v2217, %v2337
    %v2374 = vadd.f32 %v2220, %v2337
    %v2375 = vadd.f32 %v2223, %v2337
    %v2376 = vadd.f32 %v2226, %v2337
    %v2377 = vadd.f32 %v2229, %v2337
    %v2378 = vadd.f32 %v2232, %v2337
    %v2379 = vadd.f32 %v2235, %v2337
    %v2380 = vadd.f32 %v2238, %v2337
    %v2381 = vadd.f32 %v2241, %v2337
    %v2382 = vadd.f32 %v2244, %v2337
    %v2383 = vadd.f32 %v2247, %v2337
    %v2384 = vadd.f32 %v2250, %v2337
    %v2385 = vadd.f32 %v2253, %v2337
    %v2386 = vadd.f32 %v2290, %v2337
    %v2387 = vadd.f32 %v2293, %v2337
    %v2388 = vadd.f32 %v2296, %v2337
    %v2389 = vadd.f32 %v2299, %v2337
    %v2390 = vadd.f32 %v2302, %v2337
    %v2391 = vadd.f32 %v2305, %v2337
    %v2392 = vadd.f32 %v2308, %v2337
    %v2393 = vadd.f32 %v2311, %v2337
    %v2394 = vadd.f32 %v2314, %v2337
    %v2395 = vadd.f32 %v2317, %v2337
    %v2396 = vadd.f32 %v2320, %v2337
    %v2397 = vadd.f32 %v2323, %v2337
    %v2398 = vadd.f32 %v2326, %v2337
    %v2399 = vadd.f32 %v2329, %v2337
    %v2400 = vadd.f32 %v2332, %v2337
    %v2401 = vadd.f32 %v2335, %v2337
    %vm2402 = vcmask 523264
    %v2403 = vsel %vm2402, %v2338, 0.0
    %v2404 = vsel %vm2402, %v2339, 0.0
    %v2405 = vadd.f32 %v2403, %v2404
    %v2406 = vsel %vm2402, %v2340, 0.0
    %v2407 = vadd.f32 %v2405, %v2406
    %v2408 = vsel %vm2402, %v2341, 0.0
    %v2409 = vadd.f32 %v2407, %v2408
    %v2410 = vsel %vm2402, %v2342, 0.0
    %v2411 = vadd.f32 %v2409, %v2410
    %v2412 = vsel %vm2402, %v2343, 0.0
    %v2413 = vadd.f32 %v2411, %v2412
    %v2414 = vsel %vm2402, %v2344, 0.0
    %v2415 = vadd.f32 %v2413, %v2414
    %v2416 = vsel %vm2402, %v2345, 0.0
    %v2417 = vadd.f32 %v2415, %v2416
    %v2418 = vsel %vm2402, %v2346, 0.0
    %v2419 = vadd.f32 %v2417, %v2418
    %v2420 = vsel %vm2402, %v2347, 0.0
    %v2421 = vadd.f32 %v2419, %v2420
    %v2422 = vsel %vm2402, %v2348, 0.0
    %v2423 = vadd.f32 %v2421, %v2422
    %v2424 = vsel %vm2402, %v2349, 0.0
    %v2425 = vadd.f32 %v2423, %v2424
    %v2426 = vsel %vm2402, %v2350, 0.0
    %v2427 = vadd.f32 %v2425, %v2426
    %v2428 = vsel %vm2402, %v2351, 0.0
    %v2429 = vadd.f32 %v2427, %v2428
    %v2430 = vsel %vm2402, %v2352, 0.0
    %v2431 = vadd.f32 %v2429, %v2430
    %v2432 = vsel %vm2402, %v2353, 0.0
    %v2433 = vadd.f32 %v2431, %v2432
    %v2434 = vsel %vm2402, %v2354, 0.0
    %v2435 = vadd.f32 %v2433, %v2434
    %v2436 = vsel %vm2402, %v2355, 0.0
    %v2437 = vadd.f32 %v2435, %v2436
    %v2438 = vsel %vm2402, %v2356, 0.0
    %v2439 = vadd.f32 %v2437, %v2438
    %v2440 = vsel %vm2402, %v2357, 0.0
    %v2441 = vadd.f32 %v2439, %v2440
    %v2442 = vsel %vm2402, %v2358, 0.0
    %v2443 = vadd.f32 %v2441, %v2442
    %v2444 = vsel %vm2402, %v2359, 0.0
    %v2445 = vadd.f32 %v2443, %v2444
    %v2446 = vsel %vm2402, %v2360, 0.0
    %v2447 = vadd.f32 %v2445, %v2446
    %v2448 = vsel %vm2402, %v2361, 0.0
    %v2449 = vadd.f32 %v2447, %v2448
    %v2450 = vsel %vm2402, %v2362, 0.0
    %v2451 = vadd.f32 %v2449, %v2450
    %v2452 = vsel %vm2402, %v2363, 0.0
    %v2453 = vadd.f32 %v2451, %v2452
    %v2454 = vsel %vm2402, %v2364, 0.0
    %v2455 = vadd.f32 %v2453, %v2454
    %v2456 = vsel %vm2402, %v2365, 0.0
    %v2457 = vadd.f32 %v2455, %v2456
    %v2458 = vsel %vm2402, %v2366, 0.0
    %v2459 = vadd.f32 %v2457, %v2458
    %v2460 = vsel %vm2402, %v2367, 0.0
    %v2461 = vadd.f32 %v2459, %v2460
    %v2462 = vsel %vm2402, %v2368, 0.0
    %v2463 = vadd.f32 %v2461, %v2462
    %v2464 = vsel %vm2402, %v2369, 0.0
    %v2465 = vadd.f32 %v2463, %v2464
    %v2466 = vsel %vm2402, %v2370, 0.0
    %v2467 = vadd.f32 %v2465, %v2466
    %v2468 = vsel %vm2402, %v2371, 0.0
    %v2469 = vadd.f32 %v2467, %v2468
    %v2470 = vsel %vm2402, %v2372, 0.0
    %v2471 = vadd.f32 %v2469, %v2470
    %v2472 = vsel %vm2402, %v2373, 0.0
    %v2473 = vadd.f32 %v2471, %v2472
    %v2474 = vsel %vm2402, %v2374, 0.0
    %v2475 = vadd.f32 %v2473, %v2474
    %v2476 = vsel %vm2402, %v2375, 0.0
    %v2477 = vadd.f32 %v2475, %v2476
    %v2478 = vsel %vm2402, %v2376, 0.0
    %v2479 = vadd.f32 %v2477, %v2478
    %v2480 = vsel %vm2402, %v2377, 0.0
    %v2481 = vadd.f32 %v2479, %v2480
    %v2482 = vsel %vm2402, %v2378, 0.0
    %v2483 = vadd.f32 %v2481, %v2482
    %v2484 = vsel %vm2402, %v2379, 0.0
    %v2485 = vadd.f32 %v2483, %v2484
    %v2486 = vsel %vm2402, %v2380, 0.0
    %v2487 = vadd.f32 %v2485, %v2486
    %v2488 = vsel %vm2402, %v2381, 0.0
    %v2489 = vadd.f32 %v2487, %v2488
    %v2490 = vsel %vm2402, %v2382, 0.0
    %v2491 = vadd.f32 %v2489, %v2490
    %v2492 = vsel %vm2402, %v2383, 0.0
    %v2493 = vadd.f32 %v2491, %v2492
    %v2494 = vsel %vm2402, %v2384, 0.0
    %v2495 = vadd.f32 %v2493, %v2494
    %v2496 = vsel %vm2402, %v2385, 0.0
    %v2497 = vadd.f32 %v2495, %v2496
    %v2498 = vsel %vm2402, %v2386, 0.0
    %v2499 = vadd.f32 %v2497, %v2498
    %v2500 = vsel %vm2402, %v2387, 0.0
    %v2501 = vadd.f32 %v2499, %v2500
    %v2502 = vsel %vm2402, %v2388, 0.0
    %v2503 = vadd.f32 %v2501, %v2502
    %v2504 = vsel %vm2402, %v2389, 0.0
    %v2505 = vadd.f32 %v2503, %v2504
    %v2506 = vsel %vm2402, %v2390, 0.0
    %v2507 = vadd.f32 %v2505, %v2506
    %v2508 = vsel %vm2402, %v2391, 0.0
    %v2509 = vadd.f32 %v2507, %v2508
    %v2510 = vsel %vm2402, %v2392, 0.0
    %v2511 = vadd.f32 %v2509, %v2510
    %v2512 = vsel %vm2402, %v2393, 0.0
    %v2513 = vadd.f32 %v2511, %v2512
    %v2514 = vsel %vm2402, %v2394, 0.0
    %v2515 = vadd.f32 %v2513, %v2514
    %v2516 = vsel %vm2402, %v2395, 0.0
    %v2517 = vadd.f32 %v2515, %v2516
    %v2518 = vsel %vm2402, %v2396, 0.0
    %v2519 = vadd.f32 %v2517, %v2518
    %v2520 = vsel %vm2402, %v2397, 0.0
    %v2521 = vadd.f32 %v2519, %v2520
    %v2522 = vsel %vm2402, %v2398, 0.0
    %v2523 = vadd.f32 %v2521, %v2522
    %v2524 = vsel %vm2402, %v2399, 0.0
    %v2525 = vadd.f32 %v2523, %v2524
    %v2526 = vsel %vm2402, %v2400, 0.0
    %v2527 = vadd.f32 %v2525, %v2526
    %v2528 = vsel %vm2402, %v2401, 0.0
    %v2529 = vadd.f32 %v2527, %v2528
    %v2530 = vrot.slane %v2529, 4
    %v2531 = vadd.f32 %v2529, %v2530
    %v2532 = vrot.slane %v2531, 2
    %v2533 = vadd.f32 %v2531, %v2532
    %v2534 = vrot.slane %v2533, 1
    %v2535 = vadd.f32 %v2533, %v2534
    %v2536 = vrcp.pop 512.0
    %v2537 = vmul.f32 512.0, %v2536
    %v2538 = vsub.f32 1.0, %v2537
    %v2539 = vmul.f32 %v2536, %v2538
    %v2540 = vadd.f32 %v2536, %v2539
    %vm2541 = vweird.f32 %v2536
    %v2542 = vsel %vm2541, %v2536, %v2540
    %v2543 = vmul.f32 %v2535, %v2542
    %v2544 = vsub.f32 %v2338, %v2543
    %v2545 = vsub.f32 %v2339, %v2543
    %v2546 = vsub.f32 %v2340, %v2543
    %v2547 = vsub.f32 %v2341, %v2543
    %v2548 = vsub.f32 %v2342, %v2543
    %v2549 = vsub.f32 %v2343, %v2543
    %v2550 = vsub.f32 %v2344, %v2543
    %v2551 = vsub.f32 %v2345, %v2543
    %v2552 = vsub.f32 %v2346, %v2543
    %v2553 = vsub.f32 %v2347, %v2543
    %v2554 = vsub.f32 %v2348, %v2543
    %v2555 = vsub.f32 %v2349, %v2543
    %v2556 = vsub.f32 %v2350, %v2543
    %v2557 = vsub.f32 %v2351, %v2543
    %v2558 = vsub.f32 %v2352, %v2543
    %v2559 = vsub.f32 %v2353, %v2543
    %v2560 = vsub.f32 %v2354, %v2543
    %v2561 = vsub.f32 %v2355, %v2543
    %v2562 = vsub.f32 %v2356, %v2543
    %v2563 = vsub.f32 %v2357, %v2543
    %v2564 = vsub.f32 %v2358, %v2543
    %v2565 = vsub.f32 %v2359, %v2543
    %v2566 = vsub.f32 %v2360, %v2543
    %v2567 = vsub.f32 %v2361, %v2543
    %v2568 = vsub.f32 %v2362, %v2543
    %v2569 = vsub.f32 %v2363, %v2543
    %v2570 = vsub.f32 %v2364, %v2543
    %v2571 = vsub.f32 %v2365, %v2543
    %v2572 = vsub.f32 %v2366, %v2543
    %v2573 = vsub.f32 %v2367, %v2543
    %v2574 = vsub.f32 %v2368, %v2543
    %v2575 = vsub.f32 %v2369, %v2543
    %v2576 = vsub.f32 %v2370, %v2543
    %v2577 = vsub.f32 %v2371, %v2543
    %v2578 = vsub.f32 %v2372, %v2543
    %v2579 = vsub.f32 %v2373, %v2543
    %v2580 = vsub.f32 %v2374, %v2543
    %v2581 = vsub.f32 %v2375, %v2543
    %v2582 = vsub.f32 %v2376, %v2543
    %v2583 = vsub.f32 %v2377, %v2543
    %v2584 = vsub.f32 %v2378, %v2543
    %v2585 = vsub.f32 %v2379, %v2543
    %v2586 = vsub.f32 %v2380, %v2543
    %v2587 = vsub.f32 %v2381, %v2543
    %v2588 = vsub.f32 %v2382, %v2543
    %v2589 = vsub.f32 %v2383, %v2543
    %v2590 = vsub.f32 %v2384, %v2543
    %v2591 = vsub.f32 %v2385, %v2543
    %v2592 = vsub.f32 %v2386, %v2543
    %v2593 = vsub.f32 %v2387, %v2543
    %v2594 = vsub.f32 %v2388, %v2543
    %v2595 = vsub.f32 %v2389, %v2543
    %v2596 = vsub.f32 %v2390, %v2543
    %v2597 = vsub.f32 %v2391, %v2543
    %v2598 = vsub.f32 %v2392, %v2543
    %v2599 = vsub.f32 %v2393, %v2543
    %v2600 = vsub.f32 %v2394, %v2543
    %v2601 = vsub.f32 %v2395, %v2543
    %v2602 = vsub.f32 %v2396, %v2543
    %v2603 = vsub.f32 %v2397, %v2543
    %v2604 = vsub.f32 %v2398, %v2543
    %v2605 = vsub.f32 %v2399, %v2543
    %v2606 = vsub.f32 %v2400, %v2543
    %v2607 = vsub.f32 %v2401, %v2543
    %v2608 = vmul.f32 %v2544, %v2544
    %v2609 = vmul.f32 %v2545, %v2545
    %v2610 = vmul.f32 %v2546, %v2546
    %v2611 = vmul.f32 %v2547, %v2547
    %v2612 = vmul.f32 %v2548, %v2548
    %v2613 = vmul.f32 %v2549, %v2549
    %v2614 = vmul.f32 %v2550, %v2550
    %v2615 = vmul.f32 %v2551, %v2551
    %v2616 = vmul.f32 %v2552, %v2552
    %v2617 = vmul.f32 %v2553, %v2553
    %v2618 = vmul.f32 %v2554, %v2554
    %v2619 = vmul.f32 %v2555, %v2555
    %v2620 = vmul.f32 %v2556, %v2556
    %v2621 = vmul.f32 %v2557, %v2557
    %v2622 = vmul.f32 %v2558, %v2558
    %v2623 = vmul.f32 %v2559, %v2559
    %v2624 = vmul.f32 %v2560, %v2560
    %v2625 = vmul.f32 %v2561, %v2561
    %v2626 = vmul.f32 %v2562, %v2562
    %v2627 = vmul.f32 %v2563, %v2563
    %v2628 = vmul.f32 %v2564, %v2564
    %v2629 = vmul.f32 %v2565, %v2565
    %v2630 = vmul.f32 %v2566, %v2566
    %v2631 = vmul.f32 %v2567, %v2567
    %v2632 = vmul.f32 %v2568, %v2568
    %v2633 = vmul.f32 %v2569, %v2569
    %v2634 = vmul.f32 %v2570, %v2570
    %v2635 = vmul.f32 %v2571, %v2571
    %v2636 = vmul.f32 %v2572, %v2572
    %v2637 = vmul.f32 %v2573, %v2573
    %v2638 = vmul.f32 %v2574, %v2574
    %v2639 = vmul.f32 %v2575, %v2575
    %v2640 = vmul.f32 %v2576, %v2576
    %v2641 = vmul.f32 %v2577, %v2577
    %v2642 = vmul.f32 %v2578, %v2578
    %v2643 = vmul.f32 %v2579, %v2579
    %v2644 = vmul.f32 %v2580, %v2580
    %v2645 = vmul.f32 %v2581, %v2581
    %v2646 = vmul.f32 %v2582, %v2582
    %v2647 = vmul.f32 %v2583, %v2583
    %v2648 = vmul.f32 %v2584, %v2584
    %v2649 = vmul.f32 %v2585, %v2585
    %v2650 = vmul.f32 %v2586, %v2586
    %v2651 = vmul.f32 %v2587, %v2587
    %v2652 = vmul.f32 %v2588, %v2588
    %v2653 = vmul.f32 %v2589, %v2589
    %v2654 = vmul.f32 %v2590, %v2590
    %v2655 = vmul.f32 %v2591, %v2591
    %v2656 = vmul.f32 %v2592, %v2592
    %v2657 = vmul.f32 %v2593, %v2593
    %v2658 = vmul.f32 %v2594, %v2594
    %v2659 = vmul.f32 %v2595, %v2595
    %v2660 = vmul.f32 %v2596, %v2596
    %v2661 = vmul.f32 %v2597, %v2597
    %v2662 = vmul.f32 %v2598, %v2598
    %v2663 = vmul.f32 %v2599, %v2599
    %v2664 = vmul.f32 %v2600, %v2600
    %v2665 = vmul.f32 %v2601, %v2601
    %v2666 = vmul.f32 %v2602, %v2602
    %v2667 = vmul.f32 %v2603, %v2603
    %v2668 = vmul.f32 %v2604, %v2604
    %v2669 = vmul.f32 %v2605, %v2605
    %v2670 = vmul.f32 %v2606, %v2606
    %v2671 = vmul.f32 %v2607, %v2607
    %v2672 = vsel %vm2402, %v2608, 0.0
    %v2673 = vsel %vm2402, %v2609, 0.0
    %v2674 = vadd.f32 %v2672, %v2673
    %v2675 = vsel %vm2402, %v2610, 0.0
    %v2676 = vadd.f32 %v2674, %v2675
    %v2677 = vsel %vm2402, %v2611, 0.0
    %v2678 = vadd.f32 %v2676, %v2677
    %v2679 = vsel %vm2402, %v2612, 0.0
    %v2680 = vadd.f32 %v2678, %v2679
    %v2681 = vsel %vm2402, %v2613, 0.0
    %v2682 = vadd.f32 %v2680, %v2681
    %v2683 = vsel %vm2402, %v2614, 0.0
    %v2684 = vadd.f32 %v2682, %v2683
    %v2685 = vsel %vm2402, %v2615, 0.0
    %v2686 = vadd.f32 %v2684, %v2685
    %v2687 = vsel %vm2402, %v2616, 0.0
    %v2688 = vadd.f32 %v2686, %v2687
    %v2689 = vsel %vm2402, %v2617, 0.0
    %v2690 = vadd.f32 %v2688, %v2689
    %v2691 = vsel %vm2402, %v2618, 0.0
    %v2692 = vadd.f32 %v2690, %v2691
    %v2693 = vsel %vm2402, %v2619, 0.0
    %v2694 = vadd.f32 %v2692, %v2693
    %v2695 = vsel %vm2402, %v2620, 0.0
    %v2696 = vadd.f32 %v2694, %v2695
    %v2697 = vsel %vm2402, %v2621, 0.0
    %v2698 = vadd.f32 %v2696, %v2697
    %v2699 = vsel %vm2402, %v2622, 0.0
    %v2700 = vadd.f32 %v2698, %v2699
    %v2701 = vsel %vm2402, %v2623, 0.0
    %v2702 = vadd.f32 %v2700, %v2701
    %v2703 = vsel %vm2402, %v2624, 0.0
    %v2704 = vadd.f32 %v2702, %v2703
    %v2705 = vsel %vm2402, %v2625, 0.0
    %v2706 = vadd.f32 %v2704, %v2705
    %v2707 = vsel %vm2402, %v2626, 0.0
    %v2708 = vadd.f32 %v2706, %v2707
    %v2709 = vsel %vm2402, %v2627, 0.0
    %v2710 = vadd.f32 %v2708, %v2709
    %v2711 = vsel %vm2402, %v2628, 0.0
    %v2712 = vadd.f32 %v2710, %v2711
    %v2713 = vsel %vm2402, %v2629, 0.0
    %v2714 = vadd.f32 %v2712, %v2713
    %v2715 = vsel %vm2402, %v2630, 0.0
    %v2716 = vadd.f32 %v2714, %v2715
    %v2717 = vsel %vm2402, %v2631, 0.0
    %v2718 = vadd.f32 %v2716, %v2717
    %v2719 = vsel %vm2402, %v2632, 0.0
    %v2720 = vadd.f32 %v2718, %v2719
    %v2721 = vsel %vm2402, %v2633, 0.0
    %v2722 = vadd.f32 %v2720, %v2721
    %v2723 = vsel %vm2402, %v2634, 0.0
    %v2724 = vadd.f32 %v2722, %v2723
    %v2725 = vsel %vm2402, %v2635, 0.0
    %v2726 = vadd.f32 %v2724, %v2725
    %v2727 = vsel %vm2402, %v2636, 0.0
    %v2728 = vadd.f32 %v2726, %v2727
    %v2729 = vsel %vm2402, %v2637, 0.0
    %v2730 = vadd.f32 %v2728, %v2729
    %v2731 = vsel %vm2402, %v2638, 0.0
    %v2732 = vadd.f32 %v2730, %v2731
    %v2733 = vsel %vm2402, %v2639, 0.0
    %v2734 = vadd.f32 %v2732, %v2733
    %v2735 = vsel %vm2402, %v2640, 0.0
    %v2736 = vadd.f32 %v2734, %v2735
    %v2737 = vsel %vm2402, %v2641, 0.0
    %v2738 = vadd.f32 %v2736, %v2737
    %v2739 = vsel %vm2402, %v2642, 0.0
    %v2740 = vadd.f32 %v2738, %v2739
    %v2741 = vsel %vm2402, %v2643, 0.0
    %v2742 = vadd.f32 %v2740, %v2741
    %v2743 = vsel %vm2402, %v2644, 0.0
    %v2744 = vadd.f32 %v2742, %v2743
    %v2745 = vsel %vm2402, %v2645, 0.0
    %v2746 = vadd.f32 %v2744, %v2745
    %v2747 = vsel %vm2402, %v2646, 0.0
    %v2748 = vadd.f32 %v2746, %v2747
    %v2749 = vsel %vm2402, %v2647, 0.0
    %v2750 = vadd.f32 %v2748, %v2749
    %v2751 = vsel %vm2402, %v2648, 0.0
    %v2752 = vadd.f32 %v2750, %v2751
    %v2753 = vsel %vm2402, %v2649, 0.0
    %v2754 = vadd.f32 %v2752, %v2753
    %v2755 = vsel %vm2402, %v2650, 0.0
    %v2756 = vadd.f32 %v2754, %v2755
    %v2757 = vsel %vm2402, %v2651, 0.0
    %v2758 = vadd.f32 %v2756, %v2757
    %v2759 = vsel %vm2402, %v2652, 0.0
    %v2760 = vadd.f32 %v2758, %v2759
    %v2761 = vsel %vm2402, %v2653, 0.0
    %v2762 = vadd.f32 %v2760, %v2761
    %v2763 = vsel %vm2402, %v2654, 0.0
    %v2764 = vadd.f32 %v2762, %v2763
    %v2765 = vsel %vm2402, %v2655, 0.0
    %v2766 = vadd.f32 %v2764, %v2765
    %v2767 = vsel %vm2402, %v2656, 0.0
    %v2768 = vadd.f32 %v2766, %v2767
    %v2769 = vsel %vm2402, %v2657, 0.0
    %v2770 = vadd.f32 %v2768, %v2769
    %v2771 = vsel %vm2402, %v2658, 0.0
    %v2772 = vadd.f32 %v2770, %v2771
    %v2773 = vsel %vm2402, %v2659, 0.0
    %v2774 = vadd.f32 %v2772, %v2773
    %v2775 = vsel %vm2402, %v2660, 0.0
    %v2776 = vadd.f32 %v2774, %v2775
    %v2777 = vsel %vm2402, %v2661, 0.0
    %v2778 = vadd.f32 %v2776, %v2777
    %v2779 = vsel %vm2402, %v2662, 0.0
    %v2780 = vadd.f32 %v2778, %v2779
    %v2781 = vsel %vm2402, %v2663, 0.0
    %v2782 = vadd.f32 %v2780, %v2781
    %v2783 = vsel %vm2402, %v2664, 0.0
    %v2784 = vadd.f32 %v2782, %v2783
    %v2785 = vsel %vm2402, %v2665, 0.0
    %v2786 = vadd.f32 %v2784, %v2785
    %v2787 = vsel %vm2402, %v2666, 0.0
    %v2788 = vadd.f32 %v2786, %v2787
    %v2789 = vsel %vm2402, %v2667, 0.0
    %v2790 = vadd.f32 %v2788, %v2789
    %v2791 = vsel %vm2402, %v2668, 0.0
    %v2792 = vadd.f32 %v2790, %v2791
    %v2793 = vsel %vm2402, %v2669, 0.0
    %v2794 = vadd.f32 %v2792, %v2793
    %v2795 = vsel %vm2402, %v2670, 0.0
    %v2796 = vadd.f32 %v2794, %v2795
    %v2797 = vsel %vm2402, %v2671, 0.0
    %v2798 = vadd.f32 %v2796, %v2797
    %v2799 = vrot.slane %v2798, 4
    %v2800 = vadd.f32 %v2798, %v2799
    %v2801 = vrot.slane %v2800, 2
    %v2802 = vadd.f32 %v2800, %v2801
    %v2803 = vrot.slane %v2802, 1
    %v2804 = vadd.f32 %v2802, %v2803
    %v2805 = vmul.f32 %v2804, %v2542
    %v2806 = vadd.f32 %v2805, 1e-05
    %v2807 = vrsqrt.pop %v2806
    %v2808 = vmul.f32 %v2807, %v2806
    %v2809 = vmul.f32 %v2808, %v2807
    %v2810 = vmul.f32 0.5, %v2809
    %v2811 = vsub.f32 1.5, %v2810
    %v2812 = vmul.f32 %v2807, %v2811
    %vm2813 = vweird.f32 %v2806
    %vm2814 = vweird.f32 %v2807
    %vm2815 = vmor %vm2813, %vm2814
    %v2816 = vsel %vm2815, %v2807, %v2812
    %v2817 = vmul.f32 %v2008, %v2816
    %v2818 = vmul.f32 %v2543, %v2817
    %v2819 = vsub.f32 %v2009, %v2818
    %v2820 = vperm.slane %v2817, 0
    %v2821 = vmul.f32 %v2338, %v2820
    %v2822 = vmul.f32 %v2339, %v2820
    %v2823 = vmul.f32 %v2340, %v2820
    %v2824 = vmul.f32 %v2341, %v2820
    %v2825 = vmul.f32 %v2342, %v2820
    %v2826 = vmul.f32 %v2343, %v2820
    %v2827 = vmul.f32 %v2344, %v2820
    %v2828 = vmul.f32 %v2345, %v2820
    %v2829 = vmul.f32 %v2346, %v2820
    %v2830 = vmul.f32 %v2347, %v2820
    %v2831 = vmul.f32 %v2348, %v2820
    %v2832 = vmul.f32 %v2349, %v2820
    %v2833 = vmul.f32 %v2350, %v2820
    %v2834 = vmul.f32 %v2351, %v2820
    %v2835 = vmul.f32 %v2352, %v2820
    %v2836 = vmul.f32 %v2353, %v2820
    %v2837 = vmul.f32 %v2354, %v2820
    %v2838 = vmul.f32 %v2355, %v2820
    %v2839 = vmul.f32 %v2356, %v2820
    %v2840 = vmul.f32 %v2357, %v2820
    %v2841 = vmul.f32 %v2358, %v2820
    %v2842 = vmul.f32 %v2359, %v2820
    %v2843 = vmul.f32 %v2360, %v2820
    %v2844 = vmul.f32 %v2361, %v2820
    %v2845 = vmul.f32 %v2362, %v2820
    %v2846 = vmul.f32 %v2363, %v2820
    %v2847 = vmul.f32 %v2364, %v2820
    %v2848 = vmul.f32 %v2365, %v2820
    %v2849 = vmul.f32 %v2366, %v2820
    %v2850 = vmul.f32 %v2367, %v2820
    %v2851 = vmul.f32 %v2368, %v2820
    %v2852 = vmul.f32 %v2369, %v2820
    %v2853 = vmul.f32 %v2370, %v2820
    %v2854 = vmul.f32 %v2371, %v2820
    %v2855 = vmul.f32 %v2372, %v2820
    %v2856 = vmul.f32 %v2373, %v2820
    %v2857 = vmul.f32 %v2374, %v2820
    %v2858 = vmul.f32 %v2375, %v2820
    %v2859 = vmul.f32 %v2376, %v2820
    %v2860 = vmul.f32 %v2377, %v2820
    %v2861 = vmul.f32 %v2378, %v2820
    %v2862 = vmul.f32 %v2379, %v2820
    %v2863 = vmul.f32 %v2380, %v2820
    %v2864 = vmul.f32 %v2381, %v2820
    %v2865 = vmul.f32 %v2382, %v2820
    %v2866 = vmul.f32 %v2383, %v2820
    %v2867 = vmul.f32 %v2384, %v2820
    %v2868 = vmul.f32 %v2385, %v2820
    %v2869 = vmul.f32 %v2386, %v2820
    %v2870 = vmul.f32 %v2387, %v2820
    %v2871 = vmul.f32 %v2388, %v2820
    %v2872 = vmul.f32 %v2389, %v2820
    %v2873 = vmul.f32 %v2390, %v2820
    %v2874 = vmul.f32 %v2391, %v2820
    %v2875 = vmul.f32 %v2392, %v2820
    %v2876 = vmul.f32 %v2393, %v2820
    %v2877 = vmul.f32 %v2394, %v2820
    %v2878 = vmul.f32 %v2395, %v2820
    %v2879 = vmul.f32 %v2396, %v2820
    %v2880 = vmul.f32 %v2397, %v2820
    %v2881 = vmul.f32 %v2398, %v2820
    %v2882 = vmul.f32 %v2399, %v2820
    %v2883 = vmul.f32 %v2400, %v2820
    %v2884 = vmul.f32 %v2401, %v2820
    %v2885 = vperm.slane %v2819, 0
    %v2886 = vadd.f32 %v2821, %v2885
    %v2887 = vadd.f32 %v2822, %v2885
    %v2888 = vadd.f32 %v2823, %v2885
    %v2889 = vadd.f32 %v2824, %v2885
    %v2890 = vadd.f32 %v2825, %v2885
    %v2891 = vadd.f32 %v2826, %v2885
    %v2892 = vadd.f32 %v2827, %v2885
    %v2893 = vadd.f32 %v2828, %v2885
    %v2894 = vadd.f32 %v2829, %v2885
    %v2895 = vadd.f32 %v2830, %v2885
    %v2896 = vadd.f32 %v2831, %v2885
    %v2897 = vadd.f32 %v2832, %v2885
    %v2898 = vadd.f32 %v2833, %v2885
    %v2899 = vadd.f32 %v2834, %v2885
    %v2900 = vadd.f32 %v2835, %v2885
    %v2901 = vadd.f32 %v2836, %v2885
    %v2902 = vadd.f32 %v2837, %v2885
    %v2903 = vadd.f32 %v2838, %v2885
    %v2904 = vadd.f32 %v2839, %v2885
    %v2905 = vadd.f32 %v2840, %v2885
    %v2906 = vadd.f32 %v2841, %v2885
    %v2907 = vadd.f32 %v2842, %v2885
    %v2908 = vadd.f32 %v2843, %v2885
    %v2909 = vadd.f32 %v2844, %v2885
    %v2910 = vadd.f32 %v2845, %v2885
    %v2911 = vadd.f32 %v2846, %v2885
    %v2912 = vadd.f32 %v2847, %v2885
    %v2913 = vadd.f32 %v2848, %v2885
    %v2914 = vadd.f32 %v2849, %v2885
    %v2915 = vadd.f32 %v2850, %v2885
    %v2916 = vadd.f32 %v2851, %v2885
    %v2917 = vadd.f32 %v2852, %v2885
    %v2918 = vadd.f32 %v2853, %v2885
    %v2919 = vadd.f32 %v2854, %v2885
    %v2920 = vadd.f32 %v2855, %v2885
    %v2921 = vadd.f32 %v2856, %v2885
    %v2922 = vadd.f32 %v2857, %v2885
    %v2923 = vadd.f32 %v2858, %v2885
    %v2924 = vadd.f32 %v2859, %v2885
    %v2925 = vadd.f32 %v2860, %v2885
    %v2926 = vadd.f32 %v2861, %v2885
    %v2927 = vadd.f32 %v2862, %v2885
    %v2928 = vadd.f32 %v2863, %v2885
    %v2929 = vadd.f32 %v2864, %v2885
    %v2930 = vadd.f32 %v2865, %v2885
    %v2931 = vadd.f32 %v2866, %v2885
    %v2932 = vadd.f32 %v2867, %v2885
    %v2933 = vadd.f32 %v2868, %v2885
    %v2934 = vadd.f32 %v2869, %v2885
    %v2935 = vadd.f32 %v2870, %v2885
    %v2936 = vadd.f32 %v2871, %v2885
    %v2937 = vadd.f32 %v2872, %v2885
    %v2938 = vadd.f32 %v2873, %v2885
    %v2939 = vadd.f32 %v2874, %v2885
    %v2940 = vadd.f32 %v2875, %v2885
    %v2941 = vadd.f32 %v2876, %v2885
    %v2942 = vadd.f32 %v2877, %v2885
    %v2943 = vadd.f32 %v2878, %v2885
    %v2944 = vadd.f32 %v2879, %v2885
    %v2945 = vadd.f32 %v2880, %v2885
    %v2946 = vadd.f32 %v2881, %v2885
    %v2947 = vadd.f32 %v2882, %v2885
    %v2948 = vadd.f32 %v2883, %v2885
    %v2949 = vadd.f32 %v2884, %v2885
    %v2950 = vmax.f32 %v2886, 0.0
    %v2951 = vmax.f32 %v2887, 0.0
    %v2952 = vmax.f32 %v2888, 0.0
    %v2953 = vmax.f32 %v2889, 0.0
    %v2954 = vmax.f32 %v2890, 0.0
    %v2955 = vmax.f32 %v2891, 0.0
    %v2956 = vmax.f32 %v2892, 0.0
    %v2957 = vmax.f32 %v2893, 0.0
    %v2958 = vmax.f32 %v2894, 0.0
    %v2959 = vmax.f32 %v2895, 0.0
    %v2960 = vmax.f32 %v2896, 0.0
    %v2961 = vmax.f32 %v2897, 0.0
    %v2962 = vmax.f32 %v2898, 0.0
    %v2963 = vmax.f32 %v2899, 0.0
    %v2964 = vmax.f32 %v2900, 0.0
    %v2965 = vmax.f32 %v2901, 0.0
    %v2966 = vmax.f32 %v2902, 0.0
    %v2967 = vmax.f32 %v2903, 0.0
    %v2968 = vmax.f32 %v2904, 0.0
    %v2969 = vmax.f32 %v2905, 0.0
    %v2970 = vmax.f32 %v2906, 0.0
    %v2971 = vmax.f32 %v2907, 0.0
    %v2972 = vmax.f32 %v2908, 0.0
    %v2973 = vmax.f32 %v2909, 0.0
    %v2974 = vmax.f32 %v2910, 0.0
    %v2975 = vmax.f32 %v2911, 0.0
    %v2976 = vmax.f32 %v2912, 0.0
    %v2977 = vmax.f32 %v2913, 0.0
    %v2978 = vmax.f32 %v2914, 0.0
    %v2979 = vmax.f32 %v2915, 0.0
    %v2980 = vmax.f32 %v2916, 0.0
    %v2981 = vmax.f32 %v2917, 0.0
    %v2982 = vmax.f32 %v2918, 0.0
    %v2983 = vmax.f32 %v2919, 0.0
    %v2984 = vmax.f32 %v2920, 0.0
    %v2985 = vmax.f32 %v2921, 0.0
    %v2986 = vmax.f32 %v2922, 0.0
    %v2987 = vmax.f32 %v2923, 0.0
    %v2988 = vmax.f32 %v2924, 0.0
    %v2989 = vmax.f32 %v2925, 0.0
    %v2990 = vmax.f32 %v2926, 0.0
    %v2991 = vmax.f32 %v2927, 0.0
    %v2992 = vmax.f32 %v2928, 0.0
    %v2993 = vmax.f32 %v2929, 0.0
    %v2994 = vmax.f32 %v2930, 0.0
    %v2995 = vmax.f32 %v2931, 0.0
    %v2996 = vmax.f32 %v2932, 0.0
    %v2997 = vmax.f32 %v2933, 0.0
    %v2998 = vmax.f32 %v2934, 0.0
    %v2999 = vmax.f32 %v2935, 0.0
    %v3000 = vmax.f32 %v2936, 0.0
    %v3001 = vmax.f32 %v2937, 0.0
    %v3002 = vmax.f32 %v2938, 0.0
    %v3003 = vmax.f32 %v2939, 0.0
    %v3004 = vmax.f32 %v2940, 0.0
    %v3005 = vmax.f32 %v2941, 0.0
    %v3006 = vmax.f32 %v2942, 0.0
    %v3007 = vmax.f32 %v2943, 0.0
    %v3008 = vmax.f32 %v2944, 0.0
    %v3009 = vmax.f32 %v2945, 0.0
    %v3010 = vmax.f32 %v2946, 0.0
    %v3011 = vmax.f32 %v2947, 0.0
    %v3012 = vmax.f32 %v2948, 0.0
    %v3013 = vmax.f32 %v2949, 0.0
    %3014 = vst.msk [vmem:[#allocation4] sm:$0xff] %vm2402, %v2950
    %3015 = vst.msk [vmem:[#allocation4 + $0x8] sm:$0xff] %vm2402, %v2951
    %3016 = vst.msk [vmem:[#allocation4 + $0x10] sm:$0xff] %vm2402, %v2952
    %3017 = vst.msk [vmem:[#allocation4 + $0x18] sm:$0xff] %vm2402, %v2953
    %3018 = vst.msk [vmem:[#allocation4 + $0x20] sm:$0xff] %vm2402, %v2954
    %3019 = vst.msk [vmem:[#allocation4 + $0x28] sm:$0xff] %vm2402, %v2955
    %3020 = vst.msk [vmem:[#allocation4 + $0x30] sm:$0xff] %vm2402, %v2956
    %3021 = vst.msk [vmem:[#allocation4 + $0x38] sm:$0xff] %vm2402, %v2957
    %3022 = vst.msk [vmem:[#allocation4 + $0x40] sm:$0xff] %vm2402, %v2958
    %3023 = vst.msk [vmem:[#allocation4 + $0x48] sm:$0xff] %vm2402, %v2959
    %3024 = vst.msk [vmem:[#allocation4 + $0x50] sm:$0xff] %vm2402, %v2960
    %3025 = vst.msk [vmem:[#allocation4 + $0x58] sm:$0xff] %vm2402, %v2961
    %3026 = vst.msk [vmem:[#allocation4 + $0x60] sm:$0xff] %vm2402, %v2962
    %3027 = vst.msk [vmem:[#allocation4 + $0x68] sm:$0xff] %vm2402, %v2963
    %3028 = vst.msk [vmem:[#allocation4 + $0x70] sm:$0xff] %vm2402, %v2964
    %3029 = vst.msk [vmem:[#allocation4 + $0x78] sm:$0xff] %vm2402, %v2965
    %3030 = vst.msk [vmem:[#allocation4 + $0x80] sm:$0xff] %vm2402, %v2966
    %3031 = vst.msk [vmem:[#allocation4 + $0x88] sm:$0xff] %vm2402, %v2967
    %3032 = vst.msk [vmem:[#allocation4 + $0x90] sm:$0xff] %vm2402, %v2968
    %3033 = vst.msk [vmem:[#allocation4 + $0x98] sm:$0xff] %vm2402, %v2969
    %3034 = vst.msk [vmem:[#allocation4 + $0xa0] sm:$0xff] %vm2402, %v2970
    %3035 = vst.msk [vmem:[#allocation4 + $0xa8] sm:$0xff] %vm2402, %v2971
    %3036 = vst.msk [vmem:[#allocation4 + $0xb0] sm:$0xff] %vm2402, %v2972
    %3037 = vst.msk [vmem:[#allocation4 + $0xb8] sm:$0xff] %vm2402, %v2973
    %3038 = vst.msk [vmem:[#allocation4 + $0xc0] sm:$0xff] %vm2402, %v2974
    %3039 = vst.msk [vmem:[#allocation4 + $0xc8] sm:$0xff] %vm2402, %v2975
    %3040 = vst.msk [vmem:[#allocation4 + $0xd0] sm:$0xff] %vm2402, %v2976
    %3041 = vst.msk [vmem:[#allocation4 + $0xd8] sm:$0xff] %vm2402, %v2977
    %3042 = vst.msk [vmem:[#allocation4 + $0xe0] sm:$0xff] %vm2402, %v2978
    %3043 = vst.msk [vmem:[#allocation4 + $0xe8] sm:$0xff] %vm2402, %v2979
    %3044 = vst.msk [vmem:[#allocation4 + $0xf0] sm:$0xff] %vm2402, %v2980
    %3045 = vst.msk [vmem:[#allocation4 + $0xf8] sm:$0xff] %vm2402, %v2981
    %3046 = vst.msk [vmem:[#allocation4 + $0x100] sm:$0xff] %vm2402, %v2982
    %3047 = vst.msk [vmem:[#allocation4 + $0x108] sm:$0xff] %vm2402, %v2983
    %3048 = vst.msk [vmem:[#allocation4 + $0x110] sm:$0xff] %vm2402, %v2984
    %3049 = vst.msk [vmem:[#allocation4 + $0x118] sm:$0xff] %vm2402, %v2985
    %3050 = vst.msk [vmem:[#allocation4 + $0x120] sm:$0xff] %vm2402, %v2986
    %3051 = vst.msk [vmem:[#allocation4 + $0x128] sm:$0xff] %vm2402, %v2987
    %3052 = vst.msk [vmem:[#allocation4 + $0x130] sm:$0xff] %vm2402, %v2988
    %3053 = vst.msk [vmem:[#allocation4 + $0x138] sm:$0xff] %vm2402, %v2989
    %3054 = vst.msk [vmem:[#allocation4 + $0x140] sm:$0xff] %vm2402, %v2990
    %3055 = vst.msk [vmem:[#allocation4 + $0x148] sm:$0xff] %vm2402, %v2991
    %3056 = vst.msk [vmem:[#allocation4 + $0x150] sm:$0xff] %vm2402, %v2992
    %3057 = vst.msk [vmem:[#allocation4 + $0x158] sm:$0xff] %vm2402, %v2993
    %3058 = vst.msk [vmem:[#allocation4 + $0x160] sm:$0xff] %vm2402, %v2994
    %3059 = vst.msk [vmem:[#allocation4 + $0x168] sm:$0xff] %vm2402, %v2995
    %3060 = vst.msk [vmem:[#allocation4 + $0x170] sm:$0xff] %vm2402, %v2996
    %3061 = vst.msk [vmem:[#allocation4 + $0x178] sm:$0xff] %vm2402, %v2997
    %3062 = vst.msk [vmem:[#allocation4 + $0x180] sm:$0xff] %vm2402, %v2998
    %3063 = vst.msk [vmem:[#allocation4 + $0x188] sm:$0xff] %vm2402, %v2999
    %3064 = vst.msk [vmem:[#allocation4 + $0x190] sm:$0xff] %vm2402, %v3000
    %3065 = vst.msk [vmem:[#allocation4 + $0x198] sm:$0xff] %vm2402, %v3001
    %3066 = vst.msk [vmem:[#allocation4 + $0x1a0] sm:$0xff] %vm2402, %v3002
    %3067 = vst.msk [vmem:[#allocation4 + $0x1a8] sm:$0xff] %vm2402, %v3003
    %3068 = vst.msk [vmem:[#allocation4 + $0x1b0] sm:$0xff] %vm2402, %v3004
    %3069 = vst.msk [vmem:[#allocation4 + $0x1b8] sm:$0xff] %vm2402, %v3005
    %3070 = vst.msk [vmem:[#allocation4 + $0x1c0] sm:$0xff] %vm2402, %v3006
    %3071 = vst.msk [vmem:[#allocation4 + $0x1c8] sm:$0xff] %vm2402, %v3007
    %3072 = vst.msk [vmem:[#allocation4 + $0x1d0] sm:$0xff] %vm2402, %v3008
    %3073 = vst.msk [vmem:[#allocation4 + $0x1d8] sm:$0xff] %vm2402, %v3009
    %3074 = vst.msk [vmem:[#allocation4 + $0x1e0] sm:$0xff] %vm2402, %v3010
    %3075 = vst.msk [vmem:[#allocation4 + $0x1e8] sm:$0xff] %vm2402, %v3011
    %3076 = vst.msk [vmem:[#allocation4 + $0x1f0] sm:$0xff] %vm2402, %v3012
    %3077 = vst.msk [vmem:[#allocation4 + $0x1f8] sm:$0xff] %vm2402, %v3013
    %v3078 = vld [vmem:[#allocation4] sm:$0xff]
    %v3079 = vld [vmem:[#allocation4 + $0x8] sm:$0xff]
    %v3080 = vld [vmem:[#allocation4 + $0x10] sm:$0xff]
    %v3081 = vld [vmem:[#allocation4 + $0x18] sm:$0xff]
    %v3082 = vld [vmem:[#allocation4 + $0x20] sm:$0xff]
    %v3083 = vld [vmem:[#allocation4 + $0x28] sm:$0xff]
    %v3084 = vld [vmem:[#allocation4 + $0x30] sm:$0xff]
    %v3085 = vld [vmem:[#allocation4 + $0x38] sm:$0xff]
    %v3086 = vld [vmem:[#allocation4 + $0x40] sm:$0xff]
    %v3087 = vld [vmem:[#allocation4 + $0x48] sm:$0xff]
    %v3088 = vld [vmem:[#allocation4 + $0x50] sm:$0xff]
    %v3089 = vld [vmem:[#allocation4 + $0x58] sm:$0xff]
    %v3090 = vld [vmem:[#allocation4 + $0x60] sm:$0xff]
    %v3091 = vld [vmem:[#allocation4 + $0x68] sm:$0xff]
    %v3092 = vld [vmem:[#allocation4 + $0x70] sm:$0xff]
    %v3093 = vld [vmem:[#allocation4 + $0x78] sm:$0xff]
    %v3094 = vld [vmem:[#allocation4 + $0x80] sm:$0xff]
    %v3095 = vld [vmem:[#allocation4 + $0x88] sm:$0xff]
    %v3096 = vld [vmem:[#allocation4 + $0x90] sm:$0xff]
    %v3097 = vld [vmem:[#allocation4 + $0x98] sm:$0xff]
    %v3098 = vld [vmem:[#allocation4 + $0xa0] sm:$0xff]
    %v3099 = vld [vmem:[#allocation4 + $0xa8] sm:$0xff]
    %v3100 = vld [vmem:[#allocation4 + $0xb0] sm:$0xff]
    %v3101 = vld [vmem:[#allocation4 + $0xb8] sm:$0xff]
    %v3102 = vld [vmem:[#allocation4 + $0xc0] sm:$0xff]
    %v3103 = vld [vmem:[#allocation4 + $0xc8] sm:$0xff]
    %v3104 = vld [vmem:[#allocation4 + $0xd0] sm:$0xff]
    %v3105 = vld [vmem:[#allocation4 + $0xd8] sm:$0xff]
    %v3106 = vld [vmem:[#allocation4 + $0xe0] sm:$0xff]
    %v3107 = vld [vmem:[#allocation4 + $0xe8] sm:$0xff]
    %v3108 = vld [vmem:[#allocation4 + $0xf0] sm:$0xff]
    %v3109 = vld [vmem:[#allocation4 + $0xf8] sm:$0xff]
    %v3110 = vld [vmem:[#allocation4 + $0x100] sm:$0xff]
    %v3111 = vld [vmem:[#allocation4 + $0x108] sm:$0xff]
    %v3112 = vld [vmem:[#allocation4 + $0x110] sm:$0xff]
    %v3113 = vld [vmem:[#allocation4 + $0x118] sm:$0xff]
    %v3114 = vld [vmem:[#allocation4 + $0x120] sm:$0xff]
    %v3115 = vld [vmem:[#allocation4 + $0x128] sm:$0xff]
    %v3116 = vld [vmem:[#allocation4 + $0x130] sm:$0xff]
    %v3117 = vld [vmem:[#allocation4 + $0x138] sm:$0xff]
    %v3118 = vld [vmem:[#allocation4 + $0x140] sm:$0xff]
    %v3119 = vld [vmem:[#allocation4 + $0x148] sm:$0xff]
    %v3120 = vld [vmem:[#allocation4 + $0x150] sm:$0xff]
    %v3121 = vld [vmem:[#allocation4 + $0x158] sm:$0xff]
    %v3122 = vld [vmem:[#allocation4 + $0x160] sm:$0xff]
    %v3123 = vld [vmem:[#allocation4 + $0x168] sm:$0xff]
    %v3124 = vld [vmem:[#allocation4 + $0x170] sm:$0xff]
    %v3125 = vld [vmem:[#allocation4 + $0x178] sm:$0xff]
    %v3126 = vld [vmem:[#allocation4 + $0x180] sm:$0xff]
    %v3127 = vld [vmem:[#allocation4 + $0x188] sm:$0xff]
    %v3128 = vld [vmem:[#allocation4 + $0x190] sm:$0xff]
    %v3129 = vld [vmem:[#allocation4 + $0x198] sm:$0xff]
    %v3130 = vld [vmem:[#allocation4 + $0x1a0] sm:$0xff]
    %v3131 = vld [vmem:[#allocation4 + $0x1a8] sm:$0xff]
    %v3132 = vld [vmem:[#allocation4 + $0x1b0] sm:$0xff]
    %v3133 = vld [vmem:[#allocation4 + $0x1b8] sm:$0xff]
    %v3134 = vld [vmem:[#allocation4 + $0x1c0] sm:$0xff]
    %v3135 = vld [vmem:[#allocation4 + $0x1c8] sm:$0xff]
    %v3136 = vld [vmem:[#allocation4 + $0x1d0] sm:$0xff]
    %v3137 = vld [vmem:[#allocation4 + $0x1d8] sm:$0xff]
    %v3138 = vld [vmem:[#allocation4 + $0x1e0] sm:$0xff]
    %v3139 = vld [vmem:[#allocation4 + $0x1e8] sm:$0xff]
    %v3140 = vld [vmem:[#allocation4 + $0x1f0] sm:$0xff]
    %v3141 = vld [vmem:[#allocation4 + $0x1f8] sm:$0xff]
    %v3142 = vld [vmem:[#allocation13] sm:$0x1]
    %v3143 = vld [vmem:[#allocation13 + $0x1] sm:$0x1]
    %v3144 = vld [vmem:[#allocation13 + $0x2] sm:$0x1]
    %v3145 = vld [vmem:[%s7] sm:$0xff]
    %v3146 = vld [vmem:[%s7 + $0x8] sm:$0xff]
    %v3147 = vld [vmem:[%s7 + $0x10] sm:$0xff]
    %v3148 = vld [vmem:[%s7 + $0x18] sm:$0xff]
    %v3149 = vld [vmem:[%s7 + $0x20] sm:$0xff]
    %v3150 = vld [vmem:[%s7 + $0x28] sm:$0xff]
    %v3151 = vld [vmem:[%s7 + $0x30] sm:$0xff]
    %v3152 = vld [vmem:[%s7 + $0x38] sm:$0xff]
    %v3154 = vsel %vm2402, %v3078, 0
    %v3157 = vsel %vm2402, %v3079, 0
    %v3160 = vsel %vm2402, %v3080, 0
    %v3163 = vsel %vm2402, %v3081, 0
    %v3166 = vsel %vm2402, %v3082, 0
    %v3169 = vsel %vm2402, %v3083, 0
    %v3172 = vsel %vm2402, %v3084, 0
    %v3175 = vsel %vm2402, %v3085, 0
    %v3178 = vsel %vm2402, %v3086, 0
    %v3181 = vsel %vm2402, %v3087, 0
    %v3184 = vsel %vm2402, %v3088, 0
    %v3187 = vsel %vm2402, %v3089, 0
    %v3190 = vsel %vm2402, %v3090, 0
    %v3193 = vsel %vm2402, %v3091, 0
    %v3196 = vsel %vm2402, %v3092, 0
    %v3199 = vsel %vm2402, %v3093, 0
    %v3202 = vsel %vm2402, %v3094, 0
    %v3205 = vsel %vm2402, %v3095, 0
    %v3208 = vsel %vm2402, %v3096, 0
    %v3211 = vsel %vm2402, %v3097, 0
    %v3214 = vsel %vm2402, %v3098, 0
    %v3217 = vsel %vm2402, %v3099, 0
    %v3220 = vsel %vm2402, %v3100, 0
    %v3223 = vsel %vm2402, %v3101, 0
    %v3226 = vsel %vm2402, %v3102, 0
    %v3229 = vsel %vm2402, %v3103, 0
    %v3232 = vsel %vm2402, %v3104, 0
    %v3235 = vsel %vm2402, %v3105, 0
    %v3238 = vsel %vm2402, %v3106, 0
    %v3241 = vsel %vm2402, %v3107, 0
    %v3244 = vsel %vm2402, %v3108, 0
    %v3247 = vsel %vm2402, %v3109, 0
    %v3250 = vsel %vm2402, %v3110, 0
    %v3253 = vsel %vm2402, %v3111, 0
    %v3256 = vsel %vm2402, %v3112, 0
    %v3259 = vsel %vm2402, %v3113, 0
    %v3262 = vsel %vm2402, %v3114, 0
    %v3265 = vsel %vm2402, %v3115, 0
    %v3268 = vsel %vm2402, %v3116, 0
    %v3271 = vsel %vm2402, %v3117, 0
    %v3274 = vsel %vm2402, %v3118, 0
    %v3277 = vsel %vm2402, %v3119, 0
    %v3280 = vsel %vm2402, %v3120, 0
    %v3283 = vsel %vm2402, %v3121, 0
    %v3286 = vsel %vm2402, %v3122, 0
    %v3289 = vsel %vm2402, %v3123, 0
    %v3292 = vsel %vm2402, %v3124, 0
    %v3295 = vsel %vm2402, %v3125, 0
    %v3298 = vsel %vm2402, %v3126, 0
    %v3301 = vsel %vm2402, %v3127, 0
    %v3304 = vsel %vm2402, %v3128, 0
    %v3307 = vsel %vm2402, %v3129, 0
    %v3310 = vsel %vm2402, %v3130, 0
    %v3313 = vsel %vm2402, %v3131, 0
    %v3316 = vsel %vm2402, %v3132, 0
    %v3319 = vsel %vm2402, %v3133, 0
    %v3322 = vsel %vm2402, %v3134, 0
    %v3325 = vsel %vm2402, %v3135, 0
    %v3328 = vsel %vm2402, %v3136, 0
    %v3331 = vsel %vm2402, %v3137, 0
    %v3334 = vsel %vm2402, %v3138, 0
    %v3337 = vsel %vm2402, %v3139, 0
    %v3340 = vsel %vm2402, %v3140, 0
    %v3343 = vsel %vm2402, %v3141, 0
    %3345 = vmatpush.msra.mxu0 0.0
    %3346 = vmatpush.msra.mxu0 0.0
    %3347 = vmatpush.msra.mxu0 0.0
    %3348 = vmatpush.msra.mxu0 0.0
    %3349 = vmatpush.msra.mxu0 0.0
    %3350 = vmatpush.msra.mxu0 0.0
    %3351 = vmatpush.msra.mxu0 0.0
    %3352 = vmatpush.msra.mxu0 0.0
    %3353 = vmatpush.msra.mxu0 %v3152
    %3354 = vmatpush.msra.mxu0 %v3151
    %3355 = vmatpush.msra.mxu0 %v3150
    %3356 = vmatpush.msra.mxu0 %v3149
    %3357 = vmatpush.msra.mxu0 %v3148
    %3358 = vmatpush.msra.mxu0 %v3147
    %3359 = vmatpush.msra.mxu0 %v3146
    %3360 = vmatpush.msra.mxu0 %v3145
    %3361 = vmatmul.f32.gmra.mxu0 %v3154
    %v3362 = vpop.f32.mrf.mxu0
    %v3363 = vadd.f32 0.0, %v3362
    %3364 = vmatmul.f32.gmra.mxu0 %v3157
    %v3365 = vpop.f32.mrf.mxu0
    %v3366 = vadd.f32 0.0, %v3365
    %3367 = vmatmul.f32.gmra.mxu0 %v3160
    %v3368 = vpop.f32.mrf.mxu0
    %v3369 = vadd.f32 0.0, %v3368
    %3370 = vmatmul.f32.gmra.mxu0 %v3163
    %v3371 = vpop.f32.mrf.mxu0
    %v3372 = vadd.f32 0.0, %v3371
    %3373 = vmatmul.f32.gmra.mxu0 %v3166
    %v3374 = vpop.f32.mrf.mxu0
    %v3375 = vadd.f32 0.0, %v3374
    %3376 = vmatmul.f32.gmra.mxu0 %v3169
    %v3377 = vpop.f32.mrf.mxu0
    %v3378 = vadd.f32 0.0, %v3377
    %3379 = vmatmul.f32.gmra.mxu0 %v3172
    %v3380 = vpop.f32.mrf.mxu0
    %v3381 = vadd.f32 0.0, %v3380
    %3382 = vmatmul.f32.gmra.mxu0 %v3175
    %v3383 = vpop.f32.mrf.mxu0
    %v3384 = vadd.f32 0.0, %v3383
    %3385 = vmatmul.f32.gmra.mxu0 %v3178
    %v3386 = vpop.f32.mrf.mxu0
    %v3387 = vadd.f32 0.0, %v3386
    %3388 = vmatmul.f32.gmra.mxu0 %v3181
    %v3389 = vpop.f32.mrf.mxu0
    %v3390 = vadd.f32 0.0, %v3389
    %3391 = vmatmul.f32.gmra.mxu0 %v3184
    %v3392 = vpop.f32.mrf.mxu0
    %v3393 = vadd.f32 0.0, %v3392
    %3394 = vmatmul.f32.gmra.mxu0 %v3187
    %v3395 = vpop.f32.mrf.mxu0
    %v3396 = vadd.f32 0.0, %v3395
    %3397 = vmatmul.f32.gmra.mxu0 %v3190
    %v3398 = vpop.f32.mrf.mxu0
    %v3399 = vadd.f32 0.0, %v3398
    %3400 = vmatmul.f32.gmra.mxu0 %v3193
    %v3401 = vpop.f32.mrf.mxu0
    %v3402 = vadd.f32 0.0, %v3401
    %3403 = vmatmul.f32.gmra.mxu0 %v3196
    %v3404 = vpop.f32.mrf.mxu0
    %v3405 = vadd.f32 0.0, %v3404
    %3406 = vmatmul.f32.gmra.mxu0 %v3199
    %v3407 = vpop.f32.mrf.mxu0
    %v3408 = vadd.f32 0.0, %v3407
    %3409 = vmatmul.f32.gmra.mxu0 %v3202
    %v3410 = vpop.f32.mrf.mxu0
    %v3411 = vadd.f32 0.0, %v3410
    %3412 = vmatmul.f32.gmra.mxu0 %v3205
    %v3413 = vpop.f32.mrf.mxu0
    %v3414 = vadd.f32 0.0, %v3413
    %3415 = vmatmul.f32.gmra.mxu0 %v3208
    %v3416 = vpop.f32.mrf.mxu0
    %v3417 = vadd.f32 0.0, %v3416
    %3418 = vmatmul.f32.gmra.mxu0 %v3211
    %v3419 = vpop.f32.mrf.mxu0
    %v3420 = vadd.f32 0.0, %v3419
    %3421 = vmatmul.f32.gmra.mxu0 %v3214
    %v3422 = vpop.f32.mrf.mxu0
    %v3423 = vadd.f32 0.0, %v3422
    %3424 = vmatmul.f32.gmra.mxu0 %v3217
    %v3425 = vpop.f32.mrf.mxu0
    %v3426 = vadd.f32 0.0, %v3425
    %3427 = vmatmul.f32.gmra.mxu0 %v3220
    %v3428 = vpop.f32.mrf.mxu0
    %v3429 = vadd.f32 0.0, %v3428
    %3430 = vmatmul.f32.gmra.mxu0 %v3223
    %v3431 = vpop.f32.mrf.mxu0
    %v3432 = vadd.f32 0.0, %v3431
    %3433 = vmatmul.f32.gmra.mxu0 %v3226
    %v3434 = vpop.f32.mrf.mxu0
    %v3435 = vadd.f32 0.0, %v3434
    %3436 = vmatmul.f32.gmra.mxu0 %v3229
    %v3437 = vpop.f32.mrf.mxu0
    %v3438 = vadd.f32 0.0, %v3437
    %3439 = vmatmul.f32.gmra.mxu0 %v3232
    %v3440 = vpop.f32.mrf.mxu0
    %v3441 = vadd.f32 0.0, %v3440
    %3442 = vmatmul.f32.gmra.mxu0 %v3235
    %v3443 = vpop.f32.mrf.mxu0
    %v3444 = vadd.f32 0.0, %v3443
    %3445 = vmatmul.f32.gmra.mxu0 %v3238
    %v3446 = vpop.f32.mrf.mxu0
    %v3447 = vadd.f32 0.0, %v3446
    %3448 = vmatmul.f32.gmra.mxu0 %v3241
    %v3449 = vpop.f32.mrf.mxu0
    %v3450 = vadd.f32 0.0, %v3449
    %3451 = vmatmul.f32.gmra.mxu0 %v3244
    %v3452 = vpop.f32.mrf.mxu0
    %v3453 = vadd.f32 0.0, %v3452
    %3454 = vmatmul.f32.gmra.mxu0 %v3247
    %v3455 = vpop.f32.mrf.mxu0
    %v3456 = vadd.f32 0.0, %v3455
    %3457 = vmatmul.f32.gmra.mxu0 %v3250
    %v3458 = vpop.f32.mrf.mxu0
    %v3459 = vadd.f32 0.0, %v3458
    %3460 = vmatmul.f32.gmra.mxu0 %v3253
    %v3461 = vpop.f32.mrf.mxu0
    %v3462 = vadd.f32 0.0, %v3461
    %3463 = vmatmul.f32.gmra.mxu0 %v3256
    %v3464 = vpop.f32.mrf.mxu0
    %v3465 = vadd.f32 0.0, %v3464
    %3466 = vmatmul.f32.gmra.mxu0 %v3259
    %v3467 = vpop.f32.mrf.mxu0
    %v3468 = vadd.f32 0.0, %v3467
    %3469 = vmatmul.f32.gmra.mxu0 %v3262
    %v3470 = vpop.f32.mrf.mxu0
    %v3471 = vadd.f32 0.0, %v3470
    %3472 = vmatmul.f32.gmra.mxu0 %v3265
    %v3473 = vpop.f32.mrf.mxu0
    %v3474 = vadd.f32 0.0, %v3473
    %3475 = vmatmul.f32.gmra.mxu0 %v3268
    %v3476 = vpop.f32.mrf.mxu0
    %v3477 = vadd.f32 0.0, %v3476
    %3478 = vmatmul.f32.gmra.mxu0 %v3271
    %v3479 = vpop.f32.mrf.mxu0
    %v3480 = vadd.f32 0.0, %v3479
    %3481 = vmatmul.f32.gmra.mxu0 %v3274
    %v3482 = vpop.f32.mrf.mxu0
    %v3483 = vadd.f32 0.0, %v3482
    %3484 = vmatmul.f32.gmra.mxu0 %v3277
    %v3485 = vpop.f32.mrf.mxu0
    %v3486 = vadd.f32 0.0, %v3485
    %3487 = vmatmul.f32.gmra.mxu0 %v3280
    %v3488 = vpop.f32.mrf.mxu0
    %v3489 = vadd.f32 0.0, %v3488
    %3490 = vmatmul.f32.gmra.mxu0 %v3283
    %v3491 = vpop.f32.mrf.mxu0
    %v3492 = vadd.f32 0.0, %v3491
    %3493 = vmatmul.f32.gmra.mxu0 %v3286
    %v3494 = vpop.f32.mrf.mxu0
    %v3495 = vadd.f32 0.0, %v3494
    %3496 = vmatmul.f32.gmra.mxu0 %v3289
    %v3497 = vpop.f32.mrf.mxu0
    %v3498 = vadd.f32 0.0, %v3497
    %3499 = vmatmul.f32.gmra.mxu0 %v3292
    %v3500 = vpop.f32.mrf.mxu0
    %v3501 = vadd.f32 0.0, %v3500
    %3502 = vmatmul.f32.gmra.mxu0 %v3295
    %v3503 = vpop.f32.mrf.mxu0
    %v3504 = vadd.f32 0.0, %v3503
    %3505 = vmatmul.f32.gmra.mxu0 %v3298
    %v3506 = vpop.f32.mrf.mxu0
    %v3507 = vadd.f32 0.0, %v3506
    %3508 = vmatmul.f32.gmra.mxu0 %v3301
    %v3509 = vpop.f32.mrf.mxu0
    %v3510 = vadd.f32 0.0, %v3509
    %3511 = vmatmul.f32.gmra.mxu0 %v3304
    %v3512 = vpop.f32.mrf.mxu0
    %v3513 = vadd.f32 0.0, %v3512
    %3514 = vmatmul.f32.gmra.mxu0 %v3307
    %v3515 = vpop.f32.mrf.mxu0
    %v3516 = vadd.f32 0.0, %v3515
    %3517 = vmatmul.f32.gmra.mxu0 %v3310
    %v3518 = vpop.f32.mrf.mxu0
    %v3519 = vadd.f32 0.0, %v3518
    %3520 = vmatmul.f32.gmra.mxu0 %v3313
    %v3521 = vpop.f32.mrf.mxu0
    %v3522 = vadd.f32 0.0, %v3521
    %3523 = vmatmul.f32.gmra.mxu0 %v3316
    %v3524 = vpop.f32.mrf.mxu0
    %v3525 = vadd.f32 0.0, %v3524
    %3526 = vmatmul.f32.gmra.mxu0 %v3319
    %v3527 = vpop.f32.mrf.mxu0
    %v3528 = vadd.f32 0.0, %v3527
    %3529 = vmatmul.f32.gmra.mxu0 %v3322
    %v3530 = vpop.f32.mrf.mxu0
    %v3531 = vadd.f32 0.0, %v3530
    %3532 = vmatmul.f32.gmra.mxu0 %v3325
    %v3533 = vpop.f32.mrf.mxu0
    %v3534 = vadd.f32 0.0, %v3533
    %3535 = vmatmul.f32.gmra.mxu0 %v3328
    %v3536 = vpop.f32.mrf.mxu0
    %v3537 = vadd.f32 0.0, %v3536
    %3538 = vmatmul.f32.gmra.mxu0 %v3331
    %v3539 = vpop.f32.mrf.mxu0
    %v3540 = vadd.f32 0.0, %v3539
    %3541 = vmatmul.f32.gmra.mxu0 %v3334
    %v3542 = vpop.f32.mrf.mxu0
    %v3543 = vadd.f32 0.0, %v3542
    %3544 = vmatmul.f32.gmra.mxu0 %v3337
    %v3545 = vpop.f32.mrf.mxu0
    %v3546 = vadd.f32 0.0, %v3545
    %3547 = vmatmul.f32.gmra.mxu0 %v3340
    %v3548 = vpop.f32.mrf.mxu0
    %v3549 = vadd.f32 0.0, %v3548
    %3550 = vmatmul.f32.gmra.mxu0 %v3343
    %v3551 = vpop.f32.mrf.mxu0
    %v3552 = vadd.f32 0.0, %v3551
    %3553 = vdwg.mxu0
    %s3554 = scalar_lea.vmem %s7, 64
    %v3555 = vld [vmem:[%s3554] sm:$0xff]
    %v3556 = vld [vmem:[%s3554 + $0x8] sm:$0xff]
    %v3557 = vld [vmem:[%s3554 + $0x10] sm:$0xff]
    %v3558 = vld [vmem:[%s3554 + $0x18] sm:$0xff]
    %v3559 = vld [vmem:[%s3554 + $0x20] sm:$0xff]
    %v3560 = vld [vmem:[%s3554 + $0x28] sm:$0xff]
    %v3561 = vld [vmem:[%s3554 + $0x30] sm:$0xff]
    %v3562 = vld [vmem:[%s3554 + $0x38] sm:$0xff]
    %3563 = vmatpush.msra.mxu0 0.0
    %3564 = vmatpush.msra.mxu0 0.0
    %3565 = vmatpush.msra.mxu0 0.0
    %3566 = vmatpush.msra.mxu0 0.0
    %3567 = vmatpush.msra.mxu0 0.0
    %3568 = vmatpush.msra.mxu0 0.0
    %3569 = vmatpush.msra.mxu0 0.0
    %3570 = vmatpush.msra.mxu0 0.0
    %3571 = vmatpush.msra.mxu0 %v3562
    %3572 = vmatpush.msra.mxu0 %v3561
    %3573 = vmatpush.msra.mxu0 %v3560
    %3574 = vmatpush.msra.mxu0 %v3559
    %3575 = vmatpush.msra.mxu0 %v3558
    %3576 = vmatpush.msra.mxu0 %v3557
    %3577 = vmatpush.msra.mxu0 %v3556
    %3578 = vmatpush.msra.mxu0 %v3555
    %3579 = vmatmul.f32.gmra.mxu0 %v3154
    %v3580 = vpop.f32.mrf.mxu0
    %v3581 = vadd.f32 0.0, %v3580
    %3582 = vmatmul.f32.gmra.mxu0 %v3157
    %v3583 = vpop.f32.mrf.mxu0
    %v3584 = vadd.f32 0.0, %v3583
    %3585 = vmatmul.f32.gmra.mxu0 %v3160
    %v3586 = vpop.f32.mrf.mxu0
    %v3587 = vadd.f32 0.0, %v3586
    %3588 = vmatmul.f32.gmra.mxu0 %v3163
    %v3589 = vpop.f32.mrf.mxu0
    %v3590 = vadd.f32 0.0, %v3589
    %3591 = vmatmul.f32.gmra.mxu0 %v3166
    %v3592 = vpop.f32.mrf.mxu0
    %v3593 = vadd.f32 0.0, %v3592
    %3594 = vmatmul.f32.gmra.mxu0 %v3169
    %v3595 = vpop.f32.mrf.mxu0
    %v3596 = vadd.f32 0.0, %v3595
    %3597 = vmatmul.f32.gmra.mxu0 %v3172
    %v3598 = vpop.f32.mrf.mxu0
    %v3599 = vadd.f32 0.0, %v3598
    %3600 = vmatmul.f32.gmra.mxu0 %v3175
    %v3601 = vpop.f32.mrf.mxu0
    %v3602 = vadd.f32 0.0, %v3601
    %3603 = vmatmul.f32.gmra.mxu0 %v3178
    %v3604 = vpop.f32.mrf.mxu0
    %v3605 = vadd.f32 0.0, %v3604
    %3606 = vmatmul.f32.gmra.mxu0 %v3181
    %v3607 = vpop.f32.mrf.mxu0
    %v3608 = vadd.f32 0.0, %v3607
    %3609 = vmatmul.f32.gmra.mxu0 %v3184
    %v3610 = vpop.f32.mrf.mxu0
    %v3611 = vadd.f32 0.0, %v3610
    %3612 = vmatmul.f32.gmra.mxu0 %v3187
    %v3613 = vpop.f32.mrf.mxu0
    %v3614 = vadd.f32 0.0, %v3613
    %3615 = vmatmul.f32.gmra.mxu0 %v3190
    %v3616 = vpop.f32.mrf.mxu0
    %v3617 = vadd.f32 0.0, %v3616
    %3618 = vmatmul.f32.gmra.mxu0 %v3193
    %v3619 = vpop.f32.mrf.mxu0
    %v3620 = vadd.f32 0.0, %v3619
    %3621 = vmatmul.f32.gmra.mxu0 %v3196
    %v3622 = vpop.f32.mrf.mxu0
    %v3623 = vadd.f32 0.0, %v3622
    %3624 = vmatmul.f32.gmra.mxu0 %v3199
    %v3625 = vpop.f32.mrf.mxu0
    %v3626 = vadd.f32 0.0, %v3625
    %3627 = vmatmul.f32.gmra.mxu0 %v3202
    %v3628 = vpop.f32.mrf.mxu0
    %v3629 = vadd.f32 0.0, %v3628
    %3630 = vmatmul.f32.gmra.mxu0 %v3205
    %v3631 = vpop.f32.mrf.mxu0
    %v3632 = vadd.f32 0.0, %v3631
    %3633 = vmatmul.f32.gmra.mxu0 %v3208
    %v3634 = vpop.f32.mrf.mxu0
    %v3635 = vadd.f32 0.0, %v3634
    %3636 = vmatmul.f32.gmra.mxu0 %v3211
    %v3637 = vpop.f32.mrf.mxu0
    %v3638 = vadd.f32 0.0, %v3637
    %3639 = vmatmul.f32.gmra.mxu0 %v3214
    %v3640 = vpop.f32.mrf.mxu0
    %v3641 = vadd.f32 0.0, %v3640
    %3642 = vmatmul.f32.gmra.mxu0 %v3217
    %v3643 = vpop.f32.mrf.mxu0
    %v3644 = vadd.f32 0.0, %v3643
    %3645 = vmatmul.f32.gmra.mxu0 %v3220
    %v3646 = vpop.f32.mrf.mxu0
    %v3647 = vadd.f32 0.0, %v3646
    %3648 = vmatmul.f32.gmra.mxu0 %v3223
    %v3649 = vpop.f32.mrf.mxu0
    %v3650 = vadd.f32 0.0, %v3649
    %3651 = vmatmul.f32.gmra.mxu0 %v3226
    %v3652 = vpop.f32.mrf.mxu0
    %v3653 = vadd.f32 0.0, %v3652
    %3654 = vmatmul.f32.gmra.mxu0 %v3229
    %v3655 = vpop.f32.mrf.mxu0
    %v3656 = vadd.f32 0.0, %v3655
    %3657 = vmatmul.f32.gmra.mxu0 %v3232
    %v3658 = vpop.f32.mrf.mxu0
    %v3659 = vadd.f32 0.0, %v3658
    %3660 = vmatmul.f32.gmra.mxu0 %v3235
    %v3661 = vpop.f32.mrf.mxu0
    %v3662 = vadd.f32 0.0, %v3661
    %3663 = vmatmul.f32.gmra.mxu0 %v3238
    %v3664 = vpop.f32.mrf.mxu0
    %v3665 = vadd.f32 0.0, %v3664
    %3666 = vmatmul.f32.gmra.mxu0 %v3241
    %v3667 = vpop.f32.mrf.mxu0
    %v3668 = vadd.f32 0.0, %v3667
    %3669 = vmatmul.f32.gmra.mxu0 %v3244
    %v3670 = vpop.f32.mrf.mxu0
    %v3671 = vadd.f32 0.0, %v3670
    %3672 = vmatmul.f32.gmra.mxu0 %v3247
    %v3673 = vpop.f32.mrf.mxu0
    %v3674 = vadd.f32 0.0, %v3673
    %3675 = vmatmul.f32.gmra.mxu0 %v3250
    %v3676 = vpop.f32.mrf.mxu0
    %v3677 = vadd.f32 0.0, %v3676
    %3678 = vmatmul.f32.gmra.mxu0 %v3253
    %v3679 = vpop.f32.mrf.mxu0
    %v3680 = vadd.f32 0.0, %v3679
    %3681 = vmatmul.f32.gmra.mxu0 %v3256
    %v3682 = vpop.f32.mrf.mxu0
    %v3683 = vadd.f32 0.0, %v3682
    %3684 = vmatmul.f32.gmra.mxu0 %v3259
    %v3685 = vpop.f32.mrf.mxu0
    %v3686 = vadd.f32 0.0, %v3685
    %3687 = vmatmul.f32.gmra.mxu0 %v3262
    %v3688 = vpop.f32.mrf.mxu0
    %v3689 = vadd.f32 0.0, %v3688
    %3690 = vmatmul.f32.gmra.mxu0 %v3265
    %v3691 = vpop.f32.mrf.mxu0
    %v3692 = vadd.f32 0.0, %v3691
    %3693 = vmatmul.f32.gmra.mxu0 %v3268
    %v3694 = vpop.f32.mrf.mxu0
    %v3695 = vadd.f32 0.0, %v3694
    %3696 = vmatmul.f32.gmra.mxu0 %v3271
    %v3697 = vpop.f32.mrf.mxu0
    %v3698 = vadd.f32 0.0, %v3697
    %3699 = vmatmul.f32.gmra.mxu0 %v3274
    %v3700 = vpop.f32.mrf.mxu0
    %v3701 = vadd.f32 0.0, %v3700
    %3702 = vmatmul.f32.gmra.mxu0 %v3277
    %v3703 = vpop.f32.mrf.mxu0
    %v3704 = vadd.f32 0.0, %v3703
    %3705 = vmatmul.f32.gmra.mxu0 %v3280
    %v3706 = vpop.f32.mrf.mxu0
    %v3707 = vadd.f32 0.0, %v3706
    %3708 = vmatmul.f32.gmra.mxu0 %v3283
    %v3709 = vpop.f32.mrf.mxu0
    %v3710 = vadd.f32 0.0, %v3709
    %3711 = vmatmul.f32.gmra.mxu0 %v3286
    %v3712 = vpop.f32.mrf.mxu0
    %v3713 = vadd.f32 0.0, %v3712
    %3714 = vmatmul.f32.gmra.mxu0 %v3289
    %v3715 = vpop.f32.mrf.mxu0
    %v3716 = vadd.f32 0.0, %v3715
    %3717 = vmatmul.f32.gmra.mxu0 %v3292
    %v3718 = vpop.f32.mrf.mxu0
    %v3719 = vadd.f32 0.0, %v3718
    %3720 = vmatmul.f32.gmra.mxu0 %v3295
    %v3721 = vpop.f32.mrf.mxu0
    %v3722 = vadd.f32 0.0, %v3721
    %3723 = vmatmul.f32.gmra.mxu0 %v3298
    %v3724 = vpop.f32.mrf.mxu0
    %v3725 = vadd.f32 0.0, %v3724
    %3726 = vmatmul.f32.gmra.mxu0 %v3301
    %v3727 = vpop.f32.mrf.mxu0
    %v3728 = vadd.f32 0.0, %v3727
    %3729 = vmatmul.f32.gmra.mxu0 %v3304
    %v3730 = vpop.f32.mrf.mxu0
    %v3731 = vadd.f32 0.0, %v3730
    %3732 = vmatmul.f32.gmra.mxu0 %v3307
    %v3733 = vpop.f32.mrf.mxu0
    %v3734 = vadd.f32 0.0, %v3733
    %3735 = vmatmul.f32.gmra.mxu0 %v3310
    %v3736 = vpop.f32.mrf.mxu0
    %v3737 = vadd.f32 0.0, %v3736
    %3738 = vmatmul.f32.gmra.mxu0 %v3313
    %v3739 = vpop.f32.mrf.mxu0
    %v3740 = vadd.f32 0.0, %v3739
    %3741 = vmatmul.f32.gmra.mxu0 %v3316
    %v3742 = vpop.f32.mrf.mxu0
    %v3743 = vadd.f32 0.0, %v3742
    %3744 = vmatmul.f32.gmra.mxu0 %v3319
    %v3745 = vpop.f32.mrf.mxu0
    %v3746 = vadd.f32 0.0, %v3745
    %3747 = vmatmul.f32.gmra.mxu0 %v3322
    %v3748 = vpop.f32.mrf.mxu0
    %v3749 = vadd.f32 0.0, %v3748
    %3750 = vmatmul.f32.gmra.mxu0 %v3325
    %v3751 = vpop.f32.mrf.mxu0
    %v3752 = vadd.f32 0.0, %v3751
    %3753 = vmatmul.f32.gmra.mxu0 %v3328
    %v3754 = vpop.f32.mrf.mxu0
    %v3755 = vadd.f32 0.0, %v3754
    %3756 = vmatmul.f32.gmra.mxu0 %v3331
    %v3757 = vpop.f32.mrf.mxu0
    %v3758 = vadd.f32 0.0, %v3757
    %3759 = vmatmul.f32.gmra.mxu0 %v3334
    %v3760 = vpop.f32.mrf.mxu0
    %v3761 = vadd.f32 0.0, %v3760
    %3762 = vmatmul.f32.gmra.mxu0 %v3337
    %v3763 = vpop.f32.mrf.mxu0
    %v3764 = vadd.f32 0.0, %v3763
    %3765 = vmatmul.f32.gmra.mxu0 %v3340
    %v3766 = vpop.f32.mrf.mxu0
    %v3767 = vadd.f32 0.0, %v3766
    %3768 = vmatmul.f32.gmra.mxu0 %v3343
    %v3769 = vpop.f32.mrf.mxu0
    %v3770 = vadd.f32 0.0, %v3769
    %3771 = vdwg.mxu0
    %s3772 = scalar_lea.vmem %s7, 128
    %v3773 = vld [vmem:[%s3772] sm:$0xff]
    %v3774 = vld [vmem:[%s3772 + $0x8] sm:$0xff]
    %v3775 = vld [vmem:[%s3772 + $0x10] sm:$0xff]
    %v3776 = vld [vmem:[%s3772 + $0x18] sm:$0xff]
    %v3777 = vld [vmem:[%s3772 + $0x20] sm:$0xff]
    %v3778 = vld [vmem:[%s3772 + $0x28] sm:$0xff]
    %v3779 = vld [vmem:[%s3772 + $0x30] sm:$0xff]
    %v3780 = vld [vmem:[%s3772 + $0x38] sm:$0xff]
    %3781 = vmatpush.msra.mxu0 0.0
    %3782 = vmatpush.msra.mxu0 0.0
    %3783 = vmatpush.msra.mxu0 0.0
    %3784 = vmatpush.msra.mxu0 0.0
    %3785 = vmatpush.msra.mxu0 0.0
    %3786 = vmatpush.msra.mxu0 0.0
    %3787 = vmatpush.msra.mxu0 0.0
    %3788 = vmatpush.msra.mxu0 0.0
    %3789 = vmatpush.msra.mxu0 %v3780
    %3790 = vmatpush.msra.mxu0 %v3779
    %3791 = vmatpush.msra.mxu0 %v3778
    %3792 = vmatpush.msra.mxu0 %v3777
    %3793 = vmatpush.msra.mxu0 %v3776
    %3794 = vmatpush.msra.mxu0 %v3775
    %3795 = vmatpush.msra.mxu0 %v3774
    %3796 = vmatpush.msra.mxu0 %v3773
    %3797 = vmatmul.f32.gmra.mxu0 %v3154
    %v3798 = vpop.f32.mrf.mxu0
    %v3799 = vadd.f32 0.0, %v3798
    %3800 = vmatmul.f32.gmra.mxu0 %v3157
    %v3801 = vpop.f32.mrf.mxu0
    %v3802 = vadd.f32 0.0, %v3801
    %3803 = vmatmul.f32.gmra.mxu0 %v3160
    %v3804 = vpop.f32.mrf.mxu0
    %v3805 = vadd.f32 0.0, %v3804
    %3806 = vmatmul.f32.gmra.mxu0 %v3163
    %v3807 = vpop.f32.mrf.mxu0
    %v3808 = vadd.f32 0.0, %v3807
    %3809 = vmatmul.f32.gmra.mxu0 %v3166
    %v3810 = vpop.f32.mrf.mxu0
    %v3811 = vadd.f32 0.0, %v3810
    %3812 = vmatmul.f32.gmra.mxu0 %v3169
    %v3813 = vpop.f32.mrf.mxu0
    %v3814 = vadd.f32 0.0, %v3813
    %3815 = vmatmul.f32.gmra.mxu0 %v3172
    %v3816 = vpop.f32.mrf.mxu0
    %v3817 = vadd.f32 0.0, %v3816
    %3818 = vmatmul.f32.gmra.mxu0 %v3175
    %v3819 = vpop.f32.mrf.mxu0
    %v3820 = vadd.f32 0.0, %v3819
    %3821 = vmatmul.f32.gmra.mxu0 %v3178
    %v3822 = vpop.f32.mrf.mxu0
    %v3823 = vadd.f32 0.0, %v3822
    %3824 = vmatmul.f32.gmra.mxu0 %v3181
    %v3825 = vpop.f32.mrf.mxu0
    %v3826 = vadd.f32 0.0, %v3825
    %3827 = vmatmul.f32.gmra.mxu0 %v3184
    %v3828 = vpop.f32.mrf.mxu0
    %v3829 = vadd.f32 0.0, %v3828
    %3830 = vmatmul.f32.gmra.mxu0 %v3187
    %v3831 = vpop.f32.mrf.mxu0
    %v3832 = vadd.f32 0.0, %v3831
    %3833 = vmatmul.f32.gmra.mxu0 %v3190
    %v3834 = vpop.f32.mrf.mxu0
    %v3835 = vadd.f32 0.0, %v3834
    %3836 = vmatmul.f32.gmra.mxu0 %v3193
    %v3837 = vpop.f32.mrf.mxu0
    %v3838 = vadd.f32 0.0, %v3837
    %3839 = vmatmul.f32.gmra.mxu0 %v3196
    %v3840 = vpop.f32.mrf.mxu0
    %v3841 = vadd.f32 0.0, %v3840
    %3842 = vmatmul.f32.gmra.mxu0 %v3199
    %v3843 = vpop.f32.mrf.mxu0
    %v3844 = vadd.f32 0.0, %v3843
    %3845 = vmatmul.f32.gmra.mxu0 %v3202
    %v3846 = vpop.f32.mrf.mxu0
    %v3847 = vadd.f32 0.0, %v3846
    %3848 = vmatmul.f32.gmra.mxu0 %v3205
    %v3849 = vpop.f32.mrf.mxu0
    %v3850 = vadd.f32 0.0, %v3849
    %3851 = vmatmul.f32.gmra.mxu0 %v3208
    %v3852 = vpop.f32.mrf.mxu0
    %v3853 = vadd.f32 0.0, %v3852
    %3854 = vmatmul.f32.gmra.mxu0 %v3211
    %v3855 = vpop.f32.mrf.mxu0
    %v3856 = vadd.f32 0.0, %v3855
    %3857 = vmatmul.f32.gmra.mxu0 %v3214
    %v3858 = vpop.f32.mrf.mxu0
    %v3859 = vadd.f32 0.0, %v3858
    %3860 = vmatmul.f32.gmra.mxu0 %v3217
    %v3861 = vpop.f32.mrf.mxu0
    %v3862 = vadd.f32 0.0, %v3861
    %3863 = vmatmul.f32.gmra.mxu0 %v3220
    %v3864 = vpop.f32.mrf.mxu0
    %v3865 = vadd.f32 0.0, %v3864
    %3866 = vmatmul.f32.gmra.mxu0 %v3223
    %v3867 = vpop.f32.mrf.mxu0
    %v3868 = vadd.f32 0.0, %v3867
    %3869 = vmatmul.f32.gmra.mxu0 %v3226
    %v3870 = vpop.f32.mrf.mxu0
    %v3871 = vadd.f32 0.0, %v3870
    %3872 = vmatmul.f32.gmra.mxu0 %v3229
    %v3873 = vpop.f32.mrf.mxu0
    %v3874 = vadd.f32 0.0, %v3873
    %3875 = vmatmul.f32.gmra.mxu0 %v3232
    %v3876 = vpop.f32.mrf.mxu0
    %v3877 = vadd.f32 0.0, %v3876
    %3878 = vmatmul.f32.gmra.mxu0 %v3235
    %v3879 = vpop.f32.mrf.mxu0
    %v3880 = vadd.f32 0.0, %v3879
    %3881 = vmatmul.f32.gmra.mxu0 %v3238
    %v3882 = vpop.f32.mrf.mxu0
    %v3883 = vadd.f32 0.0, %v3882
    %3884 = vmatmul.f32.gmra.mxu0 %v3241
    %v3885 = vpop.f32.mrf.mxu0
    %v3886 = vadd.f32 0.0, %v3885
    %3887 = vmatmul.f32.gmra.mxu0 %v3244
    %v3888 = vpop.f32.mrf.mxu0
    %v3889 = vadd.f32 0.0, %v3888
    %3890 = vmatmul.f32.gmra.mxu0 %v3247
    %v3891 = vpop.f32.mrf.mxu0
    %v3892 = vadd.f32 0.0, %v3891
    %3893 = vmatmul.f32.gmra.mxu0 %v3250
    %v3894 = vpop.f32.mrf.mxu0
    %v3895 = vadd.f32 0.0, %v3894
    %3896 = vmatmul.f32.gmra.mxu0 %v3253
    %v3897 = vpop.f32.mrf.mxu0
    %v3898 = vadd.f32 0.0, %v3897
    %3899 = vmatmul.f32.gmra.mxu0 %v3256
    %v3900 = vpop.f32.mrf.mxu0
    %v3901 = vadd.f32 0.0, %v3900
    %3902 = vmatmul.f32.gmra.mxu0 %v3259
    %v3903 = vpop.f32.mrf.mxu0
    %v3904 = vadd.f32 0.0, %v3903
    %3905 = vmatmul.f32.gmra.mxu0 %v3262
    %v3906 = vpop.f32.mrf.mxu0
    %v3907 = vadd.f32 0.0, %v3906
    %3908 = vmatmul.f32.gmra.mxu0 %v3265
    %v3909 = vpop.f32.mrf.mxu0
    %v3910 = vadd.f32 0.0, %v3909
    %3911 = vmatmul.f32.gmra.mxu0 %v3268
    %v3912 = vpop.f32.mrf.mxu0
    %v3913 = vadd.f32 0.0, %v3912
    %3914 = vmatmul.f32.gmra.mxu0 %v3271
    %v3915 = vpop.f32.mrf.mxu0
    %v3916 = vadd.f32 0.0, %v3915
    %3917 = vmatmul.f32.gmra.mxu0 %v3274
    %v3918 = vpop.f32.mrf.mxu0
    %v3919 = vadd.f32 0.0, %v3918
    %3920 = vmatmul.f32.gmra.mxu0 %v3277
    %v3921 = vpop.f32.mrf.mxu0
    %v3922 = vadd.f32 0.0, %v3921
    %3923 = vmatmul.f32.gmra.mxu0 %v3280
    %v3924 = vpop.f32.mrf.mxu0
    %v3925 = vadd.f32 0.0, %v3924
    %3926 = vmatmul.f32.gmra.mxu0 %v3283
    %v3927 = vpop.f32.mrf.mxu0
    %v3928 = vadd.f32 0.0, %v3927
    %3929 = vmatmul.f32.gmra.mxu0 %v3286
    %v3930 = vpop.f32.mrf.mxu0
    %v3931 = vadd.f32 0.0, %v3930
    %3932 = vmatmul.f32.gmra.mxu0 %v3289
    %v3933 = vpop.f32.mrf.mxu0
    %v3934 = vadd.f32 0.0, %v3933
    %3935 = vmatmul.f32.gmra.mxu0 %v3292
    %v3936 = vpop.f32.mrf.mxu0
    %v3937 = vadd.f32 0.0, %v3936
    %3938 = vmatmul.f32.gmra.mxu0 %v3295
    %v3939 = vpop.f32.mrf.mxu0
    %v3940 = vadd.f32 0.0, %v3939
    %3941 = vmatmul.f32.gmra.mxu0 %v3298
    %v3942 = vpop.f32.mrf.mxu0
    %v3943 = vadd.f32 0.0, %v3942
    %3944 = vmatmul.f32.gmra.mxu0 %v3301
    %v3945 = vpop.f32.mrf.mxu0
    %v3946 = vadd.f32 0.0, %v3945
    %3947 = vmatmul.f32.gmra.mxu0 %v3304
    %v3948 = vpop.f32.mrf.mxu0
    %v3949 = vadd.f32 0.0, %v3948
    %3950 = vmatmul.f32.gmra.mxu0 %v3307
    %v3951 = vpop.f32.mrf.mxu0
    %v3952 = vadd.f32 0.0, %v3951
    %3953 = vmatmul.f32.gmra.mxu0 %v3310
    %v3954 = vpop.f32.mrf.mxu0
    %v3955 = vadd.f32 0.0, %v3954
    %3956 = vmatmul.f32.gmra.mxu0 %v3313
    %v3957 = vpop.f32.mrf.mxu0
    %v3958 = vadd.f32 0.0, %v3957
    %3959 = vmatmul.f32.gmra.mxu0 %v3316
    %v3960 = vpop.f32.mrf.mxu0
    %v3961 = vadd.f32 0.0, %v3960
    %3962 = vmatmul.f32.gmra.mxu0 %v3319
    %v3963 = vpop.f32.mrf.mxu0
    %v3964 = vadd.f32 0.0, %v3963
    %3965 = vmatmul.f32.gmra.mxu0 %v3322
    %v3966 = vpop.f32.mrf.mxu0
    %v3967 = vadd.f32 0.0, %v3966
    %3968 = vmatmul.f32.gmra.mxu0 %v3325
    %v3969 = vpop.f32.mrf.mxu0
    %v3970 = vadd.f32 0.0, %v3969
    %3971 = vmatmul.f32.gmra.mxu0 %v3328
    %v3972 = vpop.f32.mrf.mxu0
    %v3973 = vadd.f32 0.0, %v3972
    %3974 = vmatmul.f32.gmra.mxu0 %v3331
    %v3975 = vpop.f32.mrf.mxu0
    %v3976 = vadd.f32 0.0, %v3975
    %3977 = vmatmul.f32.gmra.mxu0 %v3334
    %v3978 = vpop.f32.mrf.mxu0
    %v3979 = vadd.f32 0.0, %v3978
    %3980 = vmatmul.f32.gmra.mxu0 %v3337
    %v3981 = vpop.f32.mrf.mxu0
    %v3982 = vadd.f32 0.0, %v3981
    %3983 = vmatmul.f32.gmra.mxu0 %v3340
    %v3984 = vpop.f32.mrf.mxu0
    %v3985 = vadd.f32 0.0, %v3984
    %3986 = vmatmul.f32.gmra.mxu0 %v3343
    %v3987 = vpop.f32.mrf.mxu0
    %v3988 = vadd.f32 0.0, %v3987
    %3989 = vdwg.mxu0
    %s3990 = scalar_lea.vmem %s7, 192
    %v3991 = vld [vmem:[%s3990] sm:$0xff]
    %v3992 = vld [vmem:[%s3990 + $0x8] sm:$0xff]
    %v3993 = vld [vmem:[%s3990 + $0x10] sm:$0xff]
    %v3994 = vld [vmem:[%s3990 + $0x18] sm:$0xff]
    %v3995 = vld [vmem:[%s3990 + $0x20] sm:$0xff]
    %v3996 = vld [vmem:[%s3990 + $0x28] sm:$0xff]
    %v3997 = vld [vmem:[%s3990 + $0x30] sm:$0xff]
    %v3998 = vld [vmem:[%s3990 + $0x38] sm:$0xff]
    %3999 = vmatpush.msra.mxu0 0.0
    %4000 = vmatpush.msra.mxu0 0.0
    %4001 = vmatpush.msra.mxu0 0.0
    %4002 = vmatpush.msra.mxu0 0.0
    %4003 = vmatpush.msra.mxu0 0.0
    %4004 = vmatpush.msra.mxu0 0.0
    %4005 = vmatpush.msra.mxu0 0.0
    %4006 = vmatpush.msra.mxu0 0.0
    %4007 = vmatpush.msra.mxu0 %v3998
    %4008 = vmatpush.msra.mxu0 %v3997
    %4009 = vmatpush.msra.mxu0 %v3996
    %4010 = vmatpush.msra.mxu0 %v3995
    %4011 = vmatpush.msra.mxu0 %v3994
    %4012 = vmatpush.msra.mxu0 %v3993
    %4013 = vmatpush.msra.mxu0 %v3992
    %4014 = vmatpush.msra.mxu0 %v3991
    %4015 = vmatmul.f32.gmra.mxu0 %v3154
    %v4016 = vpop.f32.mrf.mxu0
    %v4017 = vadd.f32 0.0, %v4016
    %4018 = vmatmul.f32.gmra.mxu0 %v3157
    %v4019 = vpop.f32.mrf.mxu0
    %v4020 = vadd.f32 0.0, %v4019
    %4021 = vmatmul.f32.gmra.mxu0 %v3160
    %v4022 = vpop.f32.mrf.mxu0
    %v4023 = vadd.f32 0.0, %v4022
    %4024 = vmatmul.f32.gmra.mxu0 %v3163
    %v4025 = vpop.f32.mrf.mxu0
    %v4026 = vadd.f32 0.0, %v4025
    %4027 = vmatmul.f32.gmra.mxu0 %v3166
    %v4028 = vpop.f32.mrf.mxu0
    %v4029 = vadd.f32 0.0, %v4028
    %4030 = vmatmul.f32.gmra.mxu0 %v3169
    %v4031 = vpop.f32.mrf.mxu0
    %v4032 = vadd.f32 0.0, %v4031
    %4033 = vmatmul.f32.gmra.mxu0 %v3172
    %v4034 = vpop.f32.mrf.mxu0
    %v4035 = vadd.f32 0.0, %v4034
    %4036 = vmatmul.f32.gmra.mxu0 %v3175
    %v4037 = vpop.f32.mrf.mxu0
    %v4038 = vadd.f32 0.0, %v4037
    %4039 = vmatmul.f32.gmra.mxu0 %v3178
    %v4040 = vpop.f32.mrf.mxu0
    %v4041 = vadd.f32 0.0, %v4040
    %4042 = vmatmul.f32.gmra.mxu0 %v3181
    %v4043 = vpop.f32.mrf.mxu0
    %v4044 = vadd.f32 0.0, %v4043
    %4045 = vmatmul.f32.gmra.mxu0 %v3184
    %v4046 = vpop.f32.mrf.mxu0
    %v4047 = vadd.f32 0.0, %v4046
    %4048 = vmatmul.f32.gmra.mxu0 %v3187
    %v4049 = vpop.f32.mrf.mxu0
    %v4050 = vadd.f32 0.0, %v4049
    %4051 = vmatmul.f32.gmra.mxu0 %v3190
    %v4052 = vpop.f32.mrf.mxu0
    %v4053 = vadd.f32 0.0, %v4052
    %4054 = vmatmul.f32.gmra.mxu0 %v3193
    %v4055 = vpop.f32.mrf.mxu0
    %v4056 = vadd.f32 0.0, %v4055
    %4057 = vmatmul.f32.gmra.mxu0 %v3196
    %v4058 = vpop.f32.mrf.mxu0
    %v4059 = vadd.f32 0.0, %v4058
    %4060 = vmatmul.f32.gmra.mxu0 %v3199
    %v4061 = vpop.f32.mrf.mxu0
    %v4062 = vadd.f32 0.0, %v4061
    %4063 = vmatmul.f32.gmra.mxu0 %v3202
    %v4064 = vpop.f32.mrf.mxu0
    %v4065 = vadd.f32 0.0, %v4064
    %4066 = vmatmul.f32.gmra.mxu0 %v3205
    %v4067 = vpop.f32.mrf.mxu0
    %v4068 = vadd.f32 0.0, %v4067
    %4069 = vmatmul.f32.gmra.mxu0 %v3208
    %v4070 = vpop.f32.mrf.mxu0
    %v4071 = vadd.f32 0.0, %v4070
    %4072 = vmatmul.f32.gmra.mxu0 %v3211
    %v4073 = vpop.f32.mrf.mxu0
    %v4074 = vadd.f32 0.0, %v4073
    %4075 = vmatmul.f32.gmra.mxu0 %v3214
    %v4076 = vpop.f32.mrf.mxu0
    %v4077 = vadd.f32 0.0, %v4076
    %4078 = vmatmul.f32.gmra.mxu0 %v3217
    %v4079 = vpop.f32.mrf.mxu0
    %v4080 = vadd.f32 0.0, %v4079
    %4081 = vmatmul.f32.gmra.mxu0 %v3220
    %v4082 = vpop.f32.mrf.mxu0
    %v4083 = vadd.f32 0.0, %v4082
    %4084 = vmatmul.f32.gmra.mxu0 %v3223
    %v4085 = vpop.f32.mrf.mxu0
    %v4086 = vadd.f32 0.0, %v4085
    %4087 = vmatmul.f32.gmra.mxu0 %v3226
    %v4088 = vpop.f32.mrf.mxu0
    %v4089 = vadd.f32 0.0, %v4088
    %4090 = vmatmul.f32.gmra.mxu0 %v3229
    %v4091 = vpop.f32.mrf.mxu0
    %v4092 = vadd.f32 0.0, %v4091
    %4093 = vmatmul.f32.gmra.mxu0 %v3232
    %v4094 = vpop.f32.mrf.mxu0
    %v4095 = vadd.f32 0.0, %v4094
    %4096 = vmatmul.f32.gmra.mxu0 %v3235
    %v4097 = vpop.f32.mrf.mxu0
    %v4098 = vadd.f32 0.0, %v4097
    %4099 = vmatmul.f32.gmra.mxu0 %v3238
    %v4100 = vpop.f32.mrf.mxu0
    %v4101 = vadd.f32 0.0, %v4100
    %4102 = vmatmul.f32.gmra.mxu0 %v3241
    %v4103 = vpop.f32.mrf.mxu0
    %v4104 = vadd.f32 0.0, %v4103
    %4105 = vmatmul.f32.gmra.mxu0 %v3244
    %v4106 = vpop.f32.mrf.mxu0
    %v4107 = vadd.f32 0.0, %v4106
    %4108 = vmatmul.f32.gmra.mxu0 %v3247
    %v4109 = vpop.f32.mrf.mxu0
    %v4110 = vadd.f32 0.0, %v4109
    %4111 = vmatmul.f32.gmra.mxu0 %v3250
    %v4112 = vpop.f32.mrf.mxu0
    %v4113 = vadd.f32 0.0, %v4112
    %4114 = vmatmul.f32.gmra.mxu0 %v3253
    %v4115 = vpop.f32.mrf.mxu0
    %v4116 = vadd.f32 0.0, %v4115
    %4117 = vmatmul.f32.gmra.mxu0 %v3256
    %v4118 = vpop.f32.mrf.mxu0
    %v4119 = vadd.f32 0.0, %v4118
    %4120 = vmatmul.f32.gmra.mxu0 %v3259
    %v4121 = vpop.f32.mrf.mxu0
    %v4122 = vadd.f32 0.0, %v4121
    %4123 = vmatmul.f32.gmra.mxu0 %v3262
    %v4124 = vpop.f32.mrf.mxu0
    %v4125 = vadd.f32 0.0, %v4124
    %4126 = vmatmul.f32.gmra.mxu0 %v3265
    %v4127 = vpop.f32.mrf.mxu0
    %v4128 = vadd.f32 0.0, %v4127
    %4129 = vmatmul.f32.gmra.mxu0 %v3268
    %v4130 = vpop.f32.mrf.mxu0
    %v4131 = vadd.f32 0.0, %v4130
    %4132 = vmatmul.f32.gmra.mxu0 %v3271
    %v4133 = vpop.f32.mrf.mxu0
    %v4134 = vadd.f32 0.0, %v4133
    %4135 = vmatmul.f32.gmra.mxu0 %v3274
    %v4136 = vpop.f32.mrf.mxu0
    %v4137 = vadd.f32 0.0, %v4136
    %4138 = vmatmul.f32.gmra.mxu0 %v3277
    %v4139 = vpop.f32.mrf.mxu0
    %v4140 = vadd.f32 0.0, %v4139
    %4141 = vmatmul.f32.gmra.mxu0 %v3280
    %v4142 = vpop.f32.mrf.mxu0
    %v4143 = vadd.f32 0.0, %v4142
    %4144 = vmatmul.f32.gmra.mxu0 %v3283
    %v4145 = vpop.f32.mrf.mxu0
    %v4146 = vadd.f32 0.0, %v4145
    %4147 = vmatmul.f32.gmra.mxu0 %v3286
    %v4148 = vpop.f32.mrf.mxu0
    %v4149 = vadd.f32 0.0, %v4148
    %4150 = vmatmul.f32.gmra.mxu0 %v3289
    %v4151 = vpop.f32.mrf.mxu0
    %v4152 = vadd.f32 0.0, %v4151
    %4153 = vmatmul.f32.gmra.mxu0 %v3292
    %v4154 = vpop.f32.mrf.mxu0
    %v4155 = vadd.f32 0.0, %v4154
    %4156 = vmatmul.f32.gmra.mxu0 %v3295
    %v4157 = vpop.f32.mrf.mxu0
    %v4158 = vadd.f32 0.0, %v4157
    %4159 = vmatmul.f32.gmra.mxu0 %v3298
    %v4160 = vpop.f32.mrf.mxu0
    %v4161 = vadd.f32 0.0, %v4160
    %4162 = vmatmul.f32.gmra.mxu0 %v3301
    %v4163 = vpop.f32.mrf.mxu0
    %v4164 = vadd.f32 0.0, %v4163
    %4165 = vmatmul.f32.gmra.mxu0 %v3304
    %v4166 = vpop.f32.mrf.mxu0
    %v4167 = vadd.f32 0.0, %v4166
    %4168 = vmatmul.f32.gmra.mxu0 %v3307
    %v4169 = vpop.f32.mrf.mxu0
    %v4170 = vadd.f32 0.0, %v4169
    %4171 = vmatmul.f32.gmra.mxu0 %v3310
    %v4172 = vpop.f32.mrf.mxu0
    %v4173 = vadd.f32 0.0, %v4172
    %4174 = vmatmul.f32.gmra.mxu0 %v3313
    %v4175 = vpop.f32.mrf.mxu0
    %v4176 = vadd.f32 0.0, %v4175
    %4177 = vmatmul.f32.gmra.mxu0 %v3316
    %v4178 = vpop.f32.mrf.mxu0
    %v4179 = vadd.f32 0.0, %v4178
    %4180 = vmatmul.f32.gmra.mxu0 %v3319
    %v4181 = vpop.f32.mrf.mxu0
    %v4182 = vadd.f32 0.0, %v4181
    %4183 = vmatmul.f32.gmra.mxu0 %v3322
    %v4184 = vpop.f32.mrf.mxu0
    %v4185 = vadd.f32 0.0, %v4184
    %4186 = vmatmul.f32.gmra.mxu0 %v3325
    %v4187 = vpop.f32.mrf.mxu0
    %v4188 = vadd.f32 0.0, %v4187
    %4189 = vmatmul.f32.gmra.mxu0 %v3328
    %v4190 = vpop.f32.mrf.mxu0
    %v4191 = vadd.f32 0.0, %v4190
    %4192 = vmatmul.f32.gmra.mxu0 %v3331
    %v4193 = vpop.f32.mrf.mxu0
    %v4194 = vadd.f32 0.0, %v4193
    %4195 = vmatmul.f32.gmra.mxu0 %v3334
    %v4196 = vpop.f32.mrf.mxu0
    %v4197 = vadd.f32 0.0, %v4196
    %4198 = vmatmul.f32.gmra.mxu0 %v3337
    %v4199 = vpop.f32.mrf.mxu0
    %v4200 = vadd.f32 0.0, %v4199
    %4201 = vmatmul.f32.gmra.mxu0 %v3340
    %v4202 = vpop.f32.mrf.mxu0
    %v4203 = vadd.f32 0.0, %v4202
    %4204 = vmatmul.f32.gmra.mxu0 %v3343
    %v4205 = vpop.f32.mrf.mxu0
    %v4206 = vadd.f32 0.0, %v4205
    %4207 = vdwg.mxu0
    %v4208 = vperm.slane %v3142, 0
    %v4209 = vadd.f32 %v3363, %v4208
    %v4210 = vadd.f32 %v3366, %v4208
    %v4211 = vadd.f32 %v3369, %v4208
    %v4212 = vadd.f32 %v3372, %v4208
    %v4213 = vadd.f32 %v3375, %v4208
    %v4214 = vadd.f32 %v3378, %v4208
    %v4215 = vadd.f32 %v3381, %v4208
    %v4216 = vadd.f32 %v3384, %v4208
    %v4217 = vadd.f32 %v3387, %v4208
    %v4218 = vadd.f32 %v3390, %v4208
    %v4219 = vadd.f32 %v3393, %v4208
    %v4220 = vadd.f32 %v3396, %v4208
    %v4221 = vadd.f32 %v3399, %v4208
    %v4222 = vadd.f32 %v3402, %v4208
    %v4223 = vadd.f32 %v3405, %v4208
    %v4224 = vadd.f32 %v3408, %v4208
    %v4225 = vadd.f32 %v3411, %v4208
    %v4226 = vadd.f32 %v3414, %v4208
    %v4227 = vadd.f32 %v3417, %v4208
    %v4228 = vadd.f32 %v3420, %v4208
    %v4229 = vadd.f32 %v3423, %v4208
    %v4230 = vadd.f32 %v3426, %v4208
    %v4231 = vadd.f32 %v3429, %v4208
    %v4232 = vadd.f32 %v3432, %v4208
    %v4233 = vadd.f32 %v3435, %v4208
    %v4234 = vadd.f32 %v3438, %v4208
    %v4235 = vadd.f32 %v3441, %v4208
    %v4236 = vadd.f32 %v3444, %v4208
    %v4237 = vadd.f32 %v3447, %v4208
    %v4238 = vadd.f32 %v3450, %v4208
    %v4239 = vadd.f32 %v3453, %v4208
    %v4240 = vadd.f32 %v3456, %v4208
    %v4241 = vadd.f32 %v3459, %v4208
    %v4242 = vadd.f32 %v3462, %v4208
    %v4243 = vadd.f32 %v3465, %v4208
    %v4244 = vadd.f32 %v3468, %v4208
    %v4245 = vadd.f32 %v3471, %v4208
    %v4246 = vadd.f32 %v3474, %v4208
    %v4247 = vadd.f32 %v3477, %v4208
    %v4248 = vadd.f32 %v3480, %v4208
    %v4249 = vadd.f32 %v3483, %v4208
    %v4250 = vadd.f32 %v3486, %v4208
    %v4251 = vadd.f32 %v3489, %v4208
    %v4252 = vadd.f32 %v3492, %v4208
    %v4253 = vadd.f32 %v3495, %v4208
    %v4254 = vadd.f32 %v3498, %v4208
    %v4255 = vadd.f32 %v3501, %v4208
    %v4256 = vadd.f32 %v3504, %v4208
    %v4257 = vadd.f32 %v3507, %v4208
    %v4258 = vadd.f32 %v3510, %v4208
    %v4259 = vadd.f32 %v3513, %v4208
    %v4260 = vadd.f32 %v3516, %v4208
    %v4261 = vadd.f32 %v3519, %v4208
    %v4262 = vadd.f32 %v3522, %v4208
    %v4263 = vadd.f32 %v3525, %v4208
    %v4264 = vadd.f32 %v3528, %v4208
    %v4265 = vadd.f32 %v3531, %v4208
    %v4266 = vadd.f32 %v3534, %v4208
    %v4267 = vadd.f32 %v3537, %v4208
    %v4268 = vadd.f32 %v3540, %v4208
    %v4269 = vadd.f32 %v3543, %v4208
    %v4270 = vadd.f32 %v3546, %v4208
    %v4271 = vadd.f32 %v3549, %v4208
    %v4272 = vadd.f32 %v3552, %v4208
    %v4273 = vadd.f32 %v3581, %v4208
    %v4274 = vadd.f32 %v3584, %v4208
    %v4275 = vadd.f32 %v3587, %v4208
    %v4276 = vadd.f32 %v3590, %v4208
    %v4277 = vadd.f32 %v3593, %v4208
    %v4278 = vadd.f32 %v3596, %v4208
    %v4279 = vadd.f32 %v3599, %v4208
    %v4280 = vadd.f32 %v3602, %v4208
    %v4281 = vadd.f32 %v3605, %v4208
    %v4282 = vadd.f32 %v3608, %v4208
    %v4283 = vadd.f32 %v3611, %v4208
    %v4284 = vadd.f32 %v3614, %v4208
    %v4285 = vadd.f32 %v3617, %v4208
    %v4286 = vadd.f32 %v3620, %v4208
    %v4287 = vadd.f32 %v3623, %v4208
    %v4288 = vadd.f32 %v3626, %v4208
    %v4289 = vadd.f32 %v3629, %v4208
    %v4290 = vadd.f32 %v3632, %v4208
    %v4291 = vadd.f32 %v3635, %v4208
    %v4292 = vadd.f32 %v3638, %v4208
    %v4293 = vadd.f32 %v3641, %v4208
    %v4294 = vadd.f32 %v3644, %v4208
    %v4295 = vadd.f32 %v3647, %v4208
    %v4296 = vadd.f32 %v3650, %v4208
    %v4297 = vadd.f32 %v3653, %v4208
    %v4298 = vadd.f32 %v3656, %v4208
    %v4299 = vadd.f32 %v3659, %v4208
    %v4300 = vadd.f32 %v3662, %v4208
    %v4301 = vadd.f32 %v3665, %v4208
    %v4302 = vadd.f32 %v3668, %v4208
    %v4303 = vadd.f32 %v3671, %v4208
    %v4304 = vadd.f32 %v3674, %v4208
    %v4305 = vadd.f32 %v3677, %v4208
    %v4306 = vadd.f32 %v3680, %v4208
    %v4307 = vadd.f32 %v3683, %v4208
    %v4308 = vadd.f32 %v3686, %v4208
    %v4309 = vadd.f32 %v3689, %v4208
    %v4310 = vadd.f32 %v3692, %v4208
    %v4311 = vadd.f32 %v3695, %v4208
    %v4312 = vadd.f32 %v3698, %v4208
    %v4313 = vadd.f32 %v3701, %v4208
    %v4314 = vadd.f32 %v3704, %v4208
    %v4315 = vadd.f32 %v3707, %v4208
    %v4316 = vadd.f32 %v3710, %v4208
    %v4317 = vadd.f32 %v3713, %v4208
    %v4318 = vadd.f32 %v3716, %v4208
    %v4319 = vadd.f32 %v3719, %v4208
    %v4320 = vadd.f32 %v3722, %v4208
    %v4321 = vadd.f32 %v3725, %v4208
    %v4322 = vadd.f32 %v3728, %v4208
    %v4323 = vadd.f32 %v3731, %v4208
    %v4324 = vadd.f32 %v3734, %v4208
    %v4325 = vadd.f32 %v3737, %v4208
    %v4326 = vadd.f32 %v3740, %v4208
    %v4327 = vadd.f32 %v3743, %v4208
    %v4328 = vadd.f32 %v3746, %v4208
    %v4329 = vadd.f32 %v3749, %v4208
    %v4330 = vadd.f32 %v3752, %v4208
    %v4331 = vadd.f32 %v3755, %v4208
    %v4332 = vadd.f32 %v3758, %v4208
    %v4333 = vadd.f32 %v3761, %v4208
    %v4334 = vadd.f32 %v3764, %v4208
    %v4335 = vadd.f32 %v3767, %v4208
    %v4336 = vadd.f32 %v3770, %v4208
    %v4337 = vadd.f32 %v3799, %v4208
    %v4338 = vadd.f32 %v3802, %v4208
    %v4339 = vadd.f32 %v3805, %v4208
    %v4340 = vadd.f32 %v3808, %v4208
    %v4341 = vadd.f32 %v3811, %v4208
    %v4342 = vadd.f32 %v3814, %v4208
    %v4343 = vadd.f32 %v3817, %v4208
    %v4344 = vadd.f32 %v3820, %v4208
    %v4345 = vadd.f32 %v3823, %v4208
    %v4346 = vadd.f32 %v3826, %v4208
    %v4347 = vadd.f32 %v3829, %v4208
    %v4348 = vadd.f32 %v3832, %v4208
    %v4349 = vadd.f32 %v3835, %v4208
    %v4350 = vadd.f32 %v3838, %v4208
    %v4351 = vadd.f32 %v3841, %v4208
    %v4352 = vadd.f32 %v3844, %v4208
    %v4353 = vadd.f32 %v3847, %v4208
    %v4354 = vadd.f32 %v3850, %v4208
    %v4355 = vadd.f32 %v3853, %v4208
    %v4356 = vadd.f32 %v3856, %v4208
    %v4357 = vadd.f32 %v3859, %v4208
    %v4358 = vadd.f32 %v3862, %v4208
    %v4359 = vadd.f32 %v3865, %v4208
    %v4360 = vadd.f32 %v3868, %v4208
    %v4361 = vadd.f32 %v3871, %v4208
    %v4362 = vadd.f32 %v3874, %v4208
    %v4363 = vadd.f32 %v3877, %v4208
    %v4364 = vadd.f32 %v3880, %v4208
    %v4365 = vadd.f32 %v3883, %v4208
    %v4366 = vadd.f32 %v3886, %v4208
    %v4367 = vadd.f32 %v3889, %v4208
    %v4368 = vadd.f32 %v3892, %v4208
    %v4369 = vadd.f32 %v3895, %v4208
    %v4370 = vadd.f32 %v3898, %v4208
    %v4371 = vadd.f32 %v3901, %v4208
    %v4372 = vadd.f32 %v3904, %v4208
    %v4373 = vadd.f32 %v3907, %v4208
    %v4374 = vadd.f32 %v3910, %v4208
    %v4375 = vadd.f32 %v3913, %v4208
    %v4376 = vadd.f32 %v3916, %v4208
    %v4377 = vadd.f32 %v3919, %v4208
    %v4378 = vadd.f32 %v3922, %v4208
    %v4379 = vadd.f32 %v3925, %v4208
    %v4380 = vadd.f32 %v3928, %v4208
    %v4381 = vadd.f32 %v3931, %v4208
    %v4382 = vadd.f32 %v3934, %v4208
    %v4383 = vadd.f32 %v3937, %v4208
    %v4384 = vadd.f32 %v3940, %v4208
    %v4385 = vadd.f32 %v3943, %v4208
    %v4386 = vadd.f32 %v3946, %v4208
    %v4387 = vadd.f32 %v3949, %v4208
    %v4388 = vadd.f32 %v3952, %v4208
    %v4389 = vadd.f32 %v3955, %v4208
    %v4390 = vadd.f32 %v3958, %v4208
    %v4391 = vadd.f32 %v3961, %v4208
    %v4392 = vadd.f32 %v3964, %v4208
    %v4393 = vadd.f32 %v3967, %v4208
    %v4394 = vadd.f32 %v3970, %v4208
    %v4395 = vadd.f32 %v3973, %v4208
    %v4396 = vadd.f32 %v3976, %v4208
    %v4397 = vadd.f32 %v3979, %v4208
    %v4398 = vadd.f32 %v3982, %v4208
    %v4399 = vadd.f32 %v3985, %v4208
    %v4400 = vadd.f32 %v3988, %v4208
    %v4401 = vadd.f32 %v4017, %v4208
    %v4402 = vadd.f32 %v4020, %v4208
    %v4403 = vadd.f32 %v4023, %v4208
    %v4404 = vadd.f32 %v4026, %v4208
    %v4405 = vadd.f32 %v4029, %v4208
    %v4406 = vadd.f32 %v4032, %v4208
    %v4407 = vadd.f32 %v4035, %v4208
    %v4408 = vadd.f32 %v4038, %v4208
    %v4409 = vadd.f32 %v4041, %v4208
    %v4410 = vadd.f32 %v4044, %v4208
    %v4411 = vadd.f32 %v4047, %v4208
    %v4412 = vadd.f32 %v4050, %v4208
    %v4413 = vadd.f32 %v4053, %v4208
    %v4414 = vadd.f32 %v4056, %v4208
    %v4415 = vadd.f32 %v4059, %v4208
    %v4416 = vadd.f32 %v4062, %v4208
    %v4417 = vadd.f32 %v4065, %v4208
    %v4418 = vadd.f32 %v4068, %v4208
    %v4419 = vadd.f32 %v4071, %v4208
    %v4420 = vadd.f32 %v4074, %v4208
    %v4421 = vadd.f32 %v4077, %v4208
    %v4422 = vadd.f32 %v4080, %v4208
    %v4423 = vadd.f32 %v4083, %v4208
    %v4424 = vadd.f32 %v4086, %v4208
    %v4425 = vadd.f32 %v4089, %v4208
    %v4426 = vadd.f32 %v4092, %v4208
    %v4427 = vadd.f32 %v4095, %v4208
    %v4428 = vadd.f32 %v4098, %v4208
    %v4429 = vadd.f32 %v4101, %v4208
    %v4430 = vadd.f32 %v4104, %v4208
    %v4431 = vadd.f32 %v4107, %v4208
    %v4432 = vadd.f32 %v4110, %v4208
    %v4433 = vadd.f32 %v4113, %v4208
    %v4434 = vadd.f32 %v4116, %v4208
    %v4435 = vadd.f32 %v4119, %v4208
    %v4436 = vadd.f32 %v4122, %v4208
    %v4437 = vadd.f32 %v4125, %v4208
    %v4438 = vadd.f32 %v4128, %v4208
    %v4439 = vadd.f32 %v4131, %v4208
    %v4440 = vadd.f32 %v4134, %v4208
    %v4441 = vadd.f32 %v4137, %v4208
    %v4442 = vadd.f32 %v4140, %v4208
    %v4443 = vadd.f32 %v4143, %v4208
    %v4444 = vadd.f32 %v4146, %v4208
    %v4445 = vadd.f32 %v4149, %v4208
    %v4446 = vadd.f32 %v4152, %v4208
    %v4447 = vadd.f32 %v4155, %v4208
    %v4448 = vadd.f32 %v4158, %v4208
    %v4449 = vadd.f32 %v4161, %v4208
    %v4450 = vadd.f32 %v4164, %v4208
    %v4451 = vadd.f32 %v4167, %v4208
    %v4452 = vadd.f32 %v4170, %v4208
    %v4453 = vadd.f32 %v4173, %v4208
    %v4454 = vadd.f32 %v4176, %v4208
    %v4455 = vadd.f32 %v4179, %v4208
    %v4456 = vadd.f32 %v4182, %v4208
    %v4457 = vadd.f32 %v4185, %v4208
    %v4458 = vadd.f32 %v4188, %v4208
    %v4459 = vadd.f32 %v4191, %v4208
    %v4460 = vadd.f32 %v4194, %v4208
    %v4461 = vadd.f32 %v4197, %v4208
    %v4462 = vadd.f32 %v4200, %v4208
    %v4463 = vadd.f32 %v4203, %v4208
    %v4464 = vadd.f32 %v4206, %v4208
    %vm4465 = vcmask 261120
    %v4466 = vsel %vm4465, %v4209, 0.0
    %v4467 = vsel %vm4465, %v4210, 0.0
    %v4468 = vadd.f32 %v4466, %v4467
    %v4469 = vsel %vm4465, %v4211, 0.0
    %v4470 = vadd.f32 %v4468, %v4469
    %v4471 = vsel %vm4465, %v4212, 0.0
    %v4472 = vadd.f32 %v4470, %v4471
    %v4473 = vsel %vm4465, %v4213, 0.0
    %v4474 = vadd.f32 %v4472, %v4473
    %v4475 = vsel %vm4465, %v4214, 0.0
    %v4476 = vadd.f32 %v4474, %v4475
    %v4477 = vsel %vm4465, %v4215, 0.0
    %v4478 = vadd.f32 %v4476, %v4477
    %v4479 = vsel %vm4465, %v4216, 0.0
    %v4480 = vadd.f32 %v4478, %v4479
    %v4481 = vsel %vm4465, %v4217, 0.0
    %v4482 = vadd.f32 %v4480, %v4481
    %v4483 = vsel %vm4465, %v4218, 0.0
    %v4484 = vadd.f32 %v4482, %v4483
    %v4485 = vsel %vm4465, %v4219, 0.0
    %v4486 = vadd.f32 %v4484, %v4485
    %v4487 = vsel %vm4465, %v4220, 0.0
    %v4488 = vadd.f32 %v4486, %v4487
    %v4489 = vsel %vm4465, %v4221, 0.0
    %v4490 = vadd.f32 %v4488, %v4489
    %v4491 = vsel %vm4465, %v4222, 0.0
    %v4492 = vadd.f32 %v4490, %v4491
    %v4493 = vsel %vm4465, %v4223, 0.0
    %v4494 = vadd.f32 %v4492, %v4493
    %v4495 = vsel %vm4465, %v4224, 0.0
    %v4496 = vadd.f32 %v4494, %v4495
    %v4497 = vsel %vm4465, %v4225, 0.0
    %v4498 = vadd.f32 %v4496, %v4497
    %v4499 = vsel %vm4465, %v4226, 0.0
    %v4500 = vadd.f32 %v4498, %v4499
    %v4501 = vsel %vm4465, %v4227, 0.0
    %v4502 = vadd.f32 %v4500, %v4501
    %v4503 = vsel %vm4465, %v4228, 0.0
    %v4504 = vadd.f32 %v4502, %v4503
    %v4505 = vsel %vm4465, %v4229, 0.0
    %v4506 = vadd.f32 %v4504, %v4505
    %v4507 = vsel %vm4465, %v4230, 0.0
    %v4508 = vadd.f32 %v4506, %v4507
    %v4509 = vsel %vm4465, %v4231, 0.0
    %v4510 = vadd.f32 %v4508, %v4509
    %v4511 = vsel %vm4465, %v4232, 0.0
    %v4512 = vadd.f32 %v4510, %v4511
    %v4513 = vsel %vm4465, %v4233, 0.0
    %v4514 = vadd.f32 %v4512, %v4513
    %v4515 = vsel %vm4465, %v4234, 0.0
    %v4516 = vadd.f32 %v4514, %v4515
    %v4517 = vsel %vm4465, %v4235, 0.0
    %v4518 = vadd.f32 %v4516, %v4517
    %v4519 = vsel %vm4465, %v4236, 0.0
    %v4520 = vadd.f32 %v4518, %v4519
    %v4521 = vsel %vm4465, %v4237, 0.0
    %v4522 = vadd.f32 %v4520, %v4521
    %v4523 = vsel %vm4465, %v4238, 0.0
    %v4524 = vadd.f32 %v4522, %v4523
    %v4525 = vsel %vm4465, %v4239, 0.0
    %v4526 = vadd.f32 %v4524, %v4525
    %v4527 = vsel %vm4465, %v4240, 0.0
    %v4528 = vadd.f32 %v4526, %v4527
    %v4529 = vsel %vm4465, %v4241, 0.0
    %v4530 = vadd.f32 %v4528, %v4529
    %v4531 = vsel %vm4465, %v4242, 0.0
    %v4532 = vadd.f32 %v4530, %v4531
    %v4533 = vsel %vm4465, %v4243, 0.0
    %v4534 = vadd.f32 %v4532, %v4533
    %v4535 = vsel %vm4465, %v4244, 0.0
    %v4536 = vadd.f32 %v4534, %v4535
    %v4537 = vsel %vm4465, %v4245, 0.0
    %v4538 = vadd.f32 %v4536, %v4537
    %v4539 = vsel %vm4465, %v4246, 0.0
    %v4540 = vadd.f32 %v4538, %v4539
    %v4541 = vsel %vm4465, %v4247, 0.0
    %v4542 = vadd.f32 %v4540, %v4541
    %v4543 = vsel %vm4465, %v4248, 0.0
    %v4544 = vadd.f32 %v4542, %v4543
    %v4545 = vsel %vm4465, %v4249, 0.0
    %v4546 = vadd.f32 %v4544, %v4545
    %v4547 = vsel %vm4465, %v4250, 0.0
    %v4548 = vadd.f32 %v4546, %v4547
    %v4549 = vsel %vm4465, %v4251, 0.0
    %v4550 = vadd.f32 %v4548, %v4549
    %v4551 = vsel %vm4465, %v4252, 0.0
    %v4552 = vadd.f32 %v4550, %v4551
    %v4553 = vsel %vm4465, %v4253, 0.0
    %v4554 = vadd.f32 %v4552, %v4553
    %v4555 = vsel %vm4465, %v4254, 0.0
    %v4556 = vadd.f32 %v4554, %v4555
    %v4557 = vsel %vm4465, %v4255, 0.0
    %v4558 = vadd.f32 %v4556, %v4557
    %v4559 = vsel %vm4465, %v4256, 0.0
    %v4560 = vadd.f32 %v4558, %v4559
    %v4561 = vsel %vm4465, %v4257, 0.0
    %v4562 = vadd.f32 %v4560, %v4561
    %v4563 = vsel %vm4465, %v4258, 0.0
    %v4564 = vadd.f32 %v4562, %v4563
    %v4565 = vsel %vm4465, %v4259, 0.0
    %v4566 = vadd.f32 %v4564, %v4565
    %v4567 = vsel %vm4465, %v4260, 0.0
    %v4568 = vadd.f32 %v4566, %v4567
    %v4569 = vsel %vm4465, %v4261, 0.0
    %v4570 = vadd.f32 %v4568, %v4569
    %v4571 = vsel %vm4465, %v4262, 0.0
    %v4572 = vadd.f32 %v4570, %v4571
    %v4573 = vsel %vm4465, %v4263, 0.0
    %v4574 = vadd.f32 %v4572, %v4573
    %v4575 = vsel %vm4465, %v4264, 0.0
    %v4576 = vadd.f32 %v4574, %v4575
    %v4577 = vsel %vm4465, %v4265, 0.0
    %v4578 = vadd.f32 %v4576, %v4577
    %v4579 = vsel %vm4465, %v4266, 0.0
    %v4580 = vadd.f32 %v4578, %v4579
    %v4581 = vsel %vm4465, %v4267, 0.0
    %v4582 = vadd.f32 %v4580, %v4581
    %v4583 = vsel %vm4465, %v4268, 0.0
    %v4584 = vadd.f32 %v4582, %v4583
    %v4585 = vsel %vm4465, %v4269, 0.0
    %v4586 = vadd.f32 %v4584, %v4585
    %v4587 = vsel %vm4465, %v4270, 0.0
    %v4588 = vadd.f32 %v4586, %v4587
    %v4589 = vsel %vm4465, %v4271, 0.0
    %v4590 = vadd.f32 %v4588, %v4589
    %v4591 = vsel %vm4465, %v4272, 0.0
    %v4592 = vadd.f32 %v4590, %v4591
    %v4593 = vsel %vm4465, %v4273, 0.0
    %v4594 = vadd.f32 %v4592, %v4593
    %v4595 = vsel %vm4465, %v4274, 0.0
    %v4596 = vadd.f32 %v4594, %v4595
    %v4597 = vsel %vm4465, %v4275, 0.0
    %v4598 = vadd.f32 %v4596, %v4597
    %v4599 = vsel %vm4465, %v4276, 0.0
    %v4600 = vadd.f32 %v4598, %v4599
    %v4601 = vsel %vm4465, %v4277, 0.0
    %v4602 = vadd.f32 %v4600, %v4601
    %v4603 = vsel %vm4465, %v4278, 0.0
    %v4604 = vadd.f32 %v4602, %v4603
    %v4605 = vsel %vm4465, %v4279, 0.0
    %v4606 = vadd.f32 %v4604, %v4605
    %v4607 = vsel %vm4465, %v4280, 0.0
    %v4608 = vadd.f32 %v4606, %v4607
    %v4609 = vsel %vm4465, %v4281, 0.0
    %v4610 = vadd.f32 %v4608, %v4609
    %v4611 = vsel %vm4465, %v4282, 0.0
    %v4612 = vadd.f32 %v4610, %v4611
    %v4613 = vsel %vm4465, %v4283, 0.0
    %v4614 = vadd.f32 %v4612, %v4613
    %v4615 = vsel %vm4465, %v4284, 0.0
    %v4616 = vadd.f32 %v4614, %v4615
    %v4617 = vsel %vm4465, %v4285, 0.0
    %v4618 = vadd.f32 %v4616, %v4617
    %v4619 = vsel %vm4465, %v4286, 0.0
    %v4620 = vadd.f32 %v4618, %v4619
    %v4621 = vsel %vm4465, %v4287, 0.0
    %v4622 = vadd.f32 %v4620, %v4621
    %v4623 = vsel %vm4465, %v4288, 0.0
    %v4624 = vadd.f32 %v4622, %v4623
    %v4625 = vsel %vm4465, %v4289, 0.0
    %v4626 = vadd.f32 %v4624, %v4625
    %v4627 = vsel %vm4465, %v4290, 0.0
    %v4628 = vadd.f32 %v4626, %v4627
    %v4629 = vsel %vm4465, %v4291, 0.0
    %v4630 = vadd.f32 %v4628, %v4629
    %v4631 = vsel %vm4465, %v4292, 0.0
    %v4632 = vadd.f32 %v4630, %v4631
    %v4633 = vsel %vm4465, %v4293, 0.0
    %v4634 = vadd.f32 %v4632, %v4633
    %v4635 = vsel %vm4465, %v4294, 0.0
    %v4636 = vadd.f32 %v4634, %v4635
    %v4637 = vsel %vm4465, %v4295, 0.0
    %v4638 = vadd.f32 %v4636, %v4637
    %v4639 = vsel %vm4465, %v4296, 0.0
    %v4640 = vadd.f32 %v4638, %v4639
    %v4641 = vsel %vm4465, %v4297, 0.0
    %v4642 = vadd.f32 %v4640, %v4641
    %v4643 = vsel %vm4465, %v4298, 0.0
    %v4644 = vadd.f32 %v4642, %v4643
    %v4645 = vsel %vm4465, %v4299, 0.0
    %v4646 = vadd.f32 %v4644, %v4645
    %v4647 = vsel %vm4465, %v4300, 0.0
    %v4648 = vadd.f32 %v4646, %v4647
    %v4649 = vsel %vm4465, %v4301, 0.0
    %v4650 = vadd.f32 %v4648, %v4649
    %v4651 = vsel %vm4465, %v4302, 0.0
    %v4652 = vadd.f32 %v4650, %v4651
    %v4653 = vsel %vm4465, %v4303, 0.0
    %v4654 = vadd.f32 %v4652, %v4653
    %v4655 = vsel %vm4465, %v4304, 0.0
    %v4656 = vadd.f32 %v4654, %v4655
    %v4657 = vsel %vm4465, %v4305, 0.0
    %v4658 = vadd.f32 %v4656, %v4657
    %v4659 = vsel %vm4465, %v4306, 0.0
    %v4660 = vadd.f32 %v4658, %v4659
    %v4661 = vsel %vm4465, %v4307, 0.0
    %v4662 = vadd.f32 %v4660, %v4661
    %v4663 = vsel %vm4465, %v4308, 0.0
    %v4664 = vadd.f32 %v4662, %v4663
    %v4665 = vsel %vm4465, %v4309, 0.0
    %v4666 = vadd.f32 %v4664, %v4665
    %v4667 = vsel %vm4465, %v4310, 0.0
    %v4668 = vadd.f32 %v4666, %v4667
    %v4669 = vsel %vm4465, %v4311, 0.0
    %v4670 = vadd.f32 %v4668, %v4669
    %v4671 = vsel %vm4465, %v4312, 0.0
    %v4672 = vadd.f32 %v4670, %v4671
    %v4673 = vsel %vm4465, %v4313, 0.0
    %v4674 = vadd.f32 %v4672, %v4673
    %v4675 = vsel %vm4465, %v4314, 0.0
    %v4676 = vadd.f32 %v4674, %v4675
    %v4677 = vsel %vm4465, %v4315, 0.0
    %v4678 = vadd.f32 %v4676, %v4677
    %v4679 = vsel %vm4465, %v4316, 0.0
    %v4680 = vadd.f32 %v4678, %v4679
    %v4681 = vsel %vm4465, %v4317, 0.0
    %v4682 = vadd.f32 %v4680, %v4681
    %v4683 = vsel %vm4465, %v4318, 0.0
    %v4684 = vadd.f32 %v4682, %v4683
    %v4685 = vsel %vm4465, %v4319, 0.0
    %v4686 = vadd.f32 %v4684, %v4685
    %v4687 = vsel %vm4465, %v4320, 0.0
    %v4688 = vadd.f32 %v4686, %v4687
    %v4689 = vsel %vm4465, %v4321, 0.0
    %v4690 = vadd.f32 %v4688, %v4689
    %v4691 = vsel %vm4465, %v4322, 0.0
    %v4692 = vadd.f32 %v4690, %v4691
    %v4693 = vsel %vm4465, %v4323, 0.0
    %v4694 = vadd.f32 %v4692, %v4693
    %v4695 = vsel %vm4465, %v4324, 0.0
    %v4696 = vadd.f32 %v4694, %v4695
    %v4697 = vsel %vm4465, %v4325, 0.0
    %v4698 = vadd.f32 %v4696, %v4697
    %v4699 = vsel %vm4465, %v4326, 0.0
    %v4700 = vadd.f32 %v4698, %v4699
    %v4701 = vsel %vm4465, %v4327, 0.0
    %v4702 = vadd.f32 %v4700, %v4701
    %v4703 = vsel %vm4465, %v4328, 0.0
    %v4704 = vadd.f32 %v4702, %v4703
    %v4705 = vsel %vm4465, %v4329, 0.0
    %v4706 = vadd.f32 %v4704, %v4705
    %v4707 = vsel %vm4465, %v4330, 0.0
    %v4708 = vadd.f32 %v4706, %v4707
    %v4709 = vsel %vm4465, %v4331, 0.0
    %v4710 = vadd.f32 %v4708, %v4709
    %v4711 = vsel %vm4465, %v4332, 0.0
    %v4712 = vadd.f32 %v4710, %v4711
    %v4713 = vsel %vm4465, %v4333, 0.0
    %v4714 = vadd.f32 %v4712, %v4713
    %v4715 = vsel %vm4465, %v4334, 0.0
    %v4716 = vadd.f32 %v4714, %v4715
    %v4717 = vsel %vm4465, %v4335, 0.0
    %v4718 = vadd.f32 %v4716, %v4717
    %v4719 = vsel %vm4465, %v4336, 0.0
    %v4720 = vadd.f32 %v4718, %v4719
    %v4721 = vsel %vm4465, %v4337, 0.0
    %v4722 = vadd.f32 %v4720, %v4721
    %v4723 = vsel %vm4465, %v4338, 0.0
    %v4724 = vadd.f32 %v4722, %v4723
    %v4725 = vsel %vm4465, %v4339, 0.0
    %v4726 = vadd.f32 %v4724, %v4725
    %v4727 = vsel %vm4465, %v4340, 0.0
    %v4728 = vadd.f32 %v4726, %v4727
    %v4729 = vsel %vm4465, %v4341, 0.0
    %v4730 = vadd.f32 %v4728, %v4729
    %v4731 = vsel %vm4465, %v4342, 0.0
    %v4732 = vadd.f32 %v4730, %v4731
    %v4733 = vsel %vm4465, %v4343, 0.0
    %v4734 = vadd.f32 %v4732, %v4733
    %v4735 = vsel %vm4465, %v4344, 0.0
    %v4736 = vadd.f32 %v4734, %v4735
    %v4737 = vsel %vm4465, %v4345, 0.0
    %v4738 = vadd.f32 %v4736, %v4737
    %v4739 = vsel %vm4465, %v4346, 0.0
    %v4740 = vadd.f32 %v4738, %v4739
    %v4741 = vsel %vm4465, %v4347, 0.0
    %v4742 = vadd.f32 %v4740, %v4741
    %v4743 = vsel %vm4465, %v4348, 0.0
    %v4744 = vadd.f32 %v4742, %v4743
    %v4745 = vsel %vm4465, %v4349, 0.0
    %v4746 = vadd.f32 %v4744, %v4745
    %v4747 = vsel %vm4465, %v4350, 0.0
    %v4748 = vadd.f32 %v4746, %v4747
    %v4749 = vsel %vm4465, %v4351, 0.0
    %v4750 = vadd.f32 %v4748, %v4749
    %v4751 = vsel %vm4465, %v4352, 0.0
    %v4752 = vadd.f32 %v4750, %v4751
    %v4753 = vsel %vm4465, %v4353, 0.0
    %v4754 = vadd.f32 %v4752, %v4753
    %v4755 = vsel %vm4465, %v4354, 0.0
    %v4756 = vadd.f32 %v4754, %v4755
    %v4757 = vsel %vm4465, %v4355, 0.0
    %v4758 = vadd.f32 %v4756, %v4757
    %v4759 = vsel %vm4465, %v4356, 0.0
    %v4760 = vadd.f32 %v4758, %v4759
    %v4761 = vsel %vm4465, %v4357, 0.0
    %v4762 = vadd.f32 %v4760, %v4761
    %v4763 = vsel %vm4465, %v4358, 0.0
    %v4764 = vadd.f32 %v4762, %v4763
    %v4765 = vsel %vm4465, %v4359, 0.0
    %v4766 = vadd.f32 %v4764, %v4765
    %v4767 = vsel %vm4465, %v4360, 0.0
    %v4768 = vadd.f32 %v4766, %v4767
    %v4769 = vsel %vm4465, %v4361, 0.0
    %v4770 = vadd.f32 %v4768, %v4769
    %v4771 = vsel %vm4465, %v4362, 0.0
    %v4772 = vadd.f32 %v4770, %v4771
    %v4773 = vsel %vm4465, %v4363, 0.0
    %v4774 = vadd.f32 %v4772, %v4773
    %v4775 = vsel %vm4465, %v4364, 0.0
    %v4776 = vadd.f32 %v4774, %v4775
    %v4777 = vsel %vm4465, %v4365, 0.0
    %v4778 = vadd.f32 %v4776, %v4777
    %v4779 = vsel %vm4465, %v4366, 0.0
    %v4780 = vadd.f32 %v4778, %v4779
    %v4781 = vsel %vm4465, %v4367, 0.0
    %v4782 = vadd.f32 %v4780, %v4781
    %v4783 = vsel %vm4465, %v4368, 0.0
    %v4784 = vadd.f32 %v4782, %v4783
    %v4785 = vsel %vm4465, %v4369, 0.0
    %v4786 = vadd.f32 %v4784, %v4785
    %v4787 = vsel %vm4465, %v4370, 0.0
    %v4788 = vadd.f32 %v4786, %v4787
    %v4789 = vsel %vm4465, %v4371, 0.0
    %v4790 = vadd.f32 %v4788, %v4789
    %v4791 = vsel %vm4465, %v4372, 0.0
    %v4792 = vadd.f32 %v4790, %v4791
    %v4793 = vsel %vm4465, %v4373, 0.0
    %v4794 = vadd.f32 %v4792, %v4793
    %v4795 = vsel %vm4465, %v4374, 0.0
    %v4796 = vadd.f32 %v4794, %v4795
    %v4797 = vsel %vm4465, %v4375, 0.0
    %v4798 = vadd.f32 %v4796, %v4797
    %v4799 = vsel %vm4465, %v4376, 0.0
    %v4800 = vadd.f32 %v4798, %v4799
    %v4801 = vsel %vm4465, %v4377, 0.0
    %v4802 = vadd.f32 %v4800, %v4801
    %v4803 = vsel %vm4465, %v4378, 0.0
    %v4804 = vadd.f32 %v4802, %v4803
    %v4805 = vsel %vm4465, %v4379, 0.0
    %v4806 = vadd.f32 %v4804, %v4805
    %v4807 = vsel %vm4465, %v4380, 0.0
    %v4808 = vadd.f32 %v4806, %v4807
    %v4809 = vsel %vm4465, %v4381, 0.0
    %v4810 = vadd.f32 %v4808, %v4809
    %v4811 = vsel %vm4465, %v4382, 0.0
    %v4812 = vadd.f32 %v4810, %v4811
    %v4813 = vsel %vm4465, %v4383, 0.0
    %v4814 = vadd.f32 %v4812, %v4813
    %v4815 = vsel %vm4465, %v4384, 0.0
    %v4816 = vadd.f32 %v4814, %v4815
    %v4817 = vsel %vm4465, %v4385, 0.0
    %v4818 = vadd.f32 %v4816, %v4817
    %v4819 = vsel %vm4465, %v4386, 0.0
    %v4820 = vadd.f32 %v4818, %v4819
    %v4821 = vsel %vm4465, %v4387, 0.0
    %v4822 = vadd.f32 %v4820, %v4821
    %v4823 = vsel %vm4465, %v4388, 0.0
    %v4824 = vadd.f32 %v4822, %v4823
    %v4825 = vsel %vm4465, %v4389, 0.0
    %v4826 = vadd.f32 %v4824, %v4825
    %v4827 = vsel %vm4465, %v4390, 0.0
    %v4828 = vadd.f32 %v4826, %v4827
    %v4829 = vsel %vm4465, %v4391, 0.0
    %v4830 = vadd.f32 %v4828, %v4829
    %v4831 = vsel %vm4465, %v4392, 0.0
    %v4832 = vadd.f32 %v4830, %v4831
    %v4833 = vsel %vm4465, %v4393, 0.0
    %v4834 = vadd.f32 %v4832, %v4833
    %v4835 = vsel %vm4465, %v4394, 0.0
    %v4836 = vadd.f32 %v4834, %v4835
    %v4837 = vsel %vm4465, %v4395, 0.0
    %v4838 = vadd.f32 %v4836, %v4837
    %v4839 = vsel %vm4465, %v4396, 0.0
    %v4840 = vadd.f32 %v4838, %v4839
    %v4841 = vsel %vm4465, %v4397, 0.0
    %v4842 = vadd.f32 %v4840, %v4841
    %v4843 = vsel %vm4465, %v4398, 0.0
    %v4844 = vadd.f32 %v4842, %v4843
    %v4845 = vsel %vm4465, %v4399, 0.0
    %v4846 = vadd.f32 %v4844, %v4845
    %v4847 = vsel %vm4465, %v4400, 0.0
    %v4848 = vadd.f32 %v4846, %v4847
    %v4849 = vsel %vm4465, %v4401, 0.0
    %v4850 = vadd.f32 %v4848, %v4849
    %v4851 = vsel %vm4465, %v4402, 0.0
    %v4852 = vadd.f32 %v4850, %v4851
    %v4853 = vsel %vm4465, %v4403, 0.0
    %v4854 = vadd.f32 %v4852, %v4853
    %v4855 = vsel %vm4465, %v4404, 0.0
    %v4856 = vadd.f32 %v4854, %v4855
    %v4857 = vsel %vm4465, %v4405, 0.0
    %v4858 = vadd.f32 %v4856, %v4857
    %v4859 = vsel %vm4465, %v4406, 0.0
    %v4860 = vadd.f32 %v4858, %v4859
    %v4861 = vsel %vm4465, %v4407, 0.0
    %v4862 = vadd.f32 %v4860, %v4861
    %v4863 = vsel %vm4465, %v4408, 0.0
    %v4864 = vadd.f32 %v4862, %v4863
    %v4865 = vsel %vm4465, %v4409, 0.0
    %v4866 = vadd.f32 %v4864, %v4865
    %v4867 = vsel %vm4465, %v4410, 0.0
    %v4868 = vadd.f32 %v4866, %v4867
    %v4869 = vsel %vm4465, %v4411, 0.0
    %v4870 = vadd.f32 %v4868, %v4869
    %v4871 = vsel %vm4465, %v4412, 0.0
    %v4872 = vadd.f32 %v4870, %v4871
    %v4873 = vsel %vm4465, %v4413, 0.0
    %v4874 = vadd.f32 %v4872, %v4873
    %v4875 = vsel %vm4465, %v4414, 0.0
    %v4876 = vadd.f32 %v4874, %v4875
    %v4877 = vsel %vm4465, %v4415, 0.0
    %v4878 = vadd.f32 %v4876, %v4877
    %v4879 = vsel %vm4465, %v4416, 0.0
    %v4880 = vadd.f32 %v4878, %v4879
    %v4881 = vsel %vm4465, %v4417, 0.0
    %v4882 = vadd.f32 %v4880, %v4881
    %v4883 = vsel %vm4465, %v4418, 0.0
    %v4884 = vadd.f32 %v4882, %v4883
    %v4885 = vsel %vm4465, %v4419, 0.0
    %v4886 = vadd.f32 %v4884, %v4885
    %v4887 = vsel %vm4465, %v4420, 0.0
    %v4888 = vadd.f32 %v4886, %v4887
    %v4889 = vsel %vm4465, %v4421, 0.0
    %v4890 = vadd.f32 %v4888, %v4889
    %v4891 = vsel %vm4465, %v4422, 0.0
    %v4892 = vadd.f32 %v4890, %v4891
    %v4893 = vsel %vm4465, %v4423, 0.0
    %v4894 = vadd.f32 %v4892, %v4893
    %v4895 = vsel %vm4465, %v4424, 0.0
    %v4896 = vadd.f32 %v4894, %v4895
    %v4897 = vsel %vm4465, %v4425, 0.0
    %v4898 = vadd.f32 %v4896, %v4897
    %v4899 = vsel %vm4465, %v4426, 0.0
    %v4900 = vadd.f32 %v4898, %v4899
    %v4901 = vsel %vm4465, %v4427, 0.0
    %v4902 = vadd.f32 %v4900, %v4901
    %v4903 = vsel %vm4465, %v4428, 0.0
    %v4904 = vadd.f32 %v4902, %v4903
    %v4905 = vsel %vm4465, %v4429, 0.0
    %v4906 = vadd.f32 %v4904, %v4905
    %v4907 = vsel %vm4465, %v4430, 0.0
    %v4908 = vadd.f32 %v4906, %v4907
    %v4909 = vsel %vm4465, %v4431, 0.0
    %v4910 = vadd.f32 %v4908, %v4909
    %v4911 = vsel %vm4465, %v4432, 0.0
    %v4912 = vadd.f32 %v4910, %v4911
    %v4913 = vsel %vm4465, %v4433, 0.0
    %v4914 = vadd.f32 %v4912, %v4913
    %v4915 = vsel %vm4465, %v4434, 0.0
    %v4916 = vadd.f32 %v4914, %v4915
    %v4917 = vsel %vm4465, %v4435, 0.0
    %v4918 = vadd.f32 %v4916, %v4917
    %v4919 = vsel %vm4465, %v4436, 0.0
    %v4920 = vadd.f32 %v4918, %v4919
    %v4921 = vsel %vm4465, %v4437, 0.0
    %v4922 = vadd.f32 %v4920, %v4921
    %v4923 = vsel %vm4465, %v4438, 0.0
    %v4924 = vadd.f32 %v4922, %v4923
    %v4925 = vsel %vm4465, %v4439, 0.0
    %v4926 = vadd.f32 %v4924, %v4925
    %v4927 = vsel %vm4465, %v4440, 0.0
    %v4928 = vadd.f32 %v4926, %v4927
    %v4929 = vsel %vm4465, %v4441, 0.0
    %v4930 = vadd.f32 %v4928, %v4929
    %v4931 = vsel %vm4465, %v4442, 0.0
    %v4932 = vadd.f32 %v4930, %v4931
    %v4933 = vsel %vm4465, %v4443, 0.0
    %v4934 = vadd.f32 %v4932, %v4933
    %v4935 = vsel %vm4465, %v4444, 0.0
    %v4936 = vadd.f32 %v4934, %v4935
    %v4937 = vsel %vm4465, %v4445, 0.0
    %v4938 = vadd.f32 %v4936, %v4937
    %v4939 = vsel %vm4465, %v4446, 0.0
    %v4940 = vadd.f32 %v4938, %v4939
    %v4941 = vsel %vm4465, %v4447, 0.0
    %v4942 = vadd.f32 %v4940, %v4941
    %v4943 = vsel %vm4465, %v4448, 0.0
    %v4944 = vadd.f32 %v4942, %v4943
    %v4945 = vsel %vm4465, %v4449, 0.0
    %v4946 = vadd.f32 %v4944, %v4945
    %v4947 = vsel %vm4465, %v4450, 0.0
    %v4948 = vadd.f32 %v4946, %v4947
    %v4949 = vsel %vm4465, %v4451, 0.0
    %v4950 = vadd.f32 %v4948, %v4949
    %v4951 = vsel %vm4465, %v4452, 0.0
    %v4952 = vadd.f32 %v4950, %v4951
    %v4953 = vsel %vm4465, %v4453, 0.0
    %v4954 = vadd.f32 %v4952, %v4953
    %v4955 = vsel %vm4465, %v4454, 0.0
    %v4956 = vadd.f32 %v4954, %v4955
    %v4957 = vsel %vm4465, %v4455, 0.0
    %v4958 = vadd.f32 %v4956, %v4957
    %v4959 = vsel %vm4465, %v4456, 0.0
    %v4960 = vadd.f32 %v4958, %v4959
    %v4961 = vsel %vm4465, %v4457, 0.0
    %v4962 = vadd.f32 %v4960, %v4961
    %v4963 = vsel %vm4465, %v4458, 0.0
    %v4964 = vadd.f32 %v4962, %v4963
    %v4965 = vsel %vm4465, %v4459, 0.0
    %v4966 = vadd.f32 %v4964, %v4965
    %v4967 = vsel %vm4465, %v4460, 0.0
    %v4968 = vadd.f32 %v4966, %v4967
    %v4969 = vsel %vm4465, %v4461, 0.0
    %v4970 = vadd.f32 %v4968, %v4969
    %v4971 = vsel %vm4465, %v4462, 0.0
    %v4972 = vadd.f32 %v4970, %v4971
    %v4973 = vsel %vm4465, %v4463, 0.0
    %v4974 = vadd.f32 %v4972, %v4973
    %v4975 = vsel %vm4465, %v4464, 0.0
    %v4976 = vadd.f32 %v4974, %v4975
    %v4977 = vrot.slane %v4976, 4
    %v4978 = vadd.f32 %v4976, %v4977
    %v4979 = vrot.slane %v4978, 2
    %v4980 = vadd.f32 %v4978, %v4979
    %v4981 = vrot.slane %v4980, 1
    %v4982 = vadd.f32 %v4980, %v4981
    %v4983 = vrcp.pop 2048.0
    %v4984 = vmul.f32 2048.0, %v4983
    %v4985 = vsub.f32 1.0, %v4984
    %v4986 = vmul.f32 %v4983, %v4985
    %v4987 = vadd.f32 %v4983, %v4986
    %vm4988 = vweird.f32 %v4983
    %v4989 = vsel %vm4988, %v4983, %v4987
    %v4990 = vmul.f32 %v4982, %v4989
    %v4991 = vsub.f32 %v4209, %v4990
    %v4992 = vsub.f32 %v4210, %v4990
    %v4993 = vsub.f32 %v4211, %v4990
    %v4994 = vsub.f32 %v4212, %v4990
    %v4995 = vsub.f32 %v4213, %v4990
    %v4996 = vsub.f32 %v4214, %v4990
    %v4997 = vsub.f32 %v4215, %v4990
    %v4998 = vsub.f32 %v4216, %v4990
    %v4999 = vsub.f32 %v4217, %v4990
    %v5000 = vsub.f32 %v4218, %v4990
    %v5001 = vsub.f32 %v4219, %v4990
    %v5002 = vsub.f32 %v4220, %v4990
    %v5003 = vsub.f32 %v4221, %v4990
    %v5004 = vsub.f32 %v4222, %v4990
    %v5005 = vsub.f32 %v4223, %v4990
    %v5006 = vsub.f32 %v4224, %v4990
    %v5007 = vsub.f32 %v4225, %v4990
    %v5008 = vsub.f32 %v4226, %v4990
    %v5009 = vsub.f32 %v4227, %v4990
    %v5010 = vsub.f32 %v4228, %v4990
    %v5011 = vsub.f32 %v4229, %v4990
    %v5012 = vsub.f32 %v4230, %v4990
    %v5013 = vsub.f32 %v4231, %v4990
    %v5014 = vsub.f32 %v4232, %v4990
    %v5015 = vsub.f32 %v4233, %v4990
    %v5016 = vsub.f32 %v4234, %v4990
    %v5017 = vsub.f32 %v4235, %v4990
    %v5018 = vsub.f32 %v4236, %v4990
    %v5019 = vsub.f32 %v4237, %v4990
    %v5020 = vsub.f32 %v4238, %v4990
    %v5021 = vsub.f32 %v4239, %v4990
    %v5022 = vsub.f32 %v4240, %v4990
    %v5023 = vsub.f32 %v4241, %v4990
    %v5024 = vsub.f32 %v4242, %v4990
    %v5025 = vsub.f32 %v4243, %v4990
    %v5026 = vsub.f32 %v4244, %v4990
    %v5027 = vsub.f32 %v4245, %v4990
    %v5028 = vsub.f32 %v4246, %v4990
    %v5029 = vsub.f32 %v4247, %v4990
    %v5030 = vsub.f32 %v4248, %v4990
    %v5031 = vsub.f32 %v4249, %v4990
    %v5032 = vsub.f32 %v4250, %v4990
    %v5033 = vsub.f32 %v4251, %v4990
    %v5034 = vsub.f32 %v4252, %v4990
    %v5035 = vsub.f32 %v4253, %v4990
    %v5036 = vsub.f32 %v4254, %v4990
    %v5037 = vsub.f32 %v4255, %v4990
    %v5038 = vsub.f32 %v4256, %v4990
    %v5039 = vsub.f32 %v4257, %v4990
    %v5040 = vsub.f32 %v4258, %v4990
    %v5041 = vsub.f32 %v4259, %v4990
    %v5042 = vsub.f32 %v4260, %v4990
    %v5043 = vsub.f32 %v4261, %v4990
    %v5044 = vsub.f32 %v4262, %v4990
    %v5045 = vsub.f32 %v4263, %v4990
    %v5046 = vsub.f32 %v4264, %v4990
    %v5047 = vsub.f32 %v4265, %v4990
    %v5048 = vsub.f32 %v4266, %v4990
    %v5049 = vsub.f32 %v4267, %v4990
    %v5050 = vsub.f32 %v4268, %v4990
    %v5051 = vsub.f32 %v4269, %v4990
    %v5052 = vsub.f32 %v4270, %v4990
    %v5053 = vsub.f32 %v4271, %v4990
    %v5054 = vsub.f32 %v4272, %v4990
    %v5055 = vsub.f32 %v4273, %v4990
    %v5056 = vsub.f32 %v4274, %v4990
    %v5057 = vsub.f32 %v4275, %v4990
    %v5058 = vsub.f32 %v4276, %v4990
    %v5059 = vsub.f32 %v4277, %v4990
    %v5060 = vsub.f32 %v4278, %v4990
    %v5061 = vsub.f32 %v4279, %v4990
    %v5062 = vsub.f32 %v4280, %v4990
    %v5063 = vsub.f32 %v4281, %v4990
    %v5064 = vsub.f32 %v4282, %v4990
    %v5065 = vsub.f32 %v4283, %v4990
    %v5066 = vsub.f32 %v4284, %v4990
    %v5067 = vsub.f32 %v4285, %v4990
    %v5068 = vsub.f32 %v4286, %v4990
    %v5069 = vsub.f32 %v4287, %v4990
    %v5070 = vsub.f32 %v4288, %v4990
    %v5071 = vsub.f32 %v4289, %v4990
    %v5072 = vsub.f32 %v4290, %v4990
    %v5073 = vsub.f32 %v4291, %v4990
    %v5074 = vsub.f32 %v4292, %v4990
    %v5075 = vsub.f32 %v4293, %v4990
    %v5076 = vsub.f32 %v4294, %v4990
    %v5077 = vsub.f32 %v4295, %v4990
    %v5078 = vsub.f32 %v4296, %v4990
    %v5079 = vsub.f32 %v4297, %v4990
    %v5080 = vsub.f32 %v4298, %v4990
    %v5081 = vsub.f32 %v4299, %v4990
    %v5082 = vsub.f32 %v4300, %v4990
    %v5083 = vsub.f32 %v4301, %v4990
    %v5084 = vsub.f32 %v4302, %v4990
    %v5085 = vsub.f32 %v4303, %v4990
    %v5086 = vsub.f32 %v4304, %v4990
    %v5087 = vsub.f32 %v4305, %v4990
    %v5088 = vsub.f32 %v4306, %v4990
    %v5089 = vsub.f32 %v4307, %v4990
    %v5090 = vsub.f32 %v4308, %v4990
    %v5091 = vsub.f32 %v4309, %v4990
    %v5092 = vsub.f32 %v4310, %v4990
    %v5093 = vsub.f32 %v4311, %v4990
    %v5094 = vsub.f32 %v4312, %v4990
    %v5095 = vsub.f32 %v4313, %v4990
    %v5096 = vsub.f32 %v4314, %v4990
    %v5097 = vsub.f32 %v4315, %v4990
    %v5098 = vsub.f32 %v4316, %v4990
    %v5099 = vsub.f32 %v4317, %v4990
    %v5100 = vsub.f32 %v4318, %v4990
    %v5101 = vsub.f32 %v4319, %v4990
    %v5102 = vsub.f32 %v4320, %v4990
    %v5103 = vsub.f32 %v4321, %v4990
    %v5104 = vsub.f32 %v4322, %v4990
    %v5105 = vsub.f32 %v4323, %v4990
    %v5106 = vsub.f32 %v4324, %v4990
    %v5107 = vsub.f32 %v4325, %v4990
    %v5108 = vsub.f32 %v4326, %v4990
    %v5109 = vsub.f32 %v4327, %v4990
    %v5110 = vsub.f32 %v4328, %v4990
    %v5111 = vsub.f32 %v4329, %v4990
    %v5112 = vsub.f32 %v4330, %v4990
    %v5113 = vsub.f32 %v4331, %v4990
    %v5114 = vsub.f32 %v4332, %v4990
    %v5115 = vsub.f32 %v4333, %v4990
    %v5116 = vsub.f32 %v4334, %v4990
    %v5117 = vsub.f32 %v4335, %v4990
    %v5118 = vsub.f32 %v4336, %v4990
    %v5119 = vsub.f32 %v4337, %v4990
    %v5120 = vsub.f32 %v4338, %v4990
    %v5121 = vsub.f32 %v4339, %v4990
    %v5122 = vsub.f32 %v4340, %v4990
    %v5123 = vsub.f32 %v4341, %v4990
    %v5124 = vsub.f32 %v4342, %v4990
    %v5125 = vsub.f32 %v4343, %v4990
    %v5126 = vsub.f32 %v4344, %v4990
    %v5127 = vsub.f32 %v4345, %v4990
    %v5128 = vsub.f32 %v4346, %v4990
    %v5129 = vsub.f32 %v4347, %v4990
    %v5130 = vsub.f32 %v4348, %v4990
    %v5131 = vsub.f32 %v4349, %v4990
    %v5132 = vsub.f32 %v4350, %v4990
    %v5133 = vsub.f32 %v4351, %v4990
    %v5134 = vsub.f32 %v4352, %v4990
    %v5135 = vsub.f32 %v4353, %v4990
    %v5136 = vsub.f32 %v4354, %v4990
    %v5137 = vsub.f32 %v4355, %v4990
    %v5138 = vsub.f32 %v4356, %v4990
    %v5139 = vsub.f32 %v4357, %v4990
    %v5140 = vsub.f32 %v4358, %v4990
    %v5141 = vsub.f32 %v4359, %v4990
    %v5142 = vsub.f32 %v4360, %v4990
    %v5143 = vsub.f32 %v4361, %v4990
    %v5144 = vsub.f32 %v4362, %v4990
    %v5145 = vsub.f32 %v4363, %v4990
    %v5146 = vsub.f32 %v4364, %v4990
    %v5147 = vsub.f32 %v4365, %v4990
    %v5148 = vsub.f32 %v4366, %v4990
    %v5149 = vsub.f32 %v4367, %v4990
    %v5150 = vsub.f32 %v4368, %v4990
    %v5151 = vsub.f32 %v4369, %v4990
    %v5152 = vsub.f32 %v4370, %v4990
    %v5153 = vsub.f32 %v4371, %v4990
    %v5154 = vsub.f32 %v4372, %v4990
    %v5155 = vsub.f32 %v4373, %v4990
    %v5156 = vsub.f32 %v4374, %v4990
    %v5157 = vsub.f32 %v4375, %v4990
    %v5158 = vsub.f32 %v4376, %v4990
    %v5159 = vsub.f32 %v4377, %v4990
    %v5160 = vsub.f32 %v4378, %v4990
    %v5161 = vsub.f32 %v4379, %v4990
    %v5162 = vsub.f32 %v4380, %v4990
    %v5163 = vsub.f32 %v4381, %v4990
    %v5164 = vsub.f32 %v4382, %v4990
    %v5165 = vsub.f32 %v4383, %v4990
    %v5166 = vsub.f32 %v4384, %v4990
    %v5167 = vsub.f32 %v4385, %v4990
    %v5168 = vsub.f32 %v4386, %v4990
    %v5169 = vsub.f32 %v4387, %v4990
    %v5170 = vsub.f32 %v4388, %v4990
    %v5171 = vsub.f32 %v4389, %v4990
    %v5172 = vsub.f32 %v4390, %v4990
    %v5173 = vsub.f32 %v4391, %v4990
    %v5174 = vsub.f32 %v4392, %v4990
    %v5175 = vsub.f32 %v4393, %v4990
    %v5176 = vsub.f32 %v4394, %v4990
    %v5177 = vsub.f32 %v4395, %v4990
    %v5178 = vsub.f32 %v4396, %v4990
    %v5179 = vsub.f32 %v4397, %v4990
    %v5180 = vsub.f32 %v4398, %v4990
    %v5181 = vsub.f32 %v4399, %v4990
    %v5182 = vsub.f32 %v4400, %v4990
    %v5183 = vsub.f32 %v4401, %v4990
    %v5184 = vsub.f32 %v4402, %v4990
    %v5185 = vsub.f32 %v4403, %v4990
    %v5186 = vsub.f32 %v4404, %v4990
    %v5187 = vsub.f32 %v4405, %v4990
    %v5188 = vsub.f32 %v4406, %v4990
    %v5189 = vsub.f32 %v4407, %v4990
    %v5190 = vsub.f32 %v4408, %v4990
    %v5191 = vsub.f32 %v4409, %v4990
    %v5192 = vsub.f32 %v4410, %v4990
    %v5193 = vsub.f32 %v4411, %v4990
    %v5194 = vsub.f32 %v4412, %v4990
    %v5195 = vsub.f32 %v4413, %v4990
    %v5196 = vsub.f32 %v4414, %v4990
    %v5197 = vsub.f32 %v4415, %v4990
    %v5198 = vsub.f32 %v4416, %v4990
    %v5199 = vsub.f32 %v4417, %v4990
    %v5200 = vsub.f32 %v4418, %v4990
    %v5201 = vsub.f32 %v4419, %v4990
    %v5202 = vsub.f32 %v4420, %v4990
    %v5203 = vsub.f32 %v4421, %v4990
    %v5204 = vsub.f32 %v4422, %v4990
    %v5205 = vsub.f32 %v4423, %v4990
    %v5206 = vsub.f32 %v4424, %v4990
    %v5207 = vsub.f32 %v4425, %v4990
    %v5208 = vsub.f32 %v4426, %v4990
    %v5209 = vsub.f32 %v4427, %v4990
    %v5210 = vsub.f32 %v4428, %v4990
    %v5211 = vsub.f32 %v4429, %v4990
    %v5212 = vsub.f32 %v4430, %v4990
    %v5213 = vsub.f32 %v4431, %v4990
    %v5214 = vsub.f32 %v4432, %v4990
    %v5215 = vsub.f32 %v4433, %v4990
    %v5216 = vsub.f32 %v4434, %v4990
    %v5217 = vsub.f32 %v4435, %v4990
    %v5218 = vsub.f32 %v4436, %v4990
    %v5219 = vsub.f32 %v4437, %v4990
    %v5220 = vsub.f32 %v4438, %v4990
    %v5221 = vsub.f32 %v4439, %v4990
    %v5222 = vsub.f32 %v4440, %v4990
    %v5223 = vsub.f32 %v4441, %v4990
    %v5224 = vsub.f32 %v4442, %v4990
    %v5225 = vsub.f32 %v4443, %v4990
    %v5226 = vsub.f32 %v4444, %v4990
    %v5227 = vsub.f32 %v4445, %v4990
    %v5228 = vsub.f32 %v4446, %v4990
    %v5229 = vsub.f32 %v4447, %v4990
    %v5230 = vsub.f32 %v4448, %v4990
    %v5231 = vsub.f32 %v4449, %v4990
    %v5232 = vsub.f32 %v4450, %v4990
    %v5233 = vsub.f32 %v4451, %v4990
    %v5234 = vsub.f32 %v4452, %v4990
    %v5235 = vsub.f32 %v4453, %v4990
    %v5236 = vsub.f32 %v4454, %v4990
    %v5237 = vsub.f32 %v4455, %v4990
    %v5238 = vsub.f32 %v4456, %v4990
    %v5239 = vsub.f32 %v4457, %v4990
    %v5240 = vsub.f32 %v4458, %v4990
    %v5241 = vsub.f32 %v4459, %v4990
    %v5242 = vsub.f32 %v4460, %v4990
    %v5243 = vsub.f32 %v4461, %v4990
    %v5244 = vsub.f32 %v4462, %v4990
    %v5245 = vsub.f32 %v4463, %v4990
    %v5246 = vsub.f32 %v4464, %v4990
    %v5247 = vmul.f32 %v4991, %v4991
    %v5248 = vmul.f32 %v4992, %v4992
    %v5249 = vmul.f32 %v4993, %v4993
    %v5250 = vmul.f32 %v4994, %v4994
    %v5251 = vmul.f32 %v4995, %v4995
    %v5252 = vmul.f32 %v4996, %v4996
    %v5253 = vmul.f32 %v4997, %v4997
    %v5254 = vmul.f32 %v4998, %v4998
    %v5255 = vmul.f32 %v4999, %v4999
    %v5256 = vmul.f32 %v5000, %v5000
    %v5257 = vmul.f32 %v5001, %v5001
    %v5258 = vmul.f32 %v5002, %v5002
    %v5259 = vmul.f32 %v5003, %v5003
    %v5260 = vmul.f32 %v5004, %v5004
    %v5261 = vmul.f32 %v5005, %v5005
    %v5262 = vmul.f32 %v5006, %v5006
    %v5263 = vmul.f32 %v5007, %v5007
    %v5264 = vmul.f32 %v5008, %v5008
    %v5265 = vmul.f32 %v5009, %v5009
    %v5266 = vmul.f32 %v5010, %v5010
    %v5267 = vmul.f32 %v5011, %v5011
    %v5268 = vmul.f32 %v5012, %v5012
    %v5269 = vmul.f32 %v5013, %v5013
    %v5270 = vmul.f32 %v5014, %v5014
    %v5271 = vmul.f32 %v5015, %v5015
    %v5272 = vmul.f32 %v5016, %v5016
    %v5273 = vmul.f32 %v5017, %v5017
    %v5274 = vmul.f32 %v5018, %v5018
    %v5275 = vmul.f32 %v5019, %v5019
    %v5276 = vmul.f32 %v5020, %v5020
    %v5277 = vmul.f32 %v5021, %v5021
    %v5278 = vmul.f32 %v5022, %v5022
    %v5279 = vmul.f32 %v5023, %v5023
    %v5280 = vmul.f32 %v5024, %v5024
    %v5281 = vmul.f32 %v5025, %v5025
    %v5282 = vmul.f32 %v5026, %v5026
    %v5283 = vmul.f32 %v5027, %v5027
    %v5284 = vmul.f32 %v5028, %v5028
    %v5285 = vmul.f32 %v5029, %v5029
    %v5286 = vmul.f32 %v5030, %v5030
    %v5287 = vmul.f32 %v5031, %v5031
    %v5288 = vmul.f32 %v5032, %v5032
    %v5289 = vmul.f32 %v5033, %v5033
    %v5290 = vmul.f32 %v5034, %v5034
    %v5291 = vmul.f32 %v5035, %v5035
    %v5292 = vmul.f32 %v5036, %v5036
    %v5293 = vmul.f32 %v5037, %v5037
    %v5294 = vmul.f32 %v5038, %v5038
    %v5295 = vmul.f32 %v5039, %v5039
    %v5296 = vmul.f32 %v5040, %v5040
    %v5297 = vmul.f32 %v5041, %v5041
    %v5298 = vmul.f32 %v5042, %v5042
    %v5299 = vmul.f32 %v5043, %v5043
    %v5300 = vmul.f32 %v5044, %v5044
    %v5301 = vmul.f32 %v5045, %v5045
    %v5302 = vmul.f32 %v5046, %v5046
    %v5303 = vmul.f32 %v5047, %v5047
    %v5304 = vmul.f32 %v5048, %v5048
    %v5305 = vmul.f32 %v5049, %v5049
    %v5306 = vmul.f32 %v5050, %v5050
    %v5307 = vmul.f32 %v5051, %v5051
    %v5308 = vmul.f32 %v5052, %v5052
    %v5309 = vmul.f32 %v5053, %v5053
    %v5310 = vmul.f32 %v5054, %v5054
    %v5311 = vmul.f32 %v5055, %v5055
    %v5312 = vmul.f32 %v5056, %v5056
    %v5313 = vmul.f32 %v5057, %v5057
    %v5314 = vmul.f32 %v5058, %v5058
    %v5315 = vmul.f32 %v5059, %v5059
    %v5316 = vmul.f32 %v5060, %v5060
    %v5317 = vmul.f32 %v5061, %v5061
    %v5318 = vmul.f32 %v5062, %v5062
    %v5319 = vmul.f32 %v5063, %v5063
    %v5320 = vmul.f32 %v5064, %v5064
    %v5321 = vmul.f32 %v5065, %v5065
    %v5322 = vmul.f32 %v5066, %v5066
    %v5323 = vmul.f32 %v5067, %v5067
    %v5324 = vmul.f32 %v5068, %v5068
    %v5325 = vmul.f32 %v5069, %v5069
    %v5326 = vmul.f32 %v5070, %v5070
    %v5327 = vmul.f32 %v5071, %v5071
    %v5328 = vmul.f32 %v5072, %v5072
    %v5329 = vmul.f32 %v5073, %v5073
    %v5330 = vmul.f32 %v5074, %v5074
    %v5331 = vmul.f32 %v5075, %v5075
    %v5332 = vmul.f32 %v5076, %v5076
    %v5333 = vmul.f32 %v5077, %v5077
    %v5334 = vmul.f32 %v5078, %v5078
    %v5335 = vmul.f32 %v5079, %v5079
    %v5336 = vmul.f32 %v5080, %v5080
    %v5337 = vmul.f32 %v5081, %v5081
    %v5338 = vmul.f32 %v5082, %v5082
    %v5339 = vmul.f32 %v5083, %v5083
    %v5340 = vmul.f32 %v5084, %v5084
    %v5341 = vmul.f32 %v5085, %v5085
    %v5342 = vmul.f32 %v5086, %v5086
    %v5343 = vmul.f32 %v5087, %v5087
    %v5344 = vmul.f32 %v5088, %v5088
    %v5345 = vmul.f32 %v5089, %v5089
    %v5346 = vmul.f32 %v5090, %v5090
    %v5347 = vmul.f32 %v5091, %v5091
    %v5348 = vmul.f32 %v5092, %v5092
    %v5349 = vmul.f32 %v5093, %v5093
    %v5350 = vmul.f32 %v5094, %v5094
    %v5351 = vmul.f32 %v5095, %v5095
    %v5352 = vmul.f32 %v5096, %v5096
    %v5353 = vmul.f32 %v5097, %v5097
    %v5354 = vmul.f32 %v5098, %v5098
    %v5355 = vmul.f32 %v5099, %v5099
    %v5356 = vmul.f32 %v5100, %v5100
    %v5357 = vmul.f32 %v5101, %v5101
    %v5358 = vmul.f32 %v5102, %v5102
    %v5359 = vmul.f32 %v5103, %v5103
    %v5360 = vmul.f32 %v5104, %v5104
    %v5361 = vmul.f32 %v5105, %v5105
    %v5362 = vmul.f32 %v5106, %v5106
    %v5363 = vmul.f32 %v5107, %v5107
    %v5364 = vmul.f32 %v5108, %v5108
    %v5365 = vmul.f32 %v5109, %v5109
    %v5366 = vmul.f32 %v5110, %v5110
    %v5367 = vmul.f32 %v5111, %v5111
    %v5368 = vmul.f32 %v5112, %v5112
    %v5369 = vmul.f32 %v5113, %v5113
    %v5370 = vmul.f32 %v5114, %v5114
    %v5371 = vmul.f32 %v5115, %v5115
    %v5372 = vmul.f32 %v5116, %v5116
    %v5373 = vmul.f32 %v5117, %v5117
    %v5374 = vmul.f32 %v5118, %v5118
    %v5375 = vmul.f32 %v5119, %v5119
    %v5376 = vmul.f32 %v5120, %v5120
    %v5377 = vmul.f32 %v5121, %v5121
    %v5378 = vmul.f32 %v5122, %v5122
    %v5379 = vmul.f32 %v5123, %v5123
    %v5380 = vmul.f32 %v5124, %v5124
    %v5381 = vmul.f32 %v5125, %v5125
    %v5382 = vmul.f32 %v5126, %v5126
    %v5383 = vmul.f32 %v5127, %v5127
    %v5384 = vmul.f32 %v5128, %v5128
    %v5385 = vmul.f32 %v5129, %v5129
    %v5386 = vmul.f32 %v5130, %v5130
    %v5387 = vmul.f32 %v5131, %v5131
    %v5388 = vmul.f32 %v5132, %v5132
    %v5389 = vmul.f32 %v5133, %v5133
    %v5390 = vmul.f32 %v5134, %v5134
    %v5391 = vmul.f32 %v5135, %v5135
    %v5392 = vmul.f32 %v5136, %v5136
    %v5393 = vmul.f32 %v5137, %v5137
    %v5394 = vmul.f32 %v5138, %v5138
    %v5395 = vmul.f32 %v5139, %v5139
    %v5396 = vmul.f32 %v5140, %v5140
    %v5397 = vmul.f32 %v5141, %v5141
    %v5398 = vmul.f32 %v5142, %v5142
    %v5399 = vmul.f32 %v5143, %v5143
    %v5400 = vmul.f32 %v5144, %v5144
    %v5401 = vmul.f32 %v5145, %v5145
    %v5402 = vmul.f32 %v5146, %v5146
    %v5403 = vmul.f32 %v5147, %v5147
    %v5404 = vmul.f32 %v5148, %v5148
    %v5405 = vmul.f32 %v5149, %v5149
    %v5406 = vmul.f32 %v5150, %v5150
    %v5407 = vmul.f32 %v5151, %v5151
    %v5408 = vmul.f32 %v5152, %v5152
    %v5409 = vmul.f32 %v5153, %v5153
    %v5410 = vmul.f32 %v5154, %v5154
    %v5411 = vmul.f32 %v5155, %v5155
    %v5412 = vmul.f32 %v5156, %v5156
    %v5413 = vmul.f32 %v5157, %v5157
    %v5414 = vmul.f32 %v5158, %v5158
    %v5415 = vmul.f32 %v5159, %v5159
    %v5416 = vmul.f32 %v5160, %v5160
    %v5417 = vmul.f32 %v5161, %v5161
    %v5418 = vmul.f32 %v5162, %v5162
    %v5419 = vmul.f32 %v5163, %v5163
    %v5420 = vmul.f32 %v5164, %v5164
    %v5421 = vmul.f32 %v5165, %v5165
    %v5422 = vmul.f32 %v5166, %v5166
    %v5423 = vmul.f32 %v5167, %v5167
    %v5424 = vmul.f32 %v5168, %v5168
    %v5425 = vmul.f32 %v5169, %v5169
    %v5426 = vmul.f32 %v5170, %v5170
    %v5427 = vmul.f32 %v5171, %v5171
    %v5428 = vmul.f32 %v5172, %v5172
    %v5429 = vmul.f32 %v5173, %v5173
    %v5430 = vmul.f32 %v5174, %v5174
    %v5431 = vmul.f32 %v5175, %v5175
    %v5432 = vmul.f32 %v5176, %v5176
    %v5433 = vmul.f32 %v5177, %v5177
    %v5434 = vmul.f32 %v5178, %v5178
    %v5435 = vmul.f32 %v5179, %v5179
    %v5436 = vmul.f32 %v5180, %v5180
    %v5437 = vmul.f32 %v5181, %v5181
    %v5438 = vmul.f32 %v5182, %v5182
    %v5439 = vmul.f32 %v5183, %v5183
    %v5440 = vmul.f32 %v5184, %v5184
    %v5441 = vmul.f32 %v5185, %v5185
    %v5442 = vmul.f32 %v5186, %v5186
    %v5443 = vmul.f32 %v5187, %v5187
    %v5444 = vmul.f32 %v5188, %v5188
    %v5445 = vmul.f32 %v5189, %v5189
    %v5446 = vmul.f32 %v5190, %v5190
    %v5447 = vmul.f32 %v5191, %v5191
    %v5448 = vmul.f32 %v5192, %v5192
    %v5449 = vmul.f32 %v5193, %v5193
    %v5450 = vmul.f32 %v5194, %v5194
    %v5451 = vmul.f32 %v5195, %v5195
    %v5452 = vmul.f32 %v5196, %v5196
    %v5453 = vmul.f32 %v5197, %v5197
    %v5454 = vmul.f32 %v5198, %v5198
    %v5455 = vmul.f32 %v5199, %v5199
    %v5456 = vmul.f32 %v5200, %v5200
    %v5457 = vmul.f32 %v5201, %v5201
    %v5458 = vmul.f32 %v5202, %v5202
    %v5459 = vmul.f32 %v5203, %v5203
    %v5460 = vmul.f32 %v5204, %v5204
    %v5461 = vmul.f32 %v5205, %v5205
    %v5462 = vmul.f32 %v5206, %v5206
    %v5463 = vmul.f32 %v5207, %v5207
    %v5464 = vmul.f32 %v5208, %v5208
    %v5465 = vmul.f32 %v5209, %v5209
    %v5466 = vmul.f32 %v5210, %v5210
    %v5467 = vmul.f32 %v5211, %v5211
    %v5468 = vmul.f32 %v5212, %v5212
    %v5469 = vmul.f32 %v5213, %v5213
    %v5470 = vmul.f32 %v5214, %v5214
    %v5471 = vmul.f32 %v5215, %v5215
    %v5472 = vmul.f32 %v5216, %v5216
    %v5473 = vmul.f32 %v5217, %v5217
    %v5474 = vmul.f32 %v5218, %v5218
    %v5475 = vmul.f32 %v5219, %v5219
    %v5476 = vmul.f32 %v5220, %v5220
    %v5477 = vmul.f32 %v5221, %v5221
    %v5478 = vmul.f32 %v5222, %v5222
    %v5479 = vmul.f32 %v5223, %v5223
    %v5480 = vmul.f32 %v5224, %v5224
    %v5481 = vmul.f32 %v5225, %v5225
    %v5482 = vmul.f32 %v5226, %v5226
    %v5483 = vmul.f32 %v5227, %v5227
    %v5484 = vmul.f32 %v5228, %v5228
    %v5485 = vmul.f32 %v5229, %v5229
    %v5486 = vmul.f32 %v5230, %v5230
    %v5487 = vmul.f32 %v5231, %v5231
    %v5488 = vmul.f32 %v5232, %v5232
    %v5489 = vmul.f32 %v5233, %v5233
    %v5490 = vmul.f32 %v5234, %v5234
    %v5491 = vmul.f32 %v5235, %v5235
    %v5492 = vmul.f32 %v5236, %v5236
    %v5493 = vmul.f32 %v5237, %v5237
    %v5494 = vmul.f32 %v5238, %v5238
    %v5495 = vmul.f32 %v5239, %v5239
    %v5496 = vmul.f32 %v5240, %v5240
    %v5497 = vmul.f32 %v5241, %v5241
    %v5498 = vmul.f32 %v5242, %v5242
    %v5499 = vmul.f32 %v5243, %v5243
    %v5500 = vmul.f32 %v5244, %v5244
    %v5501 = vmul.f32 %v5245, %v5245
    %v5502 = vmul.f32 %v5246, %v5246
    %v5503 = vsel %vm4465, %v5247, 0.0
    %v5504 = vsel %vm4465, %v5248, 0.0
    %v5505 = vadd.f32 %v5503, %v5504
    %v5506 = vsel %vm4465, %v5249, 0.0
    %v5507 = vadd.f32 %v5505, %v5506
    %v5508 = vsel %vm4465, %v5250, 0.0
    %v5509 = vadd.f32 %v5507, %v5508
    %v5510 = vsel %vm4465, %v5251, 0.0
    %v5511 = vadd.f32 %v5509, %v5510
    %v5512 = vsel %vm4465, %v5252, 0.0
    %v5513 = vadd.f32 %v5511, %v5512
    %v5514 = vsel %vm4465, %v5253, 0.0
    %v5515 = vadd.f32 %v5513, %v5514
    %v5516 = vsel %vm4465, %v5254, 0.0
    %v5517 = vadd.f32 %v5515, %v5516
    %v5518 = vsel %vm4465, %v5255, 0.0
    %v5519 = vadd.f32 %v5517, %v5518
    %v5520 = vsel %vm4465, %v5256, 0.0
    %v5521 = vadd.f32 %v5519, %v5520
    %v5522 = vsel %vm4465, %v5257, 0.0
    %v5523 = vadd.f32 %v5521, %v5522
    %v5524 = vsel %vm4465, %v5258, 0.0
    %v5525 = vadd.f32 %v5523, %v5524
    %v5526 = vsel %vm4465, %v5259, 0.0
    %v5527 = vadd.f32 %v5525, %v5526
    %v5528 = vsel %vm4465, %v5260, 0.0
    %v5529 = vadd.f32 %v5527, %v5528
    %v5530 = vsel %vm4465, %v5261, 0.0
    %v5531 = vadd.f32 %v5529, %v5530
    %v5532 = vsel %vm4465, %v5262, 0.0
    %v5533 = vadd.f32 %v5531, %v5532
    %v5534 = vsel %vm4465, %v5263, 0.0
    %v5535 = vadd.f32 %v5533, %v5534
    %v5536 = vsel %vm4465, %v5264, 0.0
    %v5537 = vadd.f32 %v5535, %v5536
    %v5538 = vsel %vm4465, %v5265, 0.0
    %v5539 = vadd.f32 %v5537, %v5538
    %v5540 = vsel %vm4465, %v5266, 0.0
    %v5541 = vadd.f32 %v5539, %v5540
    %v5542 = vsel %vm4465, %v5267, 0.0
    %v5543 = vadd.f32 %v5541, %v5542
    %v5544 = vsel %vm4465, %v5268, 0.0
    %v5545 = vadd.f32 %v5543, %v5544
    %v5546 = vsel %vm4465, %v5269, 0.0
    %v5547 = vadd.f32 %v5545, %v5546
    %v5548 = vsel %vm4465, %v5270, 0.0
    %v5549 = vadd.f32 %v5547, %v5548
    %v5550 = vsel %vm4465, %v5271, 0.0
    %v5551 = vadd.f32 %v5549, %v5550
    %v5552 = vsel %vm4465, %v5272, 0.0
    %v5553 = vadd.f32 %v5551, %v5552
    %v5554 = vsel %vm4465, %v5273, 0.0
    %v5555 = vadd.f32 %v5553, %v5554
    %v5556 = vsel %vm4465, %v5274, 0.0
    %v5557 = vadd.f32 %v5555, %v5556
    %v5558 = vsel %vm4465, %v5275, 0.0
    %v5559 = vadd.f32 %v5557, %v5558
    %v5560 = vsel %vm4465, %v5276, 0.0
    %v5561 = vadd.f32 %v5559, %v5560
    %v5562 = vsel %vm4465, %v5277, 0.0
    %v5563 = vadd.f32 %v5561, %v5562
    %v5564 = vsel %vm4465, %v5278, 0.0
    %v5565 = vadd.f32 %v5563, %v5564
    %v5566 = vsel %vm4465, %v5279, 0.0
    %v5567 = vadd.f32 %v5565, %v5566
    %v5568 = vsel %vm4465, %v5280, 0.0
    %v5569 = vadd.f32 %v5567, %v5568
    %v5570 = vsel %vm4465, %v5281, 0.0
    %v5571 = vadd.f32 %v5569, %v5570
    %v5572 = vsel %vm4465, %v5282, 0.0
    %v5573 = vadd.f32 %v5571, %v5572
    %v5574 = vsel %vm4465, %v5283, 0.0
    %v5575 = vadd.f32 %v5573, %v5574
    %v5576 = vsel %vm4465, %v5284, 0.0
    %v5577 = vadd.f32 %v5575, %v5576
    %v5578 = vsel %vm4465, %v5285, 0.0
    %v5579 = vadd.f32 %v5577, %v5578
    %v5580 = vsel %vm4465, %v5286, 0.0
    %v5581 = vadd.f32 %v5579, %v5580
    %v5582 = vsel %vm4465, %v5287, 0.0
    %v5583 = vadd.f32 %v5581, %v5582
    %v5584 = vsel %vm4465, %v5288, 0.0
    %v5585 = vadd.f32 %v5583, %v5584
    %v5586 = vsel %vm4465, %v5289, 0.0
    %v5587 = vadd.f32 %v5585, %v5586
    %v5588 = vsel %vm4465, %v5290, 0.0
    %v5589 = vadd.f32 %v5587, %v5588
    %v5590 = vsel %vm4465, %v5291, 0.0
    %v5591 = vadd.f32 %v5589, %v5590
    %v5592 = vsel %vm4465, %v5292, 0.0
    %v5593 = vadd.f32 %v5591, %v5592
    %v5594 = vsel %vm4465, %v5293, 0.0
    %v5595 = vadd.f32 %v5593, %v5594
    %v5596 = vsel %vm4465, %v5294, 0.0
    %v5597 = vadd.f32 %v5595, %v5596
    %v5598 = vsel %vm4465, %v5295, 0.0
    %v5599 = vadd.f32 %v5597, %v5598
    %v5600 = vsel %vm4465, %v5296, 0.0
    %v5601 = vadd.f32 %v5599, %v5600
    %v5602 = vsel %vm4465, %v5297, 0.0
    %v5603 = vadd.f32 %v5601, %v5602
    %v5604 = vsel %vm4465, %v5298, 0.0
    %v5605 = vadd.f32 %v5603, %v5604
    %v5606 = vsel %vm4465, %v5299, 0.0
    %v5607 = vadd.f32 %v5605, %v5606
    %v5608 = vsel %vm4465, %v5300, 0.0
    %v5609 = vadd.f32 %v5607, %v5608
    %v5610 = vsel %vm4465, %v5301, 0.0
    %v5611 = vadd.f32 %v5609, %v5610
    %v5612 = vsel %vm4465, %v5302, 0.0
    %v5613 = vadd.f32 %v5611, %v5612
    %v5614 = vsel %vm4465, %v5303, 0.0
    %v5615 = vadd.f32 %v5613, %v5614
    %v5616 = vsel %vm4465, %v5304, 0.0
    %v5617 = vadd.f32 %v5615, %v5616
    %v5618 = vsel %vm4465, %v5305, 0.0
    %v5619 = vadd.f32 %v5617, %v5618
    %v5620 = vsel %vm4465, %v5306, 0.0
    %v5621 = vadd.f32 %v5619, %v5620
    %v5622 = vsel %vm4465, %v5307, 0.0
    %v5623 = vadd.f32 %v5621, %v5622
    %v5624 = vsel %vm4465, %v5308, 0.0
    %v5625 = vadd.f32 %v5623, %v5624
    %v5626 = vsel %vm4465, %v5309, 0.0
    %v5627 = vadd.f32 %v5625, %v5626
    %v5628 = vsel %vm4465, %v5310, 0.0
    %v5629 = vadd.f32 %v5627, %v5628
    %v5630 = vsel %vm4465, %v5311, 0.0
    %v5631 = vadd.f32 %v5629, %v5630
    %v5632 = vsel %vm4465, %v5312, 0.0
    %v5633 = vadd.f32 %v5631, %v5632
    %v5634 = vsel %vm4465, %v5313, 0.0
    %v5635 = vadd.f32 %v5633, %v5634
    %v5636 = vsel %vm4465, %v5314, 0.0
    %v5637 = vadd.f32 %v5635, %v5636
    %v5638 = vsel %vm4465, %v5315, 0.0
    %v5639 = vadd.f32 %v5637, %v5638
    %v5640 = vsel %vm4465, %v5316, 0.0
    %v5641 = vadd.f32 %v5639, %v5640
    %v5642 = vsel %vm4465, %v5317, 0.0
    %v5643 = vadd.f32 %v5641, %v5642
    %v5644 = vsel %vm4465, %v5318, 0.0
    %v5645 = vadd.f32 %v5643, %v5644
    %v5646 = vsel %vm4465, %v5319, 0.0
    %v5647 = vadd.f32 %v5645, %v5646
    %v5648 = vsel %vm4465, %v5320, 0.0
    %v5649 = vadd.f32 %v5647, %v5648
    %v5650 = vsel %vm4465, %v5321, 0.0
    %v5651 = vadd.f32 %v5649, %v5650
    %v5652 = vsel %vm4465, %v5322, 0.0
    %v5653 = vadd.f32 %v5651, %v5652
    %v5654 = vsel %vm4465, %v5323, 0.0
    %v5655 = vadd.f32 %v5653, %v5654
    %v5656 = vsel %vm4465, %v5324, 0.0
    %v5657 = vadd.f32 %v5655, %v5656
    %v5658 = vsel %vm4465, %v5325, 0.0
    %v5659 = vadd.f32 %v5657, %v5658
    %v5660 = vsel %vm4465, %v5326, 0.0
    %v5661 = vadd.f32 %v5659, %v5660
    %v5662 = vsel %vm4465, %v5327, 0.0
    %v5663 = vadd.f32 %v5661, %v5662
    %v5664 = vsel %vm4465, %v5328, 0.0
    %v5665 = vadd.f32 %v5663, %v5664
    %v5666 = vsel %vm4465, %v5329, 0.0
    %v5667 = vadd.f32 %v5665, %v5666
    %v5668 = vsel %vm4465, %v5330, 0.0
    %v5669 = vadd.f32 %v5667, %v5668
    %v5670 = vsel %vm4465, %v5331, 0.0
    %v5671 = vadd.f32 %v5669, %v5670
    %v5672 = vsel %vm4465, %v5332, 0.0
    %v5673 = vadd.f32 %v5671, %v5672
    %v5674 = vsel %vm4465, %v5333, 0.0
    %v5675 = vadd.f32 %v5673, %v5674
    %v5676 = vsel %vm4465, %v5334, 0.0
    %v5677 = vadd.f32 %v5675, %v5676
    %v5678 = vsel %vm4465, %v5335, 0.0
    %v5679 = vadd.f32 %v5677, %v5678
    %v5680 = vsel %vm4465, %v5336, 0.0
    %v5681 = vadd.f32 %v5679, %v5680
    %v5682 = vsel %vm4465, %v5337, 0.0
    %v5683 = vadd.f32 %v5681, %v5682
    %v5684 = vsel %vm4465, %v5338, 0.0
    %v5685 = vadd.f32 %v5683, %v5684
    %v5686 = vsel %vm4465, %v5339, 0.0
    %v5687 = vadd.f32 %v5685, %v5686
    %v5688 = vsel %vm4465, %v5340, 0.0
    %v5689 = vadd.f32 %v5687, %v5688
    %v5690 = vsel %vm4465, %v5341, 0.0
    %v5691 = vadd.f32 %v5689, %v5690
    %v5692 = vsel %vm4465, %v5342, 0.0
    %v5693 = vadd.f32 %v5691, %v5692
    %v5694 = vsel %vm4465, %v5343, 0.0
    %v5695 = vadd.f32 %v5693, %v5694
    %v5696 = vsel %vm4465, %v5344, 0.0
    %v5697 = vadd.f32 %v5695, %v5696
    %v5698 = vsel %vm4465, %v5345, 0.0
    %v5699 = vadd.f32 %v5697, %v5698
    %v5700 = vsel %vm4465, %v5346, 0.0
    %v5701 = vadd.f32 %v5699, %v5700
    %v5702 = vsel %vm4465, %v5347, 0.0
    %v5703 = vadd.f32 %v5701, %v5702
    %v5704 = vsel %vm4465, %v5348, 0.0
    %v5705 = vadd.f32 %v5703, %v5704
    %v5706 = vsel %vm4465, %v5349, 0.0
    %v5707 = vadd.f32 %v5705, %v5706
    %v5708 = vsel %vm4465, %v5350, 0.0
    %v5709 = vadd.f32 %v5707, %v5708
    %v5710 = vsel %vm4465, %v5351, 0.0
    %v5711 = vadd.f32 %v5709, %v5710
    %v5712 = vsel %vm4465, %v5352, 0.0
    %v5713 = vadd.f32 %v5711, %v5712
    %v5714 = vsel %vm4465, %v5353, 0.0
    %v5715 = vadd.f32 %v5713, %v5714
    %v5716 = vsel %vm4465, %v5354, 0.0
    %v5717 = vadd.f32 %v5715, %v5716
    %v5718 = vsel %vm4465, %v5355, 0.0
    %v5719 = vadd.f32 %v5717, %v5718
    %v5720 = vsel %vm4465, %v5356, 0.0
    %v5721 = vadd.f32 %v5719, %v5720
    %v5722 = vsel %vm4465, %v5357, 0.0
    %v5723 = vadd.f32 %v5721, %v5722
    %v5724 = vsel %vm4465, %v5358, 0.0
    %v5725 = vadd.f32 %v5723, %v5724
    %v5726 = vsel %vm4465, %v5359, 0.0
    %v5727 = vadd.f32 %v5725, %v5726
    %v5728 = vsel %vm4465, %v5360, 0.0
    %v5729 = vadd.f32 %v5727, %v5728
    %v5730 = vsel %vm4465, %v5361, 0.0
    %v5731 = vadd.f32 %v5729, %v5730
    %v5732 = vsel %vm4465, %v5362, 0.0
    %v5733 = vadd.f32 %v5731, %v5732
    %v5734 = vsel %vm4465, %v5363, 0.0
    %v5735 = vadd.f32 %v5733, %v5734
    %v5736 = vsel %vm4465, %v5364, 0.0
    %v5737 = vadd.f32 %v5735, %v5736
    %v5738 = vsel %vm4465, %v5365, 0.0
    %v5739 = vadd.f32 %v5737, %v5738
    %v5740 = vsel %vm4465, %v5366, 0.0
    %v5741 = vadd.f32 %v5739, %v5740
    %v5742 = vsel %vm4465, %v5367, 0.0
    %v5743 = vadd.f32 %v5741, %v5742
    %v5744 = vsel %vm4465, %v5368, 0.0
    %v5745 = vadd.f32 %v5743, %v5744
    %v5746 = vsel %vm4465, %v5369, 0.0
    %v5747 = vadd.f32 %v5745, %v5746
    %v5748 = vsel %vm4465, %v5370, 0.0
    %v5749 = vadd.f32 %v5747, %v5748
    %v5750 = vsel %vm4465, %v5371, 0.0
    %v5751 = vadd.f32 %v5749, %v5750
    %v5752 = vsel %vm4465, %v5372, 0.0
    %v5753 = vadd.f32 %v5751, %v5752
    %v5754 = vsel %vm4465, %v5373, 0.0
    %v5755 = vadd.f32 %v5753, %v5754
    %v5756 = vsel %vm4465, %v5374, 0.0
    %v5757 = vadd.f32 %v5755, %v5756
    %v5758 = vsel %vm4465, %v5375, 0.0
    %v5759 = vadd.f32 %v5757, %v5758
    %v5760 = vsel %vm4465, %v5376, 0.0
    %v5761 = vadd.f32 %v5759, %v5760
    %v5762 = vsel %vm4465, %v5377, 0.0
    %v5763 = vadd.f32 %v5761, %v5762
    %v5764 = vsel %vm4465, %v5378, 0.0
    %v5765 = vadd.f32 %v5763, %v5764
    %v5766 = vsel %vm4465, %v5379, 0.0
    %v5767 = vadd.f32 %v5765, %v5766
    %v5768 = vsel %vm4465, %v5380, 0.0
    %v5769 = vadd.f32 %v5767, %v5768
    %v5770 = vsel %vm4465, %v5381, 0.0
    %v5771 = vadd.f32 %v5769, %v5770
    %v5772 = vsel %vm4465, %v5382, 0.0
    %v5773 = vadd.f32 %v5771, %v5772
    %v5774 = vsel %vm4465, %v5383, 0.0
    %v5775 = vadd.f32 %v5773, %v5774
    %v5776 = vsel %vm4465, %v5384, 0.0
    %v5777 = vadd.f32 %v5775, %v5776
    %v5778 = vsel %vm4465, %v5385, 0.0
    %v5779 = vadd.f32 %v5777, %v5778
    %v5780 = vsel %vm4465, %v5386, 0.0
    %v5781 = vadd.f32 %v5779, %v5780
    %v5782 = vsel %vm4465, %v5387, 0.0
    %v5783 = vadd.f32 %v5781, %v5782
    %v5784 = vsel %vm4465, %v5388, 0.0
    %v5785 = vadd.f32 %v5783, %v5784
    %v5786 = vsel %vm4465, %v5389, 0.0
    %v5787 = vadd.f32 %v5785, %v5786
    %v5788 = vsel %vm4465, %v5390, 0.0
    %v5789 = vadd.f32 %v5787, %v5788
    %v5790 = vsel %vm4465, %v5391, 0.0
    %v5791 = vadd.f32 %v5789, %v5790
    %v5792 = vsel %vm4465, %v5392, 0.0
    %v5793 = vadd.f32 %v5791, %v5792
    %v5794 = vsel %vm4465, %v5393, 0.0
    %v5795 = vadd.f32 %v5793, %v5794
    %v5796 = vsel %vm4465, %v5394, 0.0
    %v5797 = vadd.f32 %v5795, %v5796
    %v5798 = vsel %vm4465, %v5395, 0.0
    %v5799 = vadd.f32 %v5797, %v5798
    %v5800 = vsel %vm4465, %v5396, 0.0
    %v5801 = vadd.f32 %v5799, %v5800
    %v5802 = vsel %vm4465, %v5397, 0.0
    %v5803 = vadd.f32 %v5801, %v5802
    %v5804 = vsel %vm4465, %v5398, 0.0
    %v5805 = vadd.f32 %v5803, %v5804
    %v5806 = vsel %vm4465, %v5399, 0.0
    %v5807 = vadd.f32 %v5805, %v5806
    %v5808 = vsel %vm4465, %v5400, 0.0
    %v5809 = vadd.f32 %v5807, %v5808
    %v5810 = vsel %vm4465, %v5401, 0.0
    %v5811 = vadd.f32 %v5809, %v5810
    %v5812 = vsel %vm4465, %v5402, 0.0
    %v5813 = vadd.f32 %v5811, %v5812
    %v5814 = vsel %vm4465, %v5403, 0.0
    %v5815 = vadd.f32 %v5813, %v5814
    %v5816 = vsel %vm4465, %v5404, 0.0
    %v5817 = vadd.f32 %v5815, %v5816
    %v5818 = vsel %vm4465, %v5405, 0.0
    %v5819 = vadd.f32 %v5817, %v5818
    %v5820 = vsel %vm4465, %v5406, 0.0
    %v5821 = vadd.f32 %v5819, %v5820
    %v5822 = vsel %vm4465, %v5407, 0.0
    %v5823 = vadd.f32 %v5821, %v5822
    %v5824 = vsel %vm4465, %v5408, 0.0
    %v5825 = vadd.f32 %v5823, %v5824
    %v5826 = vsel %vm4465, %v5409, 0.0
    %v5827 = vadd.f32 %v5825, %v5826
    %v5828 = vsel %vm4465, %v5410, 0.0
    %v5829 = vadd.f32 %v5827, %v5828
    %v5830 = vsel %vm4465, %v5411, 0.0
    %v5831 = vadd.f32 %v5829, %v5830
    %v5832 = vsel %vm4465, %v5412, 0.0
    %v5833 = vadd.f32 %v5831, %v5832
    %v5834 = vsel %vm4465, %v5413, 0.0
    %v5835 = vadd.f32 %v5833, %v5834
    %v5836 = vsel %vm4465, %v5414, 0.0
    %v5837 = vadd.f32 %v5835, %v5836
    %v5838 = vsel %vm4465, %v5415, 0.0
    %v5839 = vadd.f32 %v5837, %v5838
    %v5840 = vsel %vm4465, %v5416, 0.0
    %v5841 = vadd.f32 %v5839, %v5840
    %v5842 = vsel %vm4465, %v5417, 0.0
    %v5843 = vadd.f32 %v5841, %v5842
    %v5844 = vsel %vm4465, %v5418, 0.0
    %v5845 = vadd.f32 %v5843, %v5844
    %v5846 = vsel %vm4465, %v5419, 0.0
    %v5847 = vadd.f32 %v5845, %v5846
    %v5848 = vsel %vm4465, %v5420, 0.0
    %v5849 = vadd.f32 %v5847, %v5848
    %v5850 = vsel %vm4465, %v5421, 0.0
    %v5851 = vadd.f32 %v5849, %v5850
    %v5852 = vsel %vm4465, %v5422, 0.0
    %v5853 = vadd.f32 %v5851, %v5852
    %v5854 = vsel %vm4465, %v5423, 0.0
    %v5855 = vadd.f32 %v5853, %v5854
    %v5856 = vsel %vm4465, %v5424, 0.0
    %v5857 = vadd.f32 %v5855, %v5856
    %v5858 = vsel %vm4465, %v5425, 0.0
    %v5859 = vadd.f32 %v5857, %v5858
    %v5860 = vsel %vm4465, %v5426, 0.0
    %v5861 = vadd.f32 %v5859, %v5860
    %v5862 = vsel %vm4465, %v5427, 0.0
    %v5863 = vadd.f32 %v5861, %v5862
    %v5864 = vsel %vm4465, %v5428, 0.0
    %v5865 = vadd.f32 %v5863, %v5864
    %v5866 = vsel %vm4465, %v5429, 0.0
    %v5867 = vadd.f32 %v5865, %v5866
    %v5868 = vsel %vm4465, %v5430, 0.0
    %v5869 = vadd.f32 %v5867, %v5868
    %v5870 = vsel %vm4465, %v5431, 0.0
    %v5871 = vadd.f32 %v5869, %v5870
    %v5872 = vsel %vm4465, %v5432, 0.0
    %v5873 = vadd.f32 %v5871, %v5872
    %v5874 = vsel %vm4465, %v5433, 0.0
    %v5875 = vadd.f32 %v5873, %v5874
    %v5876 = vsel %vm4465, %v5434, 0.0
    %v5877 = vadd.f32 %v5875, %v5876
    %v5878 = vsel %vm4465, %v5435, 0.0
    %v5879 = vadd.f32 %v5877, %v5878
    %v5880 = vsel %vm4465, %v5436, 0.0
    %v5881 = vadd.f32 %v5879, %v5880
    %v5882 = vsel %vm4465, %v5437, 0.0
    %v5883 = vadd.f32 %v5881, %v5882
    %v5884 = vsel %vm4465, %v5438, 0.0
    %v5885 = vadd.f32 %v5883, %v5884
    %v5886 = vsel %vm4465, %v5439, 0.0
    %v5887 = vadd.f32 %v5885, %v5886
    %v5888 = vsel %vm4465, %v5440, 0.0
    %v5889 = vadd.f32 %v5887, %v5888
    %v5890 = vsel %vm4465, %v5441, 0.0
    %v5891 = vadd.f32 %v5889, %v5890
    %v5892 = vsel %vm4465, %v5442, 0.0
    %v5893 = vadd.f32 %v5891, %v5892
    %v5894 = vsel %vm4465, %v5443, 0.0
    %v5895 = vadd.f32 %v5893, %v5894
    %v5896 = vsel %vm4465, %v5444, 0.0
    %v5897 = vadd.f32 %v5895, %v5896
    %v5898 = vsel %vm4465, %v5445, 0.0
    %v5899 = vadd.f32 %v5897, %v5898
    %v5900 = vsel %vm4465, %v5446, 0.0
    %v5901 = vadd.f32 %v5899, %v5900
    %v5902 = vsel %vm4465, %v5447, 0.0
    %v5903 = vadd.f32 %v5901, %v5902
    %v5904 = vsel %vm4465, %v5448, 0.0
    %v5905 = vadd.f32 %v5903, %v5904
    %v5906 = vsel %vm4465, %v5449, 0.0
    %v5907 = vadd.f32 %v5905, %v5906
    %v5908 = vsel %vm4465, %v5450, 0.0
    %v5909 = vadd.f32 %v5907, %v5908
    %v5910 = vsel %vm4465, %v5451, 0.0
    %v5911 = vadd.f32 %v5909, %v5910
    %v5912 = vsel %vm4465, %v5452, 0.0
    %v5913 = vadd.f32 %v5911, %v5912
    %v5914 = vsel %vm4465, %v5453, 0.0
    %v5915 = vadd.f32 %v5913, %v5914
    %v5916 = vsel %vm4465, %v5454, 0.0
    %v5917 = vadd.f32 %v5915, %v5916
    %v5918 = vsel %vm4465, %v5455, 0.0
    %v5919 = vadd.f32 %v5917, %v5918
    %v5920 = vsel %vm4465, %v5456, 0.0
    %v5921 = vadd.f32 %v5919, %v5920
    %v5922 = vsel %vm4465, %v5457, 0.0
    %v5923 = vadd.f32 %v5921, %v5922
    %v5924 = vsel %vm4465, %v5458, 0.0
    %v5925 = vadd.f32 %v5923, %v5924
    %v5926 = vsel %vm4465, %v5459, 0.0
    %v5927 = vadd.f32 %v5925, %v5926
    %v5928 = vsel %vm4465, %v5460, 0.0
    %v5929 = vadd.f32 %v5927, %v5928
    %v5930 = vsel %vm4465, %v5461, 0.0
    %v5931 = vadd.f32 %v5929, %v5930
    %v5932 = vsel %vm4465, %v5462, 0.0
    %v5933 = vadd.f32 %v5931, %v5932
    %v5934 = vsel %vm4465, %v5463, 0.0
    %v5935 = vadd.f32 %v5933, %v5934
    %v5936 = vsel %vm4465, %v5464, 0.0
    %v5937 = vadd.f32 %v5935, %v5936
    %v5938 = vsel %vm4465, %v5465, 0.0
    %v5939 = vadd.f32 %v5937, %v5938
    %v5940 = vsel %vm4465, %v5466, 0.0
    %v5941 = vadd.f32 %v5939, %v5940
    %v5942 = vsel %vm4465, %v5467, 0.0
    %v5943 = vadd.f32 %v5941, %v5942
    %v5944 = vsel %vm4465, %v5468, 0.0
    %v5945 = vadd.f32 %v5943, %v5944
    %v5946 = vsel %vm4465, %v5469, 0.0
    %v5947 = vadd.f32 %v5945, %v5946
    %v5948 = vsel %vm4465, %v5470, 0.0
    %v5949 = vadd.f32 %v5947, %v5948
    %v5950 = vsel %vm4465, %v5471, 0.0
    %v5951 = vadd.f32 %v5949, %v5950
    %v5952 = vsel %vm4465, %v5472, 0.0
    %v5953 = vadd.f32 %v5951, %v5952
    %v5954 = vsel %vm4465, %v5473, 0.0
    %v5955 = vadd.f32 %v5953, %v5954
    %v5956 = vsel %vm4465, %v5474, 0.0
    %v5957 = vadd.f32 %v5955, %v5956
    %v5958 = vsel %vm4465, %v5475, 0.0
    %v5959 = vadd.f32 %v5957, %v5958
    %v5960 = vsel %vm4465, %v5476, 0.0
    %v5961 = vadd.f32 %v5959, %v5960
    %v5962 = vsel %vm4465, %v5477, 0.0
    %v5963 = vadd.f32 %v5961, %v5962
    %v5964 = vsel %vm4465, %v5478, 0.0
    %v5965 = vadd.f32 %v5963, %v5964
    %v5966 = vsel %vm4465, %v5479, 0.0
    %v5967 = vadd.f32 %v5965, %v5966
    %v5968 = vsel %vm4465, %v5480, 0.0
    %v5969 = vadd.f32 %v5967, %v5968
    %v5970 = vsel %vm4465, %v5481, 0.0
    %v5971 = vadd.f32 %v5969, %v5970
    %v5972 = vsel %vm4465, %v5482, 0.0
    %v5973 = vadd.f32 %v5971, %v5972
    %v5974 = vsel %vm4465, %v5483, 0.0
    %v5975 = vadd.f32 %v5973, %v5974
    %v5976 = vsel %vm4465, %v5484, 0.0
    %v5977 = vadd.f32 %v5975, %v5976
    %v5978 = vsel %vm4465, %v5485, 0.0
    %v5979 = vadd.f32 %v5977, %v5978
    %v5980 = vsel %vm4465, %v5486, 0.0
    %v5981 = vadd.f32 %v5979, %v5980
    %v5982 = vsel %vm4465, %v5487, 0.0
    %v5983 = vadd.f32 %v5981, %v5982
    %v5984 = vsel %vm4465, %v5488, 0.0
    %v5985 = vadd.f32 %v5983, %v5984
    %v5986 = vsel %vm4465, %v5489, 0.0
    %v5987 = vadd.f32 %v5985, %v5986
    %v5988 = vsel %vm4465, %v5490, 0.0
    %v5989 = vadd.f32 %v5987, %v5988
    %v5990 = vsel %vm4465, %v5491, 0.0
    %v5991 = vadd.f32 %v5989, %v5990
    %v5992 = vsel %vm4465, %v5492, 0.0
    %v5993 = vadd.f32 %v5991, %v5992
    %v5994 = vsel %vm4465, %v5493, 0.0
    %v5995 = vadd.f32 %v5993, %v5994
    %v5996 = vsel %vm4465, %v5494, 0.0
    %v5997 = vadd.f32 %v5995, %v5996
    %v5998 = vsel %vm4465, %v5495, 0.0
    %v5999 = vadd.f32 %v5997, %v5998
    %v6000 = vsel %vm4465, %v5496, 0.0
    %v6001 = vadd.f32 %v5999, %v6000
    %v6002 = vsel %vm4465, %v5497, 0.0
    %v6003 = vadd.f32 %v6001, %v6002
    %v6004 = vsel %vm4465, %v5498, 0.0
    %v6005 = vadd.f32 %v6003, %v6004
    %v6006 = vsel %vm4465, %v5499, 0.0
    %v6007 = vadd.f32 %v6005, %v6006
    %v6008 = vsel %vm4465, %v5500, 0.0
    %v6009 = vadd.f32 %v6007, %v6008
    %v6010 = vsel %vm4465, %v5501, 0.0
    %v6011 = vadd.f32 %v6009, %v6010
    %v6012 = vsel %vm4465, %v5502, 0.0
    %v6013 = vadd.f32 %v6011, %v6012
    %v6014 = vrot.slane %v6013, 4
    %v6015 = vadd.f32 %v6013, %v6014
    %v6016 = vrot.slane %v6015, 2
    %v6017 = vadd.f32 %v6015, %v6016
    %v6018 = vrot.slane %v6017, 1
    %v6019 = vadd.f32 %v6017, %v6018
    %v6020 = vmul.f32 %v6019, %v4989
    %v6021 = vadd.f32 %v6020, 1e-05
    %v6022 = vrsqrt.pop %v6021
    %v6023 = vmul.f32 %v6022, %v6021
    %v6024 = vmul.f32 %v6023, %v6022
    %v6025 = vmul.f32 0.5, %v6024
    %v6026 = vsub.f32 1.5, %v6025
    %v6027 = vmul.f32 %v6022, %v6026
    %vm6028 = vweird.f32 %v6021
    %vm6029 = vweird.f32 %v6022
    %vm6030 = vmor %vm6028, %vm6029
    %v6031 = vsel %vm6030, %v6022, %v6027
    %v6032 = vmul.f32 %v3143, %v6031
    %v6033 = vmul.f32 %v4990, %v6032
    %v6034 = vsub.f32 %v3144, %v6033
    %v6035 = vperm.slane %v6032, 0
    %v6036 = vmul.f32 %v4209, %v6035
    %v6037 = vmul.f32 %v4210, %v6035
    %v6038 = vmul.f32 %v4211, %v6035
    %v6039 = vmul.f32 %v4212, %v6035
    %v6040 = vmul.f32 %v4213, %v6035
    %v6041 = vmul.f32 %v4214, %v6035
    %v6042 = vmul.f32 %v4215, %v6035
    %v6043 = vmul.f32 %v4216, %v6035
    %v6044 = vmul.f32 %v4217, %v6035
    %v6045 = vmul.f32 %v4218, %v6035
    %v6046 = vmul.f32 %v4219, %v6035
    %v6047 = vmul.f32 %v4220, %v6035
    %v6048 = vmul.f32 %v4221, %v6035
    %v6049 = vmul.f32 %v4222, %v6035
    %v6050 = vmul.f32 %v4223, %v6035
    %v6051 = vmul.f32 %v4224, %v6035
    %v6052 = vmul.f32 %v4225, %v6035
    %v6053 = vmul.f32 %v4226, %v6035
    %v6054 = vmul.f32 %v4227, %v6035
    %v6055 = vmul.f32 %v4228, %v6035
    %v6056 = vmul.f32 %v4229, %v6035
    %v6057 = vmul.f32 %v4230, %v6035
    %v6058 = vmul.f32 %v4231, %v6035
    %v6059 = vmul.f32 %v4232, %v6035
    %v6060 = vmul.f32 %v4233, %v6035
    %v6061 = vmul.f32 %v4234, %v6035
    %v6062 = vmul.f32 %v4235, %v6035
    %v6063 = vmul.f32 %v4236, %v6035
    %v6064 = vmul.f32 %v4237, %v6035
    %v6065 = vmul.f32 %v4238, %v6035
    %v6066 = vmul.f32 %v4239, %v6035
    %v6067 = vmul.f32 %v4240, %v6035
    %v6068 = vmul.f32 %v4241, %v6035
    %v6069 = vmul.f32 %v4242, %v6035
    %v6070 = vmul.f32 %v4243, %v6035
    %v6071 = vmul.f32 %v4244, %v6035
    %v6072 = vmul.f32 %v4245, %v6035
    %v6073 = vmul.f32 %v4246, %v6035
    %v6074 = vmul.f32 %v4247, %v6035
    %v6075 = vmul.f32 %v4248, %v6035
    %v6076 = vmul.f32 %v4249, %v6035
    %v6077 = vmul.f32 %v4250, %v6035
    %v6078 = vmul.f32 %v4251, %v6035
    %v6079 = vmul.f32 %v4252, %v6035
    %v6080 = vmul.f32 %v4253, %v6035
    %v6081 = vmul.f32 %v4254, %v6035
    %v6082 = vmul.f32 %v4255, %v6035
    %v6083 = vmul.f32 %v4256, %v6035
    %v6084 = vmul.f32 %v4257, %v6035
    %v6085 = vmul.f32 %v4258, %v6035
    %v6086 = vmul.f32 %v4259, %v6035
    %v6087 = vmul.f32 %v4260, %v6035
    %v6088 = vmul.f32 %v4261, %v6035
    %v6089 = vmul.f32 %v4262, %v6035
    %v6090 = vmul.f32 %v4263, %v6035
    %v6091 = vmul.f32 %v4264, %v6035
    %v6092 = vmul.f32 %v4265, %v6035
    %v6093 = vmul.f32 %v4266, %v6035
    %v6094 = vmul.f32 %v4267, %v6035
    %v6095 = vmul.f32 %v4268, %v6035
    %v6096 = vmul.f32 %v4269, %v6035
    %v6097 = vmul.f32 %v4270, %v6035
    %v6098 = vmul.f32 %v4271, %v6035
    %v6099 = vmul.f32 %v4272, %v6035
    %v6100 = vmul.f32 %v4273, %v6035
    %v6101 = vmul.f32 %v4274, %v6035
    %v6102 = vmul.f32 %v4275, %v6035
    %v6103 = vmul.f32 %v4276, %v6035
    %v6104 = vmul.f32 %v4277, %v6035
    %v6105 = vmul.f32 %v4278, %v6035
    %v6106 = vmul.f32 %v4279, %v6035
    %v6107 = vmul.f32 %v4280, %v6035
    %v6108 = vmul.f32 %v4281, %v6035
    %v6109 = vmul.f32 %v4282, %v6035
    %v6110 = vmul.f32 %v4283, %v6035
    %v6111 = vmul.f32 %v4284, %v6035
    %v6112 = vmul.f32 %v4285, %v6035
    %v6113 = vmul.f32 %v4286, %v6035
    %v6114 = vmul.f32 %v4287, %v6035
    %v6115 = vmul.f32 %v4288, %v6035
    %v6116 = vmul.f32 %v4289, %v6035
    %v6117 = vmul.f32 %v4290, %v6035
    %v6118 = vmul.f32 %v4291, %v6035
    %v6119 = vmul.f32 %v4292, %v6035
    %v6120 = vmul.f32 %v4293, %v6035
    %v6121 = vmul.f32 %v4294, %v6035
    %v6122 = vmul.f32 %v4295, %v6035
    %v6123 = vmul.f32 %v4296, %v6035
    %v6124 = vmul.f32 %v4297, %v6035
    %v6125 = vmul.f32 %v4298, %v6035
    %v6126 = vmul.f32 %v4299, %v6035
    %v6127 = vmul.f32 %v4300, %v6035
    %v6128 = vmul.f32 %v4301, %v6035
    %v6129 = vmul.f32 %v4302, %v6035
    %v6130 = vmul.f32 %v4303, %v6035
    %v6131 = vmul.f32 %v4304, %v6035
    %v6132 = vmul.f32 %v4305, %v6035
    %v6133 = vmul.f32 %v4306, %v6035
    %v6134 = vmul.f32 %v4307, %v6035
    %v6135 = vmul.f32 %v4308, %v6035
    %v6136 = vmul.f32 %v4309, %v6035
    %v6137 = vmul.f32 %v4310, %v6035
    %v6138 = vmul.f32 %v4311, %v6035
    %v6139 = vmul.f32 %v4312, %v6035
    %v6140 = vmul.f32 %v4313, %v6035
    %v6141 = vmul.f32 %v4314, %v6035
    %v6142 = vmul.f32 %v4315, %v6035
    %v6143 = vmul.f32 %v4316, %v6035
    %v6144 = vmul.f32 %v4317, %v6035
    %v6145 = vmul.f32 %v4318, %v6035
    %v6146 = vmul.f32 %v4319, %v6035
    %v6147 = vmul.f32 %v4320, %v6035
    %v6148 = vmul.f32 %v4321, %v6035
    %v6149 = vmul.f32 %v4322, %v6035
    %v6150 = vmul.f32 %v4323, %v6035
    %v6151 = vmul.f32 %v4324, %v6035
    %v6152 = vmul.f32 %v4325, %v6035
    %v6153 = vmul.f32 %v4326, %v6035
    %v6154 = vmul.f32 %v4327, %v6035
    %v6155 = vmul.f32 %v4328, %v6035
    %v6156 = vmul.f32 %v4329, %v6035
    %v6157 = vmul.f32 %v4330, %v6035
    %v6158 = vmul.f32 %v4331, %v6035
    %v6159 = vmul.f32 %v4332, %v6035
    %v6160 = vmul.f32 %v4333, %v6035
    %v6161 = vmul.f32 %v4334, %v6035
    %v6162 = vmul.f32 %v4335, %v6035
    %v6163 = vmul.f32 %v4336, %v6035
    %v6164 = vmul.f32 %v4337, %v6035
    %v6165 = vmul.f32 %v4338, %v6035
    %v6166 = vmul.f32 %v4339, %v6035
    %v6167 = vmul.f32 %v4340, %v6035
    %v6168 = vmul.f32 %v4341, %v6035
    %v6169 = vmul.f32 %v4342, %v6035
    %v6170 = vmul.f32 %v4343, %v6035
    %v6171 = vmul.f32 %v4344, %v6035
    %v6172 = vmul.f32 %v4345, %v6035
    %v6173 = vmul.f32 %v4346, %v6035
    %v6174 = vmul.f32 %v4347, %v6035
    %v6175 = vmul.f32 %v4348, %v6035
    %v6176 = vmul.f32 %v4349, %v6035
    %v6177 = vmul.f32 %v4350, %v6035
    %v6178 = vmul.f32 %v4351, %v6035
    %v6179 = vmul.f32 %v4352, %v6035
    %v6180 = vmul.f32 %v4353, %v6035
    %v6181 = vmul.f32 %v4354, %v6035
    %v6182 = vmul.f32 %v4355, %v6035
    %v6183 = vmul.f32 %v4356, %v6035
    %v6184 = vmul.f32 %v4357, %v6035
    %v6185 = vmul.f32 %v4358, %v6035
    %v6186 = vmul.f32 %v4359, %v6035
    %v6187 = vmul.f32 %v4360, %v6035
    %v6188 = vmul.f32 %v4361, %v6035
    %v6189 = vmul.f32 %v4362, %v6035
    %v6190 = vmul.f32 %v4363, %v6035
    %v6191 = vmul.f32 %v4364, %v6035
    %v6192 = vmul.f32 %v4365, %v6035
    %v6193 = vmul.f32 %v4366, %v6035
    %v6194 = vmul.f32 %v4367, %v6035
    %v6195 = vmul.f32 %v4368, %v6035
    %v6196 = vmul.f32 %v4369, %v6035
    %v6197 = vmul.f32 %v4370, %v6035
    %v6198 = vmul.f32 %v4371, %v6035
    %v6199 = vmul.f32 %v4372, %v6035
    %v6200 = vmul.f32 %v4373, %v6035
    %v6201 = vmul.f32 %v4374, %v6035
    %v6202 = vmul.f32 %v4375, %v6035
    %v6203 = vmul.f32 %v4376, %v6035
    %v6204 = vmul.f32 %v4377, %v6035
    %v6205 = vmul.f32 %v4378, %v6035
    %v6206 = vmul.f32 %v4379, %v6035
    %v6207 = vmul.f32 %v4380, %v6035
    %v6208 = vmul.f32 %v4381, %v6035
    %v6209 = vmul.f32 %v4382, %v6035
    %v6210 = vmul.f32 %v4383, %v6035
    %v6211 = vmul.f32 %v4384, %v6035
    %v6212 = vmul.f32 %v4385, %v6035
    %v6213 = vmul.f32 %v4386, %v6035
    %v6214 = vmul.f32 %v4387, %v6035
    %v6215 = vmul.f32 %v4388, %v6035
    %v6216 = vmul.f32 %v4389, %v6035
    %v6217 = vmul.f32 %v4390, %v6035
    %v6218 = vmul.f32 %v4391, %v6035
    %v6219 = vmul.f32 %v4392, %v6035
    %v6220 = vmul.f32 %v4393, %v6035
    %v6221 = vmul.f32 %v4394, %v6035
    %v6222 = vmul.f32 %v4395, %v6035
    %v6223 = vmul.f32 %v4396, %v6035
    %v6224 = vmul.f32 %v4397, %v6035
    %v6225 = vmul.f32 %v4398, %v6035
    %v6226 = vmul.f32 %v4399, %v6035
    %v6227 = vmul.f32 %v4400, %v6035
    %v6228 = vmul.f32 %v4401, %v6035
    %v6229 = vmul.f32 %v4402, %v6035
    %v6230 = vmul.f32 %v4403, %v6035
    %v6231 = vmul.f32 %v4404, %v6035
    %v6232 = vmul.f32 %v4405, %v6035
    %v6233 = vmul.f32 %v4406, %v6035
    %v6234 = vmul.f32 %v4407, %v6035
    %v6235 = vmul.f32 %v4408, %v6035
    %v6236 = vmul.f32 %v4409, %v6035
    %v6237 = vmul.f32 %v4410, %v6035
    %v6238 = vmul.f32 %v4411, %v6035
    %v6239 = vmul.f32 %v4412, %v6035
    %v6240 = vmul.f32 %v4413, %v6035
    %v6241 = vmul.f32 %v4414, %v6035
    %v6242 = vmul.f32 %v4415, %v6035
    %v6243 = vmul.f32 %v4416, %v6035
    %v6244 = vmul.f32 %v4417, %v6035
    %v6245 = vmul.f32 %v4418, %v6035
    %v6246 = vmul.f32 %v4419, %v6035
    %v6247 = vmul.f32 %v4420, %v6035
    %v6248 = vmul.f32 %v4421, %v6035
    %v6249 = vmul.f32 %v4422, %v6035
    %v6250 = vmul.f32 %v4423, %v6035
    %v6251 = vmul.f32 %v4424, %v6035
    %v6252 = vmul.f32 %v4425, %v6035
    %v6253 = vmul.f32 %v4426, %v6035
    %v6254 = vmul.f32 %v4427, %v6035
    %v6255 = vmul.f32 %v4428, %v6035
    %v6256 = vmul.f32 %v4429, %v6035
    %v6257 = vmul.f32 %v4430, %v6035
    %v6258 = vmul.f32 %v4431, %v6035
    %v6259 = vmul.f32 %v4432, %v6035
    %v6260 = vmul.f32 %v4433, %v6035
    %v6261 = vmul.f32 %v4434, %v6035
    %v6262 = vmul.f32 %v4435, %v6035
    %v6263 = vmul.f32 %v4436, %v6035
    %v6264 = vmul.f32 %v4437, %v6035
    %v6265 = vmul.f32 %v4438, %v6035
    %v6266 = vmul.f32 %v4439, %v6035
    %v6267 = vmul.f32 %v4440, %v6035
    %v6268 = vmul.f32 %v4441, %v6035
    %v6269 = vmul.f32 %v4442, %v6035
    %v6270 = vmul.f32 %v4443, %v6035
    %v6271 = vmul.f32 %v4444, %v6035
    %v6272 = vmul.f32 %v4445, %v6035
    %v6273 = vmul.f32 %v4446, %v6035
    %v6274 = vmul.f32 %v4447, %v6035
    %v6275 = vmul.f32 %v4448, %v6035
    %v6276 = vmul.f32 %v4449, %v6035
    %v6277 = vmul.f32 %v4450, %v6035
    %v6278 = vmul.f32 %v4451, %v6035
    %v6279 = vmul.f32 %v4452, %v6035
    %v6280 = vmul.f32 %v4453, %v6035
    %v6281 = vmul.f32 %v4454, %v6035
    %v6282 = vmul.f32 %v4455, %v6035
    %v6283 = vmul.f32 %v4456, %v6035
    %v6284 = vmul.f32 %v4457, %v6035
    %v6285 = vmul.f32 %v4458, %v6035
    %v6286 = vmul.f32 %v4459, %v6035
    %v6287 = vmul.f32 %v4460, %v6035
    %v6288 = vmul.f32 %v4461, %v6035
    %v6289 = vmul.f32 %v4462, %v6035
    %v6290 = vmul.f32 %v4463, %v6035
    %v6291 = vmul.f32 %v4464, %v6035
    %v6292 = vperm.slane %v6034, 0
    %v6293 = vadd.f32 %v6036, %v6292
    %v6294 = vadd.f32 %v6037, %v6292
    %v6295 = vadd.f32 %v6038, %v6292
    %v6296 = vadd.f32 %v6039, %v6292
    %v6297 = vadd.f32 %v6040, %v6292
    %v6298 = vadd.f32 %v6041, %v6292
    %v6299 = vadd.f32 %v6042, %v6292
    %v6300 = vadd.f32 %v6043, %v6292
    %v6301 = vadd.f32 %v6044, %v6292
    %v6302 = vadd.f32 %v6045, %v6292
    %v6303 = vadd.f32 %v6046, %v6292
    %v6304 = vadd.f32 %v6047, %v6292
    %v6305 = vadd.f32 %v6048, %v6292
    %v6306 = vadd.f32 %v6049, %v6292
    %v6307 = vadd.f32 %v6050, %v6292
    %v6308 = vadd.f32 %v6051, %v6292
    %v6309 = vadd.f32 %v6052, %v6292
    %v6310 = vadd.f32 %v6053, %v6292
    %v6311 = vadd.f32 %v6054, %v6292
    %v6312 = vadd.f32 %v6055, %v6292
    %v6313 = vadd.f32 %v6056, %v6292
    %v6314 = vadd.f32 %v6057, %v6292
    %v6315 = vadd.f32 %v6058, %v6292
    %v6316 = vadd.f32 %v6059, %v6292
    %v6317 = vadd.f32 %v6060, %v6292
    %v6318 = vadd.f32 %v6061, %v6292
    %v6319 = vadd.f32 %v6062, %v6292
    %v6320 = vadd.f32 %v6063, %v6292
    %v6321 = vadd.f32 %v6064, %v6292
    %v6322 = vadd.f32 %v6065, %v6292
    %v6323 = vadd.f32 %v6066, %v6292
    %v6324 = vadd.f32 %v6067, %v6292
    %v6325 = vadd.f32 %v6068, %v6292
    %v6326 = vadd.f32 %v6069, %v6292
    %v6327 = vadd.f32 %v6070, %v6292
    %v6328 = vadd.f32 %v6071, %v6292
    %v6329 = vadd.f32 %v6072, %v6292
    %v6330 = vadd.f32 %v6073, %v6292
    %v6331 = vadd.f32 %v6074, %v6292
    %v6332 = vadd.f32 %v6075, %v6292
    %v6333 = vadd.f32 %v6076, %v6292
    %v6334 = vadd.f32 %v6077, %v6292
    %v6335 = vadd.f32 %v6078, %v6292
    %v6336 = vadd.f32 %v6079, %v6292
    %v6337 = vadd.f32 %v6080, %v6292
    %v6338 = vadd.f32 %v6081, %v6292
    %v6339 = vadd.f32 %v6082, %v6292
    %v6340 = vadd.f32 %v6083, %v6292
    %v6341 = vadd.f32 %v6084, %v6292
    %v6342 = vadd.f32 %v6085, %v6292
    %v6343 = vadd.f32 %v6086, %v6292
    %v6344 = vadd.f32 %v6087, %v6292
    %v6345 = vadd.f32 %v6088, %v6292
    %v6346 = vadd.f32 %v6089, %v6292
    %v6347 = vadd.f32 %v6090, %v6292
    %v6348 = vadd.f32 %v6091, %v6292
    %v6349 = vadd.f32 %v6092, %v6292
    %v6350 = vadd.f32 %v6093, %v6292
    %v6351 = vadd.f32 %v6094, %v6292
    %v6352 = vadd.f32 %v6095, %v6292
    %v6353 = vadd.f32 %v6096, %v6292
    %v6354 = vadd.f32 %v6097, %v6292
    %v6355 = vadd.f32 %v6098, %v6292
    %v6356 = vadd.f32 %v6099, %v6292
    %v6357 = vadd.f32 %v6100, %v6292
    %v6358 = vadd.f32 %v6101, %v6292
    %v6359 = vadd.f32 %v6102, %v6292
    %v6360 = vadd.f32 %v6103, %v6292
    %v6361 = vadd.f32 %v6104, %v6292
    %v6362 = vadd.f32 %v6105, %v6292
    %v6363 = vadd.f32 %v6106, %v6292
    %v6364 = vadd.f32 %v6107, %v6292
    %v6365 = vadd.f32 %v6108, %v6292
    %v6366 = vadd.f32 %v6109, %v6292
    %v6367 = vadd.f32 %v6110, %v6292
    %v6368 = vadd.f32 %v6111, %v6292
    %v6369 = vadd.f32 %v6112, %v6292
    %v6370 = vadd.f32 %v6113, %v6292
    %v6371 = vadd.f32 %v6114, %v6292
    %v6372 = vadd.f32 %v6115, %v6292
    %v6373 = vadd.f32 %v6116, %v6292
    %v6374 = vadd.f32 %v6117, %v6292
    %v6375 = vadd.f32 %v6118, %v6292
    %v6376 = vadd.f32 %v6119, %v6292
    %v6377 = vadd.f32 %v6120, %v6292
    %v6378 = vadd.f32 %v6121, %v6292
    %v6379 = vadd.f32 %v6122, %v6292
    %v6380 = vadd.f32 %v6123, %v6292
    %v6381 = vadd.f32 %v6124, %v6292
    %v6382 = vadd.f32 %v6125, %v6292
    %v6383 = vadd.f32 %v6126, %v6292
    %v6384 = vadd.f32 %v6127, %v6292
    %v6385 = vadd.f32 %v6128, %v6292
    %v6386 = vadd.f32 %v6129, %v6292
    %v6387 = vadd.f32 %v6130, %v6292
    %v6388 = vadd.f32 %v6131, %v6292
    %v6389 = vadd.f32 %v6132, %v6292
    %v6390 = vadd.f32 %v6133, %v6292
    %v6391 = vadd.f32 %v6134, %v6292
    %v6392 = vadd.f32 %v6135, %v6292
    %v6393 = vadd.f32 %v6136, %v6292
    %v6394 = vadd.f32 %v6137, %v6292
    %v6395 = vadd.f32 %v6138, %v6292
    %v6396 = vadd.f32 %v6139, %v6292
    %v6397 = vadd.f32 %v6140, %v6292
    %v6398 = vadd.f32 %v6141, %v6292
    %v6399 = vadd.f32 %v6142, %v6292
    %v6400 = vadd.f32 %v6143, %v6292
    %v6401 = vadd.f32 %v6144, %v6292
    %v6402 = vadd.f32 %v6145, %v6292
    %v6403 = vadd.f32 %v6146, %v6292
    %v6404 = vadd.f32 %v6147, %v6292
    %v6405 = vadd.f32 %v6148, %v6292
    %v6406 = vadd.f32 %v6149, %v6292
    %v6407 = vadd.f32 %v6150, %v6292
    %v6408 = vadd.f32 %v6151, %v6292
    %v6409 = vadd.f32 %v6152, %v6292
    %v6410 = vadd.f32 %v6153, %v6292
    %v6411 = vadd.f32 %v6154, %v6292
    %v6412 = vadd.f32 %v6155, %v6292
    %v6413 = vadd.f32 %v6156, %v6292
    %v6414 = vadd.f32 %v6157, %v6292
    %v6415 = vadd.f32 %v6158, %v6292
    %v6416 = vadd.f32 %v6159, %v6292
    %v6417 = vadd.f32 %v6160, %v6292
    %v6418 = vadd.f32 %v6161, %v6292
    %v6419 = vadd.f32 %v6162, %v6292
    %v6420 = vadd.f32 %v6163, %v6292
    %v6421 = vadd.f32 %v6164, %v6292
    %v6422 = vadd.f32 %v6165, %v6292
    %v6423 = vadd.f32 %v6166, %v6292
    %v6424 = vadd.f32 %v6167, %v6292
    %v6425 = vadd.f32 %v6168, %v6292
    %v6426 = vadd.f32 %v6169, %v6292
    %v6427 = vadd.f32 %v6170, %v6292
    %v6428 = vadd.f32 %v6171, %v6292
    %v6429 = vadd.f32 %v6172, %v6292
    %v6430 = vadd.f32 %v6173, %v6292
    %v6431 = vadd.f32 %v6174, %v6292
    %v6432 = vadd.f32 %v6175, %v6292
    %v6433 = vadd.f32 %v6176, %v6292
    %v6434 = vadd.f32 %v6177, %v6292
    %v6435 = vadd.f32 %v6178, %v6292
    %v6436 = vadd.f32 %v6179, %v6292
    %v6437 = vadd.f32 %v6180, %v6292
    %v6438 = vadd.f32 %v6181, %v6292
    %v6439 = vadd.f32 %v6182, %v6292
    %v6440 = vadd.f32 %v6183, %v6292
    %v6441 = vadd.f32 %v6184, %v6292
    %v6442 = vadd.f32 %v6185, %v6292
    %v6443 = vadd.f32 %v6186, %v6292
    %v6444 = vadd.f32 %v6187, %v6292
    %v6445 = vadd.f32 %v6188, %v6292
    %v6446 = vadd.f32 %v6189, %v6292
    %v6447 = vadd.f32 %v6190, %v6292
    %v6448 = vadd.f32 %v6191, %v6292
    %v6449 = vadd.f32 %v6192, %v6292
    %v6450 = vadd.f32 %v6193, %v6292
    %v6451 = vadd.f32 %v6194, %v6292
    %v6452 = vadd.f32 %v6195, %v6292
    %v6453 = vadd.f32 %v6196, %v6292
    %v6454 = vadd.f32 %v6197, %v6292
    %v6455 = vadd.f32 %v6198, %v6292
    %v6456 = vadd.f32 %v6199, %v6292
    %v6457 = vadd.f32 %v6200, %v6292
    %v6458 = vadd.f32 %v6201, %v6292
    %v6459 = vadd.f32 %v6202, %v6292
    %v6460 = vadd.f32 %v6203, %v6292
    %v6461 = vadd.f32 %v6204, %v6292
    %v6462 = vadd.f32 %v6205, %v6292
    %v6463 = vadd.f32 %v6206, %v6292
    %v6464 = vadd.f32 %v6207, %v6292
    %v6465 = vadd.f32 %v6208, %v6292
    %v6466 = vadd.f32 %v6209, %v6292
    %v6467 = vadd.f32 %v6210, %v6292
    %v6468 = vadd.f32 %v6211, %v6292
    %v6469 = vadd.f32 %v6212, %v6292
    %v6470 = vadd.f32 %v6213, %v6292
    %v6471 = vadd.f32 %v6214, %v6292
    %v6472 = vadd.f32 %v6215, %v6292
    %v6473 = vadd.f32 %v6216, %v6292
    %v6474 = vadd.f32 %v6217, %v6292
    %v6475 = vadd.f32 %v6218, %v6292
    %v6476 = vadd.f32 %v6219, %v6292
    %v6477 = vadd.f32 %v6220, %v6292
    %v6478 = vadd.f32 %v6221, %v6292
    %v6479 = vadd.f32 %v6222, %v6292
    %v6480 = vadd.f32 %v6223, %v6292
    %v6481 = vadd.f32 %v6224, %v6292
    %v6482 = vadd.f32 %v6225, %v6292
    %v6483 = vadd.f32 %v6226, %v6292
    %v6484 = vadd.f32 %v6227, %v6292
    %v6485 = vadd.f32 %v6228, %v6292
    %v6486 = vadd.f32 %v6229, %v6292
    %v6487 = vadd.f32 %v6230, %v6292
    %v6488 = vadd.f32 %v6231, %v6292
    %v6489 = vadd.f32 %v6232, %v6292
    %v6490 = vadd.f32 %v6233, %v6292
    %v6491 = vadd.f32 %v6234, %v6292
    %v6492 = vadd.f32 %v6235, %v6292
    %v6493 = vadd.f32 %v6236, %v6292
    %v6494 = vadd.f32 %v6237, %v6292
    %v6495 = vadd.f32 %v6238, %v6292
    %v6496 = vadd.f32 %v6239, %v6292
    %v6497 = vadd.f32 %v6240, %v6292
    %v6498 = vadd.f32 %v6241, %v6292
    %v6499 = vadd.f32 %v6242, %v6292
    %v6500 = vadd.f32 %v6243, %v6292
    %v6501 = vadd.f32 %v6244, %v6292
    %v6502 = vadd.f32 %v6245, %v6292
    %v6503 = vadd.f32 %v6246, %v6292
    %v6504 = vadd.f32 %v6247, %v6292
    %v6505 = vadd.f32 %v6248, %v6292
    %v6506 = vadd.f32 %v6249, %v6292
    %v6507 = vadd.f32 %v6250, %v6292
    %v6508 = vadd.f32 %v6251, %v6292
    %v6509 = vadd.f32 %v6252, %v6292
    %v6510 = vadd.f32 %v6253, %v6292
    %v6511 = vadd.f32 %v6254, %v6292
    %v6512 = vadd.f32 %v6255, %v6292
    %v6513 = vadd.f32 %v6256, %v6292
    %v6514 = vadd.f32 %v6257, %v6292
    %v6515 = vadd.f32 %v6258, %v6292
    %v6516 = vadd.f32 %v6259, %v6292
    %v6517 = vadd.f32 %v6260, %v6292
    %v6518 = vadd.f32 %v6261, %v6292
    %v6519 = vadd.f32 %v6262, %v6292
    %v6520 = vadd.f32 %v6263, %v6292
    %v6521 = vadd.f32 %v6264, %v6292
    %v6522 = vadd.f32 %v6265, %v6292
    %v6523 = vadd.f32 %v6266, %v6292
    %v6524 = vadd.f32 %v6267, %v6292
    %v6525 = vadd.f32 %v6268, %v6292
    %v6526 = vadd.f32 %v6269, %v6292
    %v6527 = vadd.f32 %v6270, %v6292
    %v6528 = vadd.f32 %v6271, %v6292
    %v6529 = vadd.f32 %v6272, %v6292
    %v6530 = vadd.f32 %v6273, %v6292
    %v6531 = vadd.f32 %v6274, %v6292
    %v6532 = vadd.f32 %v6275, %v6292
    %v6533 = vadd.f32 %v6276, %v6292
    %v6534 = vadd.f32 %v6277, %v6292
    %v6535 = vadd.f32 %v6278, %v6292
    %v6536 = vadd.f32 %v6279, %v6292
    %v6537 = vadd.f32 %v6280, %v6292
    %v6538 = vadd.f32 %v6281, %v6292
    %v6539 = vadd.f32 %v6282, %v6292
    %v6540 = vadd.f32 %v6283, %v6292
    %v6541 = vadd.f32 %v6284, %v6292
    %v6542 = vadd.f32 %v6285, %v6292
    %v6543 = vadd.f32 %v6286, %v6292
    %v6544 = vadd.f32 %v6287, %v6292
    %v6545 = vadd.f32 %v6288, %v6292
    %v6546 = vadd.f32 %v6289, %v6292
    %v6547 = vadd.f32 %v6290, %v6292
    %v6548 = vadd.f32 %v6291, %v6292
    %v6549 = vmax.f32 %v6293, 0.0
    %v6550 = vmax.f32 %v6294, 0.0
    %v6551 = vmax.f32 %v6295, 0.0
    %v6552 = vmax.f32 %v6296, 0.0
    %v6553 = vmax.f32 %v6297, 0.0
    %v6554 = vmax.f32 %v6298, 0.0
    %v6555 = vmax.f32 %v6299, 0.0
    %v6556 = vmax.f32 %v6300, 0.0
    %v6557 = vmax.f32 %v6301, 0.0
    %v6558 = vmax.f32 %v6302, 0.0
    %v6559 = vmax.f32 %v6303, 0.0
    %v6560 = vmax.f32 %v6304, 0.0
    %v6561 = vmax.f32 %v6305, 0.0
    %v6562 = vmax.f32 %v6306, 0.0
    %v6563 = vmax.f32 %v6307, 0.0
    %v6564 = vmax.f32 %v6308, 0.0
    %v6565 = vmax.f32 %v6309, 0.0
    %v6566 = vmax.f32 %v6310, 0.0
    %v6567 = vmax.f32 %v6311, 0.0
    %v6568 = vmax.f32 %v6312, 0.0
    %v6569 = vmax.f32 %v6313, 0.0
    %v6570 = vmax.f32 %v6314, 0.0
    %v6571 = vmax.f32 %v6315, 0.0
    %v6572 = vmax.f32 %v6316, 0.0
    %v6573 = vmax.f32 %v6317, 0.0
    %v6574 = vmax.f32 %v6318, 0.0
    %v6575 = vmax.f32 %v6319, 0.0
    %v6576 = vmax.f32 %v6320, 0.0
    %v6577 = vmax.f32 %v6321, 0.0
    %v6578 = vmax.f32 %v6322, 0.0
    %v6579 = vmax.f32 %v6323, 0.0
    %v6580 = vmax.f32 %v6324, 0.0
    %v6581 = vmax.f32 %v6325, 0.0
    %v6582 = vmax.f32 %v6326, 0.0
    %v6583 = vmax.f32 %v6327, 0.0
    %v6584 = vmax.f32 %v6328, 0.0
    %v6585 = vmax.f32 %v6329, 0.0
    %v6586 = vmax.f32 %v6330, 0.0
    %v6587 = vmax.f32 %v6331, 0.0
    %v6588 = vmax.f32 %v6332, 0.0
    %v6589 = vmax.f32 %v6333, 0.0
    %v6590 = vmax.f32 %v6334, 0.0
    %v6591 = vmax.f32 %v6335, 0.0
    %v6592 = vmax.f32 %v6336, 0.0
    %v6593 = vmax.f32 %v6337, 0.0
    %v6594 = vmax.f32 %v6338, 0.0
    %v6595 = vmax.f32 %v6339, 0.0
    %v6596 = vmax.f32 %v6340, 0.0
    %v6597 = vmax.f32 %v6341, 0.0
    %v6598 = vmax.f32 %v6342, 0.0
    %v6599 = vmax.f32 %v6343, 0.0
    %v6600 = vmax.f32 %v6344, 0.0
    %v6601 = vmax.f32 %v6345, 0.0
    %v6602 = vmax.f32 %v6346, 0.0
    %v6603 = vmax.f32 %v6347, 0.0
    %v6604 = vmax.f32 %v6348, 0.0
    %v6605 = vmax.f32 %v6349, 0.0
    %v6606 = vmax.f32 %v6350, 0.0
    %v6607 = vmax.f32 %v6351, 0.0
    %v6608 = vmax.f32 %v6352, 0.0
    %v6609 = vmax.f32 %v6353, 0.0
    %v6610 = vmax.f32 %v6354, 0.0
    %v6611 = vmax.f32 %v6355, 0.0
    %v6612 = vmax.f32 %v6356, 0.0
    %v6613 = vmax.f32 %v6357, 0.0
    %v6614 = vmax.f32 %v6358, 0.0
    %v6615 = vmax.f32 %v6359, 0.0
    %v6616 = vmax.f32 %v6360, 0.0
    %v6617 = vmax.f32 %v6361, 0.0
    %v6618 = vmax.f32 %v6362, 0.0
    %v6619 = vmax.f32 %v6363, 0.0
    %v6620 = vmax.f32 %v6364, 0.0
    %v6621 = vmax.f32 %v6365, 0.0
    %v6622 = vmax.f32 %v6366, 0.0
    %v6623 = vmax.f32 %v6367, 0.0
    %v6624 = vmax.f32 %v6368, 0.0
    %v6625 = vmax.f32 %v6369, 0.0
    %v6626 = vmax.f32 %v6370, 0.0
    %v6627 = vmax.f32 %v6371, 0.0
    %v6628 = vmax.f32 %v6372, 0.0
    %v6629 = vmax.f32 %v6373, 0.0
    %v6630 = vmax.f32 %v6374, 0.0
    %v6631 = vmax.f32 %v6375, 0.0
    %v6632 = vmax.f32 %v6376, 0.0
    %v6633 = vmax.f32 %v6377, 0.0
    %v6634 = vmax.f32 %v6378, 0.0
    %v6635 = vmax.f32 %v6379, 0.0
    %v6636 = vmax.f32 %v6380, 0.0
    %v6637 = vmax.f32 %v6381, 0.0
    %v6638 = vmax.f32 %v6382, 0.0
    %v6639 = vmax.f32 %v6383, 0.0
    %v6640 = vmax.f32 %v6384, 0.0
    %v6641 = vmax.f32 %v6385, 0.0
    %v6642 = vmax.f32 %v6386, 0.0
    %v6643 = vmax.f32 %v6387, 0.0
    %v6644 = vmax.f32 %v6388, 0.0
    %v6645 = vmax.f32 %v6389, 0.0
    %v6646 = vmax.f32 %v6390, 0.0
    %v6647 = vmax.f32 %v6391, 0.0
    %v6648 = vmax.f32 %v6392, 0.0
    %v6649 = vmax.f32 %v6393, 0.0
    %v6650 = vmax.f32 %v6394, 0.0
    %v6651 = vmax.f32 %v6395, 0.0
    %v6652 = vmax.f32 %v6396, 0.0
    %v6653 = vmax.f32 %v6397, 0.0
    %v6654 = vmax.f32 %v6398, 0.0
    %v6655 = vmax.f32 %v6399, 0.0
    %v6656 = vmax.f32 %v6400, 0.0
    %v6657 = vmax.f32 %v6401, 0.0
    %v6658 = vmax.f32 %v6402, 0.0
    %v6659 = vmax.f32 %v6403, 0.0
    %v6660 = vmax.f32 %v6404, 0.0
    %v6661 = vmax.f32 %v6405, 0.0
    %v6662 = vmax.f32 %v6406, 0.0
    %v6663 = vmax.f32 %v6407, 0.0
    %v6664 = vmax.f32 %v6408, 0.0
    %v6665 = vmax.f32 %v6409, 0.0
    %v6666 = vmax.f32 %v6410, 0.0
    %v6667 = vmax.f32 %v6411, 0.0
    %v6668 = vmax.f32 %v6412, 0.0
    %v6669 = vmax.f32 %v6413, 0.0
    %v6670 = vmax.f32 %v6414, 0.0
    %v6671 = vmax.f32 %v6415, 0.0
    %v6672 = vmax.f32 %v6416, 0.0
    %v6673 = vmax.f32 %v6417, 0.0
    %v6674 = vmax.f32 %v6418, 0.0
    %v6675 = vmax.f32 %v6419, 0.0
    %v6676 = vmax.f32 %v6420, 0.0
    %v6677 = vmax.f32 %v6421, 0.0
    %v6678 = vmax.f32 %v6422, 0.0
    %v6679 = vmax.f32 %v6423, 0.0
    %v6680 = vmax.f32 %v6424, 0.0
    %v6681 = vmax.f32 %v6425, 0.0
    %v6682 = vmax.f32 %v6426, 0.0
    %v6683 = vmax.f32 %v6427, 0.0
    %v6684 = vmax.f32 %v6428, 0.0
    %v6685 = vmax.f32 %v6429, 0.0
    %v6686 = vmax.f32 %v6430, 0.0
    %v6687 = vmax.f32 %v6431, 0.0
    %v6688 = vmax.f32 %v6432, 0.0
    %v6689 = vmax.f32 %v6433, 0.0
    %v6690 = vmax.f32 %v6434, 0.0
    %v6691 = vmax.f32 %v6435, 0.0
    %v6692 = vmax.f32 %v6436, 0.0
    %v6693 = vmax.f32 %v6437, 0.0
    %v6694 = vmax.f32 %v6438, 0.0
    %v6695 = vmax.f32 %v6439, 0.0
    %v6696 = vmax.f32 %v6440, 0.0
    %v6697 = vmax.f32 %v6441, 0.0
    %v6698 = vmax.f32 %v6442, 0.0
    %v6699 = vmax.f32 %v6443, 0.0
    %v6700 = vmax.f32 %v6444, 0.0
    %v6701 = vmax.f32 %v6445, 0.0
    %v6702 = vmax.f32 %v6446, 0.0
    %v6703 = vmax.f32 %v6447, 0.0
    %v6704 = vmax.f32 %v6448, 0.0
    %v6705 = vmax.f32 %v6449, 0.0
    %v6706 = vmax.f32 %v6450, 0.0
    %v6707 = vmax.f32 %v6451, 0.0
    %v6708 = vmax.f32 %v6452, 0.0
    %v6709 = vmax.f32 %v6453, 0.0
    %v6710 = vmax.f32 %v6454, 0.0
    %v6711 = vmax.f32 %v6455, 0.0
    %v6712 = vmax.f32 %v6456, 0.0
    %v6713 = vmax.f32 %v6457, 0.0
    %v6714 = vmax.f32 %v6458, 0.0
    %v6715 = vmax.f32 %v6459, 0.0
    %v6716 = vmax.f32 %v6460, 0.0
    %v6717 = vmax.f32 %v6461, 0.0
    %v6718 = vmax.f32 %v6462, 0.0
    %v6719 = vmax.f32 %v6463, 0.0
    %v6720 = vmax.f32 %v6464, 0.0
    %v6721 = vmax.f32 %v6465, 0.0
    %v6722 = vmax.f32 %v6466, 0.0
    %v6723 = vmax.f32 %v6467, 0.0
    %v6724 = vmax.f32 %v6468, 0.0
    %v6725 = vmax.f32 %v6469, 0.0
    %v6726 = vmax.f32 %v6470, 0.0
    %v6727 = vmax.f32 %v6471, 0.0
    %v6728 = vmax.f32 %v6472, 0.0
    %v6729 = vmax.f32 %v6473, 0.0
    %v6730 = vmax.f32 %v6474, 0.0
    %v6731 = vmax.f32 %v6475, 0.0
    %v6732 = vmax.f32 %v6476, 0.0
    %v6733 = vmax.f32 %v6477, 0.0
    %v6734 = vmax.f32 %v6478, 0.0
    %v6735 = vmax.f32 %v6479, 0.0
    %v6736 = vmax.f32 %v6480, 0.0
    %v6737 = vmax.f32 %v6481, 0.0
    %v6738 = vmax.f32 %v6482, 0.0
    %v6739 = vmax.f32 %v6483, 0.0
    %v6740 = vmax.f32 %v6484, 0.0
    %v6741 = vmax.f32 %v6485, 0.0
    %v6742 = vmax.f32 %v6486, 0.0
    %v6743 = vmax.f32 %v6487, 0.0
    %v6744 = vmax.f32 %v6488, 0.0
    %v6745 = vmax.f32 %v6489, 0.0
    %v6746 = vmax.f32 %v6490, 0.0
    %v6747 = vmax.f32 %v6491, 0.0
    %v6748 = vmax.f32 %v6492, 0.0
    %v6749 = vmax.f32 %v6493, 0.0
    %v6750 = vmax.f32 %v6494, 0.0
    %v6751 = vmax.f32 %v6495, 0.0
    %v6752 = vmax.f32 %v6496, 0.0
    %v6753 = vmax.f32 %v6497, 0.0
    %v6754 = vmax.f32 %v6498, 0.0
    %v6755 = vmax.f32 %v6499, 0.0
    %v6756 = vmax.f32 %v6500, 0.0
    %v6757 = vmax.f32 %v6501, 0.0
    %v6758 = vmax.f32 %v6502, 0.0
    %v6759 = vmax.f32 %v6503, 0.0
    %v6760 = vmax.f32 %v6504, 0.0
    %v6761 = vmax.f32 %v6505, 0.0
    %v6762 = vmax.f32 %v6506, 0.0
    %v6763 = vmax.f32 %v6507, 0.0
    %v6764 = vmax.f32 %v6508, 0.0
    %v6765 = vmax.f32 %v6509, 0.0
    %v6766 = vmax.f32 %v6510, 0.0
    %v6767 = vmax.f32 %v6511, 0.0
    %v6768 = vmax.f32 %v6512, 0.0
    %v6769 = vmax.f32 %v6513, 0.0
    %v6770 = vmax.f32 %v6514, 0.0
    %v6771 = vmax.f32 %v6515, 0.0
    %v6772 = vmax.f32 %v6516, 0.0
    %v6773 = vmax.f32 %v6517, 0.0
    %v6774 = vmax.f32 %v6518, 0.0
    %v6775 = vmax.f32 %v6519, 0.0
    %v6776 = vmax.f32 %v6520, 0.0
    %v6777 = vmax.f32 %v6521, 0.0
    %v6778 = vmax.f32 %v6522, 0.0
    %v6779 = vmax.f32 %v6523, 0.0
    %v6780 = vmax.f32 %v6524, 0.0
    %v6781 = vmax.f32 %v6525, 0.0
    %v6782 = vmax.f32 %v6526, 0.0
    %v6783 = vmax.f32 %v6527, 0.0
    %v6784 = vmax.f32 %v6528, 0.0
    %v6785 = vmax.f32 %v6529, 0.0
    %v6786 = vmax.f32 %v6530, 0.0
    %v6787 = vmax.f32 %v6531, 0.0
    %v6788 = vmax.f32 %v6532, 0.0
    %v6789 = vmax.f32 %v6533, 0.0
    %v6790 = vmax.f32 %v6534, 0.0
    %v6791 = vmax.f32 %v6535, 0.0
    %v6792 = vmax.f32 %v6536, 0.0
    %v6793 = vmax.f32 %v6537, 0.0
    %v6794 = vmax.f32 %v6538, 0.0
    %v6795 = vmax.f32 %v6539, 0.0
    %v6796 = vmax.f32 %v6540, 0.0
    %v6797 = vmax.f32 %v6541, 0.0
    %v6798 = vmax.f32 %v6542, 0.0
    %v6799 = vmax.f32 %v6543, 0.0
    %v6800 = vmax.f32 %v6544, 0.0
    %v6801 = vmax.f32 %v6545, 0.0
    %v6802 = vmax.f32 %v6546, 0.0
    %v6803 = vmax.f32 %v6547, 0.0
    %v6804 = vmax.f32 %v6548, 0.0
    %6805 = vst.msk [vmem:[%s9] sm:$0xff] %vm4465, %v6549
    %6806 = vst.msk [vmem:[%s9 + $0x8] sm:$0xff] %vm4465, %v6550
    %6807 = vst.msk [vmem:[%s9 + $0x10] sm:$0xff] %vm4465, %v6551
    %6808 = vst.msk [vmem:[%s9 + $0x18] sm:$0xff] %vm4465, %v6552
    %6809 = vst.msk [vmem:[%s9 + $0x20] sm:$0xff] %vm4465, %v6553
    %6810 = vst.msk [vmem:[%s9 + $0x28] sm:$0xff] %vm4465, %v6554
    %6811 = vst.msk [vmem:[%s9 + $0x30] sm:$0xff] %vm4465, %v6555
    %6812 = vst.msk [vmem:[%s9 + $0x38] sm:$0xff] %vm4465, %v6556
    %6813 = vst.msk [vmem:[%s9 + $0x40] sm:$0xff] %vm4465, %v6557
    %6814 = vst.msk [vmem:[%s9 + $0x48] sm:$0xff] %vm4465, %v6558
    %6815 = vst.msk [vmem:[%s9 + $0x50] sm:$0xff] %vm4465, %v6559
    %6816 = vst.msk [vmem:[%s9 + $0x58] sm:$0xff] %vm4465, %v6560
    %6817 = vst.msk [vmem:[%s9 + $0x60] sm:$0xff] %vm4465, %v6561
    %6818 = vst.msk [vmem:[%s9 + $0x68] sm:$0xff] %vm4465, %v6562
    %6819 = vst.msk [vmem:[%s9 + $0x70] sm:$0xff] %vm4465, %v6563
    %6820 = vst.msk [vmem:[%s9 + $0x78] sm:$0xff] %vm4465, %v6564
    %6821 = vst.msk [vmem:[%s9 + $0x80] sm:$0xff] %vm4465, %v6565
    %6822 = vst.msk [vmem:[%s9 + $0x88] sm:$0xff] %vm4465, %v6566
    %6823 = vst.msk [vmem:[%s9 + $0x90] sm:$0xff] %vm4465, %v6567
    %6824 = vst.msk [vmem:[%s9 + $0x98] sm:$0xff] %vm4465, %v6568
    %6825 = vst.msk [vmem:[%s9 + $0xa0] sm:$0xff] %vm4465, %v6569
    %6826 = vst.msk [vmem:[%s9 + $0xa8] sm:$0xff] %vm4465, %v6570
    %6827 = vst.msk [vmem:[%s9 + $0xb0] sm:$0xff] %vm4465, %v6571
    %6828 = vst.msk [vmem:[%s9 + $0xb8] sm:$0xff] %vm4465, %v6572
    %6829 = vst.msk [vmem:[%s9 + $0xc0] sm:$0xff] %vm4465, %v6573
    %6830 = vst.msk [vmem:[%s9 + $0xc8] sm:$0xff] %vm4465, %v6574
    %6831 = vst.msk [vmem:[%s9 + $0xd0] sm:$0xff] %vm4465, %v6575
    %6832 = vst.msk [vmem:[%s9 + $0xd8] sm:$0xff] %vm4465, %v6576
    %6833 = vst.msk [vmem:[%s9 + $0xe0] sm:$0xff] %vm4465, %v6577
    %6834 = vst.msk [vmem:[%s9 + $0xe8] sm:$0xff] %vm4465, %v6578
    %6835 = vst.msk [vmem:[%s9 + $0xf0] sm:$0xff] %vm4465, %v6579
    %6836 = vst.msk [vmem:[%s9 + $0xf8] sm:$0xff] %vm4465, %v6580
    %6837 = vst.msk [vmem:[%s9 + $0x100] sm:$0xff] %vm4465, %v6581
    %6838 = vst.msk [vmem:[%s9 + $0x108] sm:$0xff] %vm4465, %v6582
    %6839 = vst.msk [vmem:[%s9 + $0x110] sm:$0xff] %vm4465, %v6583
    %6840 = vst.msk [vmem:[%s9 + $0x118] sm:$0xff] %vm4465, %v6584
    %6841 = vst.msk [vmem:[%s9 + $0x120] sm:$0xff] %vm4465, %v6585
    %6842 = vst.msk [vmem:[%s9 + $0x128] sm:$0xff] %vm4465, %v6586
    %6843 = vst.msk [vmem:[%s9 + $0x130] sm:$0xff] %vm4465, %v6587
    %6844 = vst.msk [vmem:[%s9 + $0x138] sm:$0xff] %vm4465, %v6588
    %6845 = vst.msk [vmem:[%s9 + $0x140] sm:$0xff] %vm4465, %v6589
    %6846 = vst.msk [vmem:[%s9 + $0x148] sm:$0xff] %vm4465, %v6590
    %6847 = vst.msk [vmem:[%s9 + $0x150] sm:$0xff] %vm4465, %v6591
    %6848 = vst.msk [vmem:[%s9 + $0x158] sm:$0xff] %vm4465, %v6592
    %6849 = vst.msk [vmem:[%s9 + $0x160] sm:$0xff] %vm4465, %v6593
    %6850 = vst.msk [vmem:[%s9 + $0x168] sm:$0xff] %vm4465, %v6594
    %6851 = vst.msk [vmem:[%s9 + $0x170] sm:$0xff] %vm4465, %v6595
    %6852 = vst.msk [vmem:[%s9 + $0x178] sm:$0xff] %vm4465, %v6596
    %6853 = vst.msk [vmem:[%s9 + $0x180] sm:$0xff] %vm4465, %v6597
    %6854 = vst.msk [vmem:[%s9 + $0x188] sm:$0xff] %vm4465, %v6598
    %6855 = vst.msk [vmem:[%s9 + $0x190] sm:$0xff] %vm4465, %v6599
    %6856 = vst.msk [vmem:[%s9 + $0x198] sm:$0xff] %vm4465, %v6600
    %6857 = vst.msk [vmem:[%s9 + $0x1a0] sm:$0xff] %vm4465, %v6601
    %6858 = vst.msk [vmem:[%s9 + $0x1a8] sm:$0xff] %vm4465, %v6602
    %6859 = vst.msk [vmem:[%s9 + $0x1b0] sm:$0xff] %vm4465, %v6603
    %6860 = vst.msk [vmem:[%s9 + $0x1b8] sm:$0xff] %vm4465, %v6604
    %6861 = vst.msk [vmem:[%s9 + $0x1c0] sm:$0xff] %vm4465, %v6605
    %6862 = vst.msk [vmem:[%s9 + $0x1c8] sm:$0xff] %vm4465, %v6606
    %6863 = vst.msk [vmem:[%s9 + $0x1d0] sm:$0xff] %vm4465, %v6607
    %6864 = vst.msk [vmem:[%s9 + $0x1d8] sm:$0xff] %vm4465, %v6608
    %6865 = vst.msk [vmem:[%s9 + $0x1e0] sm:$0xff] %vm4465, %v6609
    %6866 = vst.msk [vmem:[%s9 + $0x1e8] sm:$0xff] %vm4465, %v6610
    %6867 = vst.msk [vmem:[%s9 + $0x1f0] sm:$0xff] %vm4465, %v6611
    %6868 = vst.msk [vmem:[%s9 + $0x1f8] sm:$0xff] %vm4465, %v6612
    %6869 = vst.msk [vmem:[%s9 + $0x200] sm:$0xff] %vm4465, %v6613
    %6870 = vst.msk [vmem:[%s9 + $0x208] sm:$0xff] %vm4465, %v6614
    %6871 = vst.msk [vmem:[%s9 + $0x210] sm:$0xff] %vm4465, %v6615
    %6872 = vst.msk [vmem:[%s9 + $0x218] sm:$0xff] %vm4465, %v6616
    %6873 = vst.msk [vmem:[%s9 + $0x220] sm:$0xff] %vm4465, %v6617
    %6874 = vst.msk [vmem:[%s9 + $0x228] sm:$0xff] %vm4465, %v6618
    %6875 = vst.msk [vmem:[%s9 + $0x230] sm:$0xff] %vm4465, %v6619
    %6876 = vst.msk [vmem:[%s9 + $0x238] sm:$0xff] %vm4465, %v6620
    %6877 = vst.msk [vmem:[%s9 + $0x240] sm:$0xff] %vm4465, %v6621
    %6878 = vst.msk [vmem:[%s9 + $0x248] sm:$0xff] %vm4465, %v6622
    %6879 = vst.msk [vmem:[%s9 + $0x250] sm:$0xff] %vm4465, %v6623
    %6880 = vst.msk [vmem:[%s9 + $0x258] sm:$0xff] %vm4465, %v6624
    %6881 = vst.msk [vmem:[%s9 + $0x260] sm:$0xff] %vm4465, %v6625
    %6882 = vst.msk [vmem:[%s9 + $0x268] sm:$0xff] %vm4465, %v6626
    %6883 = vst.msk [vmem:[%s9 + $0x270] sm:$0xff] %vm4465, %v6627
    %6884 = vst.msk [vmem:[%s9 + $0x278] sm:$0xff] %vm4465, %v6628
    %6885 = vst.msk [vmem:[%s9 + $0x280] sm:$0xff] %vm4465, %v6629
    %6886 = vst.msk [vmem:[%s9 + $0x288] sm:$0xff] %vm4465, %v6630
    %6887 = vst.msk [vmem:[%s9 + $0x290] sm:$0xff] %vm4465, %v6631
    %6888 = vst.msk [vmem:[%s9 + $0x298] sm:$0xff] %vm4465, %v6632
    %6889 = vst.msk [vmem:[%s9 + $0x2a0] sm:$0xff] %vm4465, %v6633
    %6890 = vst.msk [vmem:[%s9 + $0x2a8] sm:$0xff] %vm4465, %v6634
    %6891 = vst.msk [vmem:[%s9 + $0x2b0] sm:$0xff] %vm4465, %v6635
    %6892 = vst.msk [vmem:[%s9 + $0x2b8] sm:$0xff] %vm4465, %v6636
    %6893 = vst.msk [vmem:[%s9 + $0x2c0] sm:$0xff] %vm4465, %v6637
    %6894 = vst.msk [vmem:[%s9 + $0x2c8] sm:$0xff] %vm4465, %v6638
    %6895 = vst.msk [vmem:[%s9 + $0x2d0] sm:$0xff] %vm4465, %v6639
    %6896 = vst.msk [vmem:[%s9 + $0x2d8] sm:$0xff] %vm4465, %v6640
    %6897 = vst.msk [vmem:[%s9 + $0x2e0] sm:$0xff] %vm4465, %v6641
    %6898 = vst.msk [vmem:[%s9 + $0x2e8] sm:$0xff] %vm4465, %v6642
    %6899 = vst.msk [vmem:[%s9 + $0x2f0] sm:$0xff] %vm4465, %v6643
    %6900 = vst.msk [vmem:[%s9 + $0x2f8] sm:$0xff] %vm4465, %v6644
    %6901 = vst.msk [vmem:[%s9 + $0x300] sm:$0xff] %vm4465, %v6645
    %6902 = vst.msk [vmem:[%s9 + $0x308] sm:$0xff] %vm4465, %v6646
    %6903 = vst.msk [vmem:[%s9 + $0x310] sm:$0xff] %vm4465, %v6647
    %6904 = vst.msk [vmem:[%s9 + $0x318] sm:$0xff] %vm4465, %v6648
    %6905 = vst.msk [vmem:[%s9 + $0x320] sm:$0xff] %vm4465, %v6649
    %6906 = vst.msk [vmem:[%s9 + $0x328] sm:$0xff] %vm4465, %v6650
    %6907 = vst.msk [vmem:[%s9 + $0x330] sm:$0xff] %vm4465, %v6651
    %6908 = vst.msk [vmem:[%s9 + $0x338] sm:$0xff] %vm4465, %v6652
    %6909 = vst.msk [vmem:[%s9 + $0x340] sm:$0xff] %vm4465, %v6653
    %6910 = vst.msk [vmem:[%s9 + $0x348] sm:$0xff] %vm4465, %v6654
    %6911 = vst.msk [vmem:[%s9 + $0x350] sm:$0xff] %vm4465, %v6655
    %6912 = vst.msk [vmem:[%s9 + $0x358] sm:$0xff] %vm4465, %v6656
    %6913 = vst.msk [vmem:[%s9 + $0x360] sm:$0xff] %vm4465, %v6657
    %6914 = vst.msk [vmem:[%s9 + $0x368] sm:$0xff] %vm4465, %v6658
    %6915 = vst.msk [vmem:[%s9 + $0x370] sm:$0xff] %vm4465, %v6659
    %6916 = vst.msk [vmem:[%s9 + $0x378] sm:$0xff] %vm4465, %v6660
    %6917 = vst.msk [vmem:[%s9 + $0x380] sm:$0xff] %vm4465, %v6661
    %6918 = vst.msk [vmem:[%s9 + $0x388] sm:$0xff] %vm4465, %v6662
    %6919 = vst.msk [vmem:[%s9 + $0x390] sm:$0xff] %vm4465, %v6663
    %6920 = vst.msk [vmem:[%s9 + $0x398] sm:$0xff] %vm4465, %v6664
    %6921 = vst.msk [vmem:[%s9 + $0x3a0] sm:$0xff] %vm4465, %v6665
    %6922 = vst.msk [vmem:[%s9 + $0x3a8] sm:$0xff] %vm4465, %v6666
    %6923 = vst.msk [vmem:[%s9 + $0x3b0] sm:$0xff] %vm4465, %v6667
    %6924 = vst.msk [vmem:[%s9 + $0x3b8] sm:$0xff] %vm4465, %v6668
    %6925 = vst.msk [vmem:[%s9 + $0x3c0] sm:$0xff] %vm4465, %v6669
    %6926 = vst.msk [vmem:[%s9 + $0x3c8] sm:$0xff] %vm4465, %v6670
    %6927 = vst.msk [vmem:[%s9 + $0x3d0] sm:$0xff] %vm4465, %v6671
    %6928 = vst.msk [vmem:[%s9 + $0x3d8] sm:$0xff] %vm4465, %v6672
    %6929 = vst.msk [vmem:[%s9 + $0x3e0] sm:$0xff] %vm4465, %v6673
    %6930 = vst.msk [vmem:[%s9 + $0x3e8] sm:$0xff] %vm4465, %v6674
    %6931 = vst.msk [vmem:[%s9 + $0x3f0] sm:$0xff] %vm4465, %v6675
    %6932 = vst.msk [vmem:[%s9 + $0x3f8] sm:$0xff] %vm4465, %v6676
    %6933 = vst.msk [vmem:[%s9 + $0x400] sm:$0xff] %vm4465, %v6677
    %6934 = vst.msk [vmem:[%s9 + $0x408] sm:$0xff] %vm4465, %v6678
    %6935 = vst.msk [vmem:[%s9 + $0x410] sm:$0xff] %vm4465, %v6679
    %6936 = vst.msk [vmem:[%s9 + $0x418] sm:$0xff] %vm4465, %v6680
    %6937 = vst.msk [vmem:[%s9 + $0x420] sm:$0xff] %vm4465, %v6681
    %6938 = vst.msk [vmem:[%s9 + $0x428] sm:$0xff] %vm4465, %v6682
    %6939 = vst.msk [vmem:[%s9 + $0x430] sm:$0xff] %vm4465, %v6683
    %6940 = vst.msk [vmem:[%s9 + $0x438] sm:$0xff] %vm4465, %v6684
    %6941 = vst.msk [vmem:[%s9 + $0x440] sm:$0xff] %vm4465, %v6685
    %6942 = vst.msk [vmem:[%s9 + $0x448] sm:$0xff] %vm4465, %v6686
    %6943 = vst.msk [vmem:[%s9 + $0x450] sm:$0xff] %vm4465, %v6687
    %6944 = vst.msk [vmem:[%s9 + $0x458] sm:$0xff] %vm4465, %v6688
    %6945 = vst.msk [vmem:[%s9 + $0x460] sm:$0xff] %vm4465, %v6689
    %6946 = vst.msk [vmem:[%s9 + $0x468] sm:$0xff] %vm4465, %v6690
    %6947 = vst.msk [vmem:[%s9 + $0x470] sm:$0xff] %vm4465, %v6691
    %6948 = vst.msk [vmem:[%s9 + $0x478] sm:$0xff] %vm4465, %v6692
    %6949 = vst.msk [vmem:[%s9 + $0x480] sm:$0xff] %vm4465, %v6693
    %6950 = vst.msk [vmem:[%s9 + $0x488] sm:$0xff] %vm4465, %v6694
    %6951 = vst.msk [vmem:[%s9 + $0x490] sm:$0xff] %vm4465, %v6695
    %6952 = vst.msk [vmem:[%s9 + $0x498] sm:$0xff] %vm4465, %v6696
    %6953 = vst.msk [vmem:[%s9 + $0x4a0] sm:$0xff] %vm4465, %v6697
    %6954 = vst.msk [vmem:[%s9 + $0x4a8] sm:$0xff] %vm4465, %v6698
    %6955 = vst.msk [vmem:[%s9 + $0x4b0] sm:$0xff] %vm4465, %v6699
    %6956 = vst.msk [vmem:[%s9 + $0x4b8] sm:$0xff] %vm4465, %v6700
    %6957 = vst.msk [vmem:[%s9 + $0x4c0] sm:$0xff] %vm4465, %v6701
    %6958 = vst.msk [vmem:[%s9 + $0x4c8] sm:$0xff] %vm4465, %v6702
    %6959 = vst.msk [vmem:[%s9 + $0x4d0] sm:$0xff] %vm4465, %v6703
    %6960 = vst.msk [vmem:[%s9 + $0x4d8] sm:$0xff] %vm4465, %v6704
    %6961 = vst.msk [vmem:[%s9 + $0x4e0] sm:$0xff] %vm4465, %v6705
    %6962 = vst.msk [vmem:[%s9 + $0x4e8] sm:$0xff] %vm4465, %v6706
    %6963 = vst.msk [vmem:[%s9 + $0x4f0] sm:$0xff] %vm4465, %v6707
    %6964 = vst.msk [vmem:[%s9 + $0x4f8] sm:$0xff] %vm4465, %v6708
    %6965 = vst.msk [vmem:[%s9 + $0x500] sm:$0xff] %vm4465, %v6709
    %6966 = vst.msk [vmem:[%s9 + $0x508] sm:$0xff] %vm4465, %v6710
    %6967 = vst.msk [vmem:[%s9 + $0x510] sm:$0xff] %vm4465, %v6711
    %6968 = vst.msk [vmem:[%s9 + $0x518] sm:$0xff] %vm4465, %v6712
    %6969 = vst.msk [vmem:[%s9 + $0x520] sm:$0xff] %vm4465, %v6713
    %6970 = vst.msk [vmem:[%s9 + $0x528] sm:$0xff] %vm4465, %v6714
    %6971 = vst.msk [vmem:[%s9 + $0x530] sm:$0xff] %vm4465, %v6715
    %6972 = vst.msk [vmem:[%s9 + $0x538] sm:$0xff] %vm4465, %v6716
    %6973 = vst.msk [vmem:[%s9 + $0x540] sm:$0xff] %vm4465, %v6717
    %6974 = vst.msk [vmem:[%s9 + $0x548] sm:$0xff] %vm4465, %v6718
    %6975 = vst.msk [vmem:[%s9 + $0x550] sm:$0xff] %vm4465, %v6719
    %6976 = vst.msk [vmem:[%s9 + $0x558] sm:$0xff] %vm4465, %v6720
    %6977 = vst.msk [vmem:[%s9 + $0x560] sm:$0xff] %vm4465, %v6721
    %6978 = vst.msk [vmem:[%s9 + $0x568] sm:$0xff] %vm4465, %v6722
    %6979 = vst.msk [vmem:[%s9 + $0x570] sm:$0xff] %vm4465, %v6723
    %6980 = vst.msk [vmem:[%s9 + $0x578] sm:$0xff] %vm4465, %v6724
    %6981 = vst.msk [vmem:[%s9 + $0x580] sm:$0xff] %vm4465, %v6725
    %6982 = vst.msk [vmem:[%s9 + $0x588] sm:$0xff] %vm4465, %v6726
    %6983 = vst.msk [vmem:[%s9 + $0x590] sm:$0xff] %vm4465, %v6727
    %6984 = vst.msk [vmem:[%s9 + $0x598] sm:$0xff] %vm4465, %v6728
    %6985 = vst.msk [vmem:[%s9 + $0x5a0] sm:$0xff] %vm4465, %v6729
    %6986 = vst.msk [vmem:[%s9 + $0x5a8] sm:$0xff] %vm4465, %v6730
    %6987 = vst.msk [vmem:[%s9 + $0x5b0] sm:$0xff] %vm4465, %v6731
    %6988 = vst.msk [vmem:[%s9 + $0x5b8] sm:$0xff] %vm4465, %v6732
    %6989 = vst.msk [vmem:[%s9 + $0x5c0] sm:$0xff] %vm4465, %v6733
    %6990 = vst.msk [vmem:[%s9 + $0x5c8] sm:$0xff] %vm4465, %v6734
    %6991 = vst.msk [vmem:[%s9 + $0x5d0] sm:$0xff] %vm4465, %v6735
    %6992 = vst.msk [vmem:[%s9 + $0x5d8] sm:$0xff] %vm4465, %v6736
    %6993 = vst.msk [vmem:[%s9 + $0x5e0] sm:$0xff] %vm4465, %v6737
    %6994 = vst.msk [vmem:[%s9 + $0x5e8] sm:$0xff] %vm4465, %v6738
    %6995 = vst.msk [vmem:[%s9 + $0x5f0] sm:$0xff] %vm4465, %v6739
    %6996 = vst.msk [vmem:[%s9 + $0x5f8] sm:$0xff] %vm4465, %v6740
    %6997 = vst.msk [vmem:[%s9 + $0x600] sm:$0xff] %vm4465, %v6741
    %6998 = vst.msk [vmem:[%s9 + $0x608] sm:$0xff] %vm4465, %v6742
    %6999 = vst.msk [vmem:[%s9 + $0x610] sm:$0xff] %vm4465, %v6743
    %7000 = vst.msk [vmem:[%s9 + $0x618] sm:$0xff] %vm4465, %v6744
    %7001 = vst.msk [vmem:[%s9 + $0x620] sm:$0xff] %vm4465, %v6745
    %7002 = vst.msk [vmem:[%s9 + $0x628] sm:$0xff] %vm4465, %v6746
    %7003 = vst.msk [vmem:[%s9 + $0x630] sm:$0xff] %vm4465, %v6747
    %7004 = vst.msk [vmem:[%s9 + $0x638] sm:$0xff] %vm4465, %v6748
    %7005 = vst.msk [vmem:[%s9 + $0x640] sm:$0xff] %vm4465, %v6749
    %7006 = vst.msk [vmem:[%s9 + $0x648] sm:$0xff] %vm4465, %v6750
    %7007 = vst.msk [vmem:[%s9 + $0x650] sm:$0xff] %vm4465, %v6751
    %7008 = vst.msk [vmem:[%s9 + $0x658] sm:$0xff] %vm4465, %v6752
    %7009 = vst.msk [vmem:[%s9 + $0x660] sm:$0xff] %vm4465, %v6753
    %7010 = vst.msk [vmem:[%s9 + $0x668] sm:$0xff] %vm4465, %v6754
    %7011 = vst.msk [vmem:[%s9 + $0x670] sm:$0xff] %vm4465, %v6755
    %7012 = vst.msk [vmem:[%s9 + $0x678] sm:$0xff] %vm4465, %v6756
    %7013 = vst.msk [vmem:[%s9 + $0x680] sm:$0xff] %vm4465, %v6757
    %7014 = vst.msk [vmem:[%s9 + $0x688] sm:$0xff] %vm4465, %v6758
    %7015 = vst.msk [vmem:[%s9 + $0x690] sm:$0xff] %vm4465, %v6759
    %7016 = vst.msk [vmem:[%s9 + $0x698] sm:$0xff] %vm4465, %v6760
    %7017 = vst.msk [vmem:[%s9 + $0x6a0] sm:$0xff] %vm4465, %v6761
    %7018 = vst.msk [vmem:[%s9 + $0x6a8] sm:$0xff] %vm4465, %v6762
    %7019 = vst.msk [vmem:[%s9 + $0x6b0] sm:$0xff] %vm4465, %v6763
    %7020 = vst.msk [vmem:[%s9 + $0x6b8] sm:$0xff] %vm4465, %v6764
    %7021 = vst.msk [vmem:[%s9 + $0x6c0] sm:$0xff] %vm4465, %v6765
    %7022 = vst.msk [vmem:[%s9 + $0x6c8] sm:$0xff] %vm4465, %v6766
    %7023 = vst.msk [vmem:[%s9 + $0x6d0] sm:$0xff] %vm4465, %v6767
    %7024 = vst.msk [vmem:[%s9 + $0x6d8] sm:$0xff] %vm4465, %v6768
    %7025 = vst.msk [vmem:[%s9 + $0x6e0] sm:$0xff] %vm4465, %v6769
    %7026 = vst.msk [vmem:[%s9 + $0x6e8] sm:$0xff] %vm4465, %v6770
    %7027 = vst.msk [vmem:[%s9 + $0x6f0] sm:$0xff] %vm4465, %v6771
    %7028 = vst.msk [vmem:[%s9 + $0x6f8] sm:$0xff] %vm4465, %v6772
    %7029 = vst.msk [vmem:[%s9 + $0x700] sm:$0xff] %vm4465, %v6773
    %7030 = vst.msk [vmem:[%s9 + $0x708] sm:$0xff] %vm4465, %v6774
    %7031 = vst.msk [vmem:[%s9 + $0x710] sm:$0xff] %vm4465, %v6775
    %7032 = vst.msk [vmem:[%s9 + $0x718] sm:$0xff] %vm4465, %v6776
    %7033 = vst.msk [vmem:[%s9 + $0x720] sm:$0xff] %vm4465, %v6777
    %7034 = vst.msk [vmem:[%s9 + $0x728] sm:$0xff] %vm4465, %v6778
    %7035 = vst.msk [vmem:[%s9 + $0x730] sm:$0xff] %vm4465, %v6779
    %7036 = vst.msk [vmem:[%s9 + $0x738] sm:$0xff] %vm4465, %v6780
    %7037 = vst.msk [vmem:[%s9 + $0x740] sm:$0xff] %vm4465, %v6781
    %7038 = vst.msk [vmem:[%s9 + $0x748] sm:$0xff] %vm4465, %v6782
    %7039 = vst.msk [vmem:[%s9 + $0x750] sm:$0xff] %vm4465, %v6783
    %7040 = vst.msk [vmem:[%s9 + $0x758] sm:$0xff] %vm4465, %v6784
    %7041 = vst.msk [vmem:[%s9 + $0x760] sm:$0xff] %vm4465, %v6785
    %7042 = vst.msk [vmem:[%s9 + $0x768] sm:$0xff] %vm4465, %v6786
    %7043 = vst.msk [vmem:[%s9 + $0x770] sm:$0xff] %vm4465, %v6787
    %7044 = vst.msk [vmem:[%s9 + $0x778] sm:$0xff] %vm4465, %v6788
    %7045 = vst.msk [vmem:[%s9 + $0x780] sm:$0xff] %vm4465, %v6789
    %7046 = vst.msk [vmem:[%s9 + $0x788] sm:$0xff] %vm4465, %v6790
    %7047 = vst.msk [vmem:[%s9 + $0x790] sm:$0xff] %vm4465, %v6791
    %7048 = vst.msk [vmem:[%s9 + $0x798] sm:$0xff] %vm4465, %v6792
    %7049 = vst.msk [vmem:[%s9 + $0x7a0] sm:$0xff] %vm4465, %v6793
    %7050 = vst.msk [vmem:[%s9 + $0x7a8] sm:$0xff] %vm4465, %v6794
    %7051 = vst.msk [vmem:[%s9 + $0x7b0] sm:$0xff] %vm4465, %v6795
    %7052 = vst.msk [vmem:[%s9 + $0x7b8] sm:$0xff] %vm4465, %v6796
    %7053 = vst.msk [vmem:[%s9 + $0x7c0] sm:$0xff] %vm4465, %v6797
    %7054 = vst.msk [vmem:[%s9 + $0x7c8] sm:$0xff] %vm4465, %v6798
    %7055 = vst.msk [vmem:[%s9 + $0x7d0] sm:$0xff] %vm4465, %v6799
    %7056 = vst.msk [vmem:[%s9 + $0x7d8] sm:$0xff] %vm4465, %v6800
    %7057 = vst.msk [vmem:[%s9 + $0x7e0] sm:$0xff] %vm4465, %v6801
    %7058 = vst.msk [vmem:[%s9 + $0x7e8] sm:$0xff] %vm4465, %v6802
    %7059 = vst.msk [vmem:[%s9 + $0x7f0] sm:$0xff] %vm4465, %v6803
    %7060 = vst.msk [vmem:[%s9 + $0x7f8] sm:$0xff] %vm4465, %v6804
    // Predicated region
    $region62: #{resnet_decoder.2} parent=1 // pred_check
      _
    $region63: #{resnet_decoder.2} parent=1 // pred_check_branch
      %7062 = sbr.rel (0) target = $region65
    $region64: #{resnet_decoder.2} parent=1 // pred_region
      _
    $region65: #{resnet_decoder.2} parent=1 // pred_fallthru
      _
    // Predicated region
    $region66: #{resnet_decoder.2} parent=1 // pred_check
      _
    $region67: #{resnet_decoder.2} parent=1 // pred_check_branch
      %7064 = sbr.rel (0) target = $region69
    $region68: #{resnet_decoder.2} parent=1 // pred_region
      _
    $region69: #{resnet_decoder.2} parent=1 // pred_fallthru
      _
    %7065 = vsyncpa [#allocation6], 1
    %7066 = vsyncpa [#allocation8], 1
    %7067 = vsyncpa [#allocation11], 1
    %7068 = vsyncpa [#allocation14], 1

// kernel: resnet_decoder.3
$region0: #{resnet_decoder.3}
  #allocation0 [shape = 'u32[]', space=smem, size = 0x4, offset = 0x4, fixed_abs, tag = 'smem constant byte address 0x4 - core index']
  #allocation1 [shape = 'u32[72,128]{1,0:T(1,128)}', space=vmem, size = 0x9000, scoped, tag = 'internal scratch']
  #allocation2 [shape = 'f32[1,1]{1,0:T(1,128)S(1)}', space=vmem, size = 0x200, scoped, tag = 'scoped memory for resnet_decoder.3']
  %s0 = inlined_call_operand.vmem [shape: f32[2,34,1024], index: 0, kind: input, shape index: {}]
  %s1 = inlined_call_operand.vmem [shape: f32[3,1024,32], index: 1, kind: input, shape index: {}]
  %s2 = inlined_call_operand.<no memory space> [shape: f32[1,1], index: 2, kind: input, shape index: {}]
  %s3 = inlined_call_operand.hbm [shape: f32[2,32,32], index: 3, kind: output, shape index: {}]
  %s4 = sld [smem:[#allocation0]]
  $region22: #{resnet_decoder.3} parent=0
    _
  %s6 = ssub.s32 1, %s4
  %s7 = scalar_select 0, %s6, %s4
  %v8 = vstv %s2
  %9 = vst [vmem:[#allocation2] sm:$0x1] %v8
  $region1: #{resnet_decoder.3} parent=0
    #allocation3 [shape = 'u8[32768]{0}', space=vmem, size = 0x8000, scoped, tag = 'output window, operand 0, single buffered']
    #allocation4 [shape = 's32[1]{0}', space=sflag, size = 0x4, scoped, tag = 'scoped memory for resnet_decoder.3']
    %10 = vsyncpa [#allocation4], 0
    // Predicated region
    $region2: #{resnet_decoder.3} parent=1 // pred_check
      _
    $region3: #{resnet_decoder.3} parent=1 // pred_check_branch
      %12 = sbr.rel (0) target = $region5
    $region4: #{resnet_decoder.3} parent=1 // pred_region
      _
    $region5: #{resnet_decoder.3} parent=1 // pred_fallthru
      _
    // Predicated region
    $region6: #{resnet_decoder.3} parent=1 // pred_check
      _
    $region7: #{resnet_decoder.3} parent=1 // pred_check_branch
      %14 = sbr.rel (0) target = $region9
    $region8: #{resnet_decoder.3} parent=1 // pred_region
      _
    $region9: #{resnet_decoder.3} parent=1 // pred_fallthru
      _
    // Predicated region
    $region10: #{resnet_decoder.3} parent=1 // pred_check
      _
    $region11: #{resnet_decoder.3} parent=1 // pred_check_branch
      %16 = sbr.rel (0) target = $region13
    $region12: #{resnet_decoder.3} parent=1 // pred_region
      _
    $region13: #{resnet_decoder.3} parent=1 // pred_fallthru
      _
    %v17 = vld [vmem:[%s0] sm:$0xff]
    %v18 = vld [vmem:[%s0 + $0x8] sm:$0xff]
    %v19 = vld [vmem:[%s0 + $0x10] sm:$0xff]
    %v20 = vld [vmem:[%s0 + $0x18] sm:$0xff]
    %v21 = vld [vmem:[%s0 + $0x20] sm:$0xff]
    %v22 = vld [vmem:[%s0 + $0x28] sm:$0xff]
    %v23 = vld [vmem:[%s0 + $0x30] sm:$0xff]
    %v24 = vld [vmem:[%s0 + $0x38] sm:$0xff]
    %v25 = vld [vmem:[%s0 + $0x40] sm:$0xff]
    %v26 = vld [vmem:[%s0 + $0x48] sm:$0xff]
    %v27 = vld [vmem:[%s0 + $0x50] sm:$0xff]
    %v28 = vld [vmem:[%s0 + $0x58] sm:$0xff]
    %v29 = vld [vmem:[%s0 + $0x60] sm:$0xff]
    %v30 = vld [vmem:[%s0 + $0x68] sm:$0xff]
    %v31 = vld [vmem:[%s0 + $0x70] sm:$0xff]
    %v32 = vld [vmem:[%s0 + $0x78] sm:$0xff]
    %v33 = vld [vmem:[%s0 + $0x80] sm:$0xff]
    %v34 = vld [vmem:[%s0 + $0x88] sm:$0xff]
    %v35 = vld [vmem:[%s0 + $0x90] sm:$0xff]
    %v36 = vld [vmem:[%s0 + $0x98] sm:$0xff]
    %v37 = vld [vmem:[%s0 + $0xa0] sm:$0xff]
    %v38 = vld [vmem:[%s0 + $0xa8] sm:$0xff]
    %v39 = vld [vmem:[%s0 + $0xb0] sm:$0xff]
    %v40 = vld [vmem:[%s0 + $0xb8] sm:$0xff]
    %v41 = vld [vmem:[%s0 + $0xc0] sm:$0xff]
    %v42 = vld [vmem:[%s0 + $0xc8] sm:$0xff]
    %v43 = vld [vmem:[%s0 + $0xd0] sm:$0xff]
    %v44 = vld [vmem:[%s0 + $0xd8] sm:$0xff]
    %v45 = vld [vmem:[%s0 + $0xe0] sm:$0xff]
    %v46 = vld [vmem:[%s0 + $0xe8] sm:$0xff]
    %v47 = vld [vmem:[%s0 + $0xf0] sm:$0xff]
    %v48 = vld [vmem:[%s0 + $0xf8] sm:$0xff]
    %v49 = vld [vmem:[%s1] sm:$0xff]
    %v50 = vld [vmem:[%s1 + $0x8] sm:$0xff]
    %v51 = vld [vmem:[%s1 + $0x10] sm:$0xff]
    %v52 = vld [vmem:[%s1 + $0x18] sm:$0xff]
    %v53 = vld [vmem:[%s1 + $0x20] sm:$0xff]
    %v54 = vld [vmem:[%s1 + $0x28] sm:$0xff]
    %v55 = vld [vmem:[%s1 + $0x30] sm:$0xff]
    %v56 = vld [vmem:[%s1 + $0x38] sm:$0xff]
    %v57 = vld [vmem:[%s1 + $0x40] sm:$0xff]
    %v58 = vld [vmem:[%s1 + $0x48] sm:$0xff]
    %v59 = vld [vmem:[%s1 + $0x50] sm:$0xff]
    %v60 = vld [vmem:[%s1 + $0x58] sm:$0xff]
    %v61 = vld [vmem:[%s1 + $0x60] sm:$0xff]
    %v62 = vld [vmem:[%s1 + $0x68] sm:$0xff]
    %v63 = vld [vmem:[%s1 + $0x70] sm:$0xff]
    %v64 = vld [vmem:[%s1 + $0x78] sm:$0xff]
    %v65 = vld [vmem:[%s1 + $0x80] sm:$0xff]
    %v66 = vld [vmem:[%s1 + $0x88] sm:$0xff]
    %v67 = vld [vmem:[%s1 + $0x90] sm:$0xff]
    %v68 = vld [vmem:[%s1 + $0x98] sm:$0xff]
    %v69 = vld [vmem:[%s1 + $0xa0] sm:$0xff]
    %v70 = vld [vmem:[%s1 + $0xa8] sm:$0xff]
    %v71 = vld [vmem:[%s1 + $0xb0] sm:$0xff]
    %v72 = vld [vmem:[%s1 + $0xb8] sm:$0xff]
    %v73 = vld [vmem:[%s1 + $0xc0] sm:$0xff]
    %v74 = vld [vmem:[%s1 + $0xc8] sm:$0xff]
    %v75 = vld [vmem:[%s1 + $0xd0] sm:$0xff]
    %v76 = vld [vmem:[%s1 + $0xd8] sm:$0xff]
    %v77 = vld [vmem:[%s1 + $0xe0] sm:$0xff]
    %v78 = vld [vmem:[%s1 + $0xe8] sm:$0xff]
    %v79 = vld [vmem:[%s1 + $0xf0] sm:$0xff]
    %v80 = vld [vmem:[%s1 + $0xf8] sm:$0xff]
    %v81 = vld [vmem:[%s1 + $0x100] sm:$0xff]
    %v82 = vld [vmem:[%s1 + $0x108] sm:$0xff]
    %v83 = vld [vmem:[%s1 + $0x110] sm:$0xff]
    %v84 = vld [vmem:[%s1 + $0x118] sm:$0xff]
    %v85 = vld [vmem:[%s1 + $0x120] sm:$0xff]
    %v86 = vld [vmem:[%s1 + $0x128] sm:$0xff]
    %v87 = vld [vmem:[%s1 + $0x130] sm:$0xff]
    %v88 = vld [vmem:[%s1 + $0x138] sm:$0xff]
    %v89 = vld [vmem:[%s1 + $0x140] sm:$0xff]
    %v90 = vld [vmem:[%s1 + $0x148] sm:$0xff]
    %v91 = vld [vmem:[%s1 + $0x150] sm:$0xff]
    %v92 = vld [vmem:[%s1 + $0x158] sm:$0xff]
    %v93 = vld [vmem:[%s1 + $0x160] sm:$0xff]
    %v94 = vld [vmem:[%s1 + $0x168] sm:$0xff]
    %v95 = vld [vmem:[%s1 + $0x170] sm:$0xff]
    %v96 = vld [vmem:[%s1 + $0x178] sm:$0xff]
    %v97 = vld [vmem:[%s1 + $0x180] sm:$0xff]
    %v98 = vld [vmem:[%s1 + $0x188] sm:$0xff]
    %v99 = vld [vmem:[%s1 + $0x190] sm:$0xff]
    %v100 = vld [vmem:[%s1 + $0x198] sm:$0xff]
    %v101 = vld [vmem:[%s1 + $0x1a0] sm:$0xff]
    %v102 = vld [vmem:[%s1 + $0x1a8] sm:$0xff]
    %v103 = vld [vmem:[%s1 + $0x1b0] sm:$0xff]
    %v104 = vld [vmem:[%s1 + $0x1b8] sm:$0xff]
    %v105 = vld [vmem:[%s1 + $0x1c0] sm:$0xff]
    %v106 = vld [vmem:[%s1 + $0x1c8] sm:$0xff]
    %v107 = vld [vmem:[%s1 + $0x1d0] sm:$0xff]
    %v108 = vld [vmem:[%s1 + $0x1d8] sm:$0xff]
    %v109 = vld [vmem:[%s1 + $0x1e0] sm:$0xff]
    %v110 = vld [vmem:[%s1 + $0x1e8] sm:$0xff]
    %v111 = vld [vmem:[%s1 + $0x1f0] sm:$0xff]
    %v112 = vld [vmem:[%s1 + $0x1f8] sm:$0xff]
    %v113 = vld [vmem:[%s1 + $0x200] sm:$0xff]
    %v114 = vld [vmem:[%s1 + $0x208] sm:$0xff]
    %v115 = vld [vmem:[%s1 + $0x210] sm:$0xff]
    %v116 = vld [vmem:[%s1 + $0x218] sm:$0xff]
    %v117 = vld [vmem:[%s1 + $0x220] sm:$0xff]
    %v118 = vld [vmem:[%s1 + $0x228] sm:$0xff]
    %v119 = vld [vmem:[%s1 + $0x230] sm:$0xff]
    %v120 = vld [vmem:[%s1 + $0x238] sm:$0xff]
    %v121 = vld [vmem:[%s1 + $0x240] sm:$0xff]
    %v122 = vld [vmem:[%s1 + $0x248] sm:$0xff]
    %v123 = vld [vmem:[%s1 + $0x250] sm:$0xff]
    %v124 = vld [vmem:[%s1 + $0x258] sm:$0xff]
    %v125 = vld [vmem:[%s1 + $0x260] sm:$0xff]
    %v126 = vld [vmem:[%s1 + $0x268] sm:$0xff]
    %v127 = vld [vmem:[%s1 + $0x270] sm:$0xff]
    %v128 = vld [vmem:[%s1 + $0x278] sm:$0xff]
    %v129 = vld [vmem:[%s1 + $0x280] sm:$0xff]
    %v130 = vld [vmem:[%s1 + $0x288] sm:$0xff]
    %v131 = vld [vmem:[%s1 + $0x290] sm:$0xff]
    %v132 = vld [vmem:[%s1 + $0x298] sm:$0xff]
    %v133 = vld [vmem:[%s1 + $0x2a0] sm:$0xff]
    %v134 = vld [vmem:[%s1 + $0x2a8] sm:$0xff]
    %v135 = vld [vmem:[%s1 + $0x2b0] sm:$0xff]
    %v136 = vld [vmem:[%s1 + $0x2b8] sm:$0xff]
    %v137 = vld [vmem:[%s1 + $0x2c0] sm:$0xff]
    %v138 = vld [vmem:[%s1 + $0x2c8] sm:$0xff]
    %v139 = vld [vmem:[%s1 + $0x2d0] sm:$0xff]
    %v140 = vld [vmem:[%s1 + $0x2d8] sm:$0xff]
    %v141 = vld [vmem:[%s1 + $0x2e0] sm:$0xff]
    %v142 = vld [vmem:[%s1 + $0x2e8] sm:$0xff]
    %v143 = vld [vmem:[%s1 + $0x2f0] sm:$0xff]
    %v144 = vld [vmem:[%s1 + $0x2f8] sm:$0xff]
    %v145 = vld [vmem:[%s1 + $0x300] sm:$0xff]
    %v146 = vld [vmem:[%s1 + $0x308] sm:$0xff]
    %v147 = vld [vmem:[%s1 + $0x310] sm:$0xff]
    %v148 = vld [vmem:[%s1 + $0x318] sm:$0xff]
    %v149 = vld [vmem:[%s1 + $0x320] sm:$0xff]
    %v150 = vld [vmem:[%s1 + $0x328] sm:$0xff]
    %v151 = vld [vmem:[%s1 + $0x330] sm:$0xff]
    %v152 = vld [vmem:[%s1 + $0x338] sm:$0xff]
    %v153 = vld [vmem:[%s1 + $0x340] sm:$0xff]
    %v154 = vld [vmem:[%s1 + $0x348] sm:$0xff]
    %v155 = vld [vmem:[%s1 + $0x350] sm:$0xff]
    %v156 = vld [vmem:[%s1 + $0x358] sm:$0xff]
    %v157 = vld [vmem:[%s1 + $0x360] sm:$0xff]
    %v158 = vld [vmem:[%s1 + $0x368] sm:$0xff]
    %v159 = vld [vmem:[%s1 + $0x370] sm:$0xff]
    %v160 = vld [vmem:[%s1 + $0x378] sm:$0xff]
    %v161 = vld [vmem:[%s1 + $0x380] sm:$0xff]
    %v162 = vld [vmem:[%s1 + $0x388] sm:$0xff]
    %v163 = vld [vmem:[%s1 + $0x390] sm:$0xff]
    %v164 = vld [vmem:[%s1 + $0x398] sm:$0xff]
    %v165 = vld [vmem:[%s1 + $0x3a0] sm:$0xff]
    %v166 = vld [vmem:[%s1 + $0x3a8] sm:$0xff]
    %v167 = vld [vmem:[%s1 + $0x3b0] sm:$0xff]
    %v168 = vld [vmem:[%s1 + $0x3b8] sm:$0xff]
    %v169 = vld [vmem:[%s1 + $0x3c0] sm:$0xff]
    %v170 = vld [vmem:[%s1 + $0x3c8] sm:$0xff]
    %v171 = vld [vmem:[%s1 + $0x3d0] sm:$0xff]
    %v172 = vld [vmem:[%s1 + $0x3d8] sm:$0xff]
    %v173 = vld [vmem:[%s1 + $0x3e0] sm:$0xff]
    %v174 = vld [vmem:[%s1 + $0x3e8] sm:$0xff]
    %v175 = vld [vmem:[%s1 + $0x3f0] sm:$0xff]
    %v176 = vld [vmem:[%s1 + $0x3f8] sm:$0xff]
    %v177 = vld [vmem:[%s0] sm:$0xfe]
    %v178 = vld [vmem:[%s0 + $0x8] sm:$0xfe]
    %v179 = vld [vmem:[%s0 + $0x10] sm:$0xfe]
    %v180 = vld [vmem:[%s0 + $0x18] sm:$0xfe]
    %v181 = vld [vmem:[%s0 + $0x20] sm:$0xfe]
    %v182 = vld [vmem:[%s0 + $0x28] sm:$0xfe]
    %v183 = vld [vmem:[%s0 + $0x30] sm:$0xfe]
    %v184 = vld [vmem:[%s0 + $0x38] sm:$0xfe]
    %v185 = vld [vmem:[%s0 + $0x100] sm:$0x1]
    %v186 = vld [vmem:[%s0 + $0x108] sm:$0x1]
    %v187 = vld [vmem:[%s0 + $0x110] sm:$0x1]
    %v188 = vld [vmem:[%s0 + $0x118] sm:$0x1]
    %v189 = vld [vmem:[%s0 + $0x120] sm:$0x1]
    %v190 = vld [vmem:[%s0 + $0x128] sm:$0x1]
    %v191 = vld [vmem:[%s0 + $0x130] sm:$0x1]
    %v192 = vld [vmem:[%s0 + $0x138] sm:$0x1]
    %s193 = scalar_lea.vmem %s1, 1024
    %v194 = vld [vmem:[%s193] sm:$0xff]
    %v195 = vld [vmem:[%s193 + $0x8] sm:$0xff]
    %v196 = vld [vmem:[%s193 + $0x10] sm:$0xff]
    %v197 = vld [vmem:[%s193 + $0x18] sm:$0xff]
    %v198 = vld [vmem:[%s193 + $0x20] sm:$0xff]
    %v199 = vld [vmem:[%s193 + $0x28] sm:$0xff]
    %v200 = vld [vmem:[%s193 + $0x30] sm:$0xff]
    %v201 = vld [vmem:[%s193 + $0x38] sm:$0xff]
    %v202 = vld [vmem:[%s193 + $0x40] sm:$0xff]
    %v203 = vld [vmem:[%s193 + $0x48] sm:$0xff]
    %v204 = vld [vmem:[%s193 + $0x50] sm:$0xff]
    %v205 = vld [vmem:[%s193 + $0x58] sm:$0xff]
    %v206 = vld [vmem:[%s193 + $0x60] sm:$0xff]
    %v207 = vld [vmem:[%s193 + $0x68] sm:$0xff]
    %v208 = vld [vmem:[%s193 + $0x70] sm:$0xff]
    %v209 = vld [vmem:[%s193 + $0x78] sm:$0xff]
    %v210 = vld [vmem:[%s193 + $0x80] sm:$0xff]
    %v211 = vld [vmem:[%s193 + $0x88] sm:$0xff]
    %v212 = vld [vmem:[%s193 + $0x90] sm:$0xff]
    %v213 = vld [vmem:[%s193 + $0x98] sm:$0xff]
    %v214 = vld [vmem:[%s193 + $0xa0] sm:$0xff]
    %v215 = vld [vmem:[%s193 + $0xa8] sm:$0xff]
    %v216 = vld [vmem:[%s193 + $0xb0] sm:$0xff]
    %v217 = vld [vmem:[%s193 + $0xb8] sm:$0xff]
    %v218 = vld [vmem:[%s193 + $0xc0] sm:$0xff]
    %v219 = vld [vmem:[%s193 + $0xc8] sm:$0xff]
    %v220 = vld [vmem:[%s193 + $0xd0] sm:$0xff]
    %v221 = vld [vmem:[%s193 + $0xd8] sm:$0xff]
    %v222 = vld [vmem:[%s193 + $0xe0] sm:$0xff]
    %v223 = vld [vmem:[%s193 + $0xe8] sm:$0xff]
    %v224 = vld [vmem:[%s193 + $0xf0] sm:$0xff]
    %v225 = vld [vmem:[%s193 + $0xf8] sm:$0xff]
    %v226 = vld [vmem:[%s193 + $0x100] sm:$0xff]
    %v227 = vld [vmem:[%s193 + $0x108] sm:$0xff]
    %v228 = vld [vmem:[%s193 + $0x110] sm:$0xff]
    %v229 = vld [vmem:[%s193 + $0x118] sm:$0xff]
    %v230 = vld [vmem:[%s193 + $0x120] sm:$0xff]
    %v231 = vld [vmem:[%s193 + $0x128] sm:$0xff]
    %v232 = vld [vmem:[%s193 + $0x130] sm:$0xff]
    %v233 = vld [vmem:[%s193 + $0x138] sm:$0xff]
    %v234 = vld [vmem:[%s193 + $0x140] sm:$0xff]
    %v235 = vld [vmem:[%s193 + $0x148] sm:$0xff]
    %v236 = vld [vmem:[%s193 + $0x150] sm:$0xff]
    %v237 = vld [vmem:[%s193 + $0x158] sm:$0xff]
    %v238 = vld [vmem:[%s193 + $0x160] sm:$0xff]
    %v239 = vld [vmem:[%s193 + $0x168] sm:$0xff]
    %v240 = vld [vmem:[%s193 + $0x170] sm:$0xff]
    %v241 = vld [vmem:[%s193 + $0x178] sm:$0xff]
    %v242 = vld [vmem:[%s193 + $0x180] sm:$0xff]
    %v243 = vld [vmem:[%s193 + $0x188] sm:$0xff]
    %v244 = vld [vmem:[%s193 + $0x190] sm:$0xff]
    %v245 = vld [vmem:[%s193 + $0x198] sm:$0xff]
    %v246 = vld [vmem:[%s193 + $0x1a0] sm:$0xff]
    %v247 = vld [vmem:[%s193 + $0x1a8] sm:$0xff]
    %v248 = vld [vmem:[%s193 + $0x1b0] sm:$0xff]
    %v249 = vld [vmem:[%s193 + $0x1b8] sm:$0xff]
    %v250 = vld [vmem:[%s193 + $0x1c0] sm:$0xff]
    %v251 = vld [vmem:[%s193 + $0x1c8] sm:$0xff]
    %v252 = vld [vmem:[%s193 + $0x1d0] sm:$0xff]
    %v253 = vld [vmem:[%s193 + $0x1d8] sm:$0xff]
    %v254 = vld [vmem:[%s193 + $0x1e0] sm:$0xff]
    %v255 = vld [vmem:[%s193 + $0x1e8] sm:$0xff]
    %v256 = vld [vmem:[%s193 + $0x1f0] sm:$0xff]
    %v257 = vld [vmem:[%s193 + $0x1f8] sm:$0xff]
    %v258 = vld [vmem:[%s193 + $0x200] sm:$0xff]
    %v259 = vld [vmem:[%s193 + $0x208] sm:$0xff]
    %v260 = vld [vmem:[%s193 + $0x210] sm:$0xff]
    %v261 = vld [vmem:[%s193 + $0x218] sm:$0xff]
    %v262 = vld [vmem:[%s193 + $0x220] sm:$0xff]
    %v263 = vld [vmem:[%s193 + $0x228] sm:$0xff]
    %v264 = vld [vmem:[%s193 + $0x230] sm:$0xff]
    %v265 = vld [vmem:[%s193 + $0x238] sm:$0xff]
    %v266 = vld [vmem:[%s193 + $0x240] sm:$0xff]
    %v267 = vld [vmem:[%s193 + $0x248] sm:$0xff]
    %v268 = vld [vmem:[%s193 + $0x250] sm:$0xff]
    %v269 = vld [vmem:[%s193 + $0x258] sm:$0xff]
    %v270 = vld [vmem:[%s193 + $0x260] sm:$0xff]
    %v271 = vld [vmem:[%s193 + $0x268] sm:$0xff]
    %v272 = vld [vmem:[%s193 + $0x270] sm:$0xff]
    %v273 = vld [vmem:[%s193 + $0x278] sm:$0xff]
    %v274 = vld [vmem:[%s193 + $0x280] sm:$0xff]
    %v275 = vld [vmem:[%s193 + $0x288] sm:$0xff]
    %v276 = vld [vmem:[%s193 + $0x290] sm:$0xff]
    %v277 = vld [vmem:[%s193 + $0x298] sm:$0xff]
    %v278 = vld [vmem:[%s193 + $0x2a0] sm:$0xff]
    %v279 = vld [vmem:[%s193 + $0x2a8] sm:$0xff]
    %v280 = vld [vmem:[%s193 + $0x2b0] sm:$0xff]
    %v281 = vld [vmem:[%s193 + $0x2b8] sm:$0xff]
    %v282 = vld [vmem:[%s193 + $0x2c0] sm:$0xff]
    %v283 = vld [vmem:[%s193 + $0x2c8] sm:$0xff]
    %v284 = vld [vmem:[%s193 + $0x2d0] sm:$0xff]
    %v285 = vld [vmem:[%s193 + $0x2d8] sm:$0xff]
    %v286 = vld [vmem:[%s193 + $0x2e0] sm:$0xff]
    %v287 = vld [vmem:[%s193 + $0x2e8] sm:$0xff]
    %v288 = vld [vmem:[%s193 + $0x2f0] sm:$0xff]
    %v289 = vld [vmem:[%s193 + $0x2f8] sm:$0xff]
    %v290 = vld [vmem:[%s193 + $0x300] sm:$0xff]
    %v291 = vld [vmem:[%s193 + $0x308] sm:$0xff]
    %v292 = vld [vmem:[%s193 + $0x310] sm:$0xff]
    %v293 = vld [vmem:[%s193 + $0x318] sm:$0xff]
    %v294 = vld [vmem:[%s193 + $0x320] sm:$0xff]
    %v295 = vld [vmem:[%s193 + $0x328] sm:$0xff]
    %v296 = vld [vmem:[%s193 + $0x330] sm:$0xff]
    %v297 = vld [vmem:[%s193 + $0x338] sm:$0xff]
    %v298 = vld [vmem:[%s193 + $0x340] sm:$0xff]
    %v299 = vld [vmem:[%s193 + $0x348] sm:$0xff]
    %v300 = vld [vmem:[%s193 + $0x350] sm:$0xff]
    %v301 = vld [vmem:[%s193 + $0x358] sm:$0xff]
    %v302 = vld [vmem:[%s193 + $0x360] sm:$0xff]
    %v303 = vld [vmem:[%s193 + $0x368] sm:$0xff]
    %v304 = vld [vmem:[%s193 + $0x370] sm:$0xff]
    %v305 = vld [vmem:[%s193 + $0x378] sm:$0xff]
    %v306 = vld [vmem:[%s193 + $0x380] sm:$0xff]
    %v307 = vld [vmem:[%s193 + $0x388] sm:$0xff]
    %v308 = vld [vmem:[%s193 + $0x390] sm:$0xff]
    %v309 = vld [vmem:[%s193 + $0x398] sm:$0xff]
    %v310 = vld [vmem:[%s193 + $0x3a0] sm:$0xff]
    %v311 = vld [vmem:[%s193 + $0x3a8] sm:$0xff]
    %v312 = vld [vmem:[%s193 + $0x3b0] sm:$0xff]
    %v313 = vld [vmem:[%s193 + $0x3b8] sm:$0xff]
    %v314 = vld [vmem:[%s193 + $0x3c0] sm:$0xff]
    %v315 = vld [vmem:[%s193 + $0x3c8] sm:$0xff]
    %v316 = vld [vmem:[%s193 + $0x3d0] sm:$0xff]
    %v317 = vld [vmem:[%s193 + $0x3d8] sm:$0xff]
    %v318 = vld [vmem:[%s193 + $0x3e0] sm:$0xff]
    %v319 = vld [vmem:[%s193 + $0x3e8] sm:$0xff]
    %v320 = vld [vmem:[%s193 + $0x3f0] sm:$0xff]
    %v321 = vld [vmem:[%s193 + $0x3f8] sm:$0xff]
    %vm362 = vcmask 1046528
    %v363 = vrot.slane %v177, 1
    %v364 = vrot.slane %v25, 1
    %v365 = vsel %vm362, %v363, %v364
    %v366 = vrot.slane %v178, 1
    %v367 = vrot.slane %v26, 1
    %v368 = vsel %vm362, %v366, %v367
    %v369 = vrot.slane %v179, 1
    %v370 = vrot.slane %v27, 1
    %v371 = vsel %vm362, %v369, %v370
    %v372 = vrot.slane %v180, 1
    %v373 = vrot.slane %v28, 1
    %v374 = vsel %vm362, %v372, %v373
    %v375 = vrot.slane %v181, 1
    %v376 = vrot.slane %v29, 1
    %v377 = vsel %vm362, %v375, %v376
    %v378 = vrot.slane %v182, 1
    %v379 = vrot.slane %v30, 1
    %v380 = vsel %vm362, %v378, %v379
    %v381 = vrot.slane %v183, 1
    %v382 = vrot.slane %v31, 1
    %v383 = vsel %vm362, %v381, %v382
    %v384 = vrot.slane %v184, 1
    %v385 = vrot.slane %v32, 1
    %v386 = vsel %vm362, %v384, %v385
    %v387 = vrot.slane %v33, 1
    %v388 = vsel %vm362, %v364, %v387
    %v389 = vrot.slane %v34, 1
    %v390 = vsel %vm362, %v367, %v389
    %v391 = vrot.slane %v35, 1
    %v392 = vsel %vm362, %v370, %v391
    %v393 = vrot.slane %v36, 1
    %v394 = vsel %vm362, %v373, %v393
    %v395 = vrot.slane %v37, 1
    %v396 = vsel %vm362, %v376, %v395
    %v397 = vrot.slane %v38, 1
    %v398 = vsel %vm362, %v379, %v397
    %v399 = vrot.slane %v39, 1
    %v400 = vsel %vm362, %v382, %v399
    %v401 = vrot.slane %v40, 1
    %v402 = vsel %vm362, %v385, %v401
    %v403 = vrot.slane %v41, 1
    %v404 = vsel %vm362, %v387, %v403
    %v405 = vrot.slane %v42, 1
    %v406 = vsel %vm362, %v389, %v405
    %v407 = vrot.slane %v43, 1
    %v408 = vsel %vm362, %v391, %v407
    %v409 = vrot.slane %v44, 1
    %v410 = vsel %vm362, %v393, %v409
    %v411 = vrot.slane %v45, 1
    %v412 = vsel %vm362, %v395, %v411
    %v413 = vrot.slane %v46, 1
    %v414 = vsel %vm362, %v397, %v413
    %v415 = vrot.slane %v47, 1
    %v416 = vsel %vm362, %v399, %v415
    %v417 = vrot.slane %v48, 1
    %v418 = vsel %vm362, %v401, %v417
    %v419 = vrot.slane %v185, 1
    %v420 = vsel %vm362, %v403, %v419
    %v421 = vrot.slane %v186, 1
    %v422 = vsel %vm362, %v405, %v421
    %v423 = vrot.slane %v187, 1
    %v424 = vsel %vm362, %v407, %v423
    %v425 = vrot.slane %v188, 1
    %v426 = vsel %vm362, %v409, %v425
    %v427 = vrot.slane %v189, 1
    %v428 = vsel %vm362, %v411, %v427
    %v429 = vrot.slane %v190, 1
    %v430 = vsel %vm362, %v413, %v429
    %v431 = vrot.slane %v191, 1
    %v432 = vsel %vm362, %v415, %v431
    %v433 = vrot.slane %v192, 1
    %v434 = vsel %vm362, %v417, %v433
    %467 = vmatpush.msra.mxu0 %v209
    %468 = vmatpush.msra.mxu0 %v208
    %469 = vmatpush.msra.mxu0 %v207
    %470 = vmatpush.msra.mxu0 %v206
    %471 = vmatpush.msra.mxu0 %v205
    %472 = vmatpush.msra.mxu0 %v204
    %473 = vmatpush.msra.mxu0 %v203
    %474 = vmatpush.msra.mxu0 %v202
    %475 = vmatpush.msra.mxu0 %v201
    %476 = vmatpush.msra.mxu0 %v200
    %477 = vmatpush.msra.mxu0 %v199
    %478 = vmatpush.msra.mxu0 %v198
    %479 = vmatpush.msra.mxu0 %v197
    %480 = vmatpush.msra.mxu0 %v196
    %481 = vmatpush.msra.mxu0 %v195
    %482 = vmatpush.msra.mxu0 %v194
    %483 = vmatmul.f32.gmra.mxu0 %v365
    %v484 = vpop.f32.mrf.mxu0
    %v485 = vadd.f32 0.0, %v484
    %486 = vmatmul.f32.gmra.mxu0 %v388
    %v487 = vpop.f32.mrf.mxu0
    %v488 = vadd.f32 0.0, %v487
    %489 = vmatmul.f32.gmra.mxu0 %v404
    %v490 = vpop.f32.mrf.mxu0
    %v491 = vadd.f32 0.0, %v490
    %492 = vmatmul.f32.gmra.mxu0 %v420
    %v493 = vpop.f32.mrf.mxu0
    %v494 = vadd.f32 0.0, %v493
    %495 = vdwg.mxu0
    %496 = vmatpush.msra.mxu0 %v225
    %497 = vmatpush.msra.mxu0 %v224
    %498 = vmatpush.msra.mxu0 %v223
    %499 = vmatpush.msra.mxu0 %v222
    %500 = vmatpush.msra.mxu0 %v221
    %501 = vmatpush.msra.mxu0 %v220
    %502 = vmatpush.msra.mxu0 %v219
    %503 = vmatpush.msra.mxu0 %v218
    %504 = vmatpush.msra.mxu0 %v217
    %505 = vmatpush.msra.mxu0 %v216
    %506 = vmatpush.msra.mxu0 %v215
    %507 = vmatpush.msra.mxu0 %v214
    %508 = vmatpush.msra.mxu0 %v213
    %509 = vmatpush.msra.mxu0 %v212
    %510 = vmatpush.msra.mxu0 %v211
    %511 = vmatpush.msra.mxu0 %v210
    %512 = vmatmul.f32.gmra.mxu0 %v368
    %v513 = vpop.f32.mrf.mxu0
    %v514 = vadd.f32 %v485, %v513
    %515 = vmatmul.f32.gmra.mxu0 %v390
    %v516 = vpop.f32.mrf.mxu0
    %v517 = vadd.f32 %v488, %v516
    %518 = vmatmul.f32.gmra.mxu0 %v406
    %v519 = vpop.f32.mrf.mxu0
    %v520 = vadd.f32 %v491, %v519
    %521 = vmatmul.f32.gmra.mxu0 %v422
    %v522 = vpop.f32.mrf.mxu0
    %v523 = vadd.f32 %v494, %v522
    %524 = vdwg.mxu0
    %525 = vmatpush.msra.mxu0 %v241
    %526 = vmatpush.msra.mxu0 %v240
    %527 = vmatpush.msra.mxu0 %v239
    %528 = vmatpush.msra.mxu0 %v238
    %529 = vmatpush.msra.mxu0 %v237
    %530 = vmatpush.msra.mxu0 %v236
    %531 = vmatpush.msra.mxu0 %v235
    %532 = vmatpush.msra.mxu0 %v234
    %533 = vmatpush.msra.mxu0 %v233
    %534 = vmatpush.msra.mxu0 %v232
    %535 = vmatpush.msra.mxu0 %v231
    %536 = vmatpush.msra.mxu0 %v230
    %537 = vmatpush.msra.mxu0 %v229
    %538 = vmatpush.msra.mxu0 %v228
    %539 = vmatpush.msra.mxu0 %v227
    %540 = vmatpush.msra.mxu0 %v226
    %541 = vmatmul.f32.gmra.mxu0 %v371
    %v542 = vpop.f32.mrf.mxu0
    %v543 = vadd.f32 %v514, %v542
    %544 = vmatmul.f32.gmra.mxu0 %v392
    %v545 = vpop.f32.mrf.mxu0
    %v546 = vadd.f32 %v517, %v545
    %547 = vmatmul.f32.gmra.mxu0 %v408
    %v548 = vpop.f32.mrf.mxu0
    %v549 = vadd.f32 %v520, %v548
    %550 = vmatmul.f32.gmra.mxu0 %v424
    %v551 = vpop.f32.mrf.mxu0
    %v552 = vadd.f32 %v523, %v551
    %553 = vdwg.mxu0
    %554 = vmatpush.msra.mxu0 %v257
    %555 = vmatpush.msra.mxu0 %v256
    %556 = vmatpush.msra.mxu0 %v255
    %557 = vmatpush.msra.mxu0 %v254
    %558 = vmatpush.msra.mxu0 %v253
    %559 = vmatpush.msra.mxu0 %v252
    %560 = vmatpush.msra.mxu0 %v251
    %561 = vmatpush.msra.mxu0 %v250
    %562 = vmatpush.msra.mxu0 %v249
    %563 = vmatpush.msra.mxu0 %v248
    %564 = vmatpush.msra.mxu0 %v247
    %565 = vmatpush.msra.mxu0 %v246
    %566 = vmatpush.msra.mxu0 %v245
    %567 = vmatpush.msra.mxu0 %v244
    %568 = vmatpush.msra.mxu0 %v243
    %569 = vmatpush.msra.mxu0 %v242
    %570 = vmatmul.f32.gmra.mxu0 %v374
    %v571 = vpop.f32.mrf.mxu0
    %v572 = vadd.f32 %v543, %v571
    %573 = vmatmul.f32.gmra.mxu0 %v394
    %v574 = vpop.f32.mrf.mxu0
    %v575 = vadd.f32 %v546, %v574
    %576 = vmatmul.f32.gmra.mxu0 %v410
    %v577 = vpop.f32.mrf.mxu0
    %v578 = vadd.f32 %v549, %v577
    %579 = vmatmul.f32.gmra.mxu0 %v426
    %v580 = vpop.f32.mrf.mxu0
    %v581 = vadd.f32 %v552, %v580
    %582 = vdwg.mxu0
    %583 = vmatpush.msra.mxu0 %v273
    %584 = vmatpush.msra.mxu0 %v272
    %585 = vmatpush.msra.mxu0 %v271
    %586 = vmatpush.msra.mxu0 %v270
    %587 = vmatpush.msra.mxu0 %v269
    %588 = vmatpush.msra.mxu0 %v268
    %589 = vmatpush.msra.mxu0 %v267
    %590 = vmatpush.msra.mxu0 %v266
    %591 = vmatpush.msra.mxu0 %v265
    %592 = vmatpush.msra.mxu0 %v264
    %593 = vmatpush.msra.mxu0 %v263
    %594 = vmatpush.msra.mxu0 %v262
    %595 = vmatpush.msra.mxu0 %v261
    %596 = vmatpush.msra.mxu0 %v260
    %597 = vmatpush.msra.mxu0 %v259
    %598 = vmatpush.msra.mxu0 %v258
    %599 = vmatmul.f32.gmra.mxu0 %v377
    %v600 = vpop.f32.mrf.mxu0
    %v601 = vadd.f32 %v572, %v600
    %602 = vmatmul.f32.gmra.mxu0 %v396
    %v603 = vpop.f32.mrf.mxu0
    %v604 = vadd.f32 %v575, %v603
    %605 = vmatmul.f32.gmra.mxu0 %v412
    %v606 = vpop.f32.mrf.mxu0
    %v607 = vadd.f32 %v578, %v606
    %608 = vmatmul.f32.gmra.mxu0 %v428
    %v609 = vpop.f32.mrf.mxu0
    %v610 = vadd.f32 %v581, %v609
    %611 = vdwg.mxu0
    %612 = vmatpush.msra.mxu0 %v289
    %613 = vmatpush.msra.mxu0 %v288
    %614 = vmatpush.msra.mxu0 %v287
    %615 = vmatpush.msra.mxu0 %v286
    %616 = vmatpush.msra.mxu0 %v285
    %617 = vmatpush.msra.mxu0 %v284
    %618 = vmatpush.msra.mxu0 %v283
    %619 = vmatpush.msra.mxu0 %v282
    %620 = vmatpush.msra.mxu0 %v281
    %621 = vmatpush.msra.mxu0 %v280
    %622 = vmatpush.msra.mxu0 %v279
    %623 = vmatpush.msra.mxu0 %v278
    %624 = vmatpush.msra.mxu0 %v277
    %625 = vmatpush.msra.mxu0 %v276
    %626 = vmatpush.msra.mxu0 %v275
    %627 = vmatpush.msra.mxu0 %v274
    %628 = vmatmul.f32.gmra.mxu0 %v380
    %v629 = vpop.f32.mrf.mxu0
    %v630 = vadd.f32 %v601, %v629
    %631 = vmatmul.f32.gmra.mxu0 %v398
    %v632 = vpop.f32.mrf.mxu0
    %v633 = vadd.f32 %v604, %v632
    %634 = vmatmul.f32.gmra.mxu0 %v414
    %v635 = vpop.f32.mrf.mxu0
    %v636 = vadd.f32 %v607, %v635
    %637 = vmatmul.f32.gmra.mxu0 %v430
    %v638 = vpop.f32.mrf.mxu0
    %v639 = vadd.f32 %v610, %v638
    %640 = vdwg.mxu0
    %641 = vmatpush.msra.mxu0 %v305
    %642 = vmatpush.msra.mxu0 %v304
    %643 = vmatpush.msra.mxu0 %v303
    %644 = vmatpush.msra.mxu0 %v302
    %645 = vmatpush.msra.mxu0 %v301
    %646 = vmatpush.msra.mxu0 %v300
    %647 = vmatpush.msra.mxu0 %v299
    %648 = vmatpush.msra.mxu0 %v298
    %649 = vmatpush.msra.mxu0 %v297
    %650 = vmatpush.msra.mxu0 %v296
    %651 = vmatpush.msra.mxu0 %v295
    %652 = vmatpush.msra.mxu0 %v294
    %653 = vmatpush.msra.mxu0 %v293
    %654 = vmatpush.msra.mxu0 %v292
    %655 = vmatpush.msra.mxu0 %v291
    %656 = vmatpush.msra.mxu0 %v290
    %657 = vmatmul.f32.gmra.mxu0 %v383
    %v658 = vpop.f32.mrf.mxu0
    %v659 = vadd.f32 %v630, %v658
    %660 = vmatmul.f32.gmra.mxu0 %v400
    %v661 = vpop.f32.mrf.mxu0
    %v662 = vadd.f32 %v633, %v661
    %663 = vmatmul.f32.gmra.mxu0 %v416
    %v664 = vpop.f32.mrf.mxu0
    %v665 = vadd.f32 %v636, %v664
    %666 = vmatmul.f32.gmra.mxu0 %v432
    %v667 = vpop.f32.mrf.mxu0
    %v668 = vadd.f32 %v639, %v667
    %669 = vdwg.mxu0
    %670 = vmatpush.msra.mxu0 %v321
    %671 = vmatpush.msra.mxu0 %v320
    %672 = vmatpush.msra.mxu0 %v319
    %673 = vmatpush.msra.mxu0 %v318
    %674 = vmatpush.msra.mxu0 %v317
    %675 = vmatpush.msra.mxu0 %v316
    %676 = vmatpush.msra.mxu0 %v315
    %677 = vmatpush.msra.mxu0 %v314
    %678 = vmatpush.msra.mxu0 %v313
    %679 = vmatpush.msra.mxu0 %v312
    %680 = vmatpush.msra.mxu0 %v311
    %681 = vmatpush.msra.mxu0 %v310
    %682 = vmatpush.msra.mxu0 %v309
    %683 = vmatpush.msra.mxu0 %v308
    %684 = vmatpush.msra.mxu0 %v307
    %685 = vmatpush.msra.mxu0 %v306
    %686 = vmatmul.f32.gmra.mxu0 %v386
    %v687 = vpop.f32.mrf.mxu0
    %v688 = vadd.f32 %v659, %v687
    %689 = vmatmul.f32.gmra.mxu0 %v402
    %v690 = vpop.f32.mrf.mxu0
    %v691 = vadd.f32 %v662, %v690
    %692 = vmatmul.f32.gmra.mxu0 %v418
    %v693 = vpop.f32.mrf.mxu0
    %v694 = vadd.f32 %v665, %v693
    %695 = vmatmul.f32.gmra.mxu0 %v434
    %v696 = vpop.f32.mrf.mxu0
    %v697 = vadd.f32 %v668, %v696
    %698 = vdwg.mxu0
    %699 = vmatpush.msra.mxu0 %v64
    %700 = vmatpush.msra.mxu0 %v63
    %701 = vmatpush.msra.mxu0 %v62
    %702 = vmatpush.msra.mxu0 %v61
    %703 = vmatpush.msra.mxu0 %v60
    %704 = vmatpush.msra.mxu0 %v59
    %705 = vmatpush.msra.mxu0 %v58
    %706 = vmatpush.msra.mxu0 %v57
    %707 = vmatpush.msra.mxu0 %v56
    %708 = vmatpush.msra.mxu0 %v55
    %709 = vmatpush.msra.mxu0 %v54
    %710 = vmatpush.msra.mxu0 %v53
    %711 = vmatpush.msra.mxu0 %v52
    %712 = vmatpush.msra.mxu0 %v51
    %713 = vmatpush.msra.mxu0 %v50
    %714 = vmatpush.msra.mxu0 %v49
    %715 = vmatmul.f32.gmra.mxu0 %v17
    %v716 = vpop.f32.mrf.mxu0
    %v717 = vadd.f32 %v688, %v716
    %718 = vmatmul.f32.gmra.mxu0 %v25
    %v719 = vpop.f32.mrf.mxu0
    %v720 = vadd.f32 %v691, %v719
    %721 = vmatmul.f32.gmra.mxu0 %v33
    %v722 = vpop.f32.mrf.mxu0
    %v723 = vadd.f32 %v694, %v722
    %724 = vmatmul.f32.gmra.mxu0 %v41
    %v725 = vpop.f32.mrf.mxu0
    %v726 = vadd.f32 %v697, %v725
    %727 = vdwg.mxu0
    %728 = vmatpush.msra.mxu0 %v80
    %729 = vmatpush.msra.mxu0 %v79
    %730 = vmatpush.msra.mxu0 %v78
    %731 = vmatpush.msra.mxu0 %v77
    %732 = vmatpush.msra.mxu0 %v76
    %733 = vmatpush.msra.mxu0 %v75
    %734 = vmatpush.msra.mxu0 %v74
    %735 = vmatpush.msra.mxu0 %v73
    %736 = vmatpush.msra.mxu0 %v72
    %737 = vmatpush.msra.mxu0 %v71
    %738 = vmatpush.msra.mxu0 %v70
    %739 = vmatpush.msra.mxu0 %v69
    %740 = vmatpush.msra.mxu0 %v68
    %741 = vmatpush.msra.mxu0 %v67
    %742 = vmatpush.msra.mxu0 %v66
    %743 = vmatpush.msra.mxu0 %v65
    %744 = vmatmul.f32.gmra.mxu0 %v18
    %v745 = vpop.f32.mrf.mxu0
    %v746 = vadd.f32 %v717, %v745
    %747 = vmatmul.f32.gmra.mxu0 %v26
    %v748 = vpop.f32.mrf.mxu0
    %v749 = vadd.f32 %v720, %v748
    %750 = vmatmul.f32.gmra.mxu0 %v34
    %v751 = vpop.f32.mrf.mxu0
    %v752 = vadd.f32 %v723, %v751
    %753 = vmatmul.f32.gmra.mxu0 %v42
    %v754 = vpop.f32.mrf.mxu0
    %v755 = vadd.f32 %v726, %v754
    %756 = vdwg.mxu0
    %757 = vmatpush.msra.mxu0 %v96
    %758 = vmatpush.msra.mxu0 %v95
    %759 = vmatpush.msra.mxu0 %v94
    %760 = vmatpush.msra.mxu0 %v93
    %761 = vmatpush.msra.mxu0 %v92
    %762 = vmatpush.msra.mxu0 %v91
    %763 = vmatpush.msra.mxu0 %v90
    %764 = vmatpush.msra.mxu0 %v89
    %765 = vmatpush.msra.mxu0 %v88
    %766 = vmatpush.msra.mxu0 %v87
    %767 = vmatpush.msra.mxu0 %v86
    %768 = vmatpush.msra.mxu0 %v85
    %769 = vmatpush.msra.mxu0 %v84
    %770 = vmatpush.msra.mxu0 %v83
    %771 = vmatpush.msra.mxu0 %v82
    %772 = vmatpush.msra.mxu0 %v81
    %773 = vmatmul.f32.gmra.mxu0 %v19
    %v774 = vpop.f32.mrf.mxu0
    %v775 = vadd.f32 %v746, %v774
    %776 = vmatmul.f32.gmra.mxu0 %v27
    %v777 = vpop.f32.mrf.mxu0
    %v778 = vadd.f32 %v749, %v777
    %779 = vmatmul.f32.gmra.mxu0 %v35
    %v780 = vpop.f32.mrf.mxu0
    %v781 = vadd.f32 %v752, %v780
    %782 = vmatmul.f32.gmra.mxu0 %v43
    %v783 = vpop.f32.mrf.mxu0
    %v784 = vadd.f32 %v755, %v783
    %785 = vdwg.mxu0
    %786 = vmatpush.msra.mxu0 %v112
    %787 = vmatpush.msra.mxu0 %v111
    %788 = vmatpush.msra.mxu0 %v110
    %789 = vmatpush.msra.mxu0 %v109
    %790 = vmatpush.msra.mxu0 %v108
    %791 = vmatpush.msra.mxu0 %v107
    %792 = vmatpush.msra.mxu0 %v106
    %793 = vmatpush.msra.mxu0 %v105
    %794 = vmatpush.msra.mxu0 %v104
    %795 = vmatpush.msra.mxu0 %v103
    %796 = vmatpush.msra.mxu0 %v102
    %797 = vmatpush.msra.mxu0 %v101
    %798 = vmatpush.msra.mxu0 %v100
    %799 = vmatpush.msra.mxu0 %v99
    %800 = vmatpush.msra.mxu0 %v98
    %801 = vmatpush.msra.mxu0 %v97
    %802 = vmatmul.f32.gmra.mxu0 %v20
    %v803 = vpop.f32.mrf.mxu0
    %v804 = vadd.f32 %v775, %v803
    %805 = vmatmul.f32.gmra.mxu0 %v28
    %v806 = vpop.f32.mrf.mxu0
    %v807 = vadd.f32 %v778, %v806
    %808 = vmatmul.f32.gmra.mxu0 %v36
    %v809 = vpop.f32.mrf.mxu0
    %v810 = vadd.f32 %v781, %v809
    %811 = vmatmul.f32.gmra.mxu0 %v44
    %v812 = vpop.f32.mrf.mxu0
    %v813 = vadd.f32 %v784, %v812
    %814 = vdwg.mxu0
    %815 = vmatpush.msra.mxu0 %v128
    %816 = vmatpush.msra.mxu0 %v127
    %817 = vmatpush.msra.mxu0 %v126
    %818 = vmatpush.msra.mxu0 %v125
    %819 = vmatpush.msra.mxu0 %v124
    %820 = vmatpush.msra.mxu0 %v123
    %821 = vmatpush.msra.mxu0 %v122
    %822 = vmatpush.msra.mxu0 %v121
    %823 = vmatpush.msra.mxu0 %v120
    %824 = vmatpush.msra.mxu0 %v119
    %825 = vmatpush.msra.mxu0 %v118
    %826 = vmatpush.msra.mxu0 %v117
    %827 = vmatpush.msra.mxu0 %v116
    %828 = vmatpush.msra.mxu0 %v115
    %829 = vmatpush.msra.mxu0 %v114
    %830 = vmatpush.msra.mxu0 %v113
    %831 = vmatmul.f32.gmra.mxu0 %v21
    %v832 = vpop.f32.mrf.mxu0
    %v833 = vadd.f32 %v804, %v832
    %834 = vmatmul.f32.gmra.mxu0 %v29
    %v835 = vpop.f32.mrf.mxu0
    %v836 = vadd.f32 %v807, %v835
    %837 = vmatmul.f32.gmra.mxu0 %v37
    %v838 = vpop.f32.mrf.mxu0
    %v839 = vadd.f32 %v810, %v838
    %840 = vmatmul.f32.gmra.mxu0 %v45
    %v841 = vpop.f32.mrf.mxu0
    %v842 = vadd.f32 %v813, %v841
    %843 = vdwg.mxu0
    %844 = vmatpush.msra.mxu0 %v144
    %845 = vmatpush.msra.mxu0 %v143
    %846 = vmatpush.msra.mxu0 %v142
    %847 = vmatpush.msra.mxu0 %v141
    %848 = vmatpush.msra.mxu0 %v140
    %849 = vmatpush.msra.mxu0 %v139
    %850 = vmatpush.msra.mxu0 %v138
    %851 = vmatpush.msra.mxu0 %v137
    %852 = vmatpush.msra.mxu0 %v136
    %853 = vmatpush.msra.mxu0 %v135
    %854 = vmatpush.msra.mxu0 %v134
    %855 = vmatpush.msra.mxu0 %v133
    %856 = vmatpush.msra.mxu0 %v132
    %857 = vmatpush.msra.mxu0 %v131
    %858 = vmatpush.msra.mxu0 %v130
    %859 = vmatpush.msra.mxu0 %v129
    %860 = vmatmul.f32.gmra.mxu0 %v22
    %v861 = vpop.f32.mrf.mxu0
    %v862 = vadd.f32 %v833, %v861
    %863 = vmatmul.f32.gmra.mxu0 %v30
    %v864 = vpop.f32.mrf.mxu0
    %v865 = vadd.f32 %v836, %v864
    %866 = vmatmul.f32.gmra.mxu0 %v38
    %v867 = vpop.f32.mrf.mxu0
    %v868 = vadd.f32 %v839, %v867
    %869 = vmatmul.f32.gmra.mxu0 %v46
    %v870 = vpop.f32.mrf.mxu0
    %v871 = vadd.f32 %v842, %v870
    %872 = vdwg.mxu0
    %873 = vmatpush.msra.mxu0 %v160
    %874 = vmatpush.msra.mxu0 %v159
    %875 = vmatpush.msra.mxu0 %v158
    %876 = vmatpush.msra.mxu0 %v157
    %877 = vmatpush.msra.mxu0 %v156
    %878 = vmatpush.msra.mxu0 %v155
    %879 = vmatpush.msra.mxu0 %v154
    %880 = vmatpush.msra.mxu0 %v153
    %881 = vmatpush.msra.mxu0 %v152
    %882 = vmatpush.msra.mxu0 %v151
    %883 = vmatpush.msra.mxu0 %v150
    %884 = vmatpush.msra.mxu0 %v149
    %885 = vmatpush.msra.mxu0 %v148
    %886 = vmatpush.msra.mxu0 %v147
    %887 = vmatpush.msra.mxu0 %v146
    %888 = vmatpush.msra.mxu0 %v145
    %889 = vmatmul.f32.gmra.mxu0 %v23
    %v890 = vpop.f32.mrf.mxu0
    %v891 = vadd.f32 %v862, %v890
    %892 = vmatmul.f32.gmra.mxu0 %v31
    %v893 = vpop.f32.mrf.mxu0
    %v894 = vadd.f32 %v865, %v893
    %895 = vmatmul.f32.gmra.mxu0 %v39
    %v896 = vpop.f32.mrf.mxu0
    %v897 = vadd.f32 %v868, %v896
    %898 = vmatmul.f32.gmra.mxu0 %v47
    %v899 = vpop.f32.mrf.mxu0
    %v900 = vadd.f32 %v871, %v899
    %901 = vdwg.mxu0
    %902 = vmatpush.msra.mxu0 %v176
    %903 = vmatpush.msra.mxu0 %v175
    %904 = vmatpush.msra.mxu0 %v174
    %905 = vmatpush.msra.mxu0 %v173
    %906 = vmatpush.msra.mxu0 %v172
    %907 = vmatpush.msra.mxu0 %v171
    %908 = vmatpush.msra.mxu0 %v170
    %909 = vmatpush.msra.mxu0 %v169
    %910 = vmatpush.msra.mxu0 %v168
    %911 = vmatpush.msra.mxu0 %v167
    %912 = vmatpush.msra.mxu0 %v166
    %913 = vmatpush.msra.mxu0 %v165
    %914 = vmatpush.msra.mxu0 %v164
    %915 = vmatpush.msra.mxu0 %v163
    %916 = vmatpush.msra.mxu0 %v162
    %917 = vmatpush.msra.mxu0 %v161
    %918 = vmatmul.f32.gmra.mxu0 %v24
    %v919 = vpop.f32.mrf.mxu0
    %v920 = vadd.f32 %v891, %v919
    %921 = vmatmul.f32.gmra.mxu0 %v32
    %v922 = vpop.f32.mrf.mxu0
    %v923 = vadd.f32 %v894, %v922
    %924 = vmatmul.f32.gmra.mxu0 %v40
    %v925 = vpop.f32.mrf.mxu0
    %v926 = vadd.f32 %v897, %v925
    %927 = vmatmul.f32.gmra.mxu0 %v48
    %v928 = vpop.f32.mrf.mxu0
    %v929 = vadd.f32 %v900, %v928
    %930 = vdwg.mxu0
    %v931 = vld [vmem:[%s0] sm:$0xfc]
    %v932 = vld [vmem:[%s0 + $0x8] sm:$0xfc]
    %v933 = vld [vmem:[%s0 + $0x10] sm:$0xfc]
    %v934 = vld [vmem:[%s0 + $0x18] sm:$0xfc]
    %v935 = vld [vmem:[%s0 + $0x20] sm:$0xfc]
    %v936 = vld [vmem:[%s0 + $0x28] sm:$0xfc]
    %v937 = vld [vmem:[%s0 + $0x30] sm:$0xfc]
    %v938 = vld [vmem:[%s0 + $0x38] sm:$0xfc]
    %v939 = vld [vmem:[%s0 + $0x100] sm:$0x3]
    %v940 = vld [vmem:[%s0 + $0x108] sm:$0x3]
    %v941 = vld [vmem:[%s0 + $0x110] sm:$0x3]
    %v942 = vld [vmem:[%s0 + $0x118] sm:$0x3]
    %v943 = vld [vmem:[%s0 + $0x120] sm:$0x3]
    %v944 = vld [vmem:[%s0 + $0x128] sm:$0x3]
    %v945 = vld [vmem:[%s0 + $0x130] sm:$0x3]
    %v946 = vld [vmem:[%s0 + $0x138] sm:$0x3]
    %s947 = scalar_lea.vmem %s1, 2048
    %v948 = vld [vmem:[%s947] sm:$0xff]
    %v949 = vld [vmem:[%s947 + $0x8] sm:$0xff]
    %v950 = vld [vmem:[%s947 + $0x10] sm:$0xff]
    %v951 = vld [vmem:[%s947 + $0x18] sm:$0xff]
    %v952 = vld [vmem:[%s947 + $0x20] sm:$0xff]
    %v953 = vld [vmem:[%s947 + $0x28] sm:$0xff]
    %v954 = vld [vmem:[%s947 + $0x30] sm:$0xff]
    %v955 = vld [vmem:[%s947 + $0x38] sm:$0xff]
    %v956 = vld [vmem:[%s947 + $0x40] sm:$0xff]
    %v957 = vld [vmem:[%s947 + $0x48] sm:$0xff]
    %v958 = vld [vmem:[%s947 + $0x50] sm:$0xff]
    %v959 = vld [vmem:[%s947 + $0x58] sm:$0xff]
    %v960 = vld [vmem:[%s947 + $0x60] sm:$0xff]
    %v961 = vld [vmem:[%s947 + $0x68] sm:$0xff]
    %v962 = vld [vmem:[%s947 + $0x70] sm:$0xff]
    %v963 = vld [vmem:[%s947 + $0x78] sm:$0xff]
    %v964 = vld [vmem:[%s947 + $0x80] sm:$0xff]
    %v965 = vld [vmem:[%s947 + $0x88] sm:$0xff]
    %v966 = vld [vmem:[%s947 + $0x90] sm:$0xff]
    %v967 = vld [vmem:[%s947 + $0x98] sm:$0xff]
    %v968 = vld [vmem:[%s947 + $0xa0] sm:$0xff]
    %v969 = vld [vmem:[%s947 + $0xa8] sm:$0xff]
    %v970 = vld [vmem:[%s947 + $0xb0] sm:$0xff]
    %v971 = vld [vmem:[%s947 + $0xb8] sm:$0xff]
    %v972 = vld [vmem:[%s947 + $0xc0] sm:$0xff]
    %v973 = vld [vmem:[%s947 + $0xc8] sm:$0xff]
    %v974 = vld [vmem:[%s947 + $0xd0] sm:$0xff]
    %v975 = vld [vmem:[%s947 + $0xd8] sm:$0xff]
    %v976 = vld [vmem:[%s947 + $0xe0] sm:$0xff]
    %v977 = vld [vmem:[%s947 + $0xe8] sm:$0xff]
    %v978 = vld [vmem:[%s947 + $0xf0] sm:$0xff]
    %v979 = vld [vmem:[%s947 + $0xf8] sm:$0xff]
    %v980 = vld [vmem:[%s947 + $0x100] sm:$0xff]
    %v981 = vld [vmem:[%s947 + $0x108] sm:$0xff]
    %v982 = vld [vmem:[%s947 + $0x110] sm:$0xff]
    %v983 = vld [vmem:[%s947 + $0x118] sm:$0xff]
    %v984 = vld [vmem:[%s947 + $0x120] sm:$0xff]
    %v985 = vld [vmem:[%s947 + $0x128] sm:$0xff]
    %v986 = vld [vmem:[%s947 + $0x130] sm:$0xff]
    %v987 = vld [vmem:[%s947 + $0x138] sm:$0xff]
    %v988 = vld [vmem:[%s947 + $0x140] sm:$0xff]
    %v989 = vld [vmem:[%s947 + $0x148] sm:$0xff]
    %v990 = vld [vmem:[%s947 + $0x150] sm:$0xff]
    %v991 = vld [vmem:[%s947 + $0x158] sm:$0xff]
    %v992 = vld [vmem:[%s947 + $0x160] sm:$0xff]
    %v993 = vld [vmem:[%s947 + $0x168] sm:$0xff]
    %v994 = vld [vmem:[%s947 + $0x170] sm:$0xff]
    %v995 = vld [vmem:[%s947 + $0x178] sm:$0xff]
    %v996 = vld [vmem:[%s947 + $0x180] sm:$0xff]
    %v997 = vld [vmem:[%s947 + $0x188] sm:$0xff]
    %v998 = vld [vmem:[%s947 + $0x190] sm:$0xff]
    %v999 = vld [vmem:[%s947 + $0x198] sm:$0xff]
    %v1000 = vld [vmem:[%s947 + $0x1a0] sm:$0xff]
    %v1001 = vld [vmem:[%s947 + $0x1a8] sm:$0xff]
    %v1002 = vld [vmem:[%s947 + $0x1b0] sm:$0xff]
    %v1003 = vld [vmem:[%s947 + $0x1b8] sm:$0xff]
    %v1004 = vld [vmem:[%s947 + $0x1c0] sm:$0xff]
    %v1005 = vld [vmem:[%s947 + $0x1c8] sm:$0xff]
    %v1006 = vld [vmem:[%s947 + $0x1d0] sm:$0xff]
    %v1007 = vld [vmem:[%s947 + $0x1d8] sm:$0xff]
    %v1008 = vld [vmem:[%s947 + $0x1e0] sm:$0xff]
    %v1009 = vld [vmem:[%s947 + $0x1e8] sm:$0xff]
    %v1010 = vld [vmem:[%s947 + $0x1f0] sm:$0xff]
    %v1011 = vld [vmem:[%s947 + $0x1f8] sm:$0xff]
    %v1012 = vld [vmem:[%s947 + $0x200] sm:$0xff]
    %v1013 = vld [vmem:[%s947 + $0x208] sm:$0xff]
    %v1014 = vld [vmem:[%s947 + $0x210] sm:$0xff]
    %v1015 = vld [vmem:[%s947 + $0x218] sm:$0xff]
    %v1016 = vld [vmem:[%s947 + $0x220] sm:$0xff]
    %v1017 = vld [vmem:[%s947 + $0x228] sm:$0xff]
    %v1018 = vld [vmem:[%s947 + $0x230] sm:$0xff]
    %v1019 = vld [vmem:[%s947 + $0x238] sm:$0xff]
    %v1020 = vld [vmem:[%s947 + $0x240] sm:$0xff]
    %v1021 = vld [vmem:[%s947 + $0x248] sm:$0xff]
    %v1022 = vld [vmem:[%s947 + $0x250] sm:$0xff]
    %v1023 = vld [vmem:[%s947 + $0x258] sm:$0xff]
    %v1024 = vld [vmem:[%s947 + $0x260] sm:$0xff]
    %v1025 = vld [vmem:[%s947 + $0x268] sm:$0xff]
    %v1026 = vld [vmem:[%s947 + $0x270] sm:$0xff]
    %v1027 = vld [vmem:[%s947 + $0x278] sm:$0xff]
    %v1028 = vld [vmem:[%s947 + $0x280] sm:$0xff]
    %v1029 = vld [vmem:[%s947 + $0x288] sm:$0xff]
    %v1030 = vld [vmem:[%s947 + $0x290] sm:$0xff]
    %v1031 = vld [vmem:[%s947 + $0x298] sm:$0xff]
    %v1032 = vld [vmem:[%s947 + $0x2a0] sm:$0xff]
    %v1033 = vld [vmem:[%s947 + $0x2a8] sm:$0xff]
    %v1034 = vld [vmem:[%s947 + $0x2b0] sm:$0xff]
    %v1035 = vld [vmem:[%s947 + $0x2b8] sm:$0xff]
    %v1036 = vld [vmem:[%s947 + $0x2c0] sm:$0xff]
    %v1037 = vld [vmem:[%s947 + $0x2c8] sm:$0xff]
    %v1038 = vld [vmem:[%s947 + $0x2d0] sm:$0xff]
    %v1039 = vld [vmem:[%s947 + $0x2d8] sm:$0xff]
    %v1040 = vld [vmem:[%s947 + $0x2e0] sm:$0xff]
    %v1041 = vld [vmem:[%s947 + $0x2e8] sm:$0xff]
    %v1042 = vld [vmem:[%s947 + $0x2f0] sm:$0xff]
    %v1043 = vld [vmem:[%s947 + $0x2f8] sm:$0xff]
    %v1044 = vld [vmem:[%s947 + $0x300] sm:$0xff]
    %v1045 = vld [vmem:[%s947 + $0x308] sm:$0xff]
    %v1046 = vld [vmem:[%s947 + $0x310] sm:$0xff]
    %v1047 = vld [vmem:[%s947 + $0x318] sm:$0xff]
    %v1048 = vld [vmem:[%s947 + $0x320] sm:$0xff]
    %v1049 = vld [vmem:[%s947 + $0x328] sm:$0xff]
    %v1050 = vld [vmem:[%s947 + $0x330] sm:$0xff]
    %v1051 = vld [vmem:[%s947 + $0x338] sm:$0xff]
    %v1052 = vld [vmem:[%s947 + $0x340] sm:$0xff]
    %v1053 = vld [vmem:[%s947 + $0x348] sm:$0xff]
    %v1054 = vld [vmem:[%s947 + $0x350] sm:$0xff]
    %v1055 = vld [vmem:[%s947 + $0x358] sm:$0xff]
    %v1056 = vld [vmem:[%s947 + $0x360] sm:$0xff]
    %v1057 = vld [vmem:[%s947 + $0x368] sm:$0xff]
    %v1058 = vld [vmem:[%s947 + $0x370] sm:$0xff]
    %v1059 = vld [vmem:[%s947 + $0x378] sm:$0xff]
    %v1060 = vld [vmem:[%s947 + $0x380] sm:$0xff]
    %v1061 = vld [vmem:[%s947 + $0x388] sm:$0xff]
    %v1062 = vld [vmem:[%s947 + $0x390] sm:$0xff]
    %v1063 = vld [vmem:[%s947 + $0x398] sm:$0xff]
    %v1064 = vld [vmem:[%s947 + $0x3a0] sm:$0xff]
    %v1065 = vld [vmem:[%s947 + $0x3a8] sm:$0xff]
    %v1066 = vld [vmem:[%s947 + $0x3b0] sm:$0xff]
    %v1067 = vld [vmem:[%s947 + $0x3b8] sm:$0xff]
    %v1068 = vld [vmem:[%s947 + $0x3c0] sm:$0xff]
    %v1069 = vld [vmem:[%s947 + $0x3c8] sm:$0xff]
    %v1070 = vld [vmem:[%s947 + $0x3d0] sm:$0xff]
    %v1071 = vld [vmem:[%s947 + $0x3d8] sm:$0xff]
    %v1072 = vld [vmem:[%s947 + $0x3e0] sm:$0xff]
    %v1073 = vld [vmem:[%s947 + $0x3e8] sm:$0xff]
    %v1074 = vld [vmem:[%s947 + $0x3f0] sm:$0xff]
    %v1075 = vld [vmem:[%s947 + $0x3f8] sm:$0xff]
    %vm1092 = vcmask 1045504
    %v1093 = vrot.slane %v931, 2
    %v1094 = vrot.slane %v25, 2
    %v1095 = vsel %vm1092, %v1093, %v1094
    %v1096 = vrot.slane %v932, 2
    %v1097 = vrot.slane %v26, 2
    %v1098 = vsel %vm1092, %v1096, %v1097
    %v1099 = vrot.slane %v933, 2
    %v1100 = vrot.slane %v27, 2
    %v1101 = vsel %vm1092, %v1099, %v1100
    %v1102 = vrot.slane %v934, 2
    %v1103 = vrot.slane %v28, 2
    %v1104 = vsel %vm1092, %v1102, %v1103
    %v1105 = vrot.slane %v935, 2
    %v1106 = vrot.slane %v29, 2
    %v1107 = vsel %vm1092, %v1105, %v1106
    %v1108 = vrot.slane %v936, 2
    %v1109 = vrot.slane %v30, 2
    %v1110 = vsel %vm1092, %v1108, %v1109
    %v1111 = vrot.slane %v937, 2
    %v1112 = vrot.slane %v31, 2
    %v1113 = vsel %vm1092, %v1111, %v1112
    %v1114 = vrot.slane %v938, 2
    %v1115 = vrot.slane %v32, 2
    %v1116 = vsel %vm1092, %v1114, %v1115
    %v1117 = vrot.slane %v33, 2
    %v1118 = vsel %vm1092, %v1094, %v1117
    %v1119 = vrot.slane %v34, 2
    %v1120 = vsel %vm1092, %v1097, %v1119
    %v1121 = vrot.slane %v35, 2
    %v1122 = vsel %vm1092, %v1100, %v1121
    %v1123 = vrot.slane %v36, 2
    %v1124 = vsel %vm1092, %v1103, %v1123
    %v1125 = vrot.slane %v37, 2
    %v1126 = vsel %vm1092, %v1106, %v1125
    %v1127 = vrot.slane %v38, 2
    %v1128 = vsel %vm1092, %v1109, %v1127
    %v1129 = vrot.slane %v39, 2
    %v1130 = vsel %vm1092, %v1112, %v1129
    %v1131 = vrot.slane %v40, 2
    %v1132 = vsel %vm1092, %v1115, %v1131
    %v1133 = vrot.slane %v41, 2
    %v1134 = vsel %vm1092, %v1117, %v1133
    %v1135 = vrot.slane %v42, 2
    %v1136 = vsel %vm1092, %v1119, %v1135
    %v1137 = vrot.slane %v43, 2
    %v1138 = vsel %vm1092, %v1121, %v1137
    %v1139 = vrot.slane %v44, 2
    %v1140 = vsel %vm1092, %v1123, %v1139
    %v1141 = vrot.slane %v45, 2
    %v1142 = vsel %vm1092, %v1125, %v1141
    %v1143 = vrot.slane %v46, 2
    %v1144 = vsel %vm1092, %v1127, %v1143
    %v1145 = vrot.slane %v47, 2
    %v1146 = vsel %vm1092, %v1129, %v1145
    %v1147 = vrot.slane %v48, 2
    %v1148 = vsel %vm1092, %v1131, %v1147
    %v1149 = vrot.slane %v939, 2
    %v1150 = vsel %vm1092, %v1133, %v1149
    %v1151 = vrot.slane %v940, 2
    %v1152 = vsel %vm1092, %v1135, %v1151
    %v1153 = vrot.slane %v941, 2
    %v1154 = vsel %vm1092, %v1137, %v1153
    %v1155 = vrot.slane %v942, 2
    %v1156 = vsel %vm1092, %v1139, %v1155
    %v1157 = vrot.slane %v943, 2
    %v1158 = vsel %vm1092, %v1141, %v1157
    %v1159 = vrot.slane %v944, 2
    %v1160 = vsel %vm1092, %v1143, %v1159
    %v1161 = vrot.slane %v945, 2
    %v1162 = vsel %vm1092, %v1145, %v1161
    %v1163 = vrot.slane %v946, 2
    %v1164 = vsel %vm1092, %v1147, %v1163
    %1197 = vmatpush.msra.mxu0 %v963
    %1198 = vmatpush.msra.mxu0 %v962
    %1199 = vmatpush.msra.mxu0 %v961
    %1200 = vmatpush.msra.mxu0 %v960
    %1201 = vmatpush.msra.mxu0 %v959
    %1202 = vmatpush.msra.mxu0 %v958
    %1203 = vmatpush.msra.mxu0 %v957
    %1204 = vmatpush.msra.mxu0 %v956
    %1205 = vmatpush.msra.mxu0 %v955
    %1206 = vmatpush.msra.mxu0 %v954
    %1207 = vmatpush.msra.mxu0 %v953
    %1208 = vmatpush.msra.mxu0 %v952
    %1209 = vmatpush.msra.mxu0 %v951
    %1210 = vmatpush.msra.mxu0 %v950
    %1211 = vmatpush.msra.mxu0 %v949
    %1212 = vmatpush.msra.mxu0 %v948
    %1213 = vmatmul.f32.gmra.mxu0 %v1095
    %v1214 = vpop.f32.mrf.mxu0
    %v1215 = vadd.f32 0.0, %v1214
    %1216 = vmatmul.f32.gmra.mxu0 %v1118
    %v1217 = vpop.f32.mrf.mxu0
    %v1218 = vadd.f32 0.0, %v1217
    %1219 = vmatmul.f32.gmra.mxu0 %v1134
    %v1220 = vpop.f32.mrf.mxu0
    %v1221 = vadd.f32 0.0, %v1220
    %1222 = vmatmul.f32.gmra.mxu0 %v1150
    %v1223 = vpop.f32.mrf.mxu0
    %v1224 = vadd.f32 0.0, %v1223
    %1225 = vdwg.mxu0
    %1226 = vmatpush.msra.mxu0 %v979
    %1227 = vmatpush.msra.mxu0 %v978
    %1228 = vmatpush.msra.mxu0 %v977
    %1229 = vmatpush.msra.mxu0 %v976
    %1230 = vmatpush.msra.mxu0 %v975
    %1231 = vmatpush.msra.mxu0 %v974
    %1232 = vmatpush.msra.mxu0 %v973
    %1233 = vmatpush.msra.mxu0 %v972
    %1234 = vmatpush.msra.mxu0 %v971
    %1235 = vmatpush.msra.mxu0 %v970
    %1236 = vmatpush.msra.mxu0 %v969
    %1237 = vmatpush.msra.mxu0 %v968
    %1238 = vmatpush.msra.mxu0 %v967
    %1239 = vmatpush.msra.mxu0 %v966
    %1240 = vmatpush.msra.mxu0 %v965
    %1241 = vmatpush.msra.mxu0 %v964
    %1242 = vmatmul.f32.gmra.mxu0 %v1098
    %v1243 = vpop.f32.mrf.mxu0
    %v1244 = vadd.f32 %v1215, %v1243
    %1245 = vmatmul.f32.gmra.mxu0 %v1120
    %v1246 = vpop.f32.mrf.mxu0
    %v1247 = vadd.f32 %v1218, %v1246
    %1248 = vmatmul.f32.gmra.mxu0 %v1136
    %v1249 = vpop.f32.mrf.mxu0
    %v1250 = vadd.f32 %v1221, %v1249
    %1251 = vmatmul.f32.gmra.mxu0 %v1152
    %v1252 = vpop.f32.mrf.mxu0
    %v1253 = vadd.f32 %v1224, %v1252
    %1254 = vdwg.mxu0
    %1255 = vmatpush.msra.mxu0 %v995
    %1256 = vmatpush.msra.mxu0 %v994
    %1257 = vmatpush.msra.mxu0 %v993
    %1258 = vmatpush.msra.mxu0 %v992
    %1259 = vmatpush.msra.mxu0 %v991
    %1260 = vmatpush.msra.mxu0 %v990
    %1261 = vmatpush.msra.mxu0 %v989
    %1262 = vmatpush.msra.mxu0 %v988
    %1263 = vmatpush.msra.mxu0 %v987
    %1264 = vmatpush.msra.mxu0 %v986
    %1265 = vmatpush.msra.mxu0 %v985
    %1266 = vmatpush.msra.mxu0 %v984
    %1267 = vmatpush.msra.mxu0 %v983
    %1268 = vmatpush.msra.mxu0 %v982
    %1269 = vmatpush.msra.mxu0 %v981
    %1270 = vmatpush.msra.mxu0 %v980
    %1271 = vmatmul.f32.gmra.mxu0 %v1101
    %v1272 = vpop.f32.mrf.mxu0
    %v1273 = vadd.f32 %v1244, %v1272
    %1274 = vmatmul.f32.gmra.mxu0 %v1122
    %v1275 = vpop.f32.mrf.mxu0
    %v1276 = vadd.f32 %v1247, %v1275
    %1277 = vmatmul.f32.gmra.mxu0 %v1138
    %v1278 = vpop.f32.mrf.mxu0
    %v1279 = vadd.f32 %v1250, %v1278
    %1280 = vmatmul.f32.gmra.mxu0 %v1154
    %v1281 = vpop.f32.mrf.mxu0
    %v1282 = vadd.f32 %v1253, %v1281
    %1283 = vdwg.mxu0
    %1284 = vmatpush.msra.mxu0 %v1011
    %1285 = vmatpush.msra.mxu0 %v1010
    %1286 = vmatpush.msra.mxu0 %v1009
    %1287 = vmatpush.msra.mxu0 %v1008
    %1288 = vmatpush.msra.mxu0 %v1007
    %1289 = vmatpush.msra.mxu0 %v1006
    %1290 = vmatpush.msra.mxu0 %v1005
    %1291 = vmatpush.msra.mxu0 %v1004
    %1292 = vmatpush.msra.mxu0 %v1003
    %1293 = vmatpush.msra.mxu0 %v1002
    %1294 = vmatpush.msra.mxu0 %v1001
    %1295 = vmatpush.msra.mxu0 %v1000
    %1296 = vmatpush.msra.mxu0 %v999
    %1297 = vmatpush.msra.mxu0 %v998
    %1298 = vmatpush.msra.mxu0 %v997
    %1299 = vmatpush.msra.mxu0 %v996
    %1300 = vmatmul.f32.gmra.mxu0 %v1104
    %v1301 = vpop.f32.mrf.mxu0
    %v1302 = vadd.f32 %v1273, %v1301
    %1303 = vmatmul.f32.gmra.mxu0 %v1124
    %v1304 = vpop.f32.mrf.mxu0
    %v1305 = vadd.f32 %v1276, %v1304
    %1306 = vmatmul.f32.gmra.mxu0 %v1140
    %v1307 = vpop.f32.mrf.mxu0
    %v1308 = vadd.f32 %v1279, %v1307
    %1309 = vmatmul.f32.gmra.mxu0 %v1156
    %v1310 = vpop.f32.mrf.mxu0
    %v1311 = vadd.f32 %v1282, %v1310
    %1312 = vdwg.mxu0
    %1313 = vmatpush.msra.mxu0 %v1027
    %1314 = vmatpush.msra.mxu0 %v1026
    %1315 = vmatpush.msra.mxu0 %v1025
    %1316 = vmatpush.msra.mxu0 %v1024
    %1317 = vmatpush.msra.mxu0 %v1023
    %1318 = vmatpush.msra.mxu0 %v1022
    %1319 = vmatpush.msra.mxu0 %v1021
    %1320 = vmatpush.msra.mxu0 %v1020
    %1321 = vmatpush.msra.mxu0 %v1019
    %1322 = vmatpush.msra.mxu0 %v1018
    %1323 = vmatpush.msra.mxu0 %v1017
    %1324 = vmatpush.msra.mxu0 %v1016
    %1325 = vmatpush.msra.mxu0 %v1015
    %1326 = vmatpush.msra.mxu0 %v1014
    %1327 = vmatpush.msra.mxu0 %v1013
    %1328 = vmatpush.msra.mxu0 %v1012
    %1329 = vmatmul.f32.gmra.mxu0 %v1107
    %v1330 = vpop.f32.mrf.mxu0
    %v1331 = vadd.f32 %v1302, %v1330
    %1332 = vmatmul.f32.gmra.mxu0 %v1126
    %v1333 = vpop.f32.mrf.mxu0
    %v1334 = vadd.f32 %v1305, %v1333
    %1335 = vmatmul.f32.gmra.mxu0 %v1142
    %v1336 = vpop.f32.mrf.mxu0
    %v1337 = vadd.f32 %v1308, %v1336
    %1338 = vmatmul.f32.gmra.mxu0 %v1158
    %v1339 = vpop.f32.mrf.mxu0
    %v1340 = vadd.f32 %v1311, %v1339
    %1341 = vdwg.mxu0
    %1342 = vmatpush.msra.mxu0 %v1043
    %1343 = vmatpush.msra.mxu0 %v1042
    %1344 = vmatpush.msra.mxu0 %v1041
    %1345 = vmatpush.msra.mxu0 %v1040
    %1346 = vmatpush.msra.mxu0 %v1039
    %1347 = vmatpush.msra.mxu0 %v1038
    %1348 = vmatpush.msra.mxu0 %v1037
    %1349 = vmatpush.msra.mxu0 %v1036
    %1350 = vmatpush.msra.mxu0 %v1035
    %1351 = vmatpush.msra.mxu0 %v1034
    %1352 = vmatpush.msra.mxu0 %v1033
    %1353 = vmatpush.msra.mxu0 %v1032
    %1354 = vmatpush.msra.mxu0 %v1031
    %1355 = vmatpush.msra.mxu0 %v1030
    %1356 = vmatpush.msra.mxu0 %v1029
    %1357 = vmatpush.msra.mxu0 %v1028
    %1358 = vmatmul.f32.gmra.mxu0 %v1110
    %v1359 = vpop.f32.mrf.mxu0
    %v1360 = vadd.f32 %v1331, %v1359
    %1361 = vmatmul.f32.gmra.mxu0 %v1128
    %v1362 = vpop.f32.mrf.mxu0
    %v1363 = vadd.f32 %v1334, %v1362
    %1364 = vmatmul.f32.gmra.mxu0 %v1144
    %v1365 = vpop.f32.mrf.mxu0
    %v1366 = vadd.f32 %v1337, %v1365
    %1367 = vmatmul.f32.gmra.mxu0 %v1160
    %v1368 = vpop.f32.mrf.mxu0
    %v1369 = vadd.f32 %v1340, %v1368
    %1370 = vdwg.mxu0
    %1371 = vmatpush.msra.mxu0 %v1059
    %1372 = vmatpush.msra.mxu0 %v1058
    %1373 = vmatpush.msra.mxu0 %v1057
    %1374 = vmatpush.msra.mxu0 %v1056
    %1375 = vmatpush.msra.mxu0 %v1055
    %1376 = vmatpush.msra.mxu0 %v1054
    %1377 = vmatpush.msra.mxu0 %v1053
    %1378 = vmatpush.msra.mxu0 %v1052
    %1379 = vmatpush.msra.mxu0 %v1051
    %1380 = vmatpush.msra.mxu0 %v1050
    %1381 = vmatpush.msra.mxu0 %v1049
    %1382 = vmatpush.msra.mxu0 %v1048
    %1383 = vmatpush.msra.mxu0 %v1047
    %1384 = vmatpush.msra.mxu0 %v1046
    %1385 = vmatpush.msra.mxu0 %v1045
    %1386 = vmatpush.msra.mxu0 %v1044
    %1387 = vmatmul.f32.gmra.mxu0 %v1113
    %v1388 = vpop.f32.mrf.mxu0
    %v1389 = vadd.f32 %v1360, %v1388
    %1390 = vmatmul.f32.gmra.mxu0 %v1130
    %v1391 = vpop.f32.mrf.mxu0
    %v1392 = vadd.f32 %v1363, %v1391
    %1393 = vmatmul.f32.gmra.mxu0 %v1146
    %v1394 = vpop.f32.mrf.mxu0
    %v1395 = vadd.f32 %v1366, %v1394
    %1396 = vmatmul.f32.gmra.mxu0 %v1162
    %v1397 = vpop.f32.mrf.mxu0
    %v1398 = vadd.f32 %v1369, %v1397
    %1399 = vdwg.mxu0
    %1400 = vmatpush.msra.mxu0 %v1075
    %1401 = vmatpush.msra.mxu0 %v1074
    %1402 = vmatpush.msra.mxu0 %v1073
    %1403 = vmatpush.msra.mxu0 %v1072
    %1404 = vmatpush.msra.mxu0 %v1071
    %1405 = vmatpush.msra.mxu0 %v1070
    %1406 = vmatpush.msra.mxu0 %v1069
    %1407 = vmatpush.msra.mxu0 %v1068
    %1408 = vmatpush.msra.mxu0 %v1067
    %1409 = vmatpush.msra.mxu0 %v1066
    %1410 = vmatpush.msra.mxu0 %v1065
    %1411 = vmatpush.msra.mxu0 %v1064
    %1412 = vmatpush.msra.mxu0 %v1063
    %1413 = vmatpush.msra.mxu0 %v1062
    %1414 = vmatpush.msra.mxu0 %v1061
    %1415 = vmatpush.msra.mxu0 %v1060
    %1416 = vmatmul.f32.gmra.mxu0 %v1116
    %v1417 = vpop.f32.mrf.mxu0
    %v1418 = vadd.f32 %v1389, %v1417
    %1419 = vmatmul.f32.gmra.mxu0 %v1132
    %v1420 = vpop.f32.mrf.mxu0
    %v1421 = vadd.f32 %v1392, %v1420
    %1422 = vmatmul.f32.gmra.mxu0 %v1148
    %v1423 = vpop.f32.mrf.mxu0
    %v1424 = vadd.f32 %v1395, %v1423
    %1425 = vmatmul.f32.gmra.mxu0 %v1164
    %v1426 = vpop.f32.mrf.mxu0
    %v1427 = vadd.f32 %v1398, %v1426
    %1428 = vdwg.mxu0
    %v1429 = vadd.f32 %v920, %v1418
    %v1430 = vadd.f32 %v923, %v1421
    %v1431 = vadd.f32 %v926, %v1424
    %v1432 = vadd.f32 %v929, %v1427
    %v1433 = vld [vmem:[#allocation2] sm:$0x1]
    %v1435 = vperm.slane %v1433, 0
    %1436 = vset.pattern.permute.xlu0 0
    %1437 = vperm.xlu0 %1436, %v1435
    %v1438 = vpop.permute.xlu0 %1437
    %v1440 = vadd.f32 %v1429, %v1438
    %v1441 = vadd.f32 %v1430, %v1438
    %v1442 = vadd.f32 %v1431, %v1438
    %v1443 = vadd.f32 %v1432, %v1438
    %v1444 = vtanh.pop %v1440
    %v1445 = vtanh.pop %v1441
    %v1446 = vtanh.pop %v1442
    %v1447 = vtanh.pop %v1443
    %vm1448 = vcmask 261120
    %1449 = vst.msk [vmem:[#allocation3] sm:$0xff] %vm1448, %v1444
    %1450 = vst.msk [vmem:[#allocation3 + $0x8] sm:$0xff] %vm1448, %v1445
    %1451 = vst.msk [vmem:[#allocation3 + $0x10] sm:$0xff] %vm1448, %v1446
    %1452 = vst.msk [vmem:[#allocation3 + $0x18] sm:$0xff] %vm1448, %v1447
    %s1453 = scalar_lea.vmem %s0, 320
    %v1454 = vld [vmem:[%s1453] sm:$0xff]
    %v1455 = vld [vmem:[%s1453 + $0x8] sm:$0xff]
    %v1456 = vld [vmem:[%s1453 + $0x10] sm:$0xff]
    %v1457 = vld [vmem:[%s1453 + $0x18] sm:$0xff]
    %v1458 = vld [vmem:[%s1453 + $0x20] sm:$0xff]
    %v1459 = vld [vmem:[%s1453 + $0x28] sm:$0xff]
    %v1460 = vld [vmem:[%s1453 + $0x30] sm:$0xff]
    %v1461 = vld [vmem:[%s1453 + $0x38] sm:$0xff]
    %v1462 = vld [vmem:[%s1453 + $0x40] sm:$0xff]
    %v1463 = vld [vmem:[%s1453 + $0x48] sm:$0xff]
    %v1464 = vld [vmem:[%s1453 + $0x50] sm:$0xff]
    %v1465 = vld [vmem:[%s1453 + $0x58] sm:$0xff]
    %v1466 = vld [vmem:[%s1453 + $0x60] sm:$0xff]
    %v1467 = vld [vmem:[%s1453 + $0x68] sm:$0xff]
    %v1468 = vld [vmem:[%s1453 + $0x70] sm:$0xff]
    %v1469 = vld [vmem:[%s1453 + $0x78] sm:$0xff]
    %v1470 = vld [vmem:[%s1453 + $0x80] sm:$0xff]
    %v1471 = vld [vmem:[%s1453 + $0x88] sm:$0xff]
    %v1472 = vld [vmem:[%s1453 + $0x90] sm:$0xff]
    %v1473 = vld [vmem:[%s1453 + $0x98] sm:$0xff]
    %v1474 = vld [vmem:[%s1453 + $0xa0] sm:$0xff]
    %v1475 = vld [vmem:[%s1453 + $0xa8] sm:$0xff]
    %v1476 = vld [vmem:[%s1453 + $0xb0] sm:$0xff]
    %v1477 = vld [vmem:[%s1453 + $0xb8] sm:$0xff]
    %v1478 = vld [vmem:[%s1453 + $0xc0] sm:$0xff]
    %v1479 = vld [vmem:[%s1453 + $0xc8] sm:$0xff]
    %v1480 = vld [vmem:[%s1453 + $0xd0] sm:$0xff]
    %v1481 = vld [vmem:[%s1453 + $0xd8] sm:$0xff]
    %v1482 = vld [vmem:[%s1453 + $0xe0] sm:$0xff]
    %v1483 = vld [vmem:[%s1453 + $0xe8] sm:$0xff]
    %v1484 = vld [vmem:[%s1453 + $0xf0] sm:$0xff]
    %v1485 = vld [vmem:[%s1453 + $0xf8] sm:$0xff]
    %v1486 = vld [vmem:[%s1] sm:$0xff]
    %v1487 = vld [vmem:[%s1 + $0x8] sm:$0xff]
    %v1488 = vld [vmem:[%s1 + $0x10] sm:$0xff]
    %v1489 = vld [vmem:[%s1 + $0x18] sm:$0xff]
    %v1490 = vld [vmem:[%s1 + $0x20] sm:$0xff]
    %v1491 = vld [vmem:[%s1 + $0x28] sm:$0xff]
    %v1492 = vld [vmem:[%s1 + $0x30] sm:$0xff]
    %v1493 = vld [vmem:[%s1 + $0x38] sm:$0xff]
    %v1494 = vld [vmem:[%s1 + $0x40] sm:$0xff]
    %v1495 = vld [vmem:[%s1 + $0x48] sm:$0xff]
    %v1496 = vld [vmem:[%s1 + $0x50] sm:$0xff]
    %v1497 = vld [vmem:[%s1 + $0x58] sm:$0xff]
    %v1498 = vld [vmem:[%s1 + $0x60] sm:$0xff]
    %v1499 = vld [vmem:[%s1 + $0x68] sm:$0xff]
    %v1500 = vld [vmem:[%s1 + $0x70] sm:$0xff]
    %v1501 = vld [vmem:[%s1 + $0x78] sm:$0xff]
    %v1502 = vld [vmem:[%s1 + $0x80] sm:$0xff]
    %v1503 = vld [vmem:[%s1 + $0x88] sm:$0xff]
    %v1504 = vld [vmem:[%s1 + $0x90] sm:$0xff]
    %v1505 = vld [vmem:[%s1 + $0x98] sm:$0xff]
    %v1506 = vld [vmem:[%s1 + $0xa0] sm:$0xff]
    %v1507 = vld [vmem:[%s1 + $0xa8] sm:$0xff]
    %v1508 = vld [vmem:[%s1 + $0xb0] sm:$0xff]
    %v1509 = vld [vmem:[%s1 + $0xb8] sm:$0xff]
    %v1510 = vld [vmem:[%s1 + $0xc0] sm:$0xff]
    %v1511 = vld [vmem:[%s1 + $0xc8] sm:$0xff]
    %v1512 = vld [vmem:[%s1 + $0xd0] sm:$0xff]
    %v1513 = vld [vmem:[%s1 + $0xd8] sm:$0xff]
    %v1514 = vld [vmem:[%s1 + $0xe0] sm:$0xff]
    %v1515 = vld [vmem:[%s1 + $0xe8] sm:$0xff]
    %v1516 = vld [vmem:[%s1 + $0xf0] sm:$0xff]
    %v1517 = vld [vmem:[%s1 + $0xf8] sm:$0xff]
    %v1518 = vld [vmem:[%s1 + $0x100] sm:$0xff]
    %v1519 = vld [vmem:[%s1 + $0x108] sm:$0xff]
    %v1520 = vld [vmem:[%s1 + $0x110] sm:$0xff]
    %v1521 = vld [vmem:[%s1 + $0x118] sm:$0xff]
    %v1522 = vld [vmem:[%s1 + $0x120] sm:$0xff]
    %v1523 = vld [vmem:[%s1 + $0x128] sm:$0xff]
    %v1524 = vld [vmem:[%s1 + $0x130] sm:$0xff]
    %v1525 = vld [vmem:[%s1 + $0x138] sm:$0xff]
    %v1526 = vld [vmem:[%s1 + $0x140] sm:$0xff]
    %v1527 = vld [vmem:[%s1 + $0x148] sm:$0xff]
    %v1528 = vld [vmem:[%s1 + $0x150] sm:$0xff]
    %v1529 = vld [vmem:[%s1 + $0x158] sm:$0xff]
    %v1530 = vld [vmem:[%s1 + $0x160] sm:$0xff]
    %v1531 = vld [vmem:[%s1 + $0x168] sm:$0xff]
    %v1532 = vld [vmem:[%s1 + $0x170] sm:$0xff]
    %v1533 = vld [vmem:[%s1 + $0x178] sm:$0xff]
    %v1534 = vld [vmem:[%s1 + $0x180] sm:$0xff]
    %v1535 = vld [vmem:[%s1 + $0x188] sm:$0xff]
    %v1536 = vld [vmem:[%s1 + $0x190] sm:$0xff]
    %v1537 = vld [vmem:[%s1 + $0x198] sm:$0xff]
    %v1538 = vld [vmem:[%s1 + $0x1a0] sm:$0xff]
    %v1539 = vld [vmem:[%s1 + $0x1a8] sm:$0xff]
    %v1540 = vld [vmem:[%s1 + $0x1b0] sm:$0xff]
    %v1541 = vld [vmem:[%s1 + $0x1b8] sm:$0xff]
    %v1542 = vld [vmem:[%s1 + $0x1c0] sm:$0xff]
    %v1543 = vld [vmem:[%s1 + $0x1c8] sm:$0xff]
    %v1544 = vld [vmem:[%s1 + $0x1d0] sm:$0xff]
    %v1545 = vld [vmem:[%s1 + $0x1d8] sm:$0xff]
    %v1546 = vld [vmem:[%s1 + $0x1e0] sm:$0xff]
    %v1547 = vld [vmem:[%s1 + $0x1e8] sm:$0xff]
    %v1548 = vld [vmem:[%s1 + $0x1f0] sm:$0xff]
    %v1549 = vld [vmem:[%s1 + $0x1f8] sm:$0xff]
    %v1550 = vld [vmem:[%s1 + $0x200] sm:$0xff]
    %v1551 = vld [vmem:[%s1 + $0x208] sm:$0xff]
    %v1552 = vld [vmem:[%s1 + $0x210] sm:$0xff]
    %v1553 = vld [vmem:[%s1 + $0x218] sm:$0xff]
    %v1554 = vld [vmem:[%s1 + $0x220] sm:$0xff]
    %v1555 = vld [vmem:[%s1 + $0x228] sm:$0xff]
    %v1556 = vld [vmem:[%s1 + $0x230] sm:$0xff]
    %v1557 = vld [vmem:[%s1 + $0x238] sm:$0xff]
    %v1558 = vld [vmem:[%s1 + $0x240] sm:$0xff]
    %v1559 = vld [vmem:[%s1 + $0x248] sm:$0xff]
    %v1560 = vld [vmem:[%s1 + $0x250] sm:$0xff]
    %v1561 = vld [vmem:[%s1 + $0x258] sm:$0xff]
    %v1562 = vld [vmem:[%s1 + $0x260] sm:$0xff]
    %v1563 = vld [vmem:[%s1 + $0x268] sm:$0xff]
    %v1564 = vld [vmem:[%s1 + $0x270] sm:$0xff]
    %v1565 = vld [vmem:[%s1 + $0x278] sm:$0xff]
    %v1566 = vld [vmem:[%s1 + $0x280] sm:$0xff]
    %v1567 = vld [vmem:[%s1 + $0x288] sm:$0xff]
    %v1568 = vld [vmem:[%s1 + $0x290] sm:$0xff]
    %v1569 = vld [vmem:[%s1 + $0x298] sm:$0xff]
    %v1570 = vld [vmem:[%s1 + $0x2a0] sm:$0xff]
    %v1571 = vld [vmem:[%s1 + $0x2a8] sm:$0xff]
    %v1572 = vld [vmem:[%s1 + $0x2b0] sm:$0xff]
    %v1573 = vld [vmem:[%s1 + $0x2b8] sm:$0xff]
    %v1574 = vld [vmem:[%s1 + $0x2c0] sm:$0xff]
    %v1575 = vld [vmem:[%s1 + $0x2c8] sm:$0xff]
    %v1576 = vld [vmem:[%s1 + $0x2d0] sm:$0xff]
    %v1577 = vld [vmem:[%s1 + $0x2d8] sm:$0xff]
    %v1578 = vld [vmem:[%s1 + $0x2e0] sm:$0xff]
    %v1579 = vld [vmem:[%s1 + $0x2e8] sm:$0xff]
    %v1580 = vld [vmem:[%s1 + $0x2f0] sm:$0xff]
    %v1581 = vld [vmem:[%s1 + $0x2f8] sm:$0xff]
    %v1582 = vld [vmem:[%s1 + $0x300] sm:$0xff]
    %v1583 = vld [vmem:[%s1 + $0x308] sm:$0xff]
    %v1584 = vld [vmem:[%s1 + $0x310] sm:$0xff]
    %v1585 = vld [vmem:[%s1 + $0x318] sm:$0xff]
    %v1586 = vld [vmem:[%s1 + $0x320] sm:$0xff]
    %v1587 = vld [vmem:[%s1 + $0x328] sm:$0xff]
    %v1588 = vld [vmem:[%s1 + $0x330] sm:$0xff]
    %v1589 = vld [vmem:[%s1 + $0x338] sm:$0xff]
    %v1590 = vld [vmem:[%s1 + $0x340] sm:$0xff]
    %v1591 = vld [vmem:[%s1 + $0x348] sm:$0xff]
    %v1592 = vld [vmem:[%s1 + $0x350] sm:$0xff]
    %v1593 = vld [vmem:[%s1 + $0x358] sm:$0xff]
    %v1594 = vld [vmem:[%s1 + $0x360] sm:$0xff]
    %v1595 = vld [vmem:[%s1 + $0x368] sm:$0xff]
    %v1596 = vld [vmem:[%s1 + $0x370] sm:$0xff]
    %v1597 = vld [vmem:[%s1 + $0x378] sm:$0xff]
    %v1598 = vld [vmem:[%s1 + $0x380] sm:$0xff]
    %v1599 = vld [vmem:[%s1 + $0x388] sm:$0xff]
    %v1600 = vld [vmem:[%s1 + $0x390] sm:$0xff]
    %v1601 = vld [vmem:[%s1 + $0x398] sm:$0xff]
    %v1602 = vld [vmem:[%s1 + $0x3a0] sm:$0xff]
    %v1603 = vld [vmem:[%s1 + $0x3a8] sm:$0xff]
    %v1604 = vld [vmem:[%s1 + $0x3b0] sm:$0xff]
    %v1605 = vld [vmem:[%s1 + $0x3b8] sm:$0xff]
    %v1606 = vld [vmem:[%s1 + $0x3c0] sm:$0xff]
    %v1607 = vld [vmem:[%s1 + $0x3c8] sm:$0xff]
    %v1608 = vld [vmem:[%s1 + $0x3d0] sm:$0xff]
    %v1609 = vld [vmem:[%s1 + $0x3d8] sm:$0xff]
    %v1610 = vld [vmem:[%s1 + $0x3e0] sm:$0xff]
    %v1611 = vld [vmem:[%s1 + $0x3e8] sm:$0xff]
    %v1612 = vld [vmem:[%s1 + $0x3f0] sm:$0xff]
    %v1613 = vld [vmem:[%s1 + $0x3f8] sm:$0xff]
    %v1614 = vld [vmem:[%s1453] sm:$0xfe]
    %v1615 = vld [vmem:[%s1453 + $0x8] sm:$0xfe]
    %v1616 = vld [vmem:[%s1453 + $0x10] sm:$0xfe]
    %v1617 = vld [vmem:[%s1453 + $0x18] sm:$0xfe]
    %v1618 = vld [vmem:[%s1453 + $0x20] sm:$0xfe]
    %v1619 = vld [vmem:[%s1453 + $0x28] sm:$0xfe]
    %v1620 = vld [vmem:[%s1453 + $0x30] sm:$0xfe]
    %v1621 = vld [vmem:[%s1453 + $0x38] sm:$0xfe]
    %v1622 = vld [vmem:[%s1453 + $0x100] sm:$0x1]
    %v1623 = vld [vmem:[%s1453 + $0x108] sm:$0x1]
    %v1624 = vld [vmem:[%s1453 + $0x110] sm:$0x1]
    %v1625 = vld [vmem:[%s1453 + $0x118] sm:$0x1]
    %v1626 = vld [vmem:[%s1453 + $0x120] sm:$0x1]
    %v1627 = vld [vmem:[%s1453 + $0x128] sm:$0x1]
    %v1628 = vld [vmem:[%s1453 + $0x130] sm:$0x1]
    %v1629 = vld [vmem:[%s1453 + $0x138] sm:$0x1]
    %v1630 = vld [vmem:[%s193] sm:$0xff]
    %v1631 = vld [vmem:[%s193 + $0x8] sm:$0xff]
    %v1632 = vld [vmem:[%s193 + $0x10] sm:$0xff]
    %v1633 = vld [vmem:[%s193 + $0x18] sm:$0xff]
    %v1634 = vld [vmem:[%s193 + $0x20] sm:$0xff]
    %v1635 = vld [vmem:[%s193 + $0x28] sm:$0xff]
    %v1636 = vld [vmem:[%s193 + $0x30] sm:$0xff]
    %v1637 = vld [vmem:[%s193 + $0x38] sm:$0xff]
    %v1638 = vld [vmem:[%s193 + $0x40] sm:$0xff]
    %v1639 = vld [vmem:[%s193 + $0x48] sm:$0xff]
    %v1640 = vld [vmem:[%s193 + $0x50] sm:$0xff]
    %v1641 = vld [vmem:[%s193 + $0x58] sm:$0xff]
    %v1642 = vld [vmem:[%s193 + $0x60] sm:$0xff]
    %v1643 = vld [vmem:[%s193 + $0x68] sm:$0xff]
    %v1644 = vld [vmem:[%s193 + $0x70] sm:$0xff]
    %v1645 = vld [vmem:[%s193 + $0x78] sm:$0xff]
    %v1646 = vld [vmem:[%s193 + $0x80] sm:$0xff]
    %v1647 = vld [vmem:[%s193 + $0x88] sm:$0xff]
    %v1648 = vld [vmem:[%s193 + $0x90] sm:$0xff]
    %v1649 = vld [vmem:[%s193 + $0x98] sm:$0xff]
    %v1650 = vld [vmem:[%s193 + $0xa0] sm:$0xff]
    %v1651 = vld [vmem:[%s193 + $0xa8] sm:$0xff]
    %v1652 = vld [vmem:[%s193 + $0xb0] sm:$0xff]
    %v1653 = vld [vmem:[%s193 + $0xb8] sm:$0xff]
    %v1654 = vld [vmem:[%s193 + $0xc0] sm:$0xff]
    %v1655 = vld [vmem:[%s193 + $0xc8] sm:$0xff]
    %v1656 = vld [vmem:[%s193 + $0xd0] sm:$0xff]
    %v1657 = vld [vmem:[%s193 + $0xd8] sm:$0xff]
    %v1658 = vld [vmem:[%s193 + $0xe0] sm:$0xff]
    %v1659 = vld [vmem:[%s193 + $0xe8] sm:$0xff]
    %v1660 = vld [vmem:[%s193 + $0xf0] sm:$0xff]
    %v1661 = vld [vmem:[%s193 + $0xf8] sm:$0xff]
    %v1662 = vld [vmem:[%s193 + $0x100] sm:$0xff]
    %v1663 = vld [vmem:[%s193 + $0x108] sm:$0xff]
    %v1664 = vld [vmem:[%s193 + $0x110] sm:$0xff]
    %v1665 = vld [vmem:[%s193 + $0x118] sm:$0xff]
    %v1666 = vld [vmem:[%s193 + $0x120] sm:$0xff]
    %v1667 = vld [vmem:[%s193 + $0x128] sm:$0xff]
    %v1668 = vld [vmem:[%s193 + $0x130] sm:$0xff]
    %v1669 = vld [vmem:[%s193 + $0x138] sm:$0xff]
    %v1670 = vld [vmem:[%s193 + $0x140] sm:$0xff]
    %v1671 = vld [vmem:[%s193 + $0x148] sm:$0xff]
    %v1672 = vld [vmem:[%s193 + $0x150] sm:$0xff]
    %v1673 = vld [vmem:[%s193 + $0x158] sm:$0xff]
    %v1674 = vld [vmem:[%s193 + $0x160] sm:$0xff]
    %v1675 = vld [vmem:[%s193 + $0x168] sm:$0xff]
    %v1676 = vld [vmem:[%s193 + $0x170] sm:$0xff]
    %v1677 = vld [vmem:[%s193 + $0x178] sm:$0xff]
    %v1678 = vld [vmem:[%s193 + $0x180] sm:$0xff]
    %v1679 = vld [vmem:[%s193 + $0x188] sm:$0xff]
    %v1680 = vld [vmem:[%s193 + $0x190] sm:$0xff]
    %v1681 = vld [vmem:[%s193 + $0x198] sm:$0xff]
    %v1682 = vld [vmem:[%s193 + $0x1a0] sm:$0xff]
    %v1683 = vld [vmem:[%s193 + $0x1a8] sm:$0xff]
    %v1684 = vld [vmem:[%s193 + $0x1b0] sm:$0xff]
    %v1685 = vld [vmem:[%s193 + $0x1b8] sm:$0xff]
    %v1686 = vld [vmem:[%s193 + $0x1c0] sm:$0xff]
    %v1687 = vld [vmem:[%s193 + $0x1c8] sm:$0xff]
    %v1688 = vld [vmem:[%s193 + $0x1d0] sm:$0xff]
    %v1689 = vld [vmem:[%s193 + $0x1d8] sm:$0xff]
    %v1690 = vld [vmem:[%s193 + $0x1e0] sm:$0xff]
    %v1691 = vld [vmem:[%s193 + $0x1e8] sm:$0xff]
    %v1692 = vld [vmem:[%s193 + $0x1f0] sm:$0xff]
    %v1693 = vld [vmem:[%s193 + $0x1f8] sm:$0xff]
    %v1694 = vld [vmem:[%s193 + $0x200] sm:$0xff]
    %v1695 = vld [vmem:[%s193 + $0x208] sm:$0xff]
    %v1696 = vld [vmem:[%s193 + $0x210] sm:$0xff]
    %v1697 = vld [vmem:[%s193 + $0x218] sm:$0xff]
    %v1698 = vld [vmem:[%s193 + $0x220] sm:$0xff]
    %v1699 = vld [vmem:[%s193 + $0x228] sm:$0xff]
    %v1700 = vld [vmem:[%s193 + $0x230] sm:$0xff]
    %v1701 = vld [vmem:[%s193 + $0x238] sm:$0xff]
    %v1702 = vld [vmem:[%s193 + $0x240] sm:$0xff]
    %v1703 = vld [vmem:[%s193 + $0x248] sm:$0xff]
    %v1704 = vld [vmem:[%s193 + $0x250] sm:$0xff]
    %v1705 = vld [vmem:[%s193 + $0x258] sm:$0xff]
    %v1706 = vld [vmem:[%s193 + $0x260] sm:$0xff]
    %v1707 = vld [vmem:[%s193 + $0x268] sm:$0xff]
    %v1708 = vld [vmem:[%s193 + $0x270] sm:$0xff]
    %v1709 = vld [vmem:[%s193 + $0x278] sm:$0xff]
    %v1710 = vld [vmem:[%s193 + $0x280] sm:$0xff]
    %v1711 = vld [vmem:[%s193 + $0x288] sm:$0xff]
    %v1712 = vld [vmem:[%s193 + $0x290] sm:$0xff]
    %v1713 = vld [vmem:[%s193 + $0x298] sm:$0xff]
    %v1714 = vld [vmem:[%s193 + $0x2a0] sm:$0xff]
    %v1715 = vld [vmem:[%s193 + $0x2a8] sm:$0xff]
    %v1716 = vld [vmem:[%s193 + $0x2b0] sm:$0xff]
    %v1717 = vld [vmem:[%s193 + $0x2b8] sm:$0xff]
    %v1718 = vld [vmem:[%s193 + $0x2c0] sm:$0xff]
    %v1719 = vld [vmem:[%s193 + $0x2c8] sm:$0xff]
    %v1720 = vld [vmem:[%s193 + $0x2d0] sm:$0xff]
    %v1721 = vld [vmem:[%s193 + $0x2d8] sm:$0xff]
    %v1722 = vld [vmem:[%s193 + $0x2e0] sm:$0xff]
    %v1723 = vld [vmem:[%s193 + $0x2e8] sm:$0xff]
    %v1724 = vld [vmem:[%s193 + $0x2f0] sm:$0xff]
    %v1725 = vld [vmem:[%s193 + $0x2f8] sm:$0xff]
    %v1726 = vld [vmem:[%s193 + $0x300] sm:$0xff]
    %v1727 = vld [vmem:[%s193 + $0x308] sm:$0xff]
    %v1728 = vld [vmem:[%s193 + $0x310] sm:$0xff]
    %v1729 = vld [vmem:[%s193 + $0x318] sm:$0xff]
    %v1730 = vld [vmem:[%s193 + $0x320] sm:$0xff]
    %v1731 = vld [vmem:[%s193 + $0x328] sm:$0xff]
    %v1732 = vld [vmem:[%s193 + $0x330] sm:$0xff]
    %v1733 = vld [vmem:[%s193 + $0x338] sm:$0xff]
    %v1734 = vld [vmem:[%s193 + $0x340] sm:$0xff]
    %v1735 = vld [vmem:[%s193 + $0x348] sm:$0xff]
    %v1736 = vld [vmem:[%s193 + $0x350] sm:$0xff]
    %v1737 = vld [vmem:[%s193 + $0x358] sm:$0xff]
    %v1738 = vld [vmem:[%s193 + $0x360] sm:$0xff]
    %v1739 = vld [vmem:[%s193 + $0x368] sm:$0xff]
    %v1740 = vld [vmem:[%s193 + $0x370] sm:$0xff]
    %v1741 = vld [vmem:[%s193 + $0x378] sm:$0xff]
    %v1742 = vld [vmem:[%s193 + $0x380] sm:$0xff]
    %v1743 = vld [vmem:[%s193 + $0x388] sm:$0xff]
    %v1744 = vld [vmem:[%s193 + $0x390] sm:$0xff]
    %v1745 = vld [vmem:[%s193 + $0x398] sm:$0xff]
    %v1746 = vld [vmem:[%s193 + $0x3a0] sm:$0xff]
    %v1747 = vld [vmem:[%s193 + $0x3a8] sm:$0xff]
    %v1748 = vld [vmem:[%s193 + $0x3b0] sm:$0xff]
    %v1749 = vld [vmem:[%s193 + $0x3b8] sm:$0xff]
    %v1750 = vld [vmem:[%s193 + $0x3c0] sm:$0xff]
    %v1751 = vld [vmem:[%s193 + $0x3c8] sm:$0xff]
    %v1752 = vld [vmem:[%s193 + $0x3d0] sm:$0xff]
    %v1753 = vld [vmem:[%s193 + $0x3d8] sm:$0xff]
    %v1754 = vld [vmem:[%s193 + $0x3e0] sm:$0xff]
    %v1755 = vld [vmem:[%s193 + $0x3e8] sm:$0xff]
    %v1756 = vld [vmem:[%s193 + $0x3f0] sm:$0xff]
    %v1757 = vld [vmem:[%s193 + $0x3f8] sm:$0xff]
    %v1798 = vrot.slane %v1614, 1
    %v1799 = vrot.slane %v1462, 1
    %v1800 = vsel %vm362, %v1798, %v1799
    %v1801 = vrot.slane %v1615, 1
    %v1802 = vrot.slane %v1463, 1
    %v1803 = vsel %vm362, %v1801, %v1802
    %v1804 = vrot.slane %v1616, 1
    %v1805 = vrot.slane %v1464, 1
    %v1806 = vsel %vm362, %v1804, %v1805
    %v1807 = vrot.slane %v1617, 1
    %v1808 = vrot.slane %v1465, 1
    %v1809 = vsel %vm362, %v1807, %v1808
    %v1810 = vrot.slane %v1618, 1
    %v1811 = vrot.slane %v1466, 1
    %v1812 = vsel %vm362, %v1810, %v1811
    %v1813 = vrot.slane %v1619, 1
    %v1814 = vrot.slane %v1467, 1
    %v1815 = vsel %vm362, %v1813, %v1814
    %v1816 = vrot.slane %v1620, 1
    %v1817 = vrot.slane %v1468, 1
    %v1818 = vsel %vm362, %v1816, %v1817
    %v1819 = vrot.slane %v1621, 1
    %v1820 = vrot.slane %v1469, 1
    %v1821 = vsel %vm362, %v1819, %v1820
    %v1822 = vrot.slane %v1470, 1
    %v1823 = vsel %vm362, %v1799, %v1822
    %v1824 = vrot.slane %v1471, 1
    %v1825 = vsel %vm362, %v1802, %v1824
    %v1826 = vrot.slane %v1472, 1
    %v1827 = vsel %vm362, %v1805, %v1826
    %v1828 = vrot.slane %v1473, 1
    %v1829 = vsel %vm362, %v1808, %v1828
    %v1830 = vrot.slane %v1474, 1
    %v1831 = vsel %vm362, %v1811, %v1830
    %v1832 = vrot.slane %v1475, 1
    %v1833 = vsel %vm362, %v1814, %v1832
    %v1834 = vrot.slane %v1476, 1
    %v1835 = vsel %vm362, %v1817, %v1834
    %v1836 = vrot.slane %v1477, 1
    %v1837 = vsel %vm362, %v1820, %v1836
    %v1838 = vrot.slane %v1478, 1
    %v1839 = vsel %vm362, %v1822, %v1838
    %v1840 = vrot.slane %v1479, 1
    %v1841 = vsel %vm362, %v1824, %v1840
    %v1842 = vrot.slane %v1480, 1
    %v1843 = vsel %vm362, %v1826, %v1842
    %v1844 = vrot.slane %v1481, 1
    %v1845 = vsel %vm362, %v1828, %v1844
    %v1846 = vrot.slane %v1482, 1
    %v1847 = vsel %vm362, %v1830, %v1846
    %v1848 = vrot.slane %v1483, 1
    %v1849 = vsel %vm362, %v1832, %v1848
    %v1850 = vrot.slane %v1484, 1
    %v1851 = vsel %vm362, %v1834, %v1850
    %v1852 = vrot.slane %v1485, 1
    %v1853 = vsel %vm362, %v1836, %v1852
    %v1854 = vrot.slane %v1622, 1
    %v1855 = vsel %vm362, %v1838, %v1854
    %v1856 = vrot.slane %v1623, 1
    %v1857 = vsel %vm362, %v1840, %v1856
    %v1858 = vrot.slane %v1624, 1
    %v1859 = vsel %vm362, %v1842, %v1858
    %v1860 = vrot.slane %v1625, 1
    %v1861 = vsel %vm362, %v1844, %v1860
    %v1862 = vrot.slane %v1626, 1
    %v1863 = vsel %vm362, %v1846, %v1862
    %v1864 = vrot.slane %v1627, 1
    %v1865 = vsel %vm362, %v1848, %v1864
    %v1866 = vrot.slane %v1628, 1
    %v1867 = vsel %vm362, %v1850, %v1866
    %v1868 = vrot.slane %v1629, 1
    %v1869 = vsel %vm362, %v1852, %v1868
    %1902 = vmatpush.msra.mxu0 %v1645
    %1903 = vmatpush.msra.mxu0 %v1644
    %1904 = vmatpush.msra.mxu0 %v1643
    %1905 = vmatpush.msra.mxu0 %v1642
    %1906 = vmatpush.msra.mxu0 %v1641
    %1907 = vmatpush.msra.mxu0 %v1640
    %1908 = vmatpush.msra.mxu0 %v1639
    %1909 = vmatpush.msra.mxu0 %v1638
    %1910 = vmatpush.msra.mxu0 %v1637
    %1911 = vmatpush.msra.mxu0 %v1636
    %1912 = vmatpush.msra.mxu0 %v1635
    %1913 = vmatpush.msra.mxu0 %v1634
    %1914 = vmatpush.msra.mxu0 %v1633
    %1915 = vmatpush.msra.mxu0 %v1632
    %1916 = vmatpush.msra.mxu0 %v1631
    %1917 = vmatpush.msra.mxu0 %v1630
    %1918 = vmatmul.f32.gmra.mxu0 %v1800
    %v1919 = vpop.f32.mrf.mxu0
    %v1920 = vadd.f32 0.0, %v1919
    %1921 = vmatmul.f32.gmra.mxu0 %v1823
    %v1922 = vpop.f32.mrf.mxu0
    %v1923 = vadd.f32 0.0, %v1922
    %1924 = vmatmul.f32.gmra.mxu0 %v1839
    %v1925 = vpop.f32.mrf.mxu0
    %v1926 = vadd.f32 0.0, %v1925
    %1927 = vmatmul.f32.gmra.mxu0 %v1855
    %v1928 = vpop.f32.mrf.mxu0
    %v1929 = vadd.f32 0.0, %v1928
    %1930 = vdwg.mxu0
    %1931 = vmatpush.msra.mxu0 %v1661
    %1932 = vmatpush.msra.mxu0 %v1660
    %1933 = vmatpush.msra.mxu0 %v1659
    %1934 = vmatpush.msra.mxu0 %v1658
    %1935 = vmatpush.msra.mxu0 %v1657
    %1936 = vmatpush.msra.mxu0 %v1656
    %1937 = vmatpush.msra.mxu0 %v1655
    %1938 = vmatpush.msra.mxu0 %v1654
    %1939 = vmatpush.msra.mxu0 %v1653
    %1940 = vmatpush.msra.mxu0 %v1652
    %1941 = vmatpush.msra.mxu0 %v1651
    %1942 = vmatpush.msra.mxu0 %v1650
    %1943 = vmatpush.msra.mxu0 %v1649
    %1944 = vmatpush.msra.mxu0 %v1648
    %1945 = vmatpush.msra.mxu0 %v1647
    %1946 = vmatpush.msra.mxu0 %v1646
    %1947 = vmatmul.f32.gmra.mxu0 %v1803
    %v1948 = vpop.f32.mrf.mxu0
    %v1949 = vadd.f32 %v1920, %v1948
    %1950 = vmatmul.f32.gmra.mxu0 %v1825
    %v1951 = vpop.f32.mrf.mxu0
    %v1952 = vadd.f32 %v1923, %v1951
    %1953 = vmatmul.f32.gmra.mxu0 %v1841
    %v1954 = vpop.f32.mrf.mxu0
    %v1955 = vadd.f32 %v1926, %v1954
    %1956 = vmatmul.f32.gmra.mxu0 %v1857
    %v1957 = vpop.f32.mrf.mxu0
    %v1958 = vadd.f32 %v1929, %v1957
    %1959 = vdwg.mxu0
    %1960 = vmatpush.msra.mxu0 %v1677
    %1961 = vmatpush.msra.mxu0 %v1676
    %1962 = vmatpush.msra.mxu0 %v1675
    %1963 = vmatpush.msra.mxu0 %v1674
    %1964 = vmatpush.msra.mxu0 %v1673
    %1965 = vmatpush.msra.mxu0 %v1672
    %1966 = vmatpush.msra.mxu0 %v1671
    %1967 = vmatpush.msra.mxu0 %v1670
    %1968 = vmatpush.msra.mxu0 %v1669
    %1969 = vmatpush.msra.mxu0 %v1668
    %1970 = vmatpush.msra.mxu0 %v1667
    %1971 = vmatpush.msra.mxu0 %v1666
    %1972 = vmatpush.msra.mxu0 %v1665
    %1973 = vmatpush.msra.mxu0 %v1664
    %1974 = vmatpush.msra.mxu0 %v1663
    %1975 = vmatpush.msra.mxu0 %v1662
    %1976 = vmatmul.f32.gmra.mxu0 %v1806
    %v1977 = vpop.f32.mrf.mxu0
    %v1978 = vadd.f32 %v1949, %v1977
    %1979 = vmatmul.f32.gmra.mxu0 %v1827
    %v1980 = vpop.f32.mrf.mxu0
    %v1981 = vadd.f32 %v1952, %v1980
    %1982 = vmatmul.f32.gmra.mxu0 %v1843
    %v1983 = vpop.f32.mrf.mxu0
    %v1984 = vadd.f32 %v1955, %v1983
    %1985 = vmatmul.f32.gmra.mxu0 %v1859
    %v1986 = vpop.f32.mrf.mxu0
    %v1987 = vadd.f32 %v1958, %v1986
    %1988 = vdwg.mxu0
    %1989 = vmatpush.msra.mxu0 %v1693
    %1990 = vmatpush.msra.mxu0 %v1692
    %1991 = vmatpush.msra.mxu0 %v1691
    %1992 = vmatpush.msra.mxu0 %v1690
    %1993 = vmatpush.msra.mxu0 %v1689
    %1994 = vmatpush.msra.mxu0 %v1688
    %1995 = vmatpush.msra.mxu0 %v1687
    %1996 = vmatpush.msra.mxu0 %v1686
    %1997 = vmatpush.msra.mxu0 %v1685
    %1998 = vmatpush.msra.mxu0 %v1684
    %1999 = vmatpush.msra.mxu0 %v1683
    %2000 = vmatpush.msra.mxu0 %v1682
    %2001 = vmatpush.msra.mxu0 %v1681
    %2002 = vmatpush.msra.mxu0 %v1680
    %2003 = vmatpush.msra.mxu0 %v1679
    %2004 = vmatpush.msra.mxu0 %v1678
    %2005 = vmatmul.f32.gmra.mxu0 %v1809
    %v2006 = vpop.f32.mrf.mxu0
    %v2007 = vadd.f32 %v1978, %v2006
    %2008 = vmatmul.f32.gmra.mxu0 %v1829
    %v2009 = vpop.f32.mrf.mxu0
    %v2010 = vadd.f32 %v1981, %v2009
    %2011 = vmatmul.f32.gmra.mxu0 %v1845
    %v2012 = vpop.f32.mrf.mxu0
    %v2013 = vadd.f32 %v1984, %v2012
    %2014 = vmatmul.f32.gmra.mxu0 %v1861
    %v2015 = vpop.f32.mrf.mxu0
    %v2016 = vadd.f32 %v1987, %v2015
    %2017 = vdwg.mxu0
    %2018 = vmatpush.msra.mxu0 %v1709
    %2019 = vmatpush.msra.mxu0 %v1708
    %2020 = vmatpush.msra.mxu0 %v1707
    %2021 = vmatpush.msra.mxu0 %v1706
    %2022 = vmatpush.msra.mxu0 %v1705
    %2023 = vmatpush.msra.mxu0 %v1704
    %2024 = vmatpush.msra.mxu0 %v1703
    %2025 = vmatpush.msra.mxu0 %v1702
    %2026 = vmatpush.msra.mxu0 %v1701
    %2027 = vmatpush.msra.mxu0 %v1700
    %2028 = vmatpush.msra.mxu0 %v1699
    %2029 = vmatpush.msra.mxu0 %v1698
    %2030 = vmatpush.msra.mxu0 %v1697
    %2031 = vmatpush.msra.mxu0 %v1696
    %2032 = vmatpush.msra.mxu0 %v1695
    %2033 = vmatpush.msra.mxu0 %v1694
    %2034 = vmatmul.f32.gmra.mxu0 %v1812
    %v2035 = vpop.f32.mrf.mxu0
    %v2036 = vadd.f32 %v2007, %v2035
    %2037 = vmatmul.f32.gmra.mxu0 %v1831
    %v2038 = vpop.f32.mrf.mxu0
    %v2039 = vadd.f32 %v2010, %v2038
    %2040 = vmatmul.f32.gmra.mxu0 %v1847
    %v2041 = vpop.f32.mrf.mxu0
    %v2042 = vadd.f32 %v2013, %v2041
    %2043 = vmatmul.f32.gmra.mxu0 %v1863
    %v2044 = vpop.f32.mrf.mxu0
    %v2045 = vadd.f32 %v2016, %v2044
    %2046 = vdwg.mxu0
    %2047 = vmatpush.msra.mxu0 %v1725
    %2048 = vmatpush.msra.mxu0 %v1724
    %2049 = vmatpush.msra.mxu0 %v1723
    %2050 = vmatpush.msra.mxu0 %v1722
    %2051 = vmatpush.msra.mxu0 %v1721
    %2052 = vmatpush.msra.mxu0 %v1720
    %2053 = vmatpush.msra.mxu0 %v1719
    %2054 = vmatpush.msra.mxu0 %v1718
    %2055 = vmatpush.msra.mxu0 %v1717
    %2056 = vmatpush.msra.mxu0 %v1716
    %2057 = vmatpush.msra.mxu0 %v1715
    %2058 = vmatpush.msra.mxu0 %v1714
    %2059 = vmatpush.msra.mxu0 %v1713
    %2060 = vmatpush.msra.mxu0 %v1712
    %2061 = vmatpush.msra.mxu0 %v1711
    %2062 = vmatpush.msra.mxu0 %v1710
    %2063 = vmatmul.f32.gmra.mxu0 %v1815
    %v2064 = vpop.f32.mrf.mxu0
    %v2065 = vadd.f32 %v2036, %v2064
    %2066 = vmatmul.f32.gmra.mxu0 %v1833
    %v2067 = vpop.f32.mrf.mxu0
    %v2068 = vadd.f32 %v2039, %v2067
    %2069 = vmatmul.f32.gmra.mxu0 %v1849
    %v2070 = vpop.f32.mrf.mxu0
    %v2071 = vadd.f32 %v2042, %v2070
    %2072 = vmatmul.f32.gmra.mxu0 %v1865
    %v2073 = vpop.f32.mrf.mxu0
    %v2074 = vadd.f32 %v2045, %v2073
    %2075 = vdwg.mxu0
    %2076 = vmatpush.msra.mxu0 %v1741
    %2077 = vmatpush.msra.mxu0 %v1740
    %2078 = vmatpush.msra.mxu0 %v1739
    %2079 = vmatpush.msra.mxu0 %v1738
    %2080 = vmatpush.msra.mxu0 %v1737
    %2081 = vmatpush.msra.mxu0 %v1736
    %2082 = vmatpush.msra.mxu0 %v1735
    %2083 = vmatpush.msra.mxu0 %v1734
    %2084 = vmatpush.msra.mxu0 %v1733
    %2085 = vmatpush.msra.mxu0 %v1732
    %2086 = vmatpush.msra.mxu0 %v1731
    %2087 = vmatpush.msra.mxu0 %v1730
    %2088 = vmatpush.msra.mxu0 %v1729
    %2089 = vmatpush.msra.mxu0 %v1728
    %2090 = vmatpush.msra.mxu0 %v1727
    %2091 = vmatpush.msra.mxu0 %v1726
    %2092 = vmatmul.f32.gmra.mxu0 %v1818
    %v2093 = vpop.f32.mrf.mxu0
    %v2094 = vadd.f32 %v2065, %v2093
    %2095 = vmatmul.f32.gmra.mxu0 %v1835
    %v2096 = vpop.f32.mrf.mxu0
    %v2097 = vadd.f32 %v2068, %v2096
    %2098 = vmatmul.f32.gmra.mxu0 %v1851
    %v2099 = vpop.f32.mrf.mxu0
    %v2100 = vadd.f32 %v2071, %v2099
    %2101 = vmatmul.f32.gmra.mxu0 %v1867
    %v2102 = vpop.f32.mrf.mxu0
    %v2103 = vadd.f32 %v2074, %v2102
    %2104 = vdwg.mxu0
    %2105 = vmatpush.msra.mxu0 %v1757
    %2106 = vmatpush.msra.mxu0 %v1756
    %2107 = vmatpush.msra.mxu0 %v1755
    %2108 = vmatpush.msra.mxu0 %v1754
    %2109 = vmatpush.msra.mxu0 %v1753
    %2110 = vmatpush.msra.mxu0 %v1752
    %2111 = vmatpush.msra.mxu0 %v1751
    %2112 = vmatpush.msra.mxu0 %v1750
    %2113 = vmatpush.msra.mxu0 %v1749
    %2114 = vmatpush.msra.mxu0 %v1748
    %2115 = vmatpush.msra.mxu0 %v1747
    %2116 = vmatpush.msra.mxu0 %v1746
    %2117 = vmatpush.msra.mxu0 %v1745
    %2118 = vmatpush.msra.mxu0 %v1744
    %2119 = vmatpush.msra.mxu0 %v1743
    %2120 = vmatpush.msra.mxu0 %v1742
    %2121 = vmatmul.f32.gmra.mxu0 %v1821
    %v2122 = vpop.f32.mrf.mxu0
    %v2123 = vadd.f32 %v2094, %v2122
    %2124 = vmatmul.f32.gmra.mxu0 %v1837
    %v2125 = vpop.f32.mrf.mxu0
    %v2126 = vadd.f32 %v2097, %v2125
    %2127 = vmatmul.f32.gmra.mxu0 %v1853
    %v2128 = vpop.f32.mrf.mxu0
    %v2129 = vadd.f32 %v2100, %v2128
    %2130 = vmatmul.f32.gmra.mxu0 %v1869
    %v2131 = vpop.f32.mrf.mxu0
    %v2132 = vadd.f32 %v2103, %v2131
    %2133 = vdwg.mxu0
    %2134 = vmatpush.msra.mxu0 %v1501
    %2135 = vmatpush.msra.mxu0 %v1500
    %2136 = vmatpush.msra.mxu0 %v1499
    %2137 = vmatpush.msra.mxu0 %v1498
    %2138 = vmatpush.msra.mxu0 %v1497
    %2139 = vmatpush.msra.mxu0 %v1496
    %2140 = vmatpush.msra.mxu0 %v1495
    %2141 = vmatpush.msra.mxu0 %v1494
    %2142 = vmatpush.msra.mxu0 %v1493
    %2143 = vmatpush.msra.mxu0 %v1492
    %2144 = vmatpush.msra.mxu0 %v1491
    %2145 = vmatpush.msra.mxu0 %v1490
    %2146 = vmatpush.msra.mxu0 %v1489
    %2147 = vmatpush.msra.mxu0 %v1488
    %2148 = vmatpush.msra.mxu0 %v1487
    %2149 = vmatpush.msra.mxu0 %v1486
    %2150 = vmatmul.f32.gmra.mxu0 %v1454
    %v2151 = vpop.f32.mrf.mxu0
    %v2152 = vadd.f32 %v2123, %v2151
    %2153 = vmatmul.f32.gmra.mxu0 %v1462
    %v2154 = vpop.f32.mrf.mxu0
    %v2155 = vadd.f32 %v2126, %v2154
    %2156 = vmatmul.f32.gmra.mxu0 %v1470
    %v2157 = vpop.f32.mrf.mxu0
    %v2158 = vadd.f32 %v2129, %v2157
    %2159 = vmatmul.f32.gmra.mxu0 %v1478
    %v2160 = vpop.f32.mrf.mxu0
    %v2161 = vadd.f32 %v2132, %v2160
    %2162 = vdwg.mxu0
    %2163 = vmatpush.msra.mxu0 %v1517
    %2164 = vmatpush.msra.mxu0 %v1516
    %2165 = vmatpush.msra.mxu0 %v1515
    %2166 = vmatpush.msra.mxu0 %v1514
    %2167 = vmatpush.msra.mxu0 %v1513
    %2168 = vmatpush.msra.mxu0 %v1512
    %2169 = vmatpush.msra.mxu0 %v1511
    %2170 = vmatpush.msra.mxu0 %v1510
    %2171 = vmatpush.msra.mxu0 %v1509
    %2172 = vmatpush.msra.mxu0 %v1508
    %2173 = vmatpush.msra.mxu0 %v1507
    %2174 = vmatpush.msra.mxu0 %v1506
    %2175 = vmatpush.msra.mxu0 %v1505
    %2176 = vmatpush.msra.mxu0 %v1504
    %2177 = vmatpush.msra.mxu0 %v1503
    %2178 = vmatpush.msra.mxu0 %v1502
    %2179 = vmatmul.f32.gmra.mxu0 %v1455
    %v2180 = vpop.f32.mrf.mxu0
    %v2181 = vadd.f32 %v2152, %v2180
    %2182 = vmatmul.f32.gmra.mxu0 %v1463
    %v2183 = vpop.f32.mrf.mxu0
    %v2184 = vadd.f32 %v2155, %v2183
    %2185 = vmatmul.f32.gmra.mxu0 %v1471
    %v2186 = vpop.f32.mrf.mxu0
    %v2187 = vadd.f32 %v2158, %v2186
    %2188 = vmatmul.f32.gmra.mxu0 %v1479
    %v2189 = vpop.f32.mrf.mxu0
    %v2190 = vadd.f32 %v2161, %v2189
    %2191 = vdwg.mxu0
    %2192 = vmatpush.msra.mxu0 %v1533
    %2193 = vmatpush.msra.mxu0 %v1532
    %2194 = vmatpush.msra.mxu0 %v1531
    %2195 = vmatpush.msra.mxu0 %v1530
    %2196 = vmatpush.msra.mxu0 %v1529
    %2197 = vmatpush.msra.mxu0 %v1528
    %2198 = vmatpush.msra.mxu0 %v1527
    %2199 = vmatpush.msra.mxu0 %v1526
    %2200 = vmatpush.msra.mxu0 %v1525
    %2201 = vmatpush.msra.mxu0 %v1524
    %2202 = vmatpush.msra.mxu0 %v1523
    %2203 = vmatpush.msra.mxu0 %v1522
    %2204 = vmatpush.msra.mxu0 %v1521
    %2205 = vmatpush.msra.mxu0 %v1520
    %2206 = vmatpush.msra.mxu0 %v1519
    %2207 = vmatpush.msra.mxu0 %v1518
    %2208 = vmatmul.f32.gmra.mxu0 %v1456
    %v2209 = vpop.f32.mrf.mxu0
    %v2210 = vadd.f32 %v2181, %v2209
    %2211 = vmatmul.f32.gmra.mxu0 %v1464
    %v2212 = vpop.f32.mrf.mxu0
    %v2213 = vadd.f32 %v2184, %v2212
    %2214 = vmatmul.f32.gmra.mxu0 %v1472
    %v2215 = vpop.f32.mrf.mxu0
    %v2216 = vadd.f32 %v2187, %v2215
    %2217 = vmatmul.f32.gmra.mxu0 %v1480
    %v2218 = vpop.f32.mrf.mxu0
    %v2219 = vadd.f32 %v2190, %v2218
    %2220 = vdwg.mxu0
    %2221 = vmatpush.msra.mxu0 %v1549
    %2222 = vmatpush.msra.mxu0 %v1548
    %2223 = vmatpush.msra.mxu0 %v1547
    %2224 = vmatpush.msra.mxu0 %v1546
    %2225 = vmatpush.msra.mxu0 %v1545
    %2226 = vmatpush.msra.mxu0 %v1544
    %2227 = vmatpush.msra.mxu0 %v1543
    %2228 = vmatpush.msra.mxu0 %v1542
    %2229 = vmatpush.msra.mxu0 %v1541
    %2230 = vmatpush.msra.mxu0 %v1540
    %2231 = vmatpush.msra.mxu0 %v1539
    %2232 = vmatpush.msra.mxu0 %v1538
    %2233 = vmatpush.msra.mxu0 %v1537
    %2234 = vmatpush.msra.mxu0 %v1536
    %2235 = vmatpush.msra.mxu0 %v1535
    %2236 = vmatpush.msra.mxu0 %v1534
    %2237 = vmatmul.f32.gmra.mxu0 %v1457
    %v2238 = vpop.f32.mrf.mxu0
    %v2239 = vadd.f32 %v2210, %v2238
    %2240 = vmatmul.f32.gmra.mxu0 %v1465
    %v2241 = vpop.f32.mrf.mxu0
    %v2242 = vadd.f32 %v2213, %v2241
    %2243 = vmatmul.f32.gmra.mxu0 %v1473
    %v2244 = vpop.f32.mrf.mxu0
    %v2245 = vadd.f32 %v2216, %v2244
    %2246 = vmatmul.f32.gmra.mxu0 %v1481
    %v2247 = vpop.f32.mrf.mxu0
    %v2248 = vadd.f32 %v2219, %v2247
    %2249 = vdwg.mxu0
    %2250 = vmatpush.msra.mxu0 %v1565
    %2251 = vmatpush.msra.mxu0 %v1564
    %2252 = vmatpush.msra.mxu0 %v1563
    %2253 = vmatpush.msra.mxu0 %v1562
    %2254 = vmatpush.msra.mxu0 %v1561
    %2255 = vmatpush.msra.mxu0 %v1560
    %2256 = vmatpush.msra.mxu0 %v1559
    %2257 = vmatpush.msra.mxu0 %v1558
    %2258 = vmatpush.msra.mxu0 %v1557
    %2259 = vmatpush.msra.mxu0 %v1556
    %2260 = vmatpush.msra.mxu0 %v1555
    %2261 = vmatpush.msra.mxu0 %v1554
    %2262 = vmatpush.msra.mxu0 %v1553
    %2263 = vmatpush.msra.mxu0 %v1552
    %2264 = vmatpush.msra.mxu0 %v1551
    %2265 = vmatpush.msra.mxu0 %v1550
    %2266 = vmatmul.f32.gmra.mxu0 %v1458
    %v2267 = vpop.f32.mrf.mxu0
    %v2268 = vadd.f32 %v2239, %v2267
    %2269 = vmatmul.f32.gmra.mxu0 %v1466
    %v2270 = vpop.f32.mrf.mxu0
    %v2271 = vadd.f32 %v2242, %v2270
    %2272 = vmatmul.f32.gmra.mxu0 %v1474
    %v2273 = vpop.f32.mrf.mxu0
    %v2274 = vadd.f32 %v2245, %v2273
    %2275 = vmatmul.f32.gmra.mxu0 %v1482
    %v2276 = vpop.f32.mrf.mxu0
    %v2277 = vadd.f32 %v2248, %v2276
    %2278 = vdwg.mxu0
    %2279 = vmatpush.msra.mxu0 %v1581
    %2280 = vmatpush.msra.mxu0 %v1580
    %2281 = vmatpush.msra.mxu0 %v1579
    %2282 = vmatpush.msra.mxu0 %v1578
    %2283 = vmatpush.msra.mxu0 %v1577
    %2284 = vmatpush.msra.mxu0 %v1576
    %2285 = vmatpush.msra.mxu0 %v1575
    %2286 = vmatpush.msra.mxu0 %v1574
    %2287 = vmatpush.msra.mxu0 %v1573
    %2288 = vmatpush.msra.mxu0 %v1572
    %2289 = vmatpush.msra.mxu0 %v1571
    %2290 = vmatpush.msra.mxu0 %v1570
    %2291 = vmatpush.msra.mxu0 %v1569
    %2292 = vmatpush.msra.mxu0 %v1568
    %2293 = vmatpush.msra.mxu0 %v1567
    %2294 = vmatpush.msra.mxu0 %v1566
    %2295 = vmatmul.f32.gmra.mxu0 %v1459
    %v2296 = vpop.f32.mrf.mxu0
    %v2297 = vadd.f32 %v2268, %v2296
    %2298 = vmatmul.f32.gmra.mxu0 %v1467
    %v2299 = vpop.f32.mrf.mxu0
    %v2300 = vadd.f32 %v2271, %v2299
    %2301 = vmatmul.f32.gmra.mxu0 %v1475
    %v2302 = vpop.f32.mrf.mxu0
    %v2303 = vadd.f32 %v2274, %v2302
    %2304 = vmatmul.f32.gmra.mxu0 %v1483
    %v2305 = vpop.f32.mrf.mxu0
    %v2306 = vadd.f32 %v2277, %v2305
    %2307 = vdwg.mxu0
    %2308 = vmatpush.msra.mxu0 %v1597
    %2309 = vmatpush.msra.mxu0 %v1596
    %2310 = vmatpush.msra.mxu0 %v1595
    %2311 = vmatpush.msra.mxu0 %v1594
    %2312 = vmatpush.msra.mxu0 %v1593
    %2313 = vmatpush.msra.mxu0 %v1592
    %2314 = vmatpush.msra.mxu0 %v1591
    %2315 = vmatpush.msra.mxu0 %v1590
    %2316 = vmatpush.msra.mxu0 %v1589
    %2317 = vmatpush.msra.mxu0 %v1588
    %2318 = vmatpush.msra.mxu0 %v1587
    %2319 = vmatpush.msra.mxu0 %v1586
    %2320 = vmatpush.msra.mxu0 %v1585
    %2321 = vmatpush.msra.mxu0 %v1584
    %2322 = vmatpush.msra.mxu0 %v1583
    %2323 = vmatpush.msra.mxu0 %v1582
    %2324 = vmatmul.f32.gmra.mxu0 %v1460
    %v2325 = vpop.f32.mrf.mxu0
    %v2326 = vadd.f32 %v2297, %v2325
    %2327 = vmatmul.f32.gmra.mxu0 %v1468
    %v2328 = vpop.f32.mrf.mxu0
    %v2329 = vadd.f32 %v2300, %v2328
    %2330 = vmatmul.f32.gmra.mxu0 %v1476
    %v2331 = vpop.f32.mrf.mxu0
    %v2332 = vadd.f32 %v2303, %v2331
    %2333 = vmatmul.f32.gmra.mxu0 %v1484
    %v2334 = vpop.f32.mrf.mxu0
    %v2335 = vadd.f32 %v2306, %v2334
    %2336 = vdwg.mxu0
    %2337 = vmatpush.msra.mxu0 %v1613
    %2338 = vmatpush.msra.mxu0 %v1612
    %2339 = vmatpush.msra.mxu0 %v1611
    %2340 = vmatpush.msra.mxu0 %v1610
    %2341 = vmatpush.msra.mxu0 %v1609
    %2342 = vmatpush.msra.mxu0 %v1608
    %2343 = vmatpush.msra.mxu0 %v1607
    %2344 = vmatpush.msra.mxu0 %v1606
    %2345 = vmatpush.msra.mxu0 %v1605
    %2346 = vmatpush.msra.mxu0 %v1604
    %2347 = vmatpush.msra.mxu0 %v1603
    %2348 = vmatpush.msra.mxu0 %v1602
    %2349 = vmatpush.msra.mxu0 %v1601
    %2350 = vmatpush.msra.mxu0 %v1600
    %2351 = vmatpush.msra.mxu0 %v1599
    %2352 = vmatpush.msra.mxu0 %v1598
    %2353 = vmatmul.f32.gmra.mxu0 %v1461
    %v2354 = vpop.f32.mrf.mxu0
    %v2355 = vadd.f32 %v2326, %v2354
    %2356 = vmatmul.f32.gmra.mxu0 %v1469
    %v2357 = vpop.f32.mrf.mxu0
    %v2358 = vadd.f32 %v2329, %v2357
    %2359 = vmatmul.f32.gmra.mxu0 %v1477
    %v2360 = vpop.f32.mrf.mxu0
    %v2361 = vadd.f32 %v2332, %v2360
    %2362 = vmatmul.f32.gmra.mxu0 %v1485
    %v2363 = vpop.f32.mrf.mxu0
    %v2364 = vadd.f32 %v2335, %v2363
    %2365 = vdwg.mxu0
    %v2366 = vld [vmem:[%s1453] sm:$0xfc]
    %v2367 = vld [vmem:[%s1453 + $0x8] sm:$0xfc]
    %v2368 = vld [vmem:[%s1453 + $0x10] sm:$0xfc]
    %v2369 = vld [vmem:[%s1453 + $0x18] sm:$0xfc]
    %v2370 = vld [vmem:[%s1453 + $0x20] sm:$0xfc]
    %v2371 = vld [vmem:[%s1453 + $0x28] sm:$0xfc]
    %v2372 = vld [vmem:[%s1453 + $0x30] sm:$0xfc]
    %v2373 = vld [vmem:[%s1453 + $0x38] sm:$0xfc]
    %v2374 = vld [vmem:[%s1453 + $0x100] sm:$0x3]
    %v2375 = vld [vmem:[%s1453 + $0x108] sm:$0x3]
    %v2376 = vld [vmem:[%s1453 + $0x110] sm:$0x3]
    %v2377 = vld [vmem:[%s1453 + $0x118] sm:$0x3]
    %v2378 = vld [vmem:[%s1453 + $0x120] sm:$0x3]
    %v2379 = vld [vmem:[%s1453 + $0x128] sm:$0x3]
    %v2380 = vld [vmem:[%s1453 + $0x130] sm:$0x3]
    %v2381 = vld [vmem:[%s1453 + $0x138] sm:$0x3]
    %v2382 = vld [vmem:[%s947] sm:$0xff]
    %v2383 = vld [vmem:[%s947 + $0x8] sm:$0xff]
    %v2384 = vld [vmem:[%s947 + $0x10] sm:$0xff]
    %v2385 = vld [vmem:[%s947 + $0x18] sm:$0xff]
    %v2386 = vld [vmem:[%s947 + $0x20] sm:$0xff]
    %v2387 = vld [vmem:[%s947 + $0x28] sm:$0xff]
    %v2388 = vld [vmem:[%s947 + $0x30] sm:$0xff]
    %v2389 = vld [vmem:[%s947 + $0x38] sm:$0xff]
    %v2390 = vld [vmem:[%s947 + $0x40] sm:$0xff]
    %v2391 = vld [vmem:[%s947 + $0x48] sm:$0xff]
    %v2392 = vld [vmem:[%s947 + $0x50] sm:$0xff]
    %v2393 = vld [vmem:[%s947 + $0x58] sm:$0xff]
    %v2394 = vld [vmem:[%s947 + $0x60] sm:$0xff]
    %v2395 = vld [vmem:[%s947 + $0x68] sm:$0xff]
    %v2396 = vld [vmem:[%s947 + $0x70] sm:$0xff]
    %v2397 = vld [vmem:[%s947 + $0x78] sm:$0xff]
    %v2398 = vld [vmem:[%s947 + $0x80] sm:$0xff]
    %v2399 = vld [vmem:[%s947 + $0x88] sm:$0xff]
    %v2400 = vld [vmem:[%s947 + $0x90] sm:$0xff]
    %v2401 = vld [vmem:[%s947 + $0x98] sm:$0xff]
    %v2402 = vld [vmem:[%s947 + $0xa0] sm:$0xff]
    %v2403 = vld [vmem:[%s947 + $0xa8] sm:$0xff]
    %v2404 = vld [vmem:[%s947 + $0xb0] sm:$0xff]
    %v2405 = vld [vmem:[%s947 + $0xb8] sm:$0xff]
    %v2406 = vld [vmem:[%s947 + $0xc0] sm:$0xff]
    %v2407 = vld [vmem:[%s947 + $0xc8] sm:$0xff]
    %v2408 = vld [vmem:[%s947 + $0xd0] sm:$0xff]
    %v2409 = vld [vmem:[%s947 + $0xd8] sm:$0xff]
    %v2410 = vld [vmem:[%s947 + $0xe0] sm:$0xff]
    %v2411 = vld [vmem:[%s947 + $0xe8] sm:$0xff]
    %v2412 = vld [vmem:[%s947 + $0xf0] sm:$0xff]
    %v2413 = vld [vmem:[%s947 + $0xf8] sm:$0xff]
    %v2414 = vld [vmem:[%s947 + $0x100] sm:$0xff]
    %v2415 = vld [vmem:[%s947 + $0x108] sm:$0xff]
    %v2416 = vld [vmem:[%s947 + $0x110] sm:$0xff]
    %v2417 = vld [vmem:[%s947 + $0x118] sm:$0xff]
    %v2418 = vld [vmem:[%s947 + $0x120] sm:$0xff]
    %v2419 = vld [vmem:[%s947 + $0x128] sm:$0xff]
    %v2420 = vld [vmem:[%s947 + $0x130] sm:$0xff]
    %v2421 = vld [vmem:[%s947 + $0x138] sm:$0xff]
    %v2422 = vld [vmem:[%s947 + $0x140] sm:$0xff]
    %v2423 = vld [vmem:[%s947 + $0x148] sm:$0xff]
    %v2424 = vld [vmem:[%s947 + $0x150] sm:$0xff]
    %v2425 = vld [vmem:[%s947 + $0x158] sm:$0xff]
    %v2426 = vld [vmem:[%s947 + $0x160] sm:$0xff]
    %v2427 = vld [vmem:[%s947 + $0x168] sm:$0xff]
    %v2428 = vld [vmem:[%s947 + $0x170] sm:$0xff]
    %v2429 = vld [vmem:[%s947 + $0x178] sm:$0xff]
    %v2430 = vld [vmem:[%s947 + $0x180] sm:$0xff]
    %v2431 = vld [vmem:[%s947 + $0x188] sm:$0xff]
    %v2432 = vld [vmem:[%s947 + $0x190] sm:$0xff]
    %v2433 = vld [vmem:[%s947 + $0x198] sm:$0xff]
    %v2434 = vld [vmem:[%s947 + $0x1a0] sm:$0xff]
    %v2435 = vld [vmem:[%s947 + $0x1a8] sm:$0xff]
    %v2436 = vld [vmem:[%s947 + $0x1b0] sm:$0xff]
    %v2437 = vld [vmem:[%s947 + $0x1b8] sm:$0xff]
    %v2438 = vld [vmem:[%s947 + $0x1c0] sm:$0xff]
    %v2439 = vld [vmem:[%s947 + $0x1c8] sm:$0xff]
    %v2440 = vld [vmem:[%s947 + $0x1d0] sm:$0xff]
    %v2441 = vld [vmem:[%s947 + $0x1d8] sm:$0xff]
    %v2442 = vld [vmem:[%s947 + $0x1e0] sm:$0xff]
    %v2443 = vld [vmem:[%s947 + $0x1e8] sm:$0xff]
    %v2444 = vld [vmem:[%s947 + $0x1f0] sm:$0xff]
    %v2445 = vld [vmem:[%s947 + $0x1f8] sm:$0xff]
    %v2446 = vld [vmem:[%s947 + $0x200] sm:$0xff]
    %v2447 = vld [vmem:[%s947 + $0x208] sm:$0xff]
    %v2448 = vld [vmem:[%s947 + $0x210] sm:$0xff]
    %v2449 = vld [vmem:[%s947 + $0x218] sm:$0xff]
    %v2450 = vld [vmem:[%s947 + $0x220] sm:$0xff]
    %v2451 = vld [vmem:[%s947 + $0x228] sm:$0xff]
    %v2452 = vld [vmem:[%s947 + $0x230] sm:$0xff]
    %v2453 = vld [vmem:[%s947 + $0x238] sm:$0xff]
    %v2454 = vld [vmem:[%s947 + $0x240] sm:$0xff]
    %v2455 = vld [vmem:[%s947 + $0x248] sm:$0xff]
    %v2456 = vld [vmem:[%s947 + $0x250] sm:$0xff]
    %v2457 = vld [vmem:[%s947 + $0x258] sm:$0xff]
    %v2458 = vld [vmem:[%s947 + $0x260] sm:$0xff]
    %v2459 = vld [vmem:[%s947 + $0x268] sm:$0xff]
    %v2460 = vld [vmem:[%s947 + $0x270] sm:$0xff]
    %v2461 = vld [vmem:[%s947 + $0x278] sm:$0xff]
    %v2462 = vld [vmem:[%s947 + $0x280] sm:$0xff]
    %v2463 = vld [vmem:[%s947 + $0x288] sm:$0xff]
    %v2464 = vld [vmem:[%s947 + $0x290] sm:$0xff]
    %v2465 = vld [vmem:[%s947 + $0x298] sm:$0xff]
    %v2466 = vld [vmem:[%s947 + $0x2a0] sm:$0xff]
    %v2467 = vld [vmem:[%s947 + $0x2a8] sm:$0xff]
    %v2468 = vld [vmem:[%s947 + $0x2b0] sm:$0xff]
    %v2469 = vld [vmem:[%s947 + $0x2b8] sm:$0xff]
    %v2470 = vld [vmem:[%s947 + $0x2c0] sm:$0xff]
    %v2471 = vld [vmem:[%s947 + $0x2c8] sm:$0xff]
    %v2472 = vld [vmem:[%s947 + $0x2d0] sm:$0xff]
    %v2473 = vld [vmem:[%s947 + $0x2d8] sm:$0xff]
    %v2474 = vld [vmem:[%s947 + $0x2e0] sm:$0xff]
    %v2475 = vld [vmem:[%s947 + $0x2e8] sm:$0xff]
    %v2476 = vld [vmem:[%s947 + $0x2f0] sm:$0xff]
    %v2477 = vld [vmem:[%s947 + $0x2f8] sm:$0xff]
    %v2478 = vld [vmem:[%s947 + $0x300] sm:$0xff]
    %v2479 = vld [vmem:[%s947 + $0x308] sm:$0xff]
    %v2480 = vld [vmem:[%s947 + $0x310] sm:$0xff]
    %v2481 = vld [vmem:[%s947 + $0x318] sm:$0xff]
    %v2482 = vld [vmem:[%s947 + $0x320] sm:$0xff]
    %v2483 = vld [vmem:[%s947 + $0x328] sm:$0xff]
    %v2484 = vld [vmem:[%s947 + $0x330] sm:$0xff]
    %v2485 = vld [vmem:[%s947 + $0x338] sm:$0xff]
    %v2486 = vld [vmem:[%s947 + $0x340] sm:$0xff]
    %v2487 = vld [vmem:[%s947 + $0x348] sm:$0xff]
    %v2488 = vld [vmem:[%s947 + $0x350] sm:$0xff]
    %v2489 = vld [vmem:[%s947 + $0x358] sm:$0xff]
    %v2490 = vld [vmem:[%s947 + $0x360] sm:$0xff]
    %v2491 = vld [vmem:[%s947 + $0x368] sm:$0xff]
    %v2492 = vld [vmem:[%s947 + $0x370] sm:$0xff]
    %v2493 = vld [vmem:[%s947 + $0x378] sm:$0xff]
    %v2494 = vld [vmem:[%s947 + $0x380] sm:$0xff]
    %v2495 = vld [vmem:[%s947 + $0x388] sm:$0xff]
    %v2496 = vld [vmem:[%s947 + $0x390] sm:$0xff]
    %v2497 = vld [vmem:[%s947 + $0x398] sm:$0xff]
    %v2498 = vld [vmem:[%s947 + $0x3a0] sm:$0xff]
    %v2499 = vld [vmem:[%s947 + $0x3a8] sm:$0xff]
    %v2500 = vld [vmem:[%s947 + $0x3b0] sm:$0xff]
    %v2501 = vld [vmem:[%s947 + $0x3b8] sm:$0xff]
    %v2502 = vld [vmem:[%s947 + $0x3c0] sm:$0xff]
    %v2503 = vld [vmem:[%s947 + $0x3c8] sm:$0xff]
    %v2504 = vld [vmem:[%s947 + $0x3d0] sm:$0xff]
    %v2505 = vld [vmem:[%s947 + $0x3d8] sm:$0xff]
    %v2506 = vld [vmem:[%s947 + $0x3e0] sm:$0xff]
    %v2507 = vld [vmem:[%s947 + $0x3e8] sm:$0xff]
    %v2508 = vld [vmem:[%s947 + $0x3f0] sm:$0xff]
    %v2509 = vld [vmem:[%s947 + $0x3f8] sm:$0xff]
    %v2526 = vrot.slane %v2366, 2
    %v2527 = vrot.slane %v1462, 2
    %v2528 = vsel %vm1092, %v2526, %v2527
    %v2529 = vrot.slane %v2367, 2
    %v2530 = vrot.slane %v1463, 2
    %v2531 = vsel %vm1092, %v2529, %v2530
    %v2532 = vrot.slane %v2368, 2
    %v2533 = vrot.slane %v1464, 2
    %v2534 = vsel %vm1092, %v2532, %v2533
    %v2535 = vrot.slane %v2369, 2
    %v2536 = vrot.slane %v1465, 2
    %v2537 = vsel %vm1092, %v2535, %v2536
    %v2538 = vrot.slane %v2370, 2
    %v2539 = vrot.slane %v1466, 2
    %v2540 = vsel %vm1092, %v2538, %v2539
    %v2541 = vrot.slane %v2371, 2
    %v2542 = vrot.slane %v1467, 2
    %v2543 = vsel %vm1092, %v2541, %v2542
    %v2544 = vrot.slane %v2372, 2
    %v2545 = vrot.slane %v1468, 2
    %v2546 = vsel %vm1092, %v2544, %v2545
    %v2547 = vrot.slane %v2373, 2
    %v2548 = vrot.slane %v1469, 2
    %v2549 = vsel %vm1092, %v2547, %v2548
    %v2550 = vrot.slane %v1470, 2
    %v2551 = vsel %vm1092, %v2527, %v2550
    %v2552 = vrot.slane %v1471, 2
    %v2553 = vsel %vm1092, %v2530, %v2552
    %v2554 = vrot.slane %v1472, 2
    %v2555 = vsel %vm1092, %v2533, %v2554
    %v2556 = vrot.slane %v1473, 2
    %v2557 = vsel %vm1092, %v2536, %v2556
    %v2558 = vrot.slane %v1474, 2
    %v2559 = vsel %vm1092, %v2539, %v2558
    %v2560 = vrot.slane %v1475, 2
    %v2561 = vsel %vm1092, %v2542, %v2560
    %v2562 = vrot.slane %v1476, 2
    %v2563 = vsel %vm1092, %v2545, %v2562
    %v2564 = vrot.slane %v1477, 2
    %v2565 = vsel %vm1092, %v2548, %v2564
    %v2566 = vrot.slane %v1478, 2
    %v2567 = vsel %vm1092, %v2550, %v2566
    %v2568 = vrot.slane %v1479, 2
    %v2569 = vsel %vm1092, %v2552, %v2568
    %v2570 = vrot.slane %v1480, 2
    %v2571 = vsel %vm1092, %v2554, %v2570
    %v2572 = vrot.slane %v1481, 2
    %v2573 = vsel %vm1092, %v2556, %v2572
    %v2574 = vrot.slane %v1482, 2
    %v2575 = vsel %vm1092, %v2558, %v2574
    %v2576 = vrot.slane %v1483, 2
    %v2577 = vsel %vm1092, %v2560, %v2576
    %v2578 = vrot.slane %v1484, 2
    %v2579 = vsel %vm1092, %v2562, %v2578
    %v2580 = vrot.slane %v1485, 2
    %v2581 = vsel %vm1092, %v2564, %v2580
    %v2582 = vrot.slane %v2374, 2
    %v2583 = vsel %vm1092, %v2566, %v2582
    %v2584 = vrot.slane %v2375, 2
    %v2585 = vsel %vm1092, %v2568, %v2584
    %v2586 = vrot.slane %v2376, 2
    %v2587 = vsel %vm1092, %v2570, %v2586
    %v2588 = vrot.slane %v2377, 2
    %v2589 = vsel %vm1092, %v2572, %v2588
    %v2590 = vrot.slane %v2378, 2
    %v2591 = vsel %vm1092, %v2574, %v2590
    %v2592 = vrot.slane %v2379, 2
    %v2593 = vsel %vm1092, %v2576, %v2592
    %v2594 = vrot.slane %v2380, 2
    %v2595 = vsel %vm1092, %v2578, %v2594
    %v2596 = vrot.slane %v2381, 2
    %v2597 = vsel %vm1092, %v2580, %v2596
    %2630 = vmatpush.msra.mxu0 %v2397
    %2631 = vmatpush.msra.mxu0 %v2396
    %2632 = vmatpush.msra.mxu0 %v2395
    %2633 = vmatpush.msra.mxu0 %v2394
    %2634 = vmatpush.msra.mxu0 %v2393
    %2635 = vmatpush.msra.mxu0 %v2392
    %2636 = vmatpush.msra.mxu0 %v2391
    %2637 = vmatpush.msra.mxu0 %v2390
    %2638 = vmatpush.msra.mxu0 %v2389
    %2639 = vmatpush.msra.mxu0 %v2388
    %2640 = vmatpush.msra.mxu0 %v2387
    %2641 = vmatpush.msra.mxu0 %v2386
    %2642 = vmatpush.msra.mxu0 %v2385
    %2643 = vmatpush.msra.mxu0 %v2384
    %2644 = vmatpush.msra.mxu0 %v2383
    %2645 = vmatpush.msra.mxu0 %v2382
    %2646 = vmatmul.f32.gmra.mxu0 %v2528
    %v2647 = vpop.f32.mrf.mxu0
    %v2648 = vadd.f32 0.0, %v2647
    %2649 = vmatmul.f32.gmra.mxu0 %v2551
    %v2650 = vpop.f32.mrf.mxu0
    %v2651 = vadd.f32 0.0, %v2650
    %2652 = vmatmul.f32.gmra.mxu0 %v2567
    %v2653 = vpop.f32.mrf.mxu0
    %v2654 = vadd.f32 0.0, %v2653
    %2655 = vmatmul.f32.gmra.mxu0 %v2583
    %v2656 = vpop.f32.mrf.mxu0
    %v2657 = vadd.f32 0.0, %v2656
    %2658 = vdwg.mxu0
    %2659 = vmatpush.msra.mxu0 %v2413
    %2660 = vmatpush.msra.mxu0 %v2412
    %2661 = vmatpush.msra.mxu0 %v2411
    %2662 = vmatpush.msra.mxu0 %v2410
    %2663 = vmatpush.msra.mxu0 %v2409
    %2664 = vmatpush.msra.mxu0 %v2408
    %2665 = vmatpush.msra.mxu0 %v2407
    %2666 = vmatpush.msra.mxu0 %v2406
    %2667 = vmatpush.msra.mxu0 %v2405
    %2668 = vmatpush.msra.mxu0 %v2404
    %2669 = vmatpush.msra.mxu0 %v2403
    %2670 = vmatpush.msra.mxu0 %v2402
    %2671 = vmatpush.msra.mxu0 %v2401
    %2672 = vmatpush.msra.mxu0 %v2400
    %2673 = vmatpush.msra.mxu0 %v2399
    %2674 = vmatpush.msra.mxu0 %v2398
    %2675 = vmatmul.f32.gmra.mxu0 %v2531
    %v2676 = vpop.f32.mrf.mxu0
    %v2677 = vadd.f32 %v2648, %v2676
    %2678 = vmatmul.f32.gmra.mxu0 %v2553
    %v2679 = vpop.f32.mrf.mxu0
    %v2680 = vadd.f32 %v2651, %v2679
    %2681 = vmatmul.f32.gmra.mxu0 %v2569
    %v2682 = vpop.f32.mrf.mxu0
    %v2683 = vadd.f32 %v2654, %v2682
    %2684 = vmatmul.f32.gmra.mxu0 %v2585
    %v2685 = vpop.f32.mrf.mxu0
    %v2686 = vadd.f32 %v2657, %v2685
    %2687 = vdwg.mxu0
    %2688 = vmatpush.msra.mxu0 %v2429
    %2689 = vmatpush.msra.mxu0 %v2428
    %2690 = vmatpush.msra.mxu0 %v2427
    %2691 = vmatpush.msra.mxu0 %v2426
    %2692 = vmatpush.msra.mxu0 %v2425
    %2693 = vmatpush.msra.mxu0 %v2424
    %2694 = vmatpush.msra.mxu0 %v2423
    %2695 = vmatpush.msra.mxu0 %v2422
    %2696 = vmatpush.msra.mxu0 %v2421
    %2697 = vmatpush.msra.mxu0 %v2420
    %2698 = vmatpush.msra.mxu0 %v2419
    %2699 = vmatpush.msra.mxu0 %v2418
    %2700 = vmatpush.msra.mxu0 %v2417
    %2701 = vmatpush.msra.mxu0 %v2416
    %2702 = vmatpush.msra.mxu0 %v2415
    %2703 = vmatpush.msra.mxu0 %v2414
    %2704 = vmatmul.f32.gmra.mxu0 %v2534
    %v2705 = vpop.f32.mrf.mxu0
    %v2706 = vadd.f32 %v2677, %v2705
    %2707 = vmatmul.f32.gmra.mxu0 %v2555
    %v2708 = vpop.f32.mrf.mxu0
    %v2709 = vadd.f32 %v2680, %v2708
    %2710 = vmatmul.f32.gmra.mxu0 %v2571
    %v2711 = vpop.f32.mrf.mxu0
    %v2712 = vadd.f32 %v2683, %v2711
    %2713 = vmatmul.f32.gmra.mxu0 %v2587
    %v2714 = vpop.f32.mrf.mxu0
    %v2715 = vadd.f32 %v2686, %v2714
    %2716 = vdwg.mxu0
    %2717 = vmatpush.msra.mxu0 %v2445
    %2718 = vmatpush.msra.mxu0 %v2444
    %2719 = vmatpush.msra.mxu0 %v2443
    %2720 = vmatpush.msra.mxu0 %v2442
    %2721 = vmatpush.msra.mxu0 %v2441
    %2722 = vmatpush.msra.mxu0 %v2440
    %2723 = vmatpush.msra.mxu0 %v2439
    %2724 = vmatpush.msra.mxu0 %v2438
    %2725 = vmatpush.msra.mxu0 %v2437
    %2726 = vmatpush.msra.mxu0 %v2436
    %2727 = vmatpush.msra.mxu0 %v2435
    %2728 = vmatpush.msra.mxu0 %v2434
    %2729 = vmatpush.msra.mxu0 %v2433
    %2730 = vmatpush.msra.mxu0 %v2432
    %2731 = vmatpush.msra.mxu0 %v2431
    %2732 = vmatpush.msra.mxu0 %v2430
    %2733 = vmatmul.f32.gmra.mxu0 %v2537
    %v2734 = vpop.f32.mrf.mxu0
    %v2735 = vadd.f32 %v2706, %v2734
    %2736 = vmatmul.f32.gmra.mxu0 %v2557
    %v2737 = vpop.f32.mrf.mxu0
    %v2738 = vadd.f32 %v2709, %v2737
    %2739 = vmatmul.f32.gmra.mxu0 %v2573
    %v2740 = vpop.f32.mrf.mxu0
    %v2741 = vadd.f32 %v2712, %v2740
    %2742 = vmatmul.f32.gmra.mxu0 %v2589
    %v2743 = vpop.f32.mrf.mxu0
    %v2744 = vadd.f32 %v2715, %v2743
    %2745 = vdwg.mxu0
    %2746 = vmatpush.msra.mxu0 %v2461
    %2747 = vmatpush.msra.mxu0 %v2460
    %2748 = vmatpush.msra.mxu0 %v2459
    %2749 = vmatpush.msra.mxu0 %v2458
    %2750 = vmatpush.msra.mxu0 %v2457
    %2751 = vmatpush.msra.mxu0 %v2456
    %2752 = vmatpush.msra.mxu0 %v2455
    %2753 = vmatpush.msra.mxu0 %v2454
    %2754 = vmatpush.msra.mxu0 %v2453
    %2755 = vmatpush.msra.mxu0 %v2452
    %2756 = vmatpush.msra.mxu0 %v2451
    %2757 = vmatpush.msra.mxu0 %v2450
    %2758 = vmatpush.msra.mxu0 %v2449
    %2759 = vmatpush.msra.mxu0 %v2448
    %2760 = vmatpush.msra.mxu0 %v2447
    %2761 = vmatpush.msra.mxu0 %v2446
    %2762 = vmatmul.f32.gmra.mxu0 %v2540
    %v2763 = vpop.f32.mrf.mxu0
    %v2764 = vadd.f32 %v2735, %v2763
    %2765 = vmatmul.f32.gmra.mxu0 %v2559
    %v2766 = vpop.f32.mrf.mxu0
    %v2767 = vadd.f32 %v2738, %v2766
    %2768 = vmatmul.f32.gmra.mxu0 %v2575
    %v2769 = vpop.f32.mrf.mxu0
    %v2770 = vadd.f32 %v2741, %v2769
    %2771 = vmatmul.f32.gmra.mxu0 %v2591
    %v2772 = vpop.f32.mrf.mxu0
    %v2773 = vadd.f32 %v2744, %v2772
    %2774 = vdwg.mxu0
    %2775 = vmatpush.msra.mxu0 %v2477
    %2776 = vmatpush.msra.mxu0 %v2476
    %2777 = vmatpush.msra.mxu0 %v2475
    %2778 = vmatpush.msra.mxu0 %v2474
    %2779 = vmatpush.msra.mxu0 %v2473
    %2780 = vmatpush.msra.mxu0 %v2472
    %2781 = vmatpush.msra.mxu0 %v2471
    %2782 = vmatpush.msra.mxu0 %v2470
    %2783 = vmatpush.msra.mxu0 %v2469
    %2784 = vmatpush.msra.mxu0 %v2468
    %2785 = vmatpush.msra.mxu0 %v2467
    %2786 = vmatpush.msra.mxu0 %v2466
    %2787 = vmatpush.msra.mxu0 %v2465
    %2788 = vmatpush.msra.mxu0 %v2464
    %2789 = vmatpush.msra.mxu0 %v2463
    %2790 = vmatpush.msra.mxu0 %v2462
    %2791 = vmatmul.f32.gmra.mxu0 %v2543
    %v2792 = vpop.f32.mrf.mxu0
    %v2793 = vadd.f32 %v2764, %v2792
    %2794 = vmatmul.f32.gmra.mxu0 %v2561
    %v2795 = vpop.f32.mrf.mxu0
    %v2796 = vadd.f32 %v2767, %v2795
    %2797 = vmatmul.f32.gmra.mxu0 %v2577
    %v2798 = vpop.f32.mrf.mxu0
    %v2799 = vadd.f32 %v2770, %v2798
    %2800 = vmatmul.f32.gmra.mxu0 %v2593
    %v2801 = vpop.f32.mrf.mxu0
    %v2802 = vadd.f32 %v2773, %v2801
    %2803 = vdwg.mxu0
    %2804 = vmatpush.msra.mxu0 %v2493
    %2805 = vmatpush.msra.mxu0 %v2492
    %2806 = vmatpush.msra.mxu0 %v2491
    %2807 = vmatpush.msra.mxu0 %v2490
    %2808 = vmatpush.msra.mxu0 %v2489
    %2809 = vmatpush.msra.mxu0 %v2488
    %2810 = vmatpush.msra.mxu0 %v2487
    %2811 = vmatpush.msra.mxu0 %v2486
    %2812 = vmatpush.msra.mxu0 %v2485
    %2813 = vmatpush.msra.mxu0 %v2484
    %2814 = vmatpush.msra.mxu0 %v2483
    %2815 = vmatpush.msra.mxu0 %v2482
    %2816 = vmatpush.msra.mxu0 %v2481
    %2817 = vmatpush.msra.mxu0 %v2480
    %2818 = vmatpush.msra.mxu0 %v2479
    %2819 = vmatpush.msra.mxu0 %v2478
    %2820 = vmatmul.f32.gmra.mxu0 %v2546
    %v2821 = vpop.f32.mrf.mxu0
    %v2822 = vadd.f32 %v2793, %v2821
    %2823 = vmatmul.f32.gmra.mxu0 %v2563
    %v2824 = vpop.f32.mrf.mxu0
    %v2825 = vadd.f32 %v2796, %v2824
    %2826 = vmatmul.f32.gmra.mxu0 %v2579
    %v2827 = vpop.f32.mrf.mxu0
    %v2828 = vadd.f32 %v2799, %v2827
    %2829 = vmatmul.f32.gmra.mxu0 %v2595
    %v2830 = vpop.f32.mrf.mxu0
    %v2831 = vadd.f32 %v2802, %v2830
    %2832 = vdwg.mxu0
    %2833 = vmatpush.msra.mxu0 %v2509
    %2834 = vmatpush.msra.mxu0 %v2508
    %2835 = vmatpush.msra.mxu0 %v2507
    %2836 = vmatpush.msra.mxu0 %v2506
    %2837 = vmatpush.msra.mxu0 %v2505
    %2838 = vmatpush.msra.mxu0 %v2504
    %2839 = vmatpush.msra.mxu0 %v2503
    %2840 = vmatpush.msra.mxu0 %v2502
    %2841 = vmatpush.msra.mxu0 %v2501
    %2842 = vmatpush.msra.mxu0 %v2500
    %2843 = vmatpush.msra.mxu0 %v2499
    %2844 = vmatpush.msra.mxu0 %v2498
    %2845 = vmatpush.msra.mxu0 %v2497
    %2846 = vmatpush.msra.mxu0 %v2496
    %2847 = vmatpush.msra.mxu0 %v2495
    %2848 = vmatpush.msra.mxu0 %v2494
    %2849 = vmatmul.f32.gmra.mxu0 %v2549
    %v2850 = vpop.f32.mrf.mxu0
    %v2851 = vadd.f32 %v2822, %v2850
    %2852 = vmatmul.f32.gmra.mxu0 %v2565
    %v2853 = vpop.f32.mrf.mxu0
    %v2854 = vadd.f32 %v2825, %v2853
    %2855 = vmatmul.f32.gmra.mxu0 %v2581
    %v2856 = vpop.f32.mrf.mxu0
    %v2857 = vadd.f32 %v2828, %v2856
    %2858 = vmatmul.f32.gmra.mxu0 %v2597
    %v2859 = vpop.f32.mrf.mxu0
    %v2860 = vadd.f32 %v2831, %v2859
    %2861 = vdwg.mxu0
    %v2862 = vadd.f32 %v2355, %v2851
    %v2863 = vadd.f32 %v2358, %v2854
    %v2864 = vadd.f32 %v2361, %v2857
    %v2865 = vadd.f32 %v2364, %v2860
    %v2866 = vld [vmem:[#allocation2] sm:$0x1]
    %v2868 = vperm.slane %v2866, 0
    %2869 = vset.pattern.permute.xlu0 0
    %2870 = vperm.xlu0 %2869, %v2868
    %v2871 = vpop.permute.xlu0 %2870
    %v2873 = vadd.f32 %v2862, %v2871
    %v2874 = vadd.f32 %v2863, %v2871
    %v2875 = vadd.f32 %v2864, %v2871
    %v2876 = vadd.f32 %v2865, %v2871
    %v2877 = vtanh.pop %v2873
    %v2878 = vtanh.pop %v2874
    %v2879 = vtanh.pop %v2875
    %v2880 = vtanh.pop %v2876
    %s2881 = scalar_lea.vmem [#allocation3], 32
    %2882 = vst.msk [vmem:[%s2881] sm:$0xff] %vm1448, %v2877
    %2883 = vst.msk [vmem:[%s2881 + $0x8] sm:$0xff] %vm1448, %v2878
    %2884 = vst.msk [vmem:[%s2881 + $0x10] sm:$0xff] %vm1448, %v2879
    %2885 = vst.msk [vmem:[%s2881 + $0x18] sm:$0xff] %vm1448, %v2880
    // Predicated region
    $region14: #{resnet_decoder.3} parent=1 // pred_check
      _
    $region15: #{resnet_decoder.3} parent=1 // pred_check_branch
      %2887 = sbr.rel (0) target = $region17
    $region16: #{resnet_decoder.3} parent=1 // pred_region
      %2889 = vsyncadd [#allocation4], 0
      %s2890 = sshll.u32 [#allocation3], 4
      %s2891 = int_to_ptr.vmem [resolvable:$true] %s2890
      %s2892 = sshll.u32 %s3, 4
      %s2893 = int_to_ptr.hbm [resolvable:$true] %s2892
      %2898 = dma.vmem_to_hbm [thread:$0]  %s2891, 1024, %s2893, [#allocation4], 128, 128, 8
    $region17: #{resnet_decoder.3} parent=1 // pred_fallthru
      _
    // Predicated region
    $region18: #{resnet_decoder.3} parent=1 // pred_check
      _
    $region19: #{resnet_decoder.3} parent=1 // pred_check_branch
      %2900 = sbr.rel (0) target = $region21
    $region20: #{resnet_decoder.3} parent=1 // pred_region
      %2902 = dma.done [#allocation4], 1024
    $region21: #{resnet_decoder.3} parent=1 // pred_fallthru
      _
    %2903 = vsyncpa [#allocation4], 1

</llo_original>
